<compile_context>
chip_gen: v5e
topology: v5e:2x2
jax: 0.10.0
libtpu: 0.0.40
codegen_flags: <defaults>
</compile_context>

<pallas_src>
import jax
import jax.numpy as jnp
from jax import lax
from jax.experimental import pallas as pl
from jax.experimental.pallas import tpu as pltpu

C_IN, C_OUT, K = 1, 4, 9
H_IN, W_IN = 28, 28
H_CONV = H_IN - K + 1                 # 20
W_CONV = W_IN - K + 1                 # 20
H_POOL = W_POOL = H_CONV // 2         # 10
N_CLASS = 10
N_PIX = H_IN * W_IN                   # 784  flattened input pixels
N_CONV = C_OUT * H_CONV * W_CONV      # 1600 flattened conv activations
N_FLAT = C_OUT * H_POOL * W_POOL      # 400  flattened pooled activations


def cnn_kernel(x_ref, wconv_ref, cb_ref, fcw_ref, fcb_ref, out_ref):
    """One batch tile. x_ref is (784, TB) with batch on the lane dimension."""
    # ---- Conv2d(1,4,9) as a single MXU matmul -> (1600, TB), f32 accumulate.
    conv = jnp.dot(wconv_ref[...], x_ref[...],
                   preferred_element_type=jnp.float32)
    a = conv + cb_ref[...]                                    # + conv bias (1600,1)

    # ---- sigmoid (f32 elementwise; approx reciprocal uses the EUP slot).
    s = pl.reciprocal(1.0 + jnp.exp(-a), approx=True)

    # ---- AvgPool folded into the FC weight: one (10,1600)@(1600,TB) matmul.
    logits = jnp.dot(fcw_ref[...], s.astype(fcw_ref.dtype),
                     preferred_element_type=jnp.float32)
    logits = logits + fcb_ref[...]                            # + fc bias (10,1)

    # ---- Softmax over the 10 classes (sublane axis); exact normalization.
    m = jnp.max(logits, axis=0, keepdims=True)
    e = jnp.exp(logits - m)
    out_ref[...] = e / jnp.sum(e, axis=0, keepdims=True)


def _pick_tb(B):
    # Lane-aligned batch tile: keep >=2 grid steps for moderate batches so the
    # "parallel" axis can shard across v7x's two TensorCores; grow the tile for
    # large batches to amortize per-step pipeline overhead.
    if B <= 256:
        return 128
    if B <= 4096:
        return 256
    return 512


def cnn_forward(x, conv_w, conv_b, fc_w, fc_b, *, tb=None):
    B = x.shape[0]
    if tb is None:
        tb = _pick_tb(B)
    b_pad = ((B + tb - 1) // tb) * tb

    # ---- Input slab: flatten pixels, batch on lanes, bf16 MXU operand. ----
    xs = x[:, 0, :, :].reshape(B, N_PIX)                      # (B, 784)
    xs = jnp.pad(xs, ((0, b_pad - B), (0, 0)))
    xs = jnp.transpose(xs, (1, 0)).astype(jnp.bfloat16)       # (784, B_pad)

    # ---- Conv as a matmul: push the pixel-basis identity through the conv to
    #      get W_conv[(c,i,j), (ih,iw)] exactly.  (One-time weight prep; would
    #      normally be precomputed / jit-cached outside the hot path.) ----
    eye = jnp.eye(N_PIX, dtype=jnp.float32).reshape(N_PIX, 1, H_IN, W_IN)
    cols = lax.conv_general_dilated(eye, conv_w, (1, 1), "VALID",
                                    dimension_numbers=("NCHW", "OIHW", "NCHW"))
    w_conv = cols.reshape(N_PIX, N_CONV).T.astype(jnp.bfloat16)   # (1600, 784)

    # Conv bias broadcast over each channel's 400 spatial positions.
    cb_full = jnp.repeat(conv_b.astype(jnp.float32), H_CONV * W_CONV)
    cb_full = cb_full.reshape(N_CONV, 1)                          # (1600, 1)

    # ---- Fold AvgPool2d(2,2) into the FC weight (pool and FC are both linear):
    #      W_eff[o, c*400 + i*20 + j] = 0.25 * fc_w[o, c*100 + (i//2)*10 + (j//2)]
    fc_w4 = fc_w.reshape(N_CLASS, C_OUT, H_POOL, W_POOL)
    w_up = 0.25 * jnp.repeat(jnp.repeat(fc_w4, 2, axis=2), 2, axis=3)
    fcw_eff = w_up.reshape(N_CLASS, N_CONV).astype(jnp.bfloat16)  # (10, 1600)
    fcb_col = fc_b.astype(jnp.float32).reshape(N_CLASS, 1)        # (10, 1)

    out = pl.pallas_call(
        cnn_kernel,
        out_shape=jax.ShapeDtypeStruct((N_CLASS, b_pad), jnp.float32),
        grid=(b_pad // tb,),
        in_specs=[
            pl.BlockSpec((N_PIX, tb), lambda b: (0, b)),          # x slab
            pl.BlockSpec((N_CONV, N_PIX), lambda b: (0, 0)),      # W_conv (VMEM-resident)
            pl.BlockSpec((N_CONV, 1), lambda b: (0, 0)),          # conv bias column
            pl.BlockSpec((N_CLASS, N_CONV), lambda b: (0, 0)),    # W_eff (pool folded)
            pl.BlockSpec((N_CLASS, 1), lambda b: (0, 0)),         # fc bias column
        ],
        out_specs=pl.BlockSpec((N_CLASS, tb), lambda b: (0, b)),
        compiler_params=pltpu.CompilerParams(
            dimension_semantics=("parallel",),
            vmem_limit_bytes=32 * 1024 * 1024),
    )(xs, w_conv, cb_full, fcw_eff, fcb_col)

    return out[:, :B].T                                           # (B, 10)


def reference_forward(x, conv_w, conv_b, fc_w, fc_b):
    """Pure-JAX reference matching the PyTorch forward semantics."""
    out = lax.conv_general_dilated(x, conv_w, (1, 1), "VALID",
                                   dimension_numbers=("NCHW", "OIHW", "NCHW"))
    out = out + conv_b[None, :, None, None]
    out = jax.nn.sigmoid(out)
    B, C, H, W = out.shape
    out = out.reshape(B, C, H // 2, 2, W // 2, 2).mean(axis=(3, 5))
    out = out.reshape(B, -1)
    logits = out @ fc_w.T + fc_b
    return jax.nn.softmax(logits, axis=-1)


if __name__ == "__main__":
    key = jax.random.PRNGKey(0)
    k1, k2, k3, k4, k5 = jax.random.split(key, 5)
    conv_w = jax.random.normal(k1, (C_OUT, C_IN, K, K), jnp.float32) * 0.1
    conv_b = jax.random.normal(k2, (C_OUT,), jnp.float32) * 0.1
    fc_w = jax.random.normal(k3, (N_CLASS, N_FLAT), jnp.float32) * 0.05
    fc_b = jax.random.normal(k4, (N_CLASS,), jnp.float32) * 0.1
    x = jax.random.normal(k5, (2, C_IN, H_IN, W_IN), jnp.float32)

    out = cnn_forward(x, conv_w, conv_b, fc_w, fc_b)
    out = jax.block_until_ready(out)

    ref = reference_forward(x, conv_w, conv_b, fc_w, fc_b)
    assert out.shape == (2, N_CLASS)
    # bf16 MXU operands (f32 accumulate) -> ~1e-3-level probability error.
    assert bool(jnp.allclose(out, ref, atol=1e-2, rtol=1e-2)), (out, ref)
    # TODO(synk): the module's debug prints (including the buggy `'<<<<<<<' + out`
    # string+tensor concat) have no compute semantics and are not reproduced.
    print("KERNEL_OK")
</pallas_src>

<mosaic_0001>
module attributes {stable_mosaic.version = 11 : i64} {
  func.func @cnn_kernel(%arg0: i32, %arg1: memref<784x128xbf16, #tpu.memory_space<vmem>>, %arg2: memref<1600x784xbf16, #tpu.memory_space<vmem>>, %arg3: memref<1600x1xf32, #tpu.memory_space<vmem>>, %arg4: memref<10x1600xbf16, #tpu.memory_space<vmem>>, %arg5: memref<10x1xf32, #tpu.memory_space<vmem>>, %arg6: memref<10x128xf32, #tpu.memory_space<vmem>>) attributes {dimension_semantics = [#tpu.dimension_semantics<parallel>], iteration_bounds = array<i64: 1>, scalar_prefetch = 0 : i64, scratch_operands = 0 : i64, tpu.core_type = #tpu.core_type<tc>, window_params = [{transform_indices = @transform_0, window_bounds = array<i64: 784, 128>}, {pipeline_mode = #tpu.pipeline_mode<synchronous>, transform_indices = @transform_1, window_bounds = array<i64: 1600, 784>}, {pipeline_mode = #tpu.pipeline_mode<synchronous>, transform_indices = @transform_2, window_bounds = array<i64: 1600, 1>}, {pipeline_mode = #tpu.pipeline_mode<synchronous>, transform_indices = @transform_3, window_bounds = array<i64: 10, 1600>}, {pipeline_mode = #tpu.pipeline_mode<synchronous>, transform_indices = @transform_4, window_bounds = array<i64: 10, 1>}, {transform_indices = @transform_5, window_bounds = array<i64: 10, 128>}]} {
    %c0 = arith.constant 0 : index
    %c0_0 = arith.constant 0 : index
    %0 = vector.load %arg2[%c0, %c0_0] : memref<1600x784xbf16, #tpu.memory_space<vmem>>, vector<1600x784xbf16>
    %c0_1 = arith.constant 0 : index
    %c0_2 = arith.constant 0 : index
    %1 = vector.load %arg1[%c0_1, %c0_2] : memref<784x128xbf16, #tpu.memory_space<vmem>>, vector<784x128xbf16>
    %cst = arith.constant dense<0.000000e+00> : vector<1600x128xf32>
    %2 = tpu.matmul %0, %1, %cst {dimension_numbers = #tpu.dot_dimension_numbers<[1], [0], [0], [1], [0, 0, 1, 1], [], []>} : vector<1600x784xbf16>, vector<784x128xbf16>, vector<1600x128xf32> -> vector<1600x128xf32>
    %c0_3 = arith.constant 0 : index
    %c0_4 = arith.constant 0 : index
    %3 = vector.load %arg3[%c0_3, %c0_4] : memref<1600x1xf32, #tpu.memory_space<vmem>>, vector<1600x1xf32>
    %4 = vector.broadcast %3 : vector<1600x1xf32> to vector<1600x128xf32>
    %5 = arith.addf %2, %4 : vector<1600x128xf32>
    %cst_5 = arith.constant 0.000000e+00 : f32
    %6 = vector.broadcast %cst_5 : f32 to vector<1600x128xf32>
    %7 = arith.subf %6, %5 : vector<1600x128xf32>
    %8 = math.exp %7 : vector<1600x128xf32>
    %cst_6 = arith.constant 1.000000e+00 : f32
    %9 = vector.broadcast %cst_6 : f32 to vector<1600x128xf32>
    %10 = arith.addf %9, %8 : vector<1600x128xf32>
    %11 = tpu.reciprocal %10 {approx = true} : vector<1600x128xf32> -> vector<1600x128xf32>
    %c0_7 = arith.constant 0 : index
    %c0_8 = arith.constant 0 : index
    %12 = vector.load %arg4[%c0_7, %c0_8] : memref<10x1600xbf16, #tpu.memory_space<vmem>>, vector<10x1600xbf16>
    %13 = arith.truncf %11 : vector<1600x128xf32> to vector<1600x128xbf16>
    %cst_9 = arith.constant dense<0.000000e+00> : vector<10x128xf32>
    %14 = tpu.matmul %12, %13, %cst_9 {dimension_numbers = #tpu.dot_dimension_numbers<[1], [0], [0], [1], [0, 0, 1, 1], [], []>} : vector<10x1600xbf16>, vector<1600x128xbf16>, vector<10x128xf32> -> vector<10x128xf32>
    %c0_10 = arith.constant 0 : index
    %c0_11 = arith.constant 0 : index
    %15 = vector.load %arg5[%c0_10, %c0_11] : memref<10x1xf32, #tpu.memory_space<vmem>>, vector<10x1xf32>
    %16 = vector.broadcast %15 : vector<10x1xf32> to vector<10x128xf32>
    %17 = arith.addf %14, %16 : vector<10x128xf32>
    %cst_12 = arith.constant dense<0xFF800000> : vector<128xf32>
    %18 = vector.multi_reduction <maximumf>, %17, %cst_12 [0] : vector<10x128xf32> to vector<128xf32>
    %19 = vector.shape_cast %18 : vector<128xf32> to vector<1x128xf32>
    %20 = vector.broadcast %19 : vector<1x128xf32> to vector<10x128xf32>
    %21 = arith.subf %17, %20 : vector<10x128xf32>
    %22 = math.exp %21 : vector<10x128xf32>
    %cst_13 = arith.constant dense<0.000000e+00> : vector<128xf32>
    %23 = vector.multi_reduction <add>, %22, %cst_13 [0] : vector<10x128xf32> to vector<128xf32>
    %24 = vector.shape_cast %23 : vector<128xf32> to vector<1x128xf32>
    %25 = vector.broadcast %24 : vector<1x128xf32> to vector<10x128xf32>
    %26 = arith.divf %22, %25 : vector<10x128xf32>
    %c0_14 = arith.constant 0 : index
    %c0_15 = arith.constant 0 : index
    %27 = vector.load %arg6[%c0_14, %c0_15] : memref<10x128xf32, #tpu.memory_space<vmem>>, vector<10x128xf32>
    tpu.vector_store %arg6[%c0_14, %c0_15], %26 {strides = array<i32>} : memref<10x128xf32, #tpu.memory_space<vmem>>, vector<10x128xf32>,
    return
  }
  func.func @transform_0(%arg0: i32) -> (i32, i32) {
    %c0_i32 = arith.constant 0 : i32
    %c0_i32_0 = arith.constant 0 : i32
    return %c0_i32, %arg0 : i32, i32
  }
  func.func @transform_1(%arg0: i32) -> (i32, i32) {
    %c0_i32 = arith.constant 0 : i32
    %c0_i32_0 = arith.constant 0 : i32
    %c0_i32_1 = arith.constant 0 : i32
    return %c0_i32, %c0_i32_0 : i32, i32
  }
  func.func @transform_2(%arg0: i32) -> (i32, i32) {
    %c0_i32 = arith.constant 0 : i32
    %c0_i32_0 = arith.constant 0 : i32
    %c0_i32_1 = arith.constant 0 : i32
    return %c0_i32, %c0_i32_0 : i32, i32
  }
  func.func @transform_3(%arg0: i32) -> (i32, i32) {
    %c0_i32 = arith.constant 0 : i32
    %c0_i32_0 = arith.constant 0 : i32
    %c0_i32_1 = arith.constant 0 : i32
    return %c0_i32, %c0_i32_0 : i32, i32
  }
  func.func @transform_4(%arg0: i32) -> (i32, i32) {
    %c0_i32 = arith.constant 0 : i32
    %c0_i32_0 = arith.constant 0 : i32
    %c0_i32_1 = arith.constant 0 : i32
    return %c0_i32, %c0_i32_0 : i32, i32
  }
  func.func @transform_5(%arg0: i32) -> (i32, i32) {
    %c0_i32 = arith.constant 0 : i32
    %c0_i32_0 = arith.constant 0 : i32
    return %c0_i32, %arg0 : i32, i32
  }
}

</mosaic_0001>

<llo_original>
// kernel: tpu_custom_call.1
$region0: #{tpu_custom_call.1}
  #allocation0 [shape = 'u32[]', space=smem, size = 0x4, offset = 0x4, fixed_abs, tag = 'smem constant byte address 0x4 - core index']
  #allocation1 [shape = 'u32[72,128]{1,0:T(1,128)}', space=vmem, size = 0x9000, scoped, tag = 'internal scratch']
  %s0 = inlined_call_operand.vmem [shape: bf16[784,128], index: 0, kind: input, shape index: {}]
  %s1 = inlined_call_operand.vmem [shape: bf16[1600,784], index: 1, kind: input, shape index: {}]
  %s2 = inlined_call_operand.vmem [shape: f32[1600,1], index: 2, kind: input, shape index: {}]
  %s3 = inlined_call_operand.vmem [shape: bf16[10,1600], index: 3, kind: input, shape index: {}]
  %s4 = inlined_call_operand.vmem [shape: f32[10,1], index: 4, kind: input, shape index: {}]
  %s5 = inlined_call_operand.hbm [shape: f32[10,128], index: 5, kind: output, shape index: {}]
  %s6 = sld [smem:[#allocation0]]
  $region30: #{tpu_custom_call.1} parent=0
    _
  %s8 = ssub.s32 1, %s6
  %s9 = scalar_select 0, %s8, %s6
  $region1: #{tpu_custom_call.1} parent=0
    #allocation2 [shape = 'u8[8192]{0}', space=vmem, size = 0x2000, scoped, tag = 'output window, operand 0, single buffered']
    #allocation3 [shape = 's32[1]{0}', space=sflag, size = 0x4, scoped, tag = 'scoped memory for tpu_custom_call.1']
    %10 = vsyncpa [#allocation3], 0
    // Predicated region
    $region2: #{tpu_custom_call.1} parent=1 // pred_check
      _
    $region3: #{tpu_custom_call.1} parent=1 // pred_check_branch
      %12 = sbr.rel (0) target = $region5
    $region4: #{tpu_custom_call.1} parent=1 // pred_region
      _
    $region5: #{tpu_custom_call.1} parent=1 // pred_fallthru
      _
    // Predicated region
    $region6: #{tpu_custom_call.1} parent=1 // pred_check
      _
    $region7: #{tpu_custom_call.1} parent=1 // pred_check_branch
      %14 = sbr.rel (0) target = $region9
    $region8: #{tpu_custom_call.1} parent=1 // pred_region
      _
    $region9: #{tpu_custom_call.1} parent=1 // pred_fallthru
      _
    // Predicated region
    $region10: #{tpu_custom_call.1} parent=1 // pred_check
      _
    $region11: #{tpu_custom_call.1} parent=1 // pred_check_branch
      %16 = sbr.rel (0) target = $region13
    $region12: #{tpu_custom_call.1} parent=1 // pred_region
      _
    $region13: #{tpu_custom_call.1} parent=1 // pred_fallthru
      _
    // Predicated region
    $region14: #{tpu_custom_call.1} parent=1 // pred_check
      _
    $region15: #{tpu_custom_call.1} parent=1 // pred_check_branch
      %18 = sbr.rel (0) target = $region17
    $region16: #{tpu_custom_call.1} parent=1 // pred_region
      _
    $region17: #{tpu_custom_call.1} parent=1 // pred_fallthru
      _
    // Predicated region
    $region18: #{tpu_custom_call.1} parent=1 // pred_check
      _
    $region19: #{tpu_custom_call.1} parent=1 // pred_check_branch
      %20 = sbr.rel (0) target = $region21
    $region20: #{tpu_custom_call.1} parent=1 // pred_region
      _
    $region21: #{tpu_custom_call.1} parent=1 // pred_fallthru
      _
    %v22 = vld [vmem:[%s1] sm:$0xff]
    %v23 = vld [vmem:[%s1 + $0x8] sm:$0xff]
    %v24 = vld [vmem:[%s1 + $0x10] sm:$0xff]
    %v25 = vld [vmem:[%s1 + $0x18] sm:$0xf]
    %v26 = vld [vmem:[%s1 + $0x1c] sm:$0xff]
    %v27 = vld [vmem:[%s1 + $0x24] sm:$0xff]
    %v28 = vld [vmem:[%s1 + $0x2c] sm:$0xff]
    %v29 = vld [vmem:[%s1 + $0x34] sm:$0xf]
    %v30 = vld [vmem:[%s1 + $0x38] sm:$0xff]
    %v31 = vld [vmem:[%s1 + $0x40] sm:$0xff]
    %v32 = vld [vmem:[%s1 + $0x48] sm:$0xff]
    %v33 = vld [vmem:[%s1 + $0x50] sm:$0xf]
    %v34 = vld [vmem:[%s1 + $0x54] sm:$0xff]
    %v35 = vld [vmem:[%s1 + $0x5c] sm:$0xff]
    %v36 = vld [vmem:[%s1 + $0x64] sm:$0xff]
    %v37 = vld [vmem:[%s1 + $0x6c] sm:$0xf]
    %v38 = vld [vmem:[%s1 + $0x70] sm:$0xff]
    %v39 = vld [vmem:[%s1 + $0x78] sm:$0xff]
    %v40 = vld [vmem:[%s1 + $0x80] sm:$0xff]
    %v41 = vld [vmem:[%s1 + $0x88] sm:$0xf]
    %v42 = vld [vmem:[%s1 + $0x8c] sm:$0xff]
    %v43 = vld [vmem:[%s1 + $0x94] sm:$0xff]
    %v44 = vld [vmem:[%s1 + $0x9c] sm:$0xff]
    %v45 = vld [vmem:[%s1 + $0xa4] sm:$0xf]
    %v46 = vld [vmem:[%s1 + $0xa8] sm:$0xff]
    %v47 = vld [vmem:[%s1 + $0xb0] sm:$0xff]
    %v48 = vld [vmem:[%s1 + $0xb8] sm:$0xff]
    %v49 = vld [vmem:[%s1 + $0xc0] sm:$0xf]
    %v50 = vld [vmem:[%s1 + $0xc4] sm:$0xff]
    %v51 = vld [vmem:[%s1 + $0xcc] sm:$0xff]
    %v52 = vld [vmem:[%s1 + $0xd4] sm:$0xff]
    %v53 = vld [vmem:[%s1 + $0xdc] sm:$0xf]
    %v54 = vld [vmem:[%s1 + $0xe0] sm:$0xff]
    %v55 = vld [vmem:[%s1 + $0xe8] sm:$0xff]
    %v56 = vld [vmem:[%s1 + $0xf0] sm:$0xff]
    %v57 = vld [vmem:[%s1 + $0xf8] sm:$0xf]
    %v58 = vld [vmem:[%s1 + $0xfc] sm:$0xff]
    %v59 = vld [vmem:[%s1 + $0x104] sm:$0xff]
    %v60 = vld [vmem:[%s1 + $0x10c] sm:$0xff]
    %v61 = vld [vmem:[%s1 + $0x114] sm:$0xf]
    %v62 = vld [vmem:[%s1 + $0x118] sm:$0xff]
    %v63 = vld [vmem:[%s1 + $0x120] sm:$0xff]
    %v64 = vld [vmem:[%s1 + $0x128] sm:$0xff]
    %v65 = vld [vmem:[%s1 + $0x130] sm:$0xf]
    %v66 = vld [vmem:[%s1 + $0x134] sm:$0xff]
    %v67 = vld [vmem:[%s1 + $0x13c] sm:$0xff]
    %v68 = vld [vmem:[%s1 + $0x144] sm:$0xff]
    %v69 = vld [vmem:[%s1 + $0x14c] sm:$0xf]
    %v70 = vld [vmem:[%s1 + $0x150] sm:$0xff]
    %v71 = vld [vmem:[%s1 + $0x158] sm:$0xff]
    %v72 = vld [vmem:[%s1 + $0x160] sm:$0xff]
    %v73 = vld [vmem:[%s1 + $0x168] sm:$0xf]
    %v74 = vld [vmem:[%s1 + $0x16c] sm:$0xff]
    %v75 = vld [vmem:[%s1 + $0x174] sm:$0xff]
    %v76 = vld [vmem:[%s1 + $0x17c] sm:$0xff]
    %v77 = vld [vmem:[%s1 + $0x184] sm:$0xf]
    %v78 = vld [vmem:[%s1 + $0x188] sm:$0xff]
    %v79 = vld [vmem:[%s1 + $0x190] sm:$0xff]
    %v80 = vld [vmem:[%s1 + $0x198] sm:$0xff]
    %v81 = vld [vmem:[%s1 + $0x1a0] sm:$0xf]
    %v82 = vld [vmem:[%s1 + $0x1a4] sm:$0xff]
    %v83 = vld [vmem:[%s1 + $0x1ac] sm:$0xff]
    %v84 = vld [vmem:[%s1 + $0x1b4] sm:$0xff]
    %v85 = vld [vmem:[%s1 + $0x1bc] sm:$0xf]
    %v86 = vld [vmem:[%s1 + $0x1c0] sm:$0xff]
    %v87 = vld [vmem:[%s1 + $0x1c8] sm:$0xff]
    %v88 = vld [vmem:[%s1 + $0x1d0] sm:$0xff]
    %v89 = vld [vmem:[%s1 + $0x1d8] sm:$0xf]
    %v90 = vld [vmem:[%s1 + $0x1dc] sm:$0xff]
    %v91 = vld [vmem:[%s1 + $0x1e4] sm:$0xff]
    %v92 = vld [vmem:[%s1 + $0x1ec] sm:$0xff]
    %v93 = vld [vmem:[%s1 + $0x1f4] sm:$0xf]
    %v94 = vld [vmem:[%s1 + $0x1f8] sm:$0xff]
    %v95 = vld [vmem:[%s1 + $0x200] sm:$0xff]
    %v96 = vld [vmem:[%s1 + $0x208] sm:$0xff]
    %v97 = vld [vmem:[%s1 + $0x210] sm:$0xf]
    %v98 = vld [vmem:[%s1 + $0x214] sm:$0xff]
    %v99 = vld [vmem:[%s1 + $0x21c] sm:$0xff]
    %v100 = vld [vmem:[%s1 + $0x224] sm:$0xff]
    %v101 = vld [vmem:[%s1 + $0x22c] sm:$0xf]
    %v102 = vld [vmem:[%s1 + $0x230] sm:$0xff]
    %v103 = vld [vmem:[%s1 + $0x238] sm:$0xff]
    %v104 = vld [vmem:[%s1 + $0x240] sm:$0xff]
    %v105 = vld [vmem:[%s1 + $0x248] sm:$0xf]
    %v106 = vld [vmem:[%s1 + $0x24c] sm:$0xff]
    %v107 = vld [vmem:[%s1 + $0x254] sm:$0xff]
    %v108 = vld [vmem:[%s1 + $0x25c] sm:$0xff]
    %v109 = vld [vmem:[%s1 + $0x264] sm:$0xf]
    %v110 = vld [vmem:[%s1 + $0x268] sm:$0xff]
    %v111 = vld [vmem:[%s1 + $0x270] sm:$0xff]
    %v112 = vld [vmem:[%s1 + $0x278] sm:$0xff]
    %v113 = vld [vmem:[%s1 + $0x280] sm:$0xf]
    %v114 = vld [vmem:[%s1 + $0x284] sm:$0xff]
    %v115 = vld [vmem:[%s1 + $0x28c] sm:$0xff]
    %v116 = vld [vmem:[%s1 + $0x294] sm:$0xff]
    %v117 = vld [vmem:[%s1 + $0x29c] sm:$0xf]
    %v118 = vld [vmem:[%s1 + $0x2a0] sm:$0xff]
    %v119 = vld [vmem:[%s1 + $0x2a8] sm:$0xff]
    %v120 = vld [vmem:[%s1 + $0x2b0] sm:$0xff]
    %v121 = vld [vmem:[%s1 + $0x2b8] sm:$0xf]
    %v122 = vld [vmem:[%s1 + $0x2bc] sm:$0xff]
    %v123 = vld [vmem:[%s1 + $0x2c4] sm:$0xff]
    %v124 = vld [vmem:[%s1 + $0x2cc] sm:$0xff]
    %v125 = vld [vmem:[%s1 + $0x2d4] sm:$0xf]
    %v126 = vld [vmem:[%s1 + $0x2d8] sm:$0xff]
    %v127 = vld [vmem:[%s1 + $0x2e0] sm:$0xff]
    %v128 = vld [vmem:[%s1 + $0x2e8] sm:$0xff]
    %v129 = vld [vmem:[%s1 + $0x2f0] sm:$0xf]
    %v130 = vld [vmem:[%s1 + $0x2f4] sm:$0xff]
    %v131 = vld [vmem:[%s1 + $0x2fc] sm:$0xff]
    %v132 = vld [vmem:[%s1 + $0x304] sm:$0xff]
    %v133 = vld [vmem:[%s1 + $0x30c] sm:$0xf]
    %v134 = vld [vmem:[%s1 + $0x310] sm:$0xff]
    %v135 = vld [vmem:[%s1 + $0x318] sm:$0xff]
    %v136 = vld [vmem:[%s1 + $0x320] sm:$0xff]
    %v137 = vld [vmem:[%s1 + $0x328] sm:$0xf]
    %v138 = vld [vmem:[%s1 + $0x32c] sm:$0xff]
    %v139 = vld [vmem:[%s1 + $0x334] sm:$0xff]
    %v140 = vld [vmem:[%s1 + $0x33c] sm:$0xff]
    %v141 = vld [vmem:[%s1 + $0x344] sm:$0xf]
    %v142 = vld [vmem:[%s1 + $0x348] sm:$0xff]
    %v143 = vld [vmem:[%s1 + $0x350] sm:$0xff]
    %v144 = vld [vmem:[%s1 + $0x358] sm:$0xff]
    %v145 = vld [vmem:[%s1 + $0x360] sm:$0xf]
    %v146 = vld [vmem:[%s1 + $0x364] sm:$0xff]
    %v147 = vld [vmem:[%s1 + $0x36c] sm:$0xff]
    %v148 = vld [vmem:[%s1 + $0x374] sm:$0xff]
    %v149 = vld [vmem:[%s1 + $0x37c] sm:$0xf]
    %v150 = vld [vmem:[%s1 + $0x380] sm:$0xff]
    %v151 = vld [vmem:[%s1 + $0x388] sm:$0xff]
    %v152 = vld [vmem:[%s1 + $0x390] sm:$0xff]
    %v153 = vld [vmem:[%s1 + $0x398] sm:$0xf]
    %v154 = vld [vmem:[%s1 + $0x39c] sm:$0xff]
    %v155 = vld [vmem:[%s1 + $0x3a4] sm:$0xff]
    %v156 = vld [vmem:[%s1 + $0x3ac] sm:$0xff]
    %v157 = vld [vmem:[%s1 + $0x3b4] sm:$0xf]
    %v158 = vld [vmem:[%s1 + $0x3b8] sm:$0xff]
    %v159 = vld [vmem:[%s1 + $0x3c0] sm:$0xff]
    %v160 = vld [vmem:[%s1 + $0x3c8] sm:$0xff]
    %v161 = vld [vmem:[%s1 + $0x3d0] sm:$0xf]
    %v162 = vld [vmem:[%s1 + $0x3d4] sm:$0xff]
    %v163 = vld [vmem:[%s1 + $0x3dc] sm:$0xff]
    %v164 = vld [vmem:[%s1 + $0x3e4] sm:$0xff]
    %v165 = vld [vmem:[%s1 + $0x3ec] sm:$0xf]
    %v166 = vld [vmem:[%s1 + $0x3f0] sm:$0xff]
    %v167 = vld [vmem:[%s1 + $0x3f8] sm:$0xff]
    %v168 = vld [vmem:[%s1 + $0x400] sm:$0xff]
    %v169 = vld [vmem:[%s1 + $0x408] sm:$0xf]
    %v170 = vld [vmem:[%s1 + $0x40c] sm:$0xff]
    %v171 = vld [vmem:[%s1 + $0x414] sm:$0xff]
    %v172 = vld [vmem:[%s1 + $0x41c] sm:$0xff]
    %v173 = vld [vmem:[%s1 + $0x424] sm:$0xf]
    %v174 = vld [vmem:[%s1 + $0x428] sm:$0xff]
    %v175 = vld [vmem:[%s1 + $0x430] sm:$0xff]
    %v176 = vld [vmem:[%s1 + $0x438] sm:$0xff]
    %v177 = vld [vmem:[%s1 + $0x440] sm:$0xf]
    %v178 = vld [vmem:[%s1 + $0x444] sm:$0xff]
    %v179 = vld [vmem:[%s1 + $0x44c] sm:$0xff]
    %v180 = vld [vmem:[%s1 + $0x454] sm:$0xff]
    %v181 = vld [vmem:[%s1 + $0x45c] sm:$0xf]
    %v182 = vld [vmem:[%s1 + $0x460] sm:$0xff]
    %v183 = vld [vmem:[%s1 + $0x468] sm:$0xff]
    %v184 = vld [vmem:[%s1 + $0x470] sm:$0xff]
    %v185 = vld [vmem:[%s1 + $0x478] sm:$0xf]
    %v186 = vld [vmem:[%s1 + $0x47c] sm:$0xff]
    %v187 = vld [vmem:[%s1 + $0x484] sm:$0xff]
    %v188 = vld [vmem:[%s1 + $0x48c] sm:$0xff]
    %v189 = vld [vmem:[%s1 + $0x494] sm:$0xf]
    %v190 = vld [vmem:[%s1 + $0x498] sm:$0xff]
    %v191 = vld [vmem:[%s1 + $0x4a0] sm:$0xff]
    %v192 = vld [vmem:[%s1 + $0x4a8] sm:$0xff]
    %v193 = vld [vmem:[%s1 + $0x4b0] sm:$0xf]
    %v194 = vld [vmem:[%s1 + $0x4b4] sm:$0xff]
    %v195 = vld [vmem:[%s1 + $0x4bc] sm:$0xff]
    %v196 = vld [vmem:[%s1 + $0x4c4] sm:$0xff]
    %v197 = vld [vmem:[%s1 + $0x4cc] sm:$0xf]
    %v198 = vld [vmem:[%s1 + $0x4d0] sm:$0xff]
    %v199 = vld [vmem:[%s1 + $0x4d8] sm:$0xff]
    %v200 = vld [vmem:[%s1 + $0x4e0] sm:$0xff]
    %v201 = vld [vmem:[%s1 + $0x4e8] sm:$0xf]
    %v202 = vld [vmem:[%s1 + $0x4ec] sm:$0xff]
    %v203 = vld [vmem:[%s1 + $0x4f4] sm:$0xff]
    %v204 = vld [vmem:[%s1 + $0x4fc] sm:$0xff]
    %v205 = vld [vmem:[%s1 + $0x504] sm:$0xf]
    %v206 = vld [vmem:[%s1 + $0x508] sm:$0xff]
    %v207 = vld [vmem:[%s1 + $0x510] sm:$0xff]
    %v208 = vld [vmem:[%s1 + $0x518] sm:$0xff]
    %v209 = vld [vmem:[%s1 + $0x520] sm:$0xf]
    %v210 = vld [vmem:[%s1 + $0x524] sm:$0xff]
    %v211 = vld [vmem:[%s1 + $0x52c] sm:$0xff]
    %v212 = vld [vmem:[%s1 + $0x534] sm:$0xff]
    %v213 = vld [vmem:[%s1 + $0x53c] sm:$0xf]
    %v214 = vld [vmem:[%s1 + $0x540] sm:$0xff]
    %v215 = vld [vmem:[%s1 + $0x548] sm:$0xff]
    %v216 = vld [vmem:[%s1 + $0x550] sm:$0xff]
    %v217 = vld [vmem:[%s1 + $0x558] sm:$0xf]
    %v218 = vld [vmem:[%s1 + $0x55c] sm:$0xff]
    %v219 = vld [vmem:[%s1 + $0x564] sm:$0xff]
    %v220 = vld [vmem:[%s1 + $0x56c] sm:$0xff]
    %v221 = vld [vmem:[%s1 + $0x574] sm:$0xf]
    %v222 = vld [vmem:[%s1 + $0x578] sm:$0xff]
    %v223 = vld [vmem:[%s1 + $0x580] sm:$0xff]
    %v224 = vld [vmem:[%s1 + $0x588] sm:$0xff]
    %v225 = vld [vmem:[%s1 + $0x590] sm:$0xf]
    %v226 = vld [vmem:[%s1 + $0x594] sm:$0xff]
    %v227 = vld [vmem:[%s1 + $0x59c] sm:$0xff]
    %v228 = vld [vmem:[%s1 + $0x5a4] sm:$0xff]
    %v229 = vld [vmem:[%s1 + $0x5ac] sm:$0xf]
    %v230 = vld [vmem:[%s1 + $0x5b0] sm:$0xff]
    %v231 = vld [vmem:[%s1 + $0x5b8] sm:$0xff]
    %v232 = vld [vmem:[%s1 + $0x5c0] sm:$0xff]
    %v233 = vld [vmem:[%s1 + $0x5c8] sm:$0xf]
    %v234 = vld [vmem:[%s1 + $0x5cc] sm:$0xff]
    %v235 = vld [vmem:[%s1 + $0x5d4] sm:$0xff]
    %v236 = vld [vmem:[%s1 + $0x5dc] sm:$0xff]
    %v237 = vld [vmem:[%s1 + $0x5e4] sm:$0xf]
    %v238 = vld [vmem:[%s1 + $0x5e8] sm:$0xff]
    %v239 = vld [vmem:[%s1 + $0x5f0] sm:$0xff]
    %v240 = vld [vmem:[%s1 + $0x5f8] sm:$0xff]
    %v241 = vld [vmem:[%s1 + $0x600] sm:$0xf]
    %v242 = vld [vmem:[%s1 + $0x604] sm:$0xff]
    %v243 = vld [vmem:[%s1 + $0x60c] sm:$0xff]
    %v244 = vld [vmem:[%s1 + $0x614] sm:$0xff]
    %v245 = vld [vmem:[%s1 + $0x61c] sm:$0xf]
    %v246 = vld [vmem:[%s1 + $0x620] sm:$0xff]
    %v247 = vld [vmem:[%s1 + $0x628] sm:$0xff]
    %v248 = vld [vmem:[%s1 + $0x630] sm:$0xff]
    %v249 = vld [vmem:[%s1 + $0x638] sm:$0xf]
    %v250 = vld [vmem:[%s1 + $0x63c] sm:$0xff]
    %v251 = vld [vmem:[%s1 + $0x644] sm:$0xff]
    %v252 = vld [vmem:[%s1 + $0x64c] sm:$0xff]
    %v253 = vld [vmem:[%s1 + $0x654] sm:$0xf]
    %v254 = vld [vmem:[%s1 + $0x658] sm:$0xff]
    %v255 = vld [vmem:[%s1 + $0x660] sm:$0xff]
    %v256 = vld [vmem:[%s1 + $0x668] sm:$0xff]
    %v257 = vld [vmem:[%s1 + $0x670] sm:$0xf]
    %v258 = vld [vmem:[%s1 + $0x674] sm:$0xff]
    %v259 = vld [vmem:[%s1 + $0x67c] sm:$0xff]
    %v260 = vld [vmem:[%s1 + $0x684] sm:$0xff]
    %v261 = vld [vmem:[%s1 + $0x68c] sm:$0xf]
    %v262 = vld [vmem:[%s1 + $0x690] sm:$0xff]
    %v263 = vld [vmem:[%s1 + $0x698] sm:$0xff]
    %v264 = vld [vmem:[%s1 + $0x6a0] sm:$0xff]
    %v265 = vld [vmem:[%s1 + $0x6a8] sm:$0xf]
    %v266 = vld [vmem:[%s1 + $0x6ac] sm:$0xff]
    %v267 = vld [vmem:[%s1 + $0x6b4] sm:$0xff]
    %v268 = vld [vmem:[%s1 + $0x6bc] sm:$0xff]
    %v269 = vld [vmem:[%s1 + $0x6c4] sm:$0xf]
    %v270 = vld [vmem:[%s1 + $0x6c8] sm:$0xff]
    %v271 = vld [vmem:[%s1 + $0x6d0] sm:$0xff]
    %v272 = vld [vmem:[%s1 + $0x6d8] sm:$0xff]
    %v273 = vld [vmem:[%s1 + $0x6e0] sm:$0xf]
    %v274 = vld [vmem:[%s1 + $0x6e4] sm:$0xff]
    %v275 = vld [vmem:[%s1 + $0x6ec] sm:$0xff]
    %v276 = vld [vmem:[%s1 + $0x6f4] sm:$0xff]
    %v277 = vld [vmem:[%s1 + $0x6fc] sm:$0xf]
    %v278 = vld [vmem:[%s1 + $0x700] sm:$0xff]
    %v279 = vld [vmem:[%s1 + $0x708] sm:$0xff]
    %v280 = vld [vmem:[%s1 + $0x710] sm:$0xff]
    %v281 = vld [vmem:[%s1 + $0x718] sm:$0xf]
    %v282 = vld [vmem:[%s1 + $0x71c] sm:$0xff]
    %v283 = vld [vmem:[%s1 + $0x724] sm:$0xff]
    %v284 = vld [vmem:[%s1 + $0x72c] sm:$0xff]
    %v285 = vld [vmem:[%s1 + $0x734] sm:$0xf]
    %v286 = vld [vmem:[%s1 + $0x738] sm:$0xff]
    %v287 = vld [vmem:[%s1 + $0x740] sm:$0xff]
    %v288 = vld [vmem:[%s1 + $0x748] sm:$0xff]
    %v289 = vld [vmem:[%s1 + $0x750] sm:$0xf]
    %v290 = vld [vmem:[%s1 + $0x754] sm:$0xff]
    %v291 = vld [vmem:[%s1 + $0x75c] sm:$0xff]
    %v292 = vld [vmem:[%s1 + $0x764] sm:$0xff]
    %v293 = vld [vmem:[%s1 + $0x76c] sm:$0xf]
    %v294 = vld [vmem:[%s1 + $0x770] sm:$0xff]
    %v295 = vld [vmem:[%s1 + $0x778] sm:$0xff]
    %v296 = vld [vmem:[%s1 + $0x780] sm:$0xff]
    %v297 = vld [vmem:[%s1 + $0x788] sm:$0xf]
    %v298 = vld [vmem:[%s1 + $0x78c] sm:$0xff]
    %v299 = vld [vmem:[%s1 + $0x794] sm:$0xff]
    %v300 = vld [vmem:[%s1 + $0x79c] sm:$0xff]
    %v301 = vld [vmem:[%s1 + $0x7a4] sm:$0xf]
    %v302 = vld [vmem:[%s1 + $0x7a8] sm:$0xff]
    %v303 = vld [vmem:[%s1 + $0x7b0] sm:$0xff]
    %v304 = vld [vmem:[%s1 + $0x7b8] sm:$0xff]
    %v305 = vld [vmem:[%s1 + $0x7c0] sm:$0xf]
    %v306 = vld [vmem:[%s1 + $0x7c4] sm:$0xff]
    %v307 = vld [vmem:[%s1 + $0x7cc] sm:$0xff]
    %v308 = vld [vmem:[%s1 + $0x7d4] sm:$0xff]
    %v309 = vld [vmem:[%s1 + $0x7dc] sm:$0xf]
    %v310 = vld [vmem:[%s1 + $0x7e0] sm:$0xff]
    %v311 = vld [vmem:[%s1 + $0x7e8] sm:$0xff]
    %v312 = vld [vmem:[%s1 + $0x7f0] sm:$0xff]
    %v313 = vld [vmem:[%s1 + $0x7f8] sm:$0xf]
    %v314 = vld [vmem:[%s1 + $0x7fc] sm:$0xff]
    %v315 = vld [vmem:[%s1 + $0x804] sm:$0xff]
    %v316 = vld [vmem:[%s1 + $0x80c] sm:$0xff]
    %v317 = vld [vmem:[%s1 + $0x814] sm:$0xf]
    %v318 = vld [vmem:[%s1 + $0x818] sm:$0xff]
    %v319 = vld [vmem:[%s1 + $0x820] sm:$0xff]
    %v320 = vld [vmem:[%s1 + $0x828] sm:$0xff]
    %v321 = vld [vmem:[%s1 + $0x830] sm:$0xf]
    %v322 = vld [vmem:[%s1 + $0x834] sm:$0xff]
    %v323 = vld [vmem:[%s1 + $0x83c] sm:$0xff]
    %v324 = vld [vmem:[%s1 + $0x844] sm:$0xff]
    %v325 = vld [vmem:[%s1 + $0x84c] sm:$0xf]
    %v326 = vld [vmem:[%s1 + $0x850] sm:$0xff]
    %v327 = vld [vmem:[%s1 + $0x858] sm:$0xff]
    %v328 = vld [vmem:[%s1 + $0x860] sm:$0xff]
    %v329 = vld [vmem:[%s1 + $0x868] sm:$0xf]
    %v330 = vld [vmem:[%s1 + $0x86c] sm:$0xff]
    %v331 = vld [vmem:[%s1 + $0x874] sm:$0xff]
    %v332 = vld [vmem:[%s1 + $0x87c] sm:$0xff]
    %v333 = vld [vmem:[%s1 + $0x884] sm:$0xf]
    %v334 = vld [vmem:[%s1 + $0x888] sm:$0xff]
    %v335 = vld [vmem:[%s1 + $0x890] sm:$0xff]
    %v336 = vld [vmem:[%s1 + $0x898] sm:$0xff]
    %v337 = vld [vmem:[%s1 + $0x8a0] sm:$0xf]
    %v338 = vld [vmem:[%s1 + $0x8a4] sm:$0xff]
    %v339 = vld [vmem:[%s1 + $0x8ac] sm:$0xff]
    %v340 = vld [vmem:[%s1 + $0x8b4] sm:$0xff]
    %v341 = vld [vmem:[%s1 + $0x8bc] sm:$0xf]
    %v342 = vld [vmem:[%s1 + $0x8c0] sm:$0xff]
    %v343 = vld [vmem:[%s1 + $0x8c8] sm:$0xff]
    %v344 = vld [vmem:[%s1 + $0x8d0] sm:$0xff]
    %v345 = vld [vmem:[%s1 + $0x8d8] sm:$0xf]
    %v346 = vld [vmem:[%s1 + $0x8dc] sm:$0xff]
    %v347 = vld [vmem:[%s1 + $0x8e4] sm:$0xff]
    %v348 = vld [vmem:[%s1 + $0x8ec] sm:$0xff]
    %v349 = vld [vmem:[%s1 + $0x8f4] sm:$0xf]
    %v350 = vld [vmem:[%s1 + $0x8f8] sm:$0xff]
    %v351 = vld [vmem:[%s1 + $0x900] sm:$0xff]
    %v352 = vld [vmem:[%s1 + $0x908] sm:$0xff]
    %v353 = vld [vmem:[%s1 + $0x910] sm:$0xf]
    %v354 = vld [vmem:[%s1 + $0x914] sm:$0xff]
    %v355 = vld [vmem:[%s1 + $0x91c] sm:$0xff]
    %v356 = vld [vmem:[%s1 + $0x924] sm:$0xff]
    %v357 = vld [vmem:[%s1 + $0x92c] sm:$0xf]
    %v358 = vld [vmem:[%s1 + $0x930] sm:$0xff]
    %v359 = vld [vmem:[%s1 + $0x938] sm:$0xff]
    %v360 = vld [vmem:[%s1 + $0x940] sm:$0xff]
    %v361 = vld [vmem:[%s1 + $0x948] sm:$0xf]
    %v362 = vld [vmem:[%s1 + $0x94c] sm:$0xff]
    %v363 = vld [vmem:[%s1 + $0x954] sm:$0xff]
    %v364 = vld [vmem:[%s1 + $0x95c] sm:$0xff]
    %v365 = vld [vmem:[%s1 + $0x964] sm:$0xf]
    %v366 = vld [vmem:[%s1 + $0x968] sm:$0xff]
    %v367 = vld [vmem:[%s1 + $0x970] sm:$0xff]
    %v368 = vld [vmem:[%s1 + $0x978] sm:$0xff]
    %v369 = vld [vmem:[%s1 + $0x980] sm:$0xf]
    %v370 = vld [vmem:[%s1 + $0x984] sm:$0xff]
    %v371 = vld [vmem:[%s1 + $0x98c] sm:$0xff]
    %v372 = vld [vmem:[%s1 + $0x994] sm:$0xff]
    %v373 = vld [vmem:[%s1 + $0x99c] sm:$0xf]
    %v374 = vld [vmem:[%s1 + $0x9a0] sm:$0xff]
    %v375 = vld [vmem:[%s1 + $0x9a8] sm:$0xff]
    %v376 = vld [vmem:[%s1 + $0x9b0] sm:$0xff]
    %v377 = vld [vmem:[%s1 + $0x9b8] sm:$0xf]
    %v378 = vld [vmem:[%s1 + $0x9bc] sm:$0xff]
    %v379 = vld [vmem:[%s1 + $0x9c4] sm:$0xff]
    %v380 = vld [vmem:[%s1 + $0x9cc] sm:$0xff]
    %v381 = vld [vmem:[%s1 + $0x9d4] sm:$0xf]
    %v382 = vld [vmem:[%s1 + $0x9d8] sm:$0xff]
    %v383 = vld [vmem:[%s1 + $0x9e0] sm:$0xff]
    %v384 = vld [vmem:[%s1 + $0x9e8] sm:$0xff]
    %v385 = vld [vmem:[%s1 + $0x9f0] sm:$0xf]
    %v386 = vld [vmem:[%s1 + $0x9f4] sm:$0xff]
    %v387 = vld [vmem:[%s1 + $0x9fc] sm:$0xff]
    %v388 = vld [vmem:[%s1 + $0xa04] sm:$0xff]
    %v389 = vld [vmem:[%s1 + $0xa0c] sm:$0xf]
    %v390 = vld [vmem:[%s1 + $0xa10] sm:$0xff]
    %v391 = vld [vmem:[%s1 + $0xa18] sm:$0xff]
    %v392 = vld [vmem:[%s1 + $0xa20] sm:$0xff]
    %v393 = vld [vmem:[%s1 + $0xa28] sm:$0xf]
    %v394 = vld [vmem:[%s1 + $0xa2c] sm:$0xff]
    %v395 = vld [vmem:[%s1 + $0xa34] sm:$0xff]
    %v396 = vld [vmem:[%s1 + $0xa3c] sm:$0xff]
    %v397 = vld [vmem:[%s1 + $0xa44] sm:$0xf]
    %v398 = vld [vmem:[%s1 + $0xa48] sm:$0xff]
    %v399 = vld [vmem:[%s1 + $0xa50] sm:$0xff]
    %v400 = vld [vmem:[%s1 + $0xa58] sm:$0xff]
    %v401 = vld [vmem:[%s1 + $0xa60] sm:$0xf]
    %v402 = vld [vmem:[%s1 + $0xa64] sm:$0xff]
    %v403 = vld [vmem:[%s1 + $0xa6c] sm:$0xff]
    %v404 = vld [vmem:[%s1 + $0xa74] sm:$0xff]
    %v405 = vld [vmem:[%s1 + $0xa7c] sm:$0xf]
    %v406 = vld [vmem:[%s1 + $0xa80] sm:$0xff]
    %v407 = vld [vmem:[%s1 + $0xa88] sm:$0xff]
    %v408 = vld [vmem:[%s1 + $0xa90] sm:$0xff]
    %v409 = vld [vmem:[%s1 + $0xa98] sm:$0xf]
    %v410 = vld [vmem:[%s1 + $0xa9c] sm:$0xff]
    %v411 = vld [vmem:[%s1 + $0xaa4] sm:$0xff]
    %v412 = vld [vmem:[%s1 + $0xaac] sm:$0xff]
    %v413 = vld [vmem:[%s1 + $0xab4] sm:$0xf]
    %v414 = vld [vmem:[%s1 + $0xab8] sm:$0xff]
    %v415 = vld [vmem:[%s1 + $0xac0] sm:$0xff]
    %v416 = vld [vmem:[%s1 + $0xac8] sm:$0xff]
    %v417 = vld [vmem:[%s1 + $0xad0] sm:$0xf]
    %v418 = vld [vmem:[%s1 + $0xad4] sm:$0xff]
    %v419 = vld [vmem:[%s1 + $0xadc] sm:$0xff]
    %v420 = vld [vmem:[%s1 + $0xae4] sm:$0xff]
    %v421 = vld [vmem:[%s1 + $0xaec] sm:$0xf]
    %v422 = vld [vmem:[%s1 + $0xaf0] sm:$0xff]
    %v423 = vld [vmem:[%s1 + $0xaf8] sm:$0xff]
    %v424 = vld [vmem:[%s1 + $0xb00] sm:$0xff]
    %v425 = vld [vmem:[%s1 + $0xb08] sm:$0xf]
    %v426 = vld [vmem:[%s1 + $0xb0c] sm:$0xff]
    %v427 = vld [vmem:[%s1 + $0xb14] sm:$0xff]
    %v428 = vld [vmem:[%s1 + $0xb1c] sm:$0xff]
    %v429 = vld [vmem:[%s1 + $0xb24] sm:$0xf]
    %v430 = vld [vmem:[%s1 + $0xb28] sm:$0xff]
    %v431 = vld [vmem:[%s1 + $0xb30] sm:$0xff]
    %v432 = vld [vmem:[%s1 + $0xb38] sm:$0xff]
    %v433 = vld [vmem:[%s1 + $0xb40] sm:$0xf]
    %v434 = vld [vmem:[%s1 + $0xb44] sm:$0xff]
    %v435 = vld [vmem:[%s1 + $0xb4c] sm:$0xff]
    %v436 = vld [vmem:[%s1 + $0xb54] sm:$0xff]
    %v437 = vld [vmem:[%s1 + $0xb5c] sm:$0xf]
    %v438 = vld [vmem:[%s1 + $0xb60] sm:$0xff]
    %v439 = vld [vmem:[%s1 + $0xb68] sm:$0xff]
    %v440 = vld [vmem:[%s1 + $0xb70] sm:$0xff]
    %v441 = vld [vmem:[%s1 + $0xb78] sm:$0xf]
    %v442 = vld [vmem:[%s1 + $0xb7c] sm:$0xff]
    %v443 = vld [vmem:[%s1 + $0xb84] sm:$0xff]
    %v444 = vld [vmem:[%s1 + $0xb8c] sm:$0xff]
    %v445 = vld [vmem:[%s1 + $0xb94] sm:$0xf]
    %v446 = vld [vmem:[%s1 + $0xb98] sm:$0xff]
    %v447 = vld [vmem:[%s1 + $0xba0] sm:$0xff]
    %v448 = vld [vmem:[%s1 + $0xba8] sm:$0xff]
    %v449 = vld [vmem:[%s1 + $0xbb0] sm:$0xf]
    %v450 = vld [vmem:[%s1 + $0xbb4] sm:$0xff]
    %v451 = vld [vmem:[%s1 + $0xbbc] sm:$0xff]
    %v452 = vld [vmem:[%s1 + $0xbc4] sm:$0xff]
    %v453 = vld [vmem:[%s1 + $0xbcc] sm:$0xf]
    %v454 = vld [vmem:[%s1 + $0xbd0] sm:$0xff]
    %v455 = vld [vmem:[%s1 + $0xbd8] sm:$0xff]
    %v456 = vld [vmem:[%s1 + $0xbe0] sm:$0xff]
    %v457 = vld [vmem:[%s1 + $0xbe8] sm:$0xf]
    %v458 = vld [vmem:[%s1 + $0xbec] sm:$0xff]
    %v459 = vld [vmem:[%s1 + $0xbf4] sm:$0xff]
    %v460 = vld [vmem:[%s1 + $0xbfc] sm:$0xff]
    %v461 = vld [vmem:[%s1 + $0xc04] sm:$0xf]
    %v462 = vld [vmem:[%s1 + $0xc08] sm:$0xff]
    %v463 = vld [vmem:[%s1 + $0xc10] sm:$0xff]
    %v464 = vld [vmem:[%s1 + $0xc18] sm:$0xff]
    %v465 = vld [vmem:[%s1 + $0xc20] sm:$0xf]
    %v466 = vld [vmem:[%s1 + $0xc24] sm:$0xff]
    %v467 = vld [vmem:[%s1 + $0xc2c] sm:$0xff]
    %v468 = vld [vmem:[%s1 + $0xc34] sm:$0xff]
    %v469 = vld [vmem:[%s1 + $0xc3c] sm:$0xf]
    %v470 = vld [vmem:[%s1 + $0xc40] sm:$0xff]
    %v471 = vld [vmem:[%s1 + $0xc48] sm:$0xff]
    %v472 = vld [vmem:[%s1 + $0xc50] sm:$0xff]
    %v473 = vld [vmem:[%s1 + $0xc58] sm:$0xf]
    %v474 = vld [vmem:[%s1 + $0xc5c] sm:$0xff]
    %v475 = vld [vmem:[%s1 + $0xc64] sm:$0xff]
    %v476 = vld [vmem:[%s1 + $0xc6c] sm:$0xff]
    %v477 = vld [vmem:[%s1 + $0xc74] sm:$0xf]
    %v478 = vld [vmem:[%s1 + $0xc78] sm:$0xff]
    %v479 = vld [vmem:[%s1 + $0xc80] sm:$0xff]
    %v480 = vld [vmem:[%s1 + $0xc88] sm:$0xff]
    %v481 = vld [vmem:[%s1 + $0xc90] sm:$0xf]
    %v482 = vld [vmem:[%s1 + $0xc94] sm:$0xff]
    %v483 = vld [vmem:[%s1 + $0xc9c] sm:$0xff]
    %v484 = vld [vmem:[%s1 + $0xca4] sm:$0xff]
    %v485 = vld [vmem:[%s1 + $0xcac] sm:$0xf]
    %v486 = vld [vmem:[%s1 + $0xcb0] sm:$0xff]
    %v487 = vld [vmem:[%s1 + $0xcb8] sm:$0xff]
    %v488 = vld [vmem:[%s1 + $0xcc0] sm:$0xff]
    %v489 = vld [vmem:[%s1 + $0xcc8] sm:$0xf]
    %v490 = vld [vmem:[%s1 + $0xccc] sm:$0xff]
    %v491 = vld [vmem:[%s1 + $0xcd4] sm:$0xff]
    %v492 = vld [vmem:[%s1 + $0xcdc] sm:$0xff]
    %v493 = vld [vmem:[%s1 + $0xce4] sm:$0xf]
    %v494 = vld [vmem:[%s1 + $0xce8] sm:$0xff]
    %v495 = vld [vmem:[%s1 + $0xcf0] sm:$0xff]
    %v496 = vld [vmem:[%s1 + $0xcf8] sm:$0xff]
    %v497 = vld [vmem:[%s1 + $0xd00] sm:$0xf]
    %v498 = vld [vmem:[%s1 + $0xd04] sm:$0xff]
    %v499 = vld [vmem:[%s1 + $0xd0c] sm:$0xff]
    %v500 = vld [vmem:[%s1 + $0xd14] sm:$0xff]
    %v501 = vld [vmem:[%s1 + $0xd1c] sm:$0xf]
    %v502 = vld [vmem:[%s1 + $0xd20] sm:$0xff]
    %v503 = vld [vmem:[%s1 + $0xd28] sm:$0xff]
    %v504 = vld [vmem:[%s1 + $0xd30] sm:$0xff]
    %v505 = vld [vmem:[%s1 + $0xd38] sm:$0xf]
    %v506 = vld [vmem:[%s1 + $0xd3c] sm:$0xff]
    %v507 = vld [vmem:[%s1 + $0xd44] sm:$0xff]
    %v508 = vld [vmem:[%s1 + $0xd4c] sm:$0xff]
    %v509 = vld [vmem:[%s1 + $0xd54] sm:$0xf]
    %v510 = vld [vmem:[%s1 + $0xd58] sm:$0xff]
    %v511 = vld [vmem:[%s1 + $0xd60] sm:$0xff]
    %v512 = vld [vmem:[%s1 + $0xd68] sm:$0xff]
    %v513 = vld [vmem:[%s1 + $0xd70] sm:$0xf]
    %v514 = vld [vmem:[%s1 + $0xd74] sm:$0xff]
    %v515 = vld [vmem:[%s1 + $0xd7c] sm:$0xff]
    %v516 = vld [vmem:[%s1 + $0xd84] sm:$0xff]
    %v517 = vld [vmem:[%s1 + $0xd8c] sm:$0xf]
    %v518 = vld [vmem:[%s1 + $0xd90] sm:$0xff]
    %v519 = vld [vmem:[%s1 + $0xd98] sm:$0xff]
    %v520 = vld [vmem:[%s1 + $0xda0] sm:$0xff]
    %v521 = vld [vmem:[%s1 + $0xda8] sm:$0xf]
    %v522 = vld [vmem:[%s1 + $0xdac] sm:$0xff]
    %v523 = vld [vmem:[%s1 + $0xdb4] sm:$0xff]
    %v524 = vld [vmem:[%s1 + $0xdbc] sm:$0xff]
    %v525 = vld [vmem:[%s1 + $0xdc4] sm:$0xf]
    %v526 = vld [vmem:[%s1 + $0xdc8] sm:$0xff]
    %v527 = vld [vmem:[%s1 + $0xdd0] sm:$0xff]
    %v528 = vld [vmem:[%s1 + $0xdd8] sm:$0xff]
    %v529 = vld [vmem:[%s1 + $0xde0] sm:$0xf]
    %v530 = vld [vmem:[%s1 + $0xde4] sm:$0xff]
    %v531 = vld [vmem:[%s1 + $0xdec] sm:$0xff]
    %v532 = vld [vmem:[%s1 + $0xdf4] sm:$0xff]
    %v533 = vld [vmem:[%s1 + $0xdfc] sm:$0xf]
    %v534 = vld [vmem:[%s1 + $0xe00] sm:$0xff]
    %v535 = vld [vmem:[%s1 + $0xe08] sm:$0xff]
    %v536 = vld [vmem:[%s1 + $0xe10] sm:$0xff]
    %v537 = vld [vmem:[%s1 + $0xe18] sm:$0xf]
    %v538 = vld [vmem:[%s1 + $0xe1c] sm:$0xff]
    %v539 = vld [vmem:[%s1 + $0xe24] sm:$0xff]
    %v540 = vld [vmem:[%s1 + $0xe2c] sm:$0xff]
    %v541 = vld [vmem:[%s1 + $0xe34] sm:$0xf]
    %v542 = vld [vmem:[%s1 + $0xe38] sm:$0xff]
    %v543 = vld [vmem:[%s1 + $0xe40] sm:$0xff]
    %v544 = vld [vmem:[%s1 + $0xe48] sm:$0xff]
    %v545 = vld [vmem:[%s1 + $0xe50] sm:$0xf]
    %v546 = vld [vmem:[%s1 + $0xe54] sm:$0xff]
    %v547 = vld [vmem:[%s1 + $0xe5c] sm:$0xff]
    %v548 = vld [vmem:[%s1 + $0xe64] sm:$0xff]
    %v549 = vld [vmem:[%s1 + $0xe6c] sm:$0xf]
    %v550 = vld [vmem:[%s1 + $0xe70] sm:$0xff]
    %v551 = vld [vmem:[%s1 + $0xe78] sm:$0xff]
    %v552 = vld [vmem:[%s1 + $0xe80] sm:$0xff]
    %v553 = vld [vmem:[%s1 + $0xe88] sm:$0xf]
    %v554 = vld [vmem:[%s1 + $0xe8c] sm:$0xff]
    %v555 = vld [vmem:[%s1 + $0xe94] sm:$0xff]
    %v556 = vld [vmem:[%s1 + $0xe9c] sm:$0xff]
    %v557 = vld [vmem:[%s1 + $0xea4] sm:$0xf]
    %v558 = vld [vmem:[%s1 + $0xea8] sm:$0xff]
    %v559 = vld [vmem:[%s1 + $0xeb0] sm:$0xff]
    %v560 = vld [vmem:[%s1 + $0xeb8] sm:$0xff]
    %v561 = vld [vmem:[%s1 + $0xec0] sm:$0xf]
    %v562 = vld [vmem:[%s1 + $0xec4] sm:$0xff]
    %v563 = vld [vmem:[%s1 + $0xecc] sm:$0xff]
    %v564 = vld [vmem:[%s1 + $0xed4] sm:$0xff]
    %v565 = vld [vmem:[%s1 + $0xedc] sm:$0xf]
    %v566 = vld [vmem:[%s1 + $0xee0] sm:$0xff]
    %v567 = vld [vmem:[%s1 + $0xee8] sm:$0xff]
    %v568 = vld [vmem:[%s1 + $0xef0] sm:$0xff]
    %v569 = vld [vmem:[%s1 + $0xef8] sm:$0xf]
    %v570 = vld [vmem:[%s1 + $0xefc] sm:$0xff]
    %v571 = vld [vmem:[%s1 + $0xf04] sm:$0xff]
    %v572 = vld [vmem:[%s1 + $0xf0c] sm:$0xff]
    %v573 = vld [vmem:[%s1 + $0xf14] sm:$0xf]
    %v574 = vld [vmem:[%s1 + $0xf18] sm:$0xff]
    %v575 = vld [vmem:[%s1 + $0xf20] sm:$0xff]
    %v576 = vld [vmem:[%s1 + $0xf28] sm:$0xff]
    %v577 = vld [vmem:[%s1 + $0xf30] sm:$0xf]
    %v578 = vld [vmem:[%s1 + $0xf34] sm:$0xff]
    %v579 = vld [vmem:[%s1 + $0xf3c] sm:$0xff]
    %v580 = vld [vmem:[%s1 + $0xf44] sm:$0xff]
    %v581 = vld [vmem:[%s1 + $0xf4c] sm:$0xf]
    %v582 = vld [vmem:[%s1 + $0xf50] sm:$0xff]
    %v583 = vld [vmem:[%s1 + $0xf58] sm:$0xff]
    %v584 = vld [vmem:[%s1 + $0xf60] sm:$0xff]
    %v585 = vld [vmem:[%s1 + $0xf68] sm:$0xf]
    %v586 = vld [vmem:[%s1 + $0xf6c] sm:$0xff]
    %v587 = vld [vmem:[%s1 + $0xf74] sm:$0xff]
    %v588 = vld [vmem:[%s1 + $0xf7c] sm:$0xff]
    %v589 = vld [vmem:[%s1 + $0xf84] sm:$0xf]
    %v590 = vld [vmem:[%s1 + $0xf88] sm:$0xff]
    %v591 = vld [vmem:[%s1 + $0xf90] sm:$0xff]
    %v592 = vld [vmem:[%s1 + $0xf98] sm:$0xff]
    %v593 = vld [vmem:[%s1 + $0xfa0] sm:$0xf]
    %v594 = vld [vmem:[%s1 + $0xfa4] sm:$0xff]
    %v595 = vld [vmem:[%s1 + $0xfac] sm:$0xff]
    %v596 = vld [vmem:[%s1 + $0xfb4] sm:$0xff]
    %v597 = vld [vmem:[%s1 + $0xfbc] sm:$0xf]
    %v598 = vld [vmem:[%s1 + $0xfc0] sm:$0xff]
    %v599 = vld [vmem:[%s1 + $0xfc8] sm:$0xff]
    %v600 = vld [vmem:[%s1 + $0xfd0] sm:$0xff]
    %v601 = vld [vmem:[%s1 + $0xfd8] sm:$0xf]
    %v602 = vld [vmem:[%s1 + $0xfdc] sm:$0xff]
    %v603 = vld [vmem:[%s1 + $0xfe4] sm:$0xff]
    %v604 = vld [vmem:[%s1 + $0xfec] sm:$0xff]
    %v605 = vld [vmem:[%s1 + $0xff4] sm:$0xf]
    %v606 = vld [vmem:[%s1 + $0xff8] sm:$0xff]
    %v607 = vld [vmem:[%s1 + $0x1000] sm:$0xff]
    %v608 = vld [vmem:[%s1 + $0x1008] sm:$0xff]
    %v609 = vld [vmem:[%s1 + $0x1010] sm:$0xf]
    %v610 = vld [vmem:[%s1 + $0x1014] sm:$0xff]
    %v611 = vld [vmem:[%s1 + $0x101c] sm:$0xff]
    %v612 = vld [vmem:[%s1 + $0x1024] sm:$0xff]
    %v613 = vld [vmem:[%s1 + $0x102c] sm:$0xf]
    %v614 = vld [vmem:[%s1 + $0x1030] sm:$0xff]
    %v615 = vld [vmem:[%s1 + $0x1038] sm:$0xff]
    %v616 = vld [vmem:[%s1 + $0x1040] sm:$0xff]
    %v617 = vld [vmem:[%s1 + $0x1048] sm:$0xf]
    %v618 = vld [vmem:[%s1 + $0x104c] sm:$0xff]
    %v619 = vld [vmem:[%s1 + $0x1054] sm:$0xff]
    %v620 = vld [vmem:[%s1 + $0x105c] sm:$0xff]
    %v621 = vld [vmem:[%s1 + $0x1064] sm:$0xf]
    %v622 = vld [vmem:[%s1 + $0x1068] sm:$0xff]
    %v623 = vld [vmem:[%s1 + $0x1070] sm:$0xff]
    %v624 = vld [vmem:[%s1 + $0x1078] sm:$0xff]
    %v625 = vld [vmem:[%s1 + $0x1080] sm:$0xf]
    %v626 = vld [vmem:[%s1 + $0x1084] sm:$0xff]
    %v627 = vld [vmem:[%s1 + $0x108c] sm:$0xff]
    %v628 = vld [vmem:[%s1 + $0x1094] sm:$0xff]
    %v629 = vld [vmem:[%s1 + $0x109c] sm:$0xf]
    %v630 = vld [vmem:[%s1 + $0x10a0] sm:$0xff]
    %v631 = vld [vmem:[%s1 + $0x10a8] sm:$0xff]
    %v632 = vld [vmem:[%s1 + $0x10b0] sm:$0xff]
    %v633 = vld [vmem:[%s1 + $0x10b8] sm:$0xf]
    %v634 = vld [vmem:[%s1 + $0x10bc] sm:$0xff]
    %v635 = vld [vmem:[%s1 + $0x10c4] sm:$0xff]
    %v636 = vld [vmem:[%s1 + $0x10cc] sm:$0xff]
    %v637 = vld [vmem:[%s1 + $0x10d4] sm:$0xf]
    %v638 = vld [vmem:[%s1 + $0x10d8] sm:$0xff]
    %v639 = vld [vmem:[%s1 + $0x10e0] sm:$0xff]
    %v640 = vld [vmem:[%s1 + $0x10e8] sm:$0xff]
    %v641 = vld [vmem:[%s1 + $0x10f0] sm:$0xf]
    %v642 = vld [vmem:[%s1 + $0x10f4] sm:$0xff]
    %v643 = vld [vmem:[%s1 + $0x10fc] sm:$0xff]
    %v644 = vld [vmem:[%s1 + $0x1104] sm:$0xff]
    %v645 = vld [vmem:[%s1 + $0x110c] sm:$0xf]
    %v646 = vld [vmem:[%s1 + $0x1110] sm:$0xff]
    %v647 = vld [vmem:[%s1 + $0x1118] sm:$0xff]
    %v648 = vld [vmem:[%s1 + $0x1120] sm:$0xff]
    %v649 = vld [vmem:[%s1 + $0x1128] sm:$0xf]
    %v650 = vld [vmem:[%s1 + $0x112c] sm:$0xff]
    %v651 = vld [vmem:[%s1 + $0x1134] sm:$0xff]
    %v652 = vld [vmem:[%s1 + $0x113c] sm:$0xff]
    %v653 = vld [vmem:[%s1 + $0x1144] sm:$0xf]
    %v654 = vld [vmem:[%s1 + $0x1148] sm:$0xff]
    %v655 = vld [vmem:[%s1 + $0x1150] sm:$0xff]
    %v656 = vld [vmem:[%s1 + $0x1158] sm:$0xff]
    %v657 = vld [vmem:[%s1 + $0x1160] sm:$0xf]
    %v658 = vld [vmem:[%s1 + $0x1164] sm:$0xff]
    %v659 = vld [vmem:[%s1 + $0x116c] sm:$0xff]
    %v660 = vld [vmem:[%s1 + $0x1174] sm:$0xff]
    %v661 = vld [vmem:[%s1 + $0x117c] sm:$0xf]
    %v662 = vld [vmem:[%s1 + $0x1180] sm:$0xff]
    %v663 = vld [vmem:[%s1 + $0x1188] sm:$0xff]
    %v664 = vld [vmem:[%s1 + $0x1190] sm:$0xff]
    %v665 = vld [vmem:[%s1 + $0x1198] sm:$0xf]
    %v666 = vld [vmem:[%s1 + $0x119c] sm:$0xff]
    %v667 = vld [vmem:[%s1 + $0x11a4] sm:$0xff]
    %v668 = vld [vmem:[%s1 + $0x11ac] sm:$0xff]
    %v669 = vld [vmem:[%s1 + $0x11b4] sm:$0xf]
    %v670 = vld [vmem:[%s1 + $0x11b8] sm:$0xff]
    %v671 = vld [vmem:[%s1 + $0x11c0] sm:$0xff]
    %v672 = vld [vmem:[%s1 + $0x11c8] sm:$0xff]
    %v673 = vld [vmem:[%s1 + $0x11d0] sm:$0xf]
    %v674 = vld [vmem:[%s1 + $0x11d4] sm:$0xff]
    %v675 = vld [vmem:[%s1 + $0x11dc] sm:$0xff]
    %v676 = vld [vmem:[%s1 + $0x11e4] sm:$0xff]
    %v677 = vld [vmem:[%s1 + $0x11ec] sm:$0xf]
    %v678 = vld [vmem:[%s1 + $0x11f0] sm:$0xff]
    %v679 = vld [vmem:[%s1 + $0x11f8] sm:$0xff]
    %v680 = vld [vmem:[%s1 + $0x1200] sm:$0xff]
    %v681 = vld [vmem:[%s1 + $0x1208] sm:$0xf]
    %v682 = vld [vmem:[%s1 + $0x120c] sm:$0xff]
    %v683 = vld [vmem:[%s1 + $0x1214] sm:$0xff]
    %v684 = vld [vmem:[%s1 + $0x121c] sm:$0xff]
    %v685 = vld [vmem:[%s1 + $0x1224] sm:$0xf]
    %v686 = vld [vmem:[%s1 + $0x1228] sm:$0xff]
    %v687 = vld [vmem:[%s1 + $0x1230] sm:$0xff]
    %v688 = vld [vmem:[%s1 + $0x1238] sm:$0xff]
    %v689 = vld [vmem:[%s1 + $0x1240] sm:$0xf]
    %v690 = vld [vmem:[%s1 + $0x1244] sm:$0xff]
    %v691 = vld [vmem:[%s1 + $0x124c] sm:$0xff]
    %v692 = vld [vmem:[%s1 + $0x1254] sm:$0xff]
    %v693 = vld [vmem:[%s1 + $0x125c] sm:$0xf]
    %v694 = vld [vmem:[%s1 + $0x1260] sm:$0xff]
    %v695 = vld [vmem:[%s1 + $0x1268] sm:$0xff]
    %v696 = vld [vmem:[%s1 + $0x1270] sm:$0xff]
    %v697 = vld [vmem:[%s1 + $0x1278] sm:$0xf]
    %v698 = vld [vmem:[%s1 + $0x127c] sm:$0xff]
    %v699 = vld [vmem:[%s1 + $0x1284] sm:$0xff]
    %v700 = vld [vmem:[%s1 + $0x128c] sm:$0xff]
    %v701 = vld [vmem:[%s1 + $0x1294] sm:$0xf]
    %v702 = vld [vmem:[%s1 + $0x1298] sm:$0xff]
    %v703 = vld [vmem:[%s1 + $0x12a0] sm:$0xff]
    %v704 = vld [vmem:[%s1 + $0x12a8] sm:$0xff]
    %v705 = vld [vmem:[%s1 + $0x12b0] sm:$0xf]
    %v706 = vld [vmem:[%s1 + $0x12b4] sm:$0xff]
    %v707 = vld [vmem:[%s1 + $0x12bc] sm:$0xff]
    %v708 = vld [vmem:[%s1 + $0x12c4] sm:$0xff]
    %v709 = vld [vmem:[%s1 + $0x12cc] sm:$0xf]
    %v710 = vld [vmem:[%s1 + $0x12d0] sm:$0xff]
    %v711 = vld [vmem:[%s1 + $0x12d8] sm:$0xff]
    %v712 = vld [vmem:[%s1 + $0x12e0] sm:$0xff]
    %v713 = vld [vmem:[%s1 + $0x12e8] sm:$0xf]
    %v714 = vld [vmem:[%s1 + $0x12ec] sm:$0xff]
    %v715 = vld [vmem:[%s1 + $0x12f4] sm:$0xff]
    %v716 = vld [vmem:[%s1 + $0x12fc] sm:$0xff]
    %v717 = vld [vmem:[%s1 + $0x1304] sm:$0xf]
    %v718 = vld [vmem:[%s1 + $0x1308] sm:$0xff]
    %v719 = vld [vmem:[%s1 + $0x1310] sm:$0xff]
    %v720 = vld [vmem:[%s1 + $0x1318] sm:$0xff]
    %v721 = vld [vmem:[%s1 + $0x1320] sm:$0xf]
    %v722 = vld [vmem:[%s1 + $0x1324] sm:$0xff]
    %v723 = vld [vmem:[%s1 + $0x132c] sm:$0xff]
    %v724 = vld [vmem:[%s1 + $0x1334] sm:$0xff]
    %v725 = vld [vmem:[%s1 + $0x133c] sm:$0xf]
    %v726 = vld [vmem:[%s1 + $0x1340] sm:$0xff]
    %v727 = vld [vmem:[%s1 + $0x1348] sm:$0xff]
    %v728 = vld [vmem:[%s1 + $0x1350] sm:$0xff]
    %v729 = vld [vmem:[%s1 + $0x1358] sm:$0xf]
    %v730 = vld [vmem:[%s1 + $0x135c] sm:$0xff]
    %v731 = vld [vmem:[%s1 + $0x1364] sm:$0xff]
    %v732 = vld [vmem:[%s1 + $0x136c] sm:$0xff]
    %v733 = vld [vmem:[%s1 + $0x1374] sm:$0xf]
    %v734 = vld [vmem:[%s1 + $0x1378] sm:$0xff]
    %v735 = vld [vmem:[%s1 + $0x1380] sm:$0xff]
    %v736 = vld [vmem:[%s1 + $0x1388] sm:$0xff]
    %v737 = vld [vmem:[%s1 + $0x1390] sm:$0xf]
    %v738 = vld [vmem:[%s1 + $0x1394] sm:$0xff]
    %v739 = vld [vmem:[%s1 + $0x139c] sm:$0xff]
    %v740 = vld [vmem:[%s1 + $0x13a4] sm:$0xff]
    %v741 = vld [vmem:[%s1 + $0x13ac] sm:$0xf]
    %v742 = vld [vmem:[%s1 + $0x13b0] sm:$0xff]
    %v743 = vld [vmem:[%s1 + $0x13b8] sm:$0xff]
    %v744 = vld [vmem:[%s1 + $0x13c0] sm:$0xff]
    %v745 = vld [vmem:[%s1 + $0x13c8] sm:$0xf]
    %v746 = vld [vmem:[%s1 + $0x13cc] sm:$0xff]
    %v747 = vld [vmem:[%s1 + $0x13d4] sm:$0xff]
    %v748 = vld [vmem:[%s1 + $0x13dc] sm:$0xff]
    %v749 = vld [vmem:[%s1 + $0x13e4] sm:$0xf]
    %v750 = vld [vmem:[%s1 + $0x13e8] sm:$0xff]
    %v751 = vld [vmem:[%s1 + $0x13f0] sm:$0xff]
    %v752 = vld [vmem:[%s1 + $0x13f8] sm:$0xff]
    %v753 = vld [vmem:[%s1 + $0x1400] sm:$0xf]
    %v754 = vld [vmem:[%s1 + $0x1404] sm:$0xff]
    %v755 = vld [vmem:[%s1 + $0x140c] sm:$0xff]
    %v756 = vld [vmem:[%s1 + $0x1414] sm:$0xff]
    %v757 = vld [vmem:[%s1 + $0x141c] sm:$0xf]
    %v758 = vld [vmem:[%s1 + $0x1420] sm:$0xff]
    %v759 = vld [vmem:[%s1 + $0x1428] sm:$0xff]
    %v760 = vld [vmem:[%s1 + $0x1430] sm:$0xff]
    %v761 = vld [vmem:[%s1 + $0x1438] sm:$0xf]
    %v762 = vld [vmem:[%s1 + $0x143c] sm:$0xff]
    %v763 = vld [vmem:[%s1 + $0x1444] sm:$0xff]
    %v764 = vld [vmem:[%s1 + $0x144c] sm:$0xff]
    %v765 = vld [vmem:[%s1 + $0x1454] sm:$0xf]
    %v766 = vld [vmem:[%s1 + $0x1458] sm:$0xff]
    %v767 = vld [vmem:[%s1 + $0x1460] sm:$0xff]
    %v768 = vld [vmem:[%s1 + $0x1468] sm:$0xff]
    %v769 = vld [vmem:[%s1 + $0x1470] sm:$0xf]
    %v770 = vld [vmem:[%s1 + $0x1474] sm:$0xff]
    %v771 = vld [vmem:[%s1 + $0x147c] sm:$0xff]
    %v772 = vld [vmem:[%s1 + $0x1484] sm:$0xff]
    %v773 = vld [vmem:[%s1 + $0x148c] sm:$0xf]
    %v774 = vld [vmem:[%s1 + $0x1490] sm:$0xff]
    %v775 = vld [vmem:[%s1 + $0x1498] sm:$0xff]
    %v776 = vld [vmem:[%s1 + $0x14a0] sm:$0xff]
    %v777 = vld [vmem:[%s1 + $0x14a8] sm:$0xf]
    %v778 = vld [vmem:[%s1 + $0x14ac] sm:$0xff]
    %v779 = vld [vmem:[%s1 + $0x14b4] sm:$0xff]
    %v780 = vld [vmem:[%s1 + $0x14bc] sm:$0xff]
    %v781 = vld [vmem:[%s1 + $0x14c4] sm:$0xf]
    %v782 = vld [vmem:[%s1 + $0x14c8] sm:$0xff]
    %v783 = vld [vmem:[%s1 + $0x14d0] sm:$0xff]
    %v784 = vld [vmem:[%s1 + $0x14d8] sm:$0xff]
    %v785 = vld [vmem:[%s1 + $0x14e0] sm:$0xf]
    %v786 = vld [vmem:[%s1 + $0x14e4] sm:$0xff]
    %v787 = vld [vmem:[%s1 + $0x14ec] sm:$0xff]
    %v788 = vld [vmem:[%s1 + $0x14f4] sm:$0xff]
    %v789 = vld [vmem:[%s1 + $0x14fc] sm:$0xf]
    %v790 = vld [vmem:[%s1 + $0x1500] sm:$0xff]
    %v791 = vld [vmem:[%s1 + $0x1508] sm:$0xff]
    %v792 = vld [vmem:[%s1 + $0x1510] sm:$0xff]
    %v793 = vld [vmem:[%s1 + $0x1518] sm:$0xf]
    %v794 = vld [vmem:[%s1 + $0x151c] sm:$0xff]
    %v795 = vld [vmem:[%s1 + $0x1524] sm:$0xff]
    %v796 = vld [vmem:[%s1 + $0x152c] sm:$0xff]
    %v797 = vld [vmem:[%s1 + $0x1534] sm:$0xf]
    %v798 = vld [vmem:[%s1 + $0x1538] sm:$0xff]
    %v799 = vld [vmem:[%s1 + $0x1540] sm:$0xff]
    %v800 = vld [vmem:[%s1 + $0x1548] sm:$0xff]
    %v801 = vld [vmem:[%s1 + $0x1550] sm:$0xf]
    %v802 = vld [vmem:[%s1 + $0x1554] sm:$0xff]
    %v803 = vld [vmem:[%s1 + $0x155c] sm:$0xff]
    %v804 = vld [vmem:[%s1 + $0x1564] sm:$0xff]
    %v805 = vld [vmem:[%s1 + $0x156c] sm:$0xf]
    %v806 = vld [vmem:[%s1 + $0x1570] sm:$0xff]
    %v807 = vld [vmem:[%s1 + $0x1578] sm:$0xff]
    %v808 = vld [vmem:[%s1 + $0x1580] sm:$0xff]
    %v809 = vld [vmem:[%s1 + $0x1588] sm:$0xf]
    %v810 = vld [vmem:[%s1 + $0x158c] sm:$0xff]
    %v811 = vld [vmem:[%s1 + $0x1594] sm:$0xff]
    %v812 = vld [vmem:[%s1 + $0x159c] sm:$0xff]
    %v813 = vld [vmem:[%s1 + $0x15a4] sm:$0xf]
    %v814 = vld [vmem:[%s1 + $0x15a8] sm:$0xff]
    %v815 = vld [vmem:[%s1 + $0x15b0] sm:$0xff]
    %v816 = vld [vmem:[%s1 + $0x15b8] sm:$0xff]
    %v817 = vld [vmem:[%s1 + $0x15c0] sm:$0xf]
    %v818 = vld [vmem:[%s1 + $0x15c4] sm:$0xff]
    %v819 = vld [vmem:[%s1 + $0x15cc] sm:$0xff]
    %v820 = vld [vmem:[%s1 + $0x15d4] sm:$0xff]
    %v821 = vld [vmem:[%s1 + $0x15dc] sm:$0xf]
    %v822 = vld [vmem:[%s0] sm:$0xf]
    %v823 = vld [vmem:[%s0 + $0x4] sm:$0xf]
    %v824 = vld [vmem:[%s0 + $0x8] sm:$0xf]
    %v825 = vld [vmem:[%s0 + $0xc] sm:$0xf]
    %v826 = vld [vmem:[%s0 + $0x10] sm:$0xf]
    %v827 = vld [vmem:[%s0 + $0x14] sm:$0xf]
    %v828 = vld [vmem:[%s0 + $0x18] sm:$0xf]
    %v829 = vld [vmem:[%s0 + $0x1c] sm:$0xf]
    %v830 = vld [vmem:[%s0 + $0x20] sm:$0xf]
    %v831 = vld [vmem:[%s0 + $0x24] sm:$0xf]
    %v832 = vld [vmem:[%s0 + $0x28] sm:$0xf]
    %v833 = vld [vmem:[%s0 + $0x2c] sm:$0xf]
    %v834 = vld [vmem:[%s0 + $0x30] sm:$0xf]
    %v835 = vld [vmem:[%s0 + $0x34] sm:$0xf]
    %v836 = vld [vmem:[%s0 + $0x38] sm:$0xf]
    %v837 = vld [vmem:[%s0 + $0x3c] sm:$0xf]
    %v838 = vld [vmem:[%s0 + $0x40] sm:$0xf]
    %v839 = vld [vmem:[%s0 + $0x44] sm:$0xf]
    %v840 = vld [vmem:[%s0 + $0x48] sm:$0xf]
    %v841 = vld [vmem:[%s0 + $0x4c] sm:$0xf]
    %v842 = vld [vmem:[%s0 + $0x50] sm:$0xf]
    %v843 = vld [vmem:[%s0 + $0x54] sm:$0xf]
    %v844 = vld [vmem:[%s0 + $0x58] sm:$0xf]
    %v845 = vld [vmem:[%s0 + $0x5c] sm:$0xf]
    %v846 = vld [vmem:[%s0 + $0x60] sm:$0xf]
    %v847 = vld [vmem:[%s0 + $0x64] sm:$0xf]
    %v848 = vld [vmem:[%s0 + $0x68] sm:$0xf]
    %v849 = vld [vmem:[%s0 + $0x6c] sm:$0xf]
    %v850 = vld [vmem:[%s0 + $0x70] sm:$0xf]
    %v851 = vld [vmem:[%s0 + $0x74] sm:$0xf]
    %v852 = vld [vmem:[%s0 + $0x78] sm:$0xf]
    %v853 = vld [vmem:[%s0 + $0x7c] sm:$0xf]
    %v854 = vld [vmem:[%s0 + $0x80] sm:$0xf]
    %v855 = vld [vmem:[%s0 + $0x84] sm:$0xf]
    %v856 = vld [vmem:[%s0 + $0x88] sm:$0xf]
    %v857 = vld [vmem:[%s0 + $0x8c] sm:$0xf]
    %v858 = vld [vmem:[%s0 + $0x90] sm:$0xf]
    %v859 = vld [vmem:[%s0 + $0x94] sm:$0xf]
    %v860 = vld [vmem:[%s0 + $0x98] sm:$0xf]
    %v861 = vld [vmem:[%s0 + $0x9c] sm:$0xf]
    %v862 = vld [vmem:[%s0 + $0xa0] sm:$0xf]
    %v863 = vld [vmem:[%s0 + $0xa4] sm:$0xf]
    %v864 = vld [vmem:[%s0 + $0xa8] sm:$0xf]
    %v865 = vld [vmem:[%s0 + $0xac] sm:$0xf]
    %v866 = vld [vmem:[%s0 + $0xb0] sm:$0xf]
    %v867 = vld [vmem:[%s0 + $0xb4] sm:$0xf]
    %v868 = vld [vmem:[%s0 + $0xb8] sm:$0xf]
    %v869 = vld [vmem:[%s0 + $0xbc] sm:$0xf]
    %v870 = vld [vmem:[%s0 + $0xc0] sm:$0xf]
    %v871 = vld [vmem:[%s0 + $0xc4] sm:$0xf]
    %v872 = vld [vmem:[%s0 + $0xc8] sm:$0xf]
    %v873 = vld [vmem:[%s0 + $0xcc] sm:$0xf]
    %v874 = vld [vmem:[%s0 + $0xd0] sm:$0xf]
    %v875 = vld [vmem:[%s0 + $0xd4] sm:$0xf]
    %v876 = vld [vmem:[%s0 + $0xd8] sm:$0xf]
    %v877 = vld [vmem:[%s0 + $0xdc] sm:$0xf]
    %v878 = vld [vmem:[%s0 + $0xe0] sm:$0xf]
    %v879 = vld [vmem:[%s0 + $0xe4] sm:$0xf]
    %v880 = vld [vmem:[%s0 + $0xe8] sm:$0xf]
    %v881 = vld [vmem:[%s0 + $0xec] sm:$0xf]
    %v882 = vld [vmem:[%s0 + $0xf0] sm:$0xf]
    %v883 = vld [vmem:[%s0 + $0xf4] sm:$0xf]
    %v884 = vld [vmem:[%s0 + $0xf8] sm:$0xf]
    %v885 = vld [vmem:[%s0 + $0xfc] sm:$0xf]
    %v886 = vld [vmem:[%s0 + $0x100] sm:$0xf]
    %v887 = vld [vmem:[%s0 + $0x104] sm:$0xf]
    %v888 = vld [vmem:[%s0 + $0x108] sm:$0xf]
    %v889 = vld [vmem:[%s0 + $0x10c] sm:$0xf]
    %v890 = vld [vmem:[%s0 + $0x110] sm:$0xf]
    %v891 = vld [vmem:[%s0 + $0x114] sm:$0xf]
    %v892 = vld [vmem:[%s0 + $0x118] sm:$0xf]
    %v893 = vld [vmem:[%s0 + $0x11c] sm:$0xf]
    %v894 = vld [vmem:[%s0 + $0x120] sm:$0xf]
    %v895 = vld [vmem:[%s0 + $0x124] sm:$0xf]
    %v896 = vld [vmem:[%s0 + $0x128] sm:$0xf]
    %v897 = vld [vmem:[%s0 + $0x12c] sm:$0xf]
    %v898 = vld [vmem:[%s0 + $0x130] sm:$0xf]
    %v899 = vld [vmem:[%s0 + $0x134] sm:$0xf]
    %v900 = vld [vmem:[%s0 + $0x138] sm:$0xf]
    %v901 = vld [vmem:[%s0 + $0x13c] sm:$0xf]
    %v902 = vld [vmem:[%s0 + $0x140] sm:$0xf]
    %v903 = vld [vmem:[%s0 + $0x144] sm:$0xf]
    %v904 = vld [vmem:[%s0 + $0x148] sm:$0xf]
    %v905 = vld [vmem:[%s0 + $0x14c] sm:$0xf]
    %v906 = vld [vmem:[%s0 + $0x150] sm:$0xf]
    %v907 = vld [vmem:[%s0 + $0x154] sm:$0xf]
    %v908 = vld [vmem:[%s0 + $0x158] sm:$0xf]
    %v909 = vld [vmem:[%s0 + $0x15c] sm:$0xf]
    %v910 = vld [vmem:[%s0 + $0x160] sm:$0xf]
    %v911 = vld [vmem:[%s0 + $0x164] sm:$0xf]
    %v912 = vld [vmem:[%s0 + $0x168] sm:$0xf]
    %v913 = vld [vmem:[%s0 + $0x16c] sm:$0xf]
    %v914 = vld [vmem:[%s0 + $0x170] sm:$0xf]
    %v915 = vld [vmem:[%s0 + $0x174] sm:$0xf]
    %v916 = vld [vmem:[%s0 + $0x178] sm:$0xf]
    %v917 = vld [vmem:[%s0 + $0x17c] sm:$0xf]
    %v918 = vld [vmem:[%s0 + $0x180] sm:$0xf]
    %v919 = vld [vmem:[%s0 + $0x184] sm:$0xf]
    %v920 = vld [vmem:[%s2] sm:$0xff]
    %v921 = vld [vmem:[%s2 + $0x8] sm:$0xff]
    %v922 = vld [vmem:[%s2 + $0x10] sm:$0xff]
    %v923 = vld [vmem:[%s2 + $0x18] sm:$0xff]
    %v924 = vld [vmem:[%s2 + $0x20] sm:$0xff]
    %v925 = vld [vmem:[%s2 + $0x28] sm:$0xff]
    %v926 = vld [vmem:[%s2 + $0x30] sm:$0xff]
    %v927 = vld [vmem:[%s2 + $0x38] sm:$0xff]
    %v928 = vld [vmem:[%s2 + $0x40] sm:$0xff]
    %v929 = vld [vmem:[%s2 + $0x48] sm:$0xff]
    %v930 = vld [vmem:[%s2 + $0x50] sm:$0xff]
    %v931 = vld [vmem:[%s2 + $0x58] sm:$0xff]
    %v932 = vld [vmem:[%s2 + $0x60] sm:$0xff]
    %v933 = vld [vmem:[%s2 + $0x68] sm:$0xff]
    %v934 = vld [vmem:[%s2 + $0x70] sm:$0xff]
    %v935 = vld [vmem:[%s2 + $0x78] sm:$0xff]
    %v936 = vld [vmem:[%s2 + $0x80] sm:$0xff]
    %v937 = vld [vmem:[%s2 + $0x88] sm:$0xff]
    %v938 = vld [vmem:[%s2 + $0x90] sm:$0xff]
    %v939 = vld [vmem:[%s2 + $0x98] sm:$0xff]
    %v940 = vld [vmem:[%s2 + $0xa0] sm:$0xff]
    %v941 = vld [vmem:[%s2 + $0xa8] sm:$0xff]
    %v942 = vld [vmem:[%s2 + $0xb0] sm:$0xff]
    %v943 = vld [vmem:[%s2 + $0xb8] sm:$0xff]
    %v944 = vld [vmem:[%s2 + $0xc0] sm:$0xff]
    %v945 = vld [vmem:[%s2 + $0xc8] sm:$0xff]
    %v946 = vld [vmem:[%s2 + $0xd0] sm:$0xff]
    %v947 = vld [vmem:[%s2 + $0xd8] sm:$0xff]
    %v948 = vld [vmem:[%s2 + $0xe0] sm:$0xff]
    %v949 = vld [vmem:[%s2 + $0xe8] sm:$0xff]
    %v950 = vld [vmem:[%s2 + $0xf0] sm:$0xff]
    %v951 = vld [vmem:[%s2 + $0xf8] sm:$0xff]
    %v952 = vld [vmem:[%s2 + $0x100] sm:$0xff]
    %v953 = vld [vmem:[%s2 + $0x108] sm:$0xff]
    %v954 = vld [vmem:[%s2 + $0x110] sm:$0xff]
    %v955 = vld [vmem:[%s2 + $0x118] sm:$0xff]
    %v956 = vld [vmem:[%s2 + $0x120] sm:$0xff]
    %v957 = vld [vmem:[%s2 + $0x128] sm:$0xff]
    %v958 = vld [vmem:[%s2 + $0x130] sm:$0xff]
    %v959 = vld [vmem:[%s2 + $0x138] sm:$0xff]
    %v960 = vld [vmem:[%s2 + $0x140] sm:$0xff]
    %v961 = vld [vmem:[%s2 + $0x148] sm:$0xff]
    %v962 = vld [vmem:[%s2 + $0x150] sm:$0xff]
    %v963 = vld [vmem:[%s2 + $0x158] sm:$0xff]
    %v964 = vld [vmem:[%s2 + $0x160] sm:$0xff]
    %v965 = vld [vmem:[%s2 + $0x168] sm:$0xff]
    %v966 = vld [vmem:[%s2 + $0x170] sm:$0xff]
    %v967 = vld [vmem:[%s2 + $0x178] sm:$0xff]
    %v968 = vld [vmem:[%s2 + $0x180] sm:$0xff]
    %v969 = vld [vmem:[%s2 + $0x188] sm:$0xff]
    %v970 = vld [vmem:[%s2 + $0x190] sm:$0xff]
    %v971 = vld [vmem:[%s2 + $0x198] sm:$0xff]
    %v972 = vld [vmem:[%s2 + $0x1a0] sm:$0xff]
    %v973 = vld [vmem:[%s2 + $0x1a8] sm:$0xff]
    %v974 = vld [vmem:[%s2 + $0x1b0] sm:$0xff]
    %v975 = vld [vmem:[%s2 + $0x1b8] sm:$0xff]
    %v976 = vld [vmem:[%s2 + $0x1c0] sm:$0xff]
    %v977 = vld [vmem:[%s2 + $0x1c8] sm:$0xff]
    %v978 = vld [vmem:[%s2 + $0x1d0] sm:$0xff]
    %v979 = vld [vmem:[%s2 + $0x1d8] sm:$0xff]
    %v980 = vld [vmem:[%s2 + $0x1e0] sm:$0xff]
    %v981 = vld [vmem:[%s2 + $0x1e8] sm:$0xff]
    %v982 = vld [vmem:[%s2 + $0x1f0] sm:$0xff]
    %v983 = vld [vmem:[%s2 + $0x1f8] sm:$0xff]
    %v984 = vld [vmem:[%s2 + $0x200] sm:$0xff]
    %v985 = vld [vmem:[%s2 + $0x208] sm:$0xff]
    %v986 = vld [vmem:[%s2 + $0x210] sm:$0xff]
    %v987 = vld [vmem:[%s2 + $0x218] sm:$0xff]
    %v988 = vld [vmem:[%s2 + $0x220] sm:$0xff]
    %v989 = vld [vmem:[%s2 + $0x228] sm:$0xff]
    %v990 = vld [vmem:[%s2 + $0x230] sm:$0xff]
    %v991 = vld [vmem:[%s2 + $0x238] sm:$0xff]
    %v992 = vld [vmem:[%s2 + $0x240] sm:$0xff]
    %v993 = vld [vmem:[%s2 + $0x248] sm:$0xff]
    %v994 = vld [vmem:[%s2 + $0x250] sm:$0xff]
    %v995 = vld [vmem:[%s2 + $0x258] sm:$0xff]
    %v996 = vld [vmem:[%s2 + $0x260] sm:$0xff]
    %v997 = vld [vmem:[%s2 + $0x268] sm:$0xff]
    %v998 = vld [vmem:[%s2 + $0x270] sm:$0xff]
    %v999 = vld [vmem:[%s2 + $0x278] sm:$0xff]
    %v1000 = vld [vmem:[%s2 + $0x280] sm:$0xff]
    %v1001 = vld [vmem:[%s2 + $0x288] sm:$0xff]
    %v1002 = vld [vmem:[%s2 + $0x290] sm:$0xff]
    %v1003 = vld [vmem:[%s2 + $0x298] sm:$0xff]
    %v1004 = vld [vmem:[%s2 + $0x2a0] sm:$0xff]
    %v1005 = vld [vmem:[%s2 + $0x2a8] sm:$0xff]
    %v1006 = vld [vmem:[%s2 + $0x2b0] sm:$0xff]
    %v1007 = vld [vmem:[%s2 + $0x2b8] sm:$0xff]
    %v1008 = vld [vmem:[%s2 + $0x2c0] sm:$0xff]
    %v1009 = vld [vmem:[%s2 + $0x2c8] sm:$0xff]
    %v1010 = vld [vmem:[%s2 + $0x2d0] sm:$0xff]
    %v1011 = vld [vmem:[%s2 + $0x2d8] sm:$0xff]
    %v1012 = vld [vmem:[%s2 + $0x2e0] sm:$0xff]
    %v1013 = vld [vmem:[%s2 + $0x2e8] sm:$0xff]
    %v1014 = vld [vmem:[%s2 + $0x2f0] sm:$0xff]
    %v1015 = vld [vmem:[%s2 + $0x2f8] sm:$0xff]
    %v1016 = vld [vmem:[%s2 + $0x300] sm:$0xff]
    %v1017 = vld [vmem:[%s2 + $0x308] sm:$0xff]
    %v1018 = vld [vmem:[%s2 + $0x310] sm:$0xff]
    %v1019 = vld [vmem:[%s2 + $0x318] sm:$0xff]
    %v1020 = vld [vmem:[%s2 + $0x320] sm:$0xff]
    %v1021 = vld [vmem:[%s2 + $0x328] sm:$0xff]
    %v1022 = vld [vmem:[%s2 + $0x330] sm:$0xff]
    %v1023 = vld [vmem:[%s2 + $0x338] sm:$0xff]
    %v1024 = vld [vmem:[%s2 + $0x340] sm:$0xff]
    %v1025 = vld [vmem:[%s2 + $0x348] sm:$0xff]
    %v1026 = vld [vmem:[%s2 + $0x350] sm:$0xff]
    %v1027 = vld [vmem:[%s2 + $0x358] sm:$0xff]
    %v1028 = vld [vmem:[%s2 + $0x360] sm:$0xff]
    %v1029 = vld [vmem:[%s2 + $0x368] sm:$0xff]
    %v1030 = vld [vmem:[%s2 + $0x370] sm:$0xff]
    %v1031 = vld [vmem:[%s2 + $0x378] sm:$0xff]
    %v1032 = vld [vmem:[%s2 + $0x380] sm:$0xff]
    %v1033 = vld [vmem:[%s2 + $0x388] sm:$0xff]
    %v1034 = vld [vmem:[%s2 + $0x390] sm:$0xff]
    %v1035 = vld [vmem:[%s2 + $0x398] sm:$0xff]
    %v1036 = vld [vmem:[%s2 + $0x3a0] sm:$0xff]
    %v1037 = vld [vmem:[%s2 + $0x3a8] sm:$0xff]
    %v1038 = vld [vmem:[%s2 + $0x3b0] sm:$0xff]
    %v1039 = vld [vmem:[%s2 + $0x3b8] sm:$0xff]
    %v1040 = vld [vmem:[%s2 + $0x3c0] sm:$0xff]
    %v1041 = vld [vmem:[%s2 + $0x3c8] sm:$0xff]
    %v1042 = vld [vmem:[%s2 + $0x3d0] sm:$0xff]
    %v1043 = vld [vmem:[%s2 + $0x3d8] sm:$0xff]
    %v1044 = vld [vmem:[%s2 + $0x3e0] sm:$0xff]
    %v1045 = vld [vmem:[%s2 + $0x3e8] sm:$0xff]
    %v1046 = vld [vmem:[%s2 + $0x3f0] sm:$0xff]
    %v1047 = vld [vmem:[%s2 + $0x3f8] sm:$0xff]
    %v1048 = vld [vmem:[%s2 + $0x400] sm:$0xff]
    %v1049 = vld [vmem:[%s2 + $0x408] sm:$0xff]
    %v1050 = vld [vmem:[%s2 + $0x410] sm:$0xff]
    %v1051 = vld [vmem:[%s2 + $0x418] sm:$0xff]
    %v1052 = vld [vmem:[%s2 + $0x420] sm:$0xff]
    %v1053 = vld [vmem:[%s2 + $0x428] sm:$0xff]
    %v1054 = vld [vmem:[%s2 + $0x430] sm:$0xff]
    %v1055 = vld [vmem:[%s2 + $0x438] sm:$0xff]
    %v1056 = vld [vmem:[%s2 + $0x440] sm:$0xff]
    %v1057 = vld [vmem:[%s2 + $0x448] sm:$0xff]
    %v1058 = vld [vmem:[%s2 + $0x450] sm:$0xff]
    %v1059 = vld [vmem:[%s2 + $0x458] sm:$0xff]
    %v1060 = vld [vmem:[%s2 + $0x460] sm:$0xff]
    %v1061 = vld [vmem:[%s2 + $0x468] sm:$0xff]
    %v1062 = vld [vmem:[%s2 + $0x470] sm:$0xff]
    %v1063 = vld [vmem:[%s2 + $0x478] sm:$0xff]
    %v1064 = vld [vmem:[%s2 + $0x480] sm:$0xff]
    %v1065 = vld [vmem:[%s2 + $0x488] sm:$0xff]
    %v1066 = vld [vmem:[%s2 + $0x490] sm:$0xff]
    %v1067 = vld [vmem:[%s2 + $0x498] sm:$0xff]
    %v1068 = vld [vmem:[%s2 + $0x4a0] sm:$0xff]
    %v1069 = vld [vmem:[%s2 + $0x4a8] sm:$0xff]
    %v1070 = vld [vmem:[%s2 + $0x4b0] sm:$0xff]
    %v1071 = vld [vmem:[%s2 + $0x4b8] sm:$0xff]
    %v1072 = vld [vmem:[%s2 + $0x4c0] sm:$0xff]
    %v1073 = vld [vmem:[%s2 + $0x4c8] sm:$0xff]
    %v1074 = vld [vmem:[%s2 + $0x4d0] sm:$0xff]
    %v1075 = vld [vmem:[%s2 + $0x4d8] sm:$0xff]
    %v1076 = vld [vmem:[%s2 + $0x4e0] sm:$0xff]
    %v1077 = vld [vmem:[%s2 + $0x4e8] sm:$0xff]
    %v1078 = vld [vmem:[%s2 + $0x4f0] sm:$0xff]
    %v1079 = vld [vmem:[%s2 + $0x4f8] sm:$0xff]
    %v1080 = vld [vmem:[%s2 + $0x500] sm:$0xff]
    %v1081 = vld [vmem:[%s2 + $0x508] sm:$0xff]
    %v1082 = vld [vmem:[%s2 + $0x510] sm:$0xff]
    %v1083 = vld [vmem:[%s2 + $0x518] sm:$0xff]
    %v1084 = vld [vmem:[%s2 + $0x520] sm:$0xff]
    %v1085 = vld [vmem:[%s2 + $0x528] sm:$0xff]
    %v1086 = vld [vmem:[%s2 + $0x530] sm:$0xff]
    %v1087 = vld [vmem:[%s2 + $0x538] sm:$0xff]
    %v1088 = vld [vmem:[%s2 + $0x540] sm:$0xff]
    %v1089 = vld [vmem:[%s2 + $0x548] sm:$0xff]
    %v1090 = vld [vmem:[%s2 + $0x550] sm:$0xff]
    %v1091 = vld [vmem:[%s2 + $0x558] sm:$0xff]
    %v1092 = vld [vmem:[%s2 + $0x560] sm:$0xff]
    %v1093 = vld [vmem:[%s2 + $0x568] sm:$0xff]
    %v1094 = vld [vmem:[%s2 + $0x570] sm:$0xff]
    %v1095 = vld [vmem:[%s2 + $0x578] sm:$0xff]
    %v1096 = vld [vmem:[%s2 + $0x580] sm:$0xff]
    %v1097 = vld [vmem:[%s2 + $0x588] sm:$0xff]
    %v1098 = vld [vmem:[%s2 + $0x590] sm:$0xff]
    %v1099 = vld [vmem:[%s2 + $0x598] sm:$0xff]
    %v1100 = vld [vmem:[%s2 + $0x5a0] sm:$0xff]
    %v1101 = vld [vmem:[%s2 + $0x5a8] sm:$0xff]
    %v1102 = vld [vmem:[%s2 + $0x5b0] sm:$0xff]
    %v1103 = vld [vmem:[%s2 + $0x5b8] sm:$0xff]
    %v1104 = vld [vmem:[%s2 + $0x5c0] sm:$0xff]
    %v1105 = vld [vmem:[%s2 + $0x5c8] sm:$0xff]
    %v1106 = vld [vmem:[%s2 + $0x5d0] sm:$0xff]
    %v1107 = vld [vmem:[%s2 + $0x5d8] sm:$0xff]
    %v1108 = vld [vmem:[%s2 + $0x5e0] sm:$0xff]
    %v1109 = vld [vmem:[%s2 + $0x5e8] sm:$0xff]
    %v1110 = vld [vmem:[%s2 + $0x5f0] sm:$0xff]
    %v1111 = vld [vmem:[%s2 + $0x5f8] sm:$0xff]
    %v1112 = vld [vmem:[%s2 + $0x600] sm:$0xff]
    %v1113 = vld [vmem:[%s2 + $0x608] sm:$0xff]
    %v1114 = vld [vmem:[%s2 + $0x610] sm:$0xff]
    %v1115 = vld [vmem:[%s2 + $0x618] sm:$0xff]
    %v1116 = vld [vmem:[%s2 + $0x620] sm:$0xff]
    %v1117 = vld [vmem:[%s2 + $0x628] sm:$0xff]
    %v1118 = vld [vmem:[%s2 + $0x630] sm:$0xff]
    %v1119 = vld [vmem:[%s2 + $0x638] sm:$0xff]
    %1121 = vset.pattern.permute.xlu0 0
    %1122 = vperm.xlu0 %1121, %v920
    %v1123 = vpop.permute.xlu0 %1122
    %1126 = vset.pattern.permute.xlu0 0
    %1127 = vperm.xlu0 %1126, %v921
    %v1128 = vpop.permute.xlu0 %1127
    %1131 = vset.pattern.permute.xlu0 0
    %1132 = vperm.xlu0 %1131, %v922
    %v1133 = vpop.permute.xlu0 %1132
    %1136 = vset.pattern.permute.xlu0 0
    %1137 = vperm.xlu0 %1136, %v923
    %v1138 = vpop.permute.xlu0 %1137
    %1141 = vset.pattern.permute.xlu0 0
    %1142 = vperm.xlu0 %1141, %v924
    %v1143 = vpop.permute.xlu0 %1142
    %1146 = vset.pattern.permute.xlu0 0
    %1147 = vperm.xlu0 %1146, %v925
    %v1148 = vpop.permute.xlu0 %1147
    %1151 = vset.pattern.permute.xlu0 0
    %1152 = vperm.xlu0 %1151, %v926
    %v1153 = vpop.permute.xlu0 %1152
    %1156 = vset.pattern.permute.xlu0 0
    %1157 = vperm.xlu0 %1156, %v927
    %v1158 = vpop.permute.xlu0 %1157
    %1161 = vset.pattern.permute.xlu0 0
    %1162 = vperm.xlu0 %1161, %v928
    %v1163 = vpop.permute.xlu0 %1162
    %1166 = vset.pattern.permute.xlu0 0
    %1167 = vperm.xlu0 %1166, %v929
    %v1168 = vpop.permute.xlu0 %1167
    %1171 = vset.pattern.permute.xlu0 0
    %1172 = vperm.xlu0 %1171, %v930
    %v1173 = vpop.permute.xlu0 %1172
    %1176 = vset.pattern.permute.xlu0 0
    %1177 = vperm.xlu0 %1176, %v931
    %v1178 = vpop.permute.xlu0 %1177
    %1181 = vset.pattern.permute.xlu0 0
    %1182 = vperm.xlu0 %1181, %v932
    %v1183 = vpop.permute.xlu0 %1182
    %1186 = vset.pattern.permute.xlu0 0
    %1187 = vperm.xlu0 %1186, %v933
    %v1188 = vpop.permute.xlu0 %1187
    %1191 = vset.pattern.permute.xlu0 0
    %1192 = vperm.xlu0 %1191, %v934
    %v1193 = vpop.permute.xlu0 %1192
    %1196 = vset.pattern.permute.xlu0 0
    %1197 = vperm.xlu0 %1196, %v935
    %v1198 = vpop.permute.xlu0 %1197
    %1201 = vset.pattern.permute.xlu0 0
    %1202 = vperm.xlu0 %1201, %v936
    %v1203 = vpop.permute.xlu0 %1202
    %1206 = vset.pattern.permute.xlu0 0
    %1207 = vperm.xlu0 %1206, %v937
    %v1208 = vpop.permute.xlu0 %1207
    %1211 = vset.pattern.permute.xlu0 0
    %1212 = vperm.xlu0 %1211, %v938
    %v1213 = vpop.permute.xlu0 %1212
    %1216 = vset.pattern.permute.xlu0 0
    %1217 = vperm.xlu0 %1216, %v939
    %v1218 = vpop.permute.xlu0 %1217
    %1221 = vset.pattern.permute.xlu0 0
    %1222 = vperm.xlu0 %1221, %v940
    %v1223 = vpop.permute.xlu0 %1222
    %1226 = vset.pattern.permute.xlu0 0
    %1227 = vperm.xlu0 %1226, %v941
    %v1228 = vpop.permute.xlu0 %1227
    %1231 = vset.pattern.permute.xlu0 0
    %1232 = vperm.xlu0 %1231, %v942
    %v1233 = vpop.permute.xlu0 %1232
    %1236 = vset.pattern.permute.xlu0 0
    %1237 = vperm.xlu0 %1236, %v943
    %v1238 = vpop.permute.xlu0 %1237
    %1241 = vset.pattern.permute.xlu0 0
    %1242 = vperm.xlu0 %1241, %v944
    %v1243 = vpop.permute.xlu0 %1242
    %1246 = vset.pattern.permute.xlu0 0
    %1247 = vperm.xlu0 %1246, %v945
    %v1248 = vpop.permute.xlu0 %1247
    %1251 = vset.pattern.permute.xlu0 0
    %1252 = vperm.xlu0 %1251, %v946
    %v1253 = vpop.permute.xlu0 %1252
    %1256 = vset.pattern.permute.xlu0 0
    %1257 = vperm.xlu0 %1256, %v947
    %v1258 = vpop.permute.xlu0 %1257
    %1261 = vset.pattern.permute.xlu0 0
    %1262 = vperm.xlu0 %1261, %v948
    %v1263 = vpop.permute.xlu0 %1262
    %1266 = vset.pattern.permute.xlu0 0
    %1267 = vperm.xlu0 %1266, %v949
    %v1268 = vpop.permute.xlu0 %1267
    %1271 = vset.pattern.permute.xlu0 0
    %1272 = vperm.xlu0 %1271, %v950
    %v1273 = vpop.permute.xlu0 %1272
    %1276 = vset.pattern.permute.xlu0 0
    %1277 = vperm.xlu0 %1276, %v951
    %v1278 = vpop.permute.xlu0 %1277
    %1281 = vset.pattern.permute.xlu0 0
    %1282 = vperm.xlu0 %1281, %v952
    %v1283 = vpop.permute.xlu0 %1282
    %1286 = vset.pattern.permute.xlu0 0
    %1287 = vperm.xlu0 %1286, %v953
    %v1288 = vpop.permute.xlu0 %1287
    %1291 = vset.pattern.permute.xlu0 0
    %1292 = vperm.xlu0 %1291, %v954
    %v1293 = vpop.permute.xlu0 %1292
    %1296 = vset.pattern.permute.xlu0 0
    %1297 = vperm.xlu0 %1296, %v955
    %v1298 = vpop.permute.xlu0 %1297
    %1301 = vset.pattern.permute.xlu0 0
    %1302 = vperm.xlu0 %1301, %v956
    %v1303 = vpop.permute.xlu0 %1302
    %1306 = vset.pattern.permute.xlu0 0
    %1307 = vperm.xlu0 %1306, %v957
    %v1308 = vpop.permute.xlu0 %1307
    %1311 = vset.pattern.permute.xlu0 0
    %1312 = vperm.xlu0 %1311, %v958
    %v1313 = vpop.permute.xlu0 %1312
    %1316 = vset.pattern.permute.xlu0 0
    %1317 = vperm.xlu0 %1316, %v959
    %v1318 = vpop.permute.xlu0 %1317
    %1321 = vset.pattern.permute.xlu0 0
    %1322 = vperm.xlu0 %1321, %v960
    %v1323 = vpop.permute.xlu0 %1322
    %1326 = vset.pattern.permute.xlu0 0
    %1327 = vperm.xlu0 %1326, %v961
    %v1328 = vpop.permute.xlu0 %1327
    %1331 = vset.pattern.permute.xlu0 0
    %1332 = vperm.xlu0 %1331, %v962
    %v1333 = vpop.permute.xlu0 %1332
    %1336 = vset.pattern.permute.xlu0 0
    %1337 = vperm.xlu0 %1336, %v963
    %v1338 = vpop.permute.xlu0 %1337
    %1341 = vset.pattern.permute.xlu0 0
    %1342 = vperm.xlu0 %1341, %v964
    %v1343 = vpop.permute.xlu0 %1342
    %1346 = vset.pattern.permute.xlu0 0
    %1347 = vperm.xlu0 %1346, %v965
    %v1348 = vpop.permute.xlu0 %1347
    %1351 = vset.pattern.permute.xlu0 0
    %1352 = vperm.xlu0 %1351, %v966
    %v1353 = vpop.permute.xlu0 %1352
    %1356 = vset.pattern.permute.xlu0 0
    %1357 = vperm.xlu0 %1356, %v967
    %v1358 = vpop.permute.xlu0 %1357
    %1361 = vset.pattern.permute.xlu0 0
    %1362 = vperm.xlu0 %1361, %v968
    %v1363 = vpop.permute.xlu0 %1362
    %1366 = vset.pattern.permute.xlu0 0
    %1367 = vperm.xlu0 %1366, %v969
    %v1368 = vpop.permute.xlu0 %1367
    %1371 = vset.pattern.permute.xlu0 0
    %1372 = vperm.xlu0 %1371, %v970
    %v1373 = vpop.permute.xlu0 %1372
    %1376 = vset.pattern.permute.xlu0 0
    %1377 = vperm.xlu0 %1376, %v971
    %v1378 = vpop.permute.xlu0 %1377
    %1381 = vset.pattern.permute.xlu0 0
    %1382 = vperm.xlu0 %1381, %v972
    %v1383 = vpop.permute.xlu0 %1382
    %1386 = vset.pattern.permute.xlu0 0
    %1387 = vperm.xlu0 %1386, %v973
    %v1388 = vpop.permute.xlu0 %1387
    %1391 = vset.pattern.permute.xlu0 0
    %1392 = vperm.xlu0 %1391, %v974
    %v1393 = vpop.permute.xlu0 %1392
    %1396 = vset.pattern.permute.xlu0 0
    %1397 = vperm.xlu0 %1396, %v975
    %v1398 = vpop.permute.xlu0 %1397
    %1401 = vset.pattern.permute.xlu0 0
    %1402 = vperm.xlu0 %1401, %v976
    %v1403 = vpop.permute.xlu0 %1402
    %1406 = vset.pattern.permute.xlu0 0
    %1407 = vperm.xlu0 %1406, %v977
    %v1408 = vpop.permute.xlu0 %1407
    %1411 = vset.pattern.permute.xlu0 0
    %1412 = vperm.xlu0 %1411, %v978
    %v1413 = vpop.permute.xlu0 %1412
    %1416 = vset.pattern.permute.xlu0 0
    %1417 = vperm.xlu0 %1416, %v979
    %v1418 = vpop.permute.xlu0 %1417
    %1421 = vset.pattern.permute.xlu0 0
    %1422 = vperm.xlu0 %1421, %v980
    %v1423 = vpop.permute.xlu0 %1422
    %1426 = vset.pattern.permute.xlu0 0
    %1427 = vperm.xlu0 %1426, %v981
    %v1428 = vpop.permute.xlu0 %1427
    %1431 = vset.pattern.permute.xlu0 0
    %1432 = vperm.xlu0 %1431, %v982
    %v1433 = vpop.permute.xlu0 %1432
    %1436 = vset.pattern.permute.xlu0 0
    %1437 = vperm.xlu0 %1436, %v983
    %v1438 = vpop.permute.xlu0 %1437
    %1441 = vset.pattern.permute.xlu0 0
    %1442 = vperm.xlu0 %1441, %v984
    %v1443 = vpop.permute.xlu0 %1442
    %1446 = vset.pattern.permute.xlu0 0
    %1447 = vperm.xlu0 %1446, %v985
    %v1448 = vpop.permute.xlu0 %1447
    %1451 = vset.pattern.permute.xlu0 0
    %1452 = vperm.xlu0 %1451, %v986
    %v1453 = vpop.permute.xlu0 %1452
    %1456 = vset.pattern.permute.xlu0 0
    %1457 = vperm.xlu0 %1456, %v987
    %v1458 = vpop.permute.xlu0 %1457
    %1461 = vset.pattern.permute.xlu0 0
    %1462 = vperm.xlu0 %1461, %v988
    %v1463 = vpop.permute.xlu0 %1462
    %1466 = vset.pattern.permute.xlu0 0
    %1467 = vperm.xlu0 %1466, %v989
    %v1468 = vpop.permute.xlu0 %1467
    %1471 = vset.pattern.permute.xlu0 0
    %1472 = vperm.xlu0 %1471, %v990
    %v1473 = vpop.permute.xlu0 %1472
    %1476 = vset.pattern.permute.xlu0 0
    %1477 = vperm.xlu0 %1476, %v991
    %v1478 = vpop.permute.xlu0 %1477
    %1481 = vset.pattern.permute.xlu0 0
    %1482 = vperm.xlu0 %1481, %v992
    %v1483 = vpop.permute.xlu0 %1482
    %1486 = vset.pattern.permute.xlu0 0
    %1487 = vperm.xlu0 %1486, %v993
    %v1488 = vpop.permute.xlu0 %1487
    %1491 = vset.pattern.permute.xlu0 0
    %1492 = vperm.xlu0 %1491, %v994
    %v1493 = vpop.permute.xlu0 %1492
    %1496 = vset.pattern.permute.xlu0 0
    %1497 = vperm.xlu0 %1496, %v995
    %v1498 = vpop.permute.xlu0 %1497
    %1501 = vset.pattern.permute.xlu0 0
    %1502 = vperm.xlu0 %1501, %v996
    %v1503 = vpop.permute.xlu0 %1502
    %1506 = vset.pattern.permute.xlu0 0
    %1507 = vperm.xlu0 %1506, %v997
    %v1508 = vpop.permute.xlu0 %1507
    %1511 = vset.pattern.permute.xlu0 0
    %1512 = vperm.xlu0 %1511, %v998
    %v1513 = vpop.permute.xlu0 %1512
    %1516 = vset.pattern.permute.xlu0 0
    %1517 = vperm.xlu0 %1516, %v999
    %v1518 = vpop.permute.xlu0 %1517
    %1521 = vset.pattern.permute.xlu0 0
    %1522 = vperm.xlu0 %1521, %v1000
    %v1523 = vpop.permute.xlu0 %1522
    %1526 = vset.pattern.permute.xlu0 0
    %1527 = vperm.xlu0 %1526, %v1001
    %v1528 = vpop.permute.xlu0 %1527
    %1531 = vset.pattern.permute.xlu0 0
    %1532 = vperm.xlu0 %1531, %v1002
    %v1533 = vpop.permute.xlu0 %1532
    %1536 = vset.pattern.permute.xlu0 0
    %1537 = vperm.xlu0 %1536, %v1003
    %v1538 = vpop.permute.xlu0 %1537
    %1541 = vset.pattern.permute.xlu0 0
    %1542 = vperm.xlu0 %1541, %v1004
    %v1543 = vpop.permute.xlu0 %1542
    %1546 = vset.pattern.permute.xlu0 0
    %1547 = vperm.xlu0 %1546, %v1005
    %v1548 = vpop.permute.xlu0 %1547
    %1551 = vset.pattern.permute.xlu0 0
    %1552 = vperm.xlu0 %1551, %v1006
    %v1553 = vpop.permute.xlu0 %1552
    %1556 = vset.pattern.permute.xlu0 0
    %1557 = vperm.xlu0 %1556, %v1007
    %v1558 = vpop.permute.xlu0 %1557
    %1561 = vset.pattern.permute.xlu0 0
    %1562 = vperm.xlu0 %1561, %v1008
    %v1563 = vpop.permute.xlu0 %1562
    %1566 = vset.pattern.permute.xlu0 0
    %1567 = vperm.xlu0 %1566, %v1009
    %v1568 = vpop.permute.xlu0 %1567
    %1571 = vset.pattern.permute.xlu0 0
    %1572 = vperm.xlu0 %1571, %v1010
    %v1573 = vpop.permute.xlu0 %1572
    %1576 = vset.pattern.permute.xlu0 0
    %1577 = vperm.xlu0 %1576, %v1011
    %v1578 = vpop.permute.xlu0 %1577
    %1581 = vset.pattern.permute.xlu0 0
    %1582 = vperm.xlu0 %1581, %v1012
    %v1583 = vpop.permute.xlu0 %1582
    %1586 = vset.pattern.permute.xlu0 0
    %1587 = vperm.xlu0 %1586, %v1013
    %v1588 = vpop.permute.xlu0 %1587
    %1591 = vset.pattern.permute.xlu0 0
    %1592 = vperm.xlu0 %1591, %v1014
    %v1593 = vpop.permute.xlu0 %1592
    %1596 = vset.pattern.permute.xlu0 0
    %1597 = vperm.xlu0 %1596, %v1015
    %v1598 = vpop.permute.xlu0 %1597
    %1601 = vset.pattern.permute.xlu0 0
    %1602 = vperm.xlu0 %1601, %v1016
    %v1603 = vpop.permute.xlu0 %1602
    %1606 = vset.pattern.permute.xlu0 0
    %1607 = vperm.xlu0 %1606, %v1017
    %v1608 = vpop.permute.xlu0 %1607
    %1611 = vset.pattern.permute.xlu0 0
    %1612 = vperm.xlu0 %1611, %v1018
    %v1613 = vpop.permute.xlu0 %1612
    %1616 = vset.pattern.permute.xlu0 0
    %1617 = vperm.xlu0 %1616, %v1019
    %v1618 = vpop.permute.xlu0 %1617
    %1621 = vset.pattern.permute.xlu0 0
    %1622 = vperm.xlu0 %1621, %v1020
    %v1623 = vpop.permute.xlu0 %1622
    %1626 = vset.pattern.permute.xlu0 0
    %1627 = vperm.xlu0 %1626, %v1021
    %v1628 = vpop.permute.xlu0 %1627
    %1631 = vset.pattern.permute.xlu0 0
    %1632 = vperm.xlu0 %1631, %v1022
    %v1633 = vpop.permute.xlu0 %1632
    %1636 = vset.pattern.permute.xlu0 0
    %1637 = vperm.xlu0 %1636, %v1023
    %v1638 = vpop.permute.xlu0 %1637
    %1641 = vset.pattern.permute.xlu0 0
    %1642 = vperm.xlu0 %1641, %v1024
    %v1643 = vpop.permute.xlu0 %1642
    %1646 = vset.pattern.permute.xlu0 0
    %1647 = vperm.xlu0 %1646, %v1025
    %v1648 = vpop.permute.xlu0 %1647
    %1651 = vset.pattern.permute.xlu0 0
    %1652 = vperm.xlu0 %1651, %v1026
    %v1653 = vpop.permute.xlu0 %1652
    %1656 = vset.pattern.permute.xlu0 0
    %1657 = vperm.xlu0 %1656, %v1027
    %v1658 = vpop.permute.xlu0 %1657
    %1661 = vset.pattern.permute.xlu0 0
    %1662 = vperm.xlu0 %1661, %v1028
    %v1663 = vpop.permute.xlu0 %1662
    %1666 = vset.pattern.permute.xlu0 0
    %1667 = vperm.xlu0 %1666, %v1029
    %v1668 = vpop.permute.xlu0 %1667
    %1671 = vset.pattern.permute.xlu0 0
    %1672 = vperm.xlu0 %1671, %v1030
    %v1673 = vpop.permute.xlu0 %1672
    %1676 = vset.pattern.permute.xlu0 0
    %1677 = vperm.xlu0 %1676, %v1031
    %v1678 = vpop.permute.xlu0 %1677
    %1681 = vset.pattern.permute.xlu0 0
    %1682 = vperm.xlu0 %1681, %v1032
    %v1683 = vpop.permute.xlu0 %1682
    %1686 = vset.pattern.permute.xlu0 0
    %1687 = vperm.xlu0 %1686, %v1033
    %v1688 = vpop.permute.xlu0 %1687
    %1691 = vset.pattern.permute.xlu0 0
    %1692 = vperm.xlu0 %1691, %v1034
    %v1693 = vpop.permute.xlu0 %1692
    %1696 = vset.pattern.permute.xlu0 0
    %1697 = vperm.xlu0 %1696, %v1035
    %v1698 = vpop.permute.xlu0 %1697
    %1701 = vset.pattern.permute.xlu0 0
    %1702 = vperm.xlu0 %1701, %v1036
    %v1703 = vpop.permute.xlu0 %1702
    %1706 = vset.pattern.permute.xlu0 0
    %1707 = vperm.xlu0 %1706, %v1037
    %v1708 = vpop.permute.xlu0 %1707
    %1711 = vset.pattern.permute.xlu0 0
    %1712 = vperm.xlu0 %1711, %v1038
    %v1713 = vpop.permute.xlu0 %1712
    %1716 = vset.pattern.permute.xlu0 0
    %1717 = vperm.xlu0 %1716, %v1039
    %v1718 = vpop.permute.xlu0 %1717
    %1721 = vset.pattern.permute.xlu0 0
    %1722 = vperm.xlu0 %1721, %v1040
    %v1723 = vpop.permute.xlu0 %1722
    %1726 = vset.pattern.permute.xlu0 0
    %1727 = vperm.xlu0 %1726, %v1041
    %v1728 = vpop.permute.xlu0 %1727
    %1731 = vset.pattern.permute.xlu0 0
    %1732 = vperm.xlu0 %1731, %v1042
    %v1733 = vpop.permute.xlu0 %1732
    %1736 = vset.pattern.permute.xlu0 0
    %1737 = vperm.xlu0 %1736, %v1043
    %v1738 = vpop.permute.xlu0 %1737
    %1741 = vset.pattern.permute.xlu0 0
    %1742 = vperm.xlu0 %1741, %v1044
    %v1743 = vpop.permute.xlu0 %1742
    %1746 = vset.pattern.permute.xlu0 0
    %1747 = vperm.xlu0 %1746, %v1045
    %v1748 = vpop.permute.xlu0 %1747
    %1751 = vset.pattern.permute.xlu0 0
    %1752 = vperm.xlu0 %1751, %v1046
    %v1753 = vpop.permute.xlu0 %1752
    %1756 = vset.pattern.permute.xlu0 0
    %1757 = vperm.xlu0 %1756, %v1047
    %v1758 = vpop.permute.xlu0 %1757
    %1761 = vset.pattern.permute.xlu0 0
    %1762 = vperm.xlu0 %1761, %v1048
    %v1763 = vpop.permute.xlu0 %1762
    %1766 = vset.pattern.permute.xlu0 0
    %1767 = vperm.xlu0 %1766, %v1049
    %v1768 = vpop.permute.xlu0 %1767
    %1771 = vset.pattern.permute.xlu0 0
    %1772 = vperm.xlu0 %1771, %v1050
    %v1773 = vpop.permute.xlu0 %1772
    %1776 = vset.pattern.permute.xlu0 0
    %1777 = vperm.xlu0 %1776, %v1051
    %v1778 = vpop.permute.xlu0 %1777
    %1781 = vset.pattern.permute.xlu0 0
    %1782 = vperm.xlu0 %1781, %v1052
    %v1783 = vpop.permute.xlu0 %1782
    %1786 = vset.pattern.permute.xlu0 0
    %1787 = vperm.xlu0 %1786, %v1053
    %v1788 = vpop.permute.xlu0 %1787
    %1791 = vset.pattern.permute.xlu0 0
    %1792 = vperm.xlu0 %1791, %v1054
    %v1793 = vpop.permute.xlu0 %1792
    %1796 = vset.pattern.permute.xlu0 0
    %1797 = vperm.xlu0 %1796, %v1055
    %v1798 = vpop.permute.xlu0 %1797
    %1801 = vset.pattern.permute.xlu0 0
    %1802 = vperm.xlu0 %1801, %v1056
    %v1803 = vpop.permute.xlu0 %1802
    %1806 = vset.pattern.permute.xlu0 0
    %1807 = vperm.xlu0 %1806, %v1057
    %v1808 = vpop.permute.xlu0 %1807
    %1811 = vset.pattern.permute.xlu0 0
    %1812 = vperm.xlu0 %1811, %v1058
    %v1813 = vpop.permute.xlu0 %1812
    %1816 = vset.pattern.permute.xlu0 0
    %1817 = vperm.xlu0 %1816, %v1059
    %v1818 = vpop.permute.xlu0 %1817
    %1821 = vset.pattern.permute.xlu0 0
    %1822 = vperm.xlu0 %1821, %v1060
    %v1823 = vpop.permute.xlu0 %1822
    %1826 = vset.pattern.permute.xlu0 0
    %1827 = vperm.xlu0 %1826, %v1061
    %v1828 = vpop.permute.xlu0 %1827
    %1831 = vset.pattern.permute.xlu0 0
    %1832 = vperm.xlu0 %1831, %v1062
    %v1833 = vpop.permute.xlu0 %1832
    %1836 = vset.pattern.permute.xlu0 0
    %1837 = vperm.xlu0 %1836, %v1063
    %v1838 = vpop.permute.xlu0 %1837
    %1841 = vset.pattern.permute.xlu0 0
    %1842 = vperm.xlu0 %1841, %v1064
    %v1843 = vpop.permute.xlu0 %1842
    %1846 = vset.pattern.permute.xlu0 0
    %1847 = vperm.xlu0 %1846, %v1065
    %v1848 = vpop.permute.xlu0 %1847
    %1851 = vset.pattern.permute.xlu0 0
    %1852 = vperm.xlu0 %1851, %v1066
    %v1853 = vpop.permute.xlu0 %1852
    %1856 = vset.pattern.permute.xlu0 0
    %1857 = vperm.xlu0 %1856, %v1067
    %v1858 = vpop.permute.xlu0 %1857
    %1861 = vset.pattern.permute.xlu0 0
    %1862 = vperm.xlu0 %1861, %v1068
    %v1863 = vpop.permute.xlu0 %1862
    %1866 = vset.pattern.permute.xlu0 0
    %1867 = vperm.xlu0 %1866, %v1069
    %v1868 = vpop.permute.xlu0 %1867
    %1871 = vset.pattern.permute.xlu0 0
    %1872 = vperm.xlu0 %1871, %v1070
    %v1873 = vpop.permute.xlu0 %1872
    %1876 = vset.pattern.permute.xlu0 0
    %1877 = vperm.xlu0 %1876, %v1071
    %v1878 = vpop.permute.xlu0 %1877
    %1881 = vset.pattern.permute.xlu0 0
    %1882 = vperm.xlu0 %1881, %v1072
    %v1883 = vpop.permute.xlu0 %1882
    %1886 = vset.pattern.permute.xlu0 0
    %1887 = vperm.xlu0 %1886, %v1073
    %v1888 = vpop.permute.xlu0 %1887
    %1891 = vset.pattern.permute.xlu0 0
    %1892 = vperm.xlu0 %1891, %v1074
    %v1893 = vpop.permute.xlu0 %1892
    %1896 = vset.pattern.permute.xlu0 0
    %1897 = vperm.xlu0 %1896, %v1075
    %v1898 = vpop.permute.xlu0 %1897
    %1901 = vset.pattern.permute.xlu0 0
    %1902 = vperm.xlu0 %1901, %v1076
    %v1903 = vpop.permute.xlu0 %1902
    %1906 = vset.pattern.permute.xlu0 0
    %1907 = vperm.xlu0 %1906, %v1077
    %v1908 = vpop.permute.xlu0 %1907
    %1911 = vset.pattern.permute.xlu0 0
    %1912 = vperm.xlu0 %1911, %v1078
    %v1913 = vpop.permute.xlu0 %1912
    %1916 = vset.pattern.permute.xlu0 0
    %1917 = vperm.xlu0 %1916, %v1079
    %v1918 = vpop.permute.xlu0 %1917
    %1921 = vset.pattern.permute.xlu0 0
    %1922 = vperm.xlu0 %1921, %v1080
    %v1923 = vpop.permute.xlu0 %1922
    %1926 = vset.pattern.permute.xlu0 0
    %1927 = vperm.xlu0 %1926, %v1081
    %v1928 = vpop.permute.xlu0 %1927
    %1931 = vset.pattern.permute.xlu0 0
    %1932 = vperm.xlu0 %1931, %v1082
    %v1933 = vpop.permute.xlu0 %1932
    %1936 = vset.pattern.permute.xlu0 0
    %1937 = vperm.xlu0 %1936, %v1083
    %v1938 = vpop.permute.xlu0 %1937
    %1941 = vset.pattern.permute.xlu0 0
    %1942 = vperm.xlu0 %1941, %v1084
    %v1943 = vpop.permute.xlu0 %1942
    %1946 = vset.pattern.permute.xlu0 0
    %1947 = vperm.xlu0 %1946, %v1085
    %v1948 = vpop.permute.xlu0 %1947
    %1951 = vset.pattern.permute.xlu0 0
    %1952 = vperm.xlu0 %1951, %v1086
    %v1953 = vpop.permute.xlu0 %1952
    %1956 = vset.pattern.permute.xlu0 0
    %1957 = vperm.xlu0 %1956, %v1087
    %v1958 = vpop.permute.xlu0 %1957
    %1961 = vset.pattern.permute.xlu0 0
    %1962 = vperm.xlu0 %1961, %v1088
    %v1963 = vpop.permute.xlu0 %1962
    %1966 = vset.pattern.permute.xlu0 0
    %1967 = vperm.xlu0 %1966, %v1089
    %v1968 = vpop.permute.xlu0 %1967
    %1971 = vset.pattern.permute.xlu0 0
    %1972 = vperm.xlu0 %1971, %v1090
    %v1973 = vpop.permute.xlu0 %1972
    %1976 = vset.pattern.permute.xlu0 0
    %1977 = vperm.xlu0 %1976, %v1091
    %v1978 = vpop.permute.xlu0 %1977
    %1981 = vset.pattern.permute.xlu0 0
    %1982 = vperm.xlu0 %1981, %v1092
    %v1983 = vpop.permute.xlu0 %1982
    %1986 = vset.pattern.permute.xlu0 0
    %1987 = vperm.xlu0 %1986, %v1093
    %v1988 = vpop.permute.xlu0 %1987
    %1991 = vset.pattern.permute.xlu0 0
    %1992 = vperm.xlu0 %1991, %v1094
    %v1993 = vpop.permute.xlu0 %1992
    %1996 = vset.pattern.permute.xlu0 0
    %1997 = vperm.xlu0 %1996, %v1095
    %v1998 = vpop.permute.xlu0 %1997
    %2001 = vset.pattern.permute.xlu0 0
    %2002 = vperm.xlu0 %2001, %v1096
    %v2003 = vpop.permute.xlu0 %2002
    %2006 = vset.pattern.permute.xlu0 0
    %2007 = vperm.xlu0 %2006, %v1097
    %v2008 = vpop.permute.xlu0 %2007
    %2011 = vset.pattern.permute.xlu0 0
    %2012 = vperm.xlu0 %2011, %v1098
    %v2013 = vpop.permute.xlu0 %2012
    %2016 = vset.pattern.permute.xlu0 0
    %2017 = vperm.xlu0 %2016, %v1099
    %v2018 = vpop.permute.xlu0 %2017
    %2021 = vset.pattern.permute.xlu0 0
    %2022 = vperm.xlu0 %2021, %v1100
    %v2023 = vpop.permute.xlu0 %2022
    %2026 = vset.pattern.permute.xlu0 0
    %2027 = vperm.xlu0 %2026, %v1101
    %v2028 = vpop.permute.xlu0 %2027
    %2031 = vset.pattern.permute.xlu0 0
    %2032 = vperm.xlu0 %2031, %v1102
    %v2033 = vpop.permute.xlu0 %2032
    %2036 = vset.pattern.permute.xlu0 0
    %2037 = vperm.xlu0 %2036, %v1103
    %v2038 = vpop.permute.xlu0 %2037
    %2041 = vset.pattern.permute.xlu0 0
    %2042 = vperm.xlu0 %2041, %v1104
    %v2043 = vpop.permute.xlu0 %2042
    %2046 = vset.pattern.permute.xlu0 0
    %2047 = vperm.xlu0 %2046, %v1105
    %v2048 = vpop.permute.xlu0 %2047
    %2051 = vset.pattern.permute.xlu0 0
    %2052 = vperm.xlu0 %2051, %v1106
    %v2053 = vpop.permute.xlu0 %2052
    %2056 = vset.pattern.permute.xlu0 0
    %2057 = vperm.xlu0 %2056, %v1107
    %v2058 = vpop.permute.xlu0 %2057
    %2061 = vset.pattern.permute.xlu0 0
    %2062 = vperm.xlu0 %2061, %v1108
    %v2063 = vpop.permute.xlu0 %2062
    %2066 = vset.pattern.permute.xlu0 0
    %2067 = vperm.xlu0 %2066, %v1109
    %v2068 = vpop.permute.xlu0 %2067
    %2071 = vset.pattern.permute.xlu0 0
    %2072 = vperm.xlu0 %2071, %v1110
    %v2073 = vpop.permute.xlu0 %2072
    %2076 = vset.pattern.permute.xlu0 0
    %2077 = vperm.xlu0 %2076, %v1111
    %v2078 = vpop.permute.xlu0 %2077
    %2081 = vset.pattern.permute.xlu0 0
    %2082 = vperm.xlu0 %2081, %v1112
    %v2083 = vpop.permute.xlu0 %2082
    %2086 = vset.pattern.permute.xlu0 0
    %2087 = vperm.xlu0 %2086, %v1113
    %v2088 = vpop.permute.xlu0 %2087
    %2091 = vset.pattern.permute.xlu0 0
    %2092 = vperm.xlu0 %2091, %v1114
    %v2093 = vpop.permute.xlu0 %2092
    %2096 = vset.pattern.permute.xlu0 0
    %2097 = vperm.xlu0 %2096, %v1115
    %v2098 = vpop.permute.xlu0 %2097
    %2101 = vset.pattern.permute.xlu0 0
    %2102 = vperm.xlu0 %2101, %v1116
    %v2103 = vpop.permute.xlu0 %2102
    %2106 = vset.pattern.permute.xlu0 0
    %2107 = vperm.xlu0 %2106, %v1117
    %v2108 = vpop.permute.xlu0 %2107
    %2111 = vset.pattern.permute.xlu0 0
    %2112 = vperm.xlu0 %2111, %v1118
    %v2113 = vpop.permute.xlu0 %2112
    %2116 = vset.pattern.permute.xlu0 0
    %2117 = vperm.xlu0 %2116, %v1119
    %v2118 = vpop.permute.xlu0 %2117
    %v2920 = vunpack.c.l.b16 %v22
    %v2921 = vunpack.c.h.b16 %v22
    %v2922 = vunpack.c.l.b16 %v23
    %v2923 = vunpack.c.h.b16 %v23
    %v2924 = vunpack.c.l.b16 %v24
    %v2925 = vunpack.c.h.b16 %v24
    %v2926 = vunpack.c.l.b16 %v25
    %v2927 = vunpack.c.l.b16 %v26
    %v2928 = vunpack.c.h.b16 %v26
    %v2929 = vunpack.c.l.b16 %v27
    %v2930 = vunpack.c.h.b16 %v27
    %v2931 = vunpack.c.l.b16 %v28
    %v2932 = vunpack.c.h.b16 %v28
    %v2933 = vunpack.c.l.b16 %v29
    %v2934 = vunpack.c.l.b16 %v30
    %v2935 = vunpack.c.h.b16 %v30
    %v2936 = vunpack.c.l.b16 %v31
    %v2937 = vunpack.c.h.b16 %v31
    %v2938 = vunpack.c.l.b16 %v32
    %v2939 = vunpack.c.h.b16 %v32
    %v2940 = vunpack.c.l.b16 %v33
    %v2941 = vunpack.c.l.b16 %v34
    %v2942 = vunpack.c.h.b16 %v34
    %v2943 = vunpack.c.l.b16 %v35
    %v2944 = vunpack.c.h.b16 %v35
    %v2945 = vunpack.c.l.b16 %v36
    %v2946 = vunpack.c.h.b16 %v36
    %v2947 = vunpack.c.l.b16 %v37
    %v2948 = vunpack.c.l.b16 %v38
    %v2949 = vunpack.c.h.b16 %v38
    %v2950 = vunpack.c.l.b16 %v39
    %v2951 = vunpack.c.h.b16 %v39
    %v2952 = vunpack.c.l.b16 %v40
    %v2953 = vunpack.c.h.b16 %v40
    %v2954 = vunpack.c.l.b16 %v41
    %v2955 = vunpack.c.l.b16 %v42
    %v2956 = vunpack.c.h.b16 %v42
    %v2957 = vunpack.c.l.b16 %v43
    %v2958 = vunpack.c.h.b16 %v43
    %v2959 = vunpack.c.l.b16 %v44
    %v2960 = vunpack.c.h.b16 %v44
    %v2961 = vunpack.c.l.b16 %v45
    %v2962 = vunpack.c.l.b16 %v46
    %v2963 = vunpack.c.h.b16 %v46
    %v2964 = vunpack.c.l.b16 %v47
    %v2965 = vunpack.c.h.b16 %v47
    %v2966 = vunpack.c.l.b16 %v48
    %v2967 = vunpack.c.h.b16 %v48
    %v2968 = vunpack.c.l.b16 %v49
    %v2969 = vunpack.c.l.b16 %v50
    %v2970 = vunpack.c.h.b16 %v50
    %v2971 = vunpack.c.l.b16 %v51
    %v2972 = vunpack.c.h.b16 %v51
    %v2973 = vunpack.c.l.b16 %v52
    %v2974 = vunpack.c.h.b16 %v52
    %v2975 = vunpack.c.l.b16 %v53
    %v2976 = vunpack.c.l.b16 %v54
    %v2977 = vunpack.c.h.b16 %v54
    %v2978 = vunpack.c.l.b16 %v55
    %v2979 = vunpack.c.h.b16 %v55
    %v2980 = vunpack.c.l.b16 %v56
    %v2981 = vunpack.c.h.b16 %v56
    %v2982 = vunpack.c.l.b16 %v57
    %v2983 = vunpack.c.l.b16 %v58
    %v2984 = vunpack.c.h.b16 %v58
    %v2985 = vunpack.c.l.b16 %v59
    %v2986 = vunpack.c.h.b16 %v59
    %v2987 = vunpack.c.l.b16 %v60
    %v2988 = vunpack.c.h.b16 %v60
    %v2989 = vunpack.c.l.b16 %v61
    %v2990 = vunpack.c.l.b16 %v62
    %v2991 = vunpack.c.h.b16 %v62
    %v2992 = vunpack.c.l.b16 %v63
    %v2993 = vunpack.c.h.b16 %v63
    %v2994 = vunpack.c.l.b16 %v64
    %v2995 = vunpack.c.h.b16 %v64
    %v2996 = vunpack.c.l.b16 %v65
    %v2997 = vunpack.c.l.b16 %v66
    %v2998 = vunpack.c.h.b16 %v66
    %v2999 = vunpack.c.l.b16 %v67
    %v3000 = vunpack.c.h.b16 %v67
    %v3001 = vunpack.c.l.b16 %v68
    %v3002 = vunpack.c.h.b16 %v68
    %v3003 = vunpack.c.l.b16 %v69
    %v3004 = vunpack.c.l.b16 %v70
    %v3005 = vunpack.c.h.b16 %v70
    %v3006 = vunpack.c.l.b16 %v71
    %v3007 = vunpack.c.h.b16 %v71
    %v3008 = vunpack.c.l.b16 %v72
    %v3009 = vunpack.c.h.b16 %v72
    %v3010 = vunpack.c.l.b16 %v73
    %v3011 = vunpack.c.l.b16 %v74
    %v3012 = vunpack.c.h.b16 %v74
    %v3013 = vunpack.c.l.b16 %v75
    %v3014 = vunpack.c.h.b16 %v75
    %v3015 = vunpack.c.l.b16 %v76
    %v3016 = vunpack.c.h.b16 %v76
    %v3017 = vunpack.c.l.b16 %v77
    %v3018 = vunpack.c.l.b16 %v78
    %v3019 = vunpack.c.h.b16 %v78
    %v3020 = vunpack.c.l.b16 %v79
    %v3021 = vunpack.c.h.b16 %v79
    %v3022 = vunpack.c.l.b16 %v80
    %v3023 = vunpack.c.h.b16 %v80
    %v3024 = vunpack.c.l.b16 %v81
    %v3025 = vunpack.c.l.b16 %v82
    %v3026 = vunpack.c.h.b16 %v82
    %v3027 = vunpack.c.l.b16 %v83
    %v3028 = vunpack.c.h.b16 %v83
    %v3029 = vunpack.c.l.b16 %v84
    %v3030 = vunpack.c.h.b16 %v84
    %v3031 = vunpack.c.l.b16 %v85
    %v3032 = vunpack.c.l.b16 %v86
    %v3033 = vunpack.c.h.b16 %v86
    %v3034 = vunpack.c.l.b16 %v87
    %v3035 = vunpack.c.h.b16 %v87
    %v3036 = vunpack.c.l.b16 %v88
    %v3037 = vunpack.c.h.b16 %v88
    %v3038 = vunpack.c.l.b16 %v89
    %v3039 = vunpack.c.l.b16 %v90
    %v3040 = vunpack.c.h.b16 %v90
    %v3041 = vunpack.c.l.b16 %v91
    %v3042 = vunpack.c.h.b16 %v91
    %v3043 = vunpack.c.l.b16 %v92
    %v3044 = vunpack.c.h.b16 %v92
    %v3045 = vunpack.c.l.b16 %v93
    %v3046 = vunpack.c.l.b16 %v94
    %v3047 = vunpack.c.h.b16 %v94
    %v3048 = vunpack.c.l.b16 %v95
    %v3049 = vunpack.c.h.b16 %v95
    %v3050 = vunpack.c.l.b16 %v96
    %v3051 = vunpack.c.h.b16 %v96
    %v3052 = vunpack.c.l.b16 %v97
    %v3053 = vunpack.c.l.b16 %v98
    %v3054 = vunpack.c.h.b16 %v98
    %v3055 = vunpack.c.l.b16 %v99
    %v3056 = vunpack.c.h.b16 %v99
    %v3057 = vunpack.c.l.b16 %v100
    %v3058 = vunpack.c.h.b16 %v100
    %v3059 = vunpack.c.l.b16 %v101
    %v3060 = vunpack.c.l.b16 %v102
    %v3061 = vunpack.c.h.b16 %v102
    %v3062 = vunpack.c.l.b16 %v103
    %v3063 = vunpack.c.h.b16 %v103
    %v3064 = vunpack.c.l.b16 %v104
    %v3065 = vunpack.c.h.b16 %v104
    %v3066 = vunpack.c.l.b16 %v105
    %v3067 = vunpack.c.l.b16 %v106
    %v3068 = vunpack.c.h.b16 %v106
    %v3069 = vunpack.c.l.b16 %v107
    %v3070 = vunpack.c.h.b16 %v107
    %v3071 = vunpack.c.l.b16 %v108
    %v3072 = vunpack.c.h.b16 %v108
    %v3073 = vunpack.c.l.b16 %v109
    %v3074 = vunpack.c.l.b16 %v110
    %v3075 = vunpack.c.h.b16 %v110
    %v3076 = vunpack.c.l.b16 %v111
    %v3077 = vunpack.c.h.b16 %v111
    %v3078 = vunpack.c.l.b16 %v112
    %v3079 = vunpack.c.h.b16 %v112
    %v3080 = vunpack.c.l.b16 %v113
    %v3081 = vunpack.c.l.b16 %v114
    %v3082 = vunpack.c.h.b16 %v114
    %v3083 = vunpack.c.l.b16 %v115
    %v3084 = vunpack.c.h.b16 %v115
    %v3085 = vunpack.c.l.b16 %v116
    %v3086 = vunpack.c.h.b16 %v116
    %v3087 = vunpack.c.l.b16 %v117
    %v3088 = vunpack.c.l.b16 %v118
    %v3089 = vunpack.c.h.b16 %v118
    %v3090 = vunpack.c.l.b16 %v119
    %v3091 = vunpack.c.h.b16 %v119
    %v3092 = vunpack.c.l.b16 %v120
    %v3093 = vunpack.c.h.b16 %v120
    %v3094 = vunpack.c.l.b16 %v121
    %v3095 = vunpack.c.l.b16 %v122
    %v3096 = vunpack.c.h.b16 %v122
    %v3097 = vunpack.c.l.b16 %v123
    %v3098 = vunpack.c.h.b16 %v123
    %v3099 = vunpack.c.l.b16 %v124
    %v3100 = vunpack.c.h.b16 %v124
    %v3101 = vunpack.c.l.b16 %v125
    %v3102 = vunpack.c.l.b16 %v126
    %v3103 = vunpack.c.h.b16 %v126
    %v3104 = vunpack.c.l.b16 %v127
    %v3105 = vunpack.c.h.b16 %v127
    %v3106 = vunpack.c.l.b16 %v128
    %v3107 = vunpack.c.h.b16 %v128
    %v3108 = vunpack.c.l.b16 %v129
    %v3109 = vunpack.c.l.b16 %v130
    %v3110 = vunpack.c.h.b16 %v130
    %v3111 = vunpack.c.l.b16 %v131
    %v3112 = vunpack.c.h.b16 %v131
    %v3113 = vunpack.c.l.b16 %v132
    %v3114 = vunpack.c.h.b16 %v132
    %v3115 = vunpack.c.l.b16 %v133
    %v3116 = vunpack.c.l.b16 %v134
    %v3117 = vunpack.c.h.b16 %v134
    %v3118 = vunpack.c.l.b16 %v135
    %v3119 = vunpack.c.h.b16 %v135
    %v3120 = vunpack.c.l.b16 %v136
    %v3121 = vunpack.c.h.b16 %v136
    %v3122 = vunpack.c.l.b16 %v137
    %v3123 = vunpack.c.l.b16 %v138
    %v3124 = vunpack.c.h.b16 %v138
    %v3125 = vunpack.c.l.b16 %v139
    %v3126 = vunpack.c.h.b16 %v139
    %v3127 = vunpack.c.l.b16 %v140
    %v3128 = vunpack.c.h.b16 %v140
    %v3129 = vunpack.c.l.b16 %v141
    %v3130 = vunpack.c.l.b16 %v142
    %v3131 = vunpack.c.h.b16 %v142
    %v3132 = vunpack.c.l.b16 %v143
    %v3133 = vunpack.c.h.b16 %v143
    %v3134 = vunpack.c.l.b16 %v144
    %v3135 = vunpack.c.h.b16 %v144
    %v3136 = vunpack.c.l.b16 %v145
    %v3137 = vunpack.c.l.b16 %v146
    %v3138 = vunpack.c.h.b16 %v146
    %v3139 = vunpack.c.l.b16 %v147
    %v3140 = vunpack.c.h.b16 %v147
    %v3141 = vunpack.c.l.b16 %v148
    %v3142 = vunpack.c.h.b16 %v148
    %v3143 = vunpack.c.l.b16 %v149
    %v3144 = vunpack.c.l.b16 %v150
    %v3145 = vunpack.c.h.b16 %v150
    %v3146 = vunpack.c.l.b16 %v151
    %v3147 = vunpack.c.h.b16 %v151
    %v3148 = vunpack.c.l.b16 %v152
    %v3149 = vunpack.c.h.b16 %v152
    %v3150 = vunpack.c.l.b16 %v153
    %v3151 = vunpack.c.l.b16 %v154
    %v3152 = vunpack.c.h.b16 %v154
    %v3153 = vunpack.c.l.b16 %v155
    %v3154 = vunpack.c.h.b16 %v155
    %v3155 = vunpack.c.l.b16 %v156
    %v3156 = vunpack.c.h.b16 %v156
    %v3157 = vunpack.c.l.b16 %v157
    %v3158 = vunpack.c.l.b16 %v158
    %v3159 = vunpack.c.h.b16 %v158
    %v3160 = vunpack.c.l.b16 %v159
    %v3161 = vunpack.c.h.b16 %v159
    %v3162 = vunpack.c.l.b16 %v160
    %v3163 = vunpack.c.h.b16 %v160
    %v3164 = vunpack.c.l.b16 %v161
    %v3165 = vunpack.c.l.b16 %v162
    %v3166 = vunpack.c.h.b16 %v162
    %v3167 = vunpack.c.l.b16 %v163
    %v3168 = vunpack.c.h.b16 %v163
    %v3169 = vunpack.c.l.b16 %v164
    %v3170 = vunpack.c.h.b16 %v164
    %v3171 = vunpack.c.l.b16 %v165
    %v3172 = vunpack.c.l.b16 %v166
    %v3173 = vunpack.c.h.b16 %v166
    %v3174 = vunpack.c.l.b16 %v167
    %v3175 = vunpack.c.h.b16 %v167
    %v3176 = vunpack.c.l.b16 %v168
    %v3177 = vunpack.c.h.b16 %v168
    %v3178 = vunpack.c.l.b16 %v169
    %v3179 = vunpack.c.l.b16 %v170
    %v3180 = vunpack.c.h.b16 %v170
    %v3181 = vunpack.c.l.b16 %v171
    %v3182 = vunpack.c.h.b16 %v171
    %v3183 = vunpack.c.l.b16 %v172
    %v3184 = vunpack.c.h.b16 %v172
    %v3185 = vunpack.c.l.b16 %v173
    %v3186 = vunpack.c.l.b16 %v174
    %v3187 = vunpack.c.h.b16 %v174
    %v3188 = vunpack.c.l.b16 %v175
    %v3189 = vunpack.c.h.b16 %v175
    %v3190 = vunpack.c.l.b16 %v176
    %v3191 = vunpack.c.h.b16 %v176
    %v3192 = vunpack.c.l.b16 %v177
    %v3193 = vunpack.c.l.b16 %v178
    %v3194 = vunpack.c.h.b16 %v178
    %v3195 = vunpack.c.l.b16 %v179
    %v3196 = vunpack.c.h.b16 %v179
    %v3197 = vunpack.c.l.b16 %v180
    %v3198 = vunpack.c.h.b16 %v180
    %v3199 = vunpack.c.l.b16 %v181
    %v3200 = vunpack.c.l.b16 %v182
    %v3201 = vunpack.c.h.b16 %v182
    %v3202 = vunpack.c.l.b16 %v183
    %v3203 = vunpack.c.h.b16 %v183
    %v3204 = vunpack.c.l.b16 %v184
    %v3205 = vunpack.c.h.b16 %v184
    %v3206 = vunpack.c.l.b16 %v185
    %v3207 = vunpack.c.l.b16 %v186
    %v3208 = vunpack.c.h.b16 %v186
    %v3209 = vunpack.c.l.b16 %v187
    %v3210 = vunpack.c.h.b16 %v187
    %v3211 = vunpack.c.l.b16 %v188
    %v3212 = vunpack.c.h.b16 %v188
    %v3213 = vunpack.c.l.b16 %v189
    %v3214 = vunpack.c.l.b16 %v190
    %v3215 = vunpack.c.h.b16 %v190
    %v3216 = vunpack.c.l.b16 %v191
    %v3217 = vunpack.c.h.b16 %v191
    %v3218 = vunpack.c.l.b16 %v192
    %v3219 = vunpack.c.h.b16 %v192
    %v3220 = vunpack.c.l.b16 %v193
    %v3221 = vunpack.c.l.b16 %v194
    %v3222 = vunpack.c.h.b16 %v194
    %v3223 = vunpack.c.l.b16 %v195
    %v3224 = vunpack.c.h.b16 %v195
    %v3225 = vunpack.c.l.b16 %v196
    %v3226 = vunpack.c.h.b16 %v196
    %v3227 = vunpack.c.l.b16 %v197
    %v3228 = vunpack.c.l.b16 %v198
    %v3229 = vunpack.c.h.b16 %v198
    %v3230 = vunpack.c.l.b16 %v199
    %v3231 = vunpack.c.h.b16 %v199
    %v3232 = vunpack.c.l.b16 %v200
    %v3233 = vunpack.c.h.b16 %v200
    %v3234 = vunpack.c.l.b16 %v201
    %v3235 = vunpack.c.l.b16 %v202
    %v3236 = vunpack.c.h.b16 %v202
    %v3237 = vunpack.c.l.b16 %v203
    %v3238 = vunpack.c.h.b16 %v203
    %v3239 = vunpack.c.l.b16 %v204
    %v3240 = vunpack.c.h.b16 %v204
    %v3241 = vunpack.c.l.b16 %v205
    %v3242 = vunpack.c.l.b16 %v206
    %v3243 = vunpack.c.h.b16 %v206
    %v3244 = vunpack.c.l.b16 %v207
    %v3245 = vunpack.c.h.b16 %v207
    %v3246 = vunpack.c.l.b16 %v208
    %v3247 = vunpack.c.h.b16 %v208
    %v3248 = vunpack.c.l.b16 %v209
    %v3249 = vunpack.c.l.b16 %v210
    %v3250 = vunpack.c.h.b16 %v210
    %v3251 = vunpack.c.l.b16 %v211
    %v3252 = vunpack.c.h.b16 %v211
    %v3253 = vunpack.c.l.b16 %v212
    %v3254 = vunpack.c.h.b16 %v212
    %v3255 = vunpack.c.l.b16 %v213
    %v3256 = vunpack.c.l.b16 %v214
    %v3257 = vunpack.c.h.b16 %v214
    %v3258 = vunpack.c.l.b16 %v215
    %v3259 = vunpack.c.h.b16 %v215
    %v3260 = vunpack.c.l.b16 %v216
    %v3261 = vunpack.c.h.b16 %v216
    %v3262 = vunpack.c.l.b16 %v217
    %v3263 = vunpack.c.l.b16 %v218
    %v3264 = vunpack.c.h.b16 %v218
    %v3265 = vunpack.c.l.b16 %v219
    %v3266 = vunpack.c.h.b16 %v219
    %v3267 = vunpack.c.l.b16 %v220
    %v3268 = vunpack.c.h.b16 %v220
    %v3269 = vunpack.c.l.b16 %v221
    %v3270 = vunpack.c.l.b16 %v222
    %v3271 = vunpack.c.h.b16 %v222
    %v3272 = vunpack.c.l.b16 %v223
    %v3273 = vunpack.c.h.b16 %v223
    %v3274 = vunpack.c.l.b16 %v224
    %v3275 = vunpack.c.h.b16 %v224
    %v3276 = vunpack.c.l.b16 %v225
    %v3277 = vunpack.c.l.b16 %v226
    %v3278 = vunpack.c.h.b16 %v226
    %v3279 = vunpack.c.l.b16 %v227
    %v3280 = vunpack.c.h.b16 %v227
    %v3281 = vunpack.c.l.b16 %v228
    %v3282 = vunpack.c.h.b16 %v228
    %v3283 = vunpack.c.l.b16 %v229
    %v3284 = vunpack.c.l.b16 %v230
    %v3285 = vunpack.c.h.b16 %v230
    %v3286 = vunpack.c.l.b16 %v231
    %v3287 = vunpack.c.h.b16 %v231
    %v3288 = vunpack.c.l.b16 %v232
    %v3289 = vunpack.c.h.b16 %v232
    %v3290 = vunpack.c.l.b16 %v233
    %v3291 = vunpack.c.l.b16 %v234
    %v3292 = vunpack.c.h.b16 %v234
    %v3293 = vunpack.c.l.b16 %v235
    %v3294 = vunpack.c.h.b16 %v235
    %v3295 = vunpack.c.l.b16 %v236
    %v3296 = vunpack.c.h.b16 %v236
    %v3297 = vunpack.c.l.b16 %v237
    %v3298 = vunpack.c.l.b16 %v238
    %v3299 = vunpack.c.h.b16 %v238
    %v3300 = vunpack.c.l.b16 %v239
    %v3301 = vunpack.c.h.b16 %v239
    %v3302 = vunpack.c.l.b16 %v240
    %v3303 = vunpack.c.h.b16 %v240
    %v3304 = vunpack.c.l.b16 %v241
    %v3305 = vunpack.c.l.b16 %v242
    %v3306 = vunpack.c.h.b16 %v242
    %v3307 = vunpack.c.l.b16 %v243
    %v3308 = vunpack.c.h.b16 %v243
    %v3309 = vunpack.c.l.b16 %v244
    %v3310 = vunpack.c.h.b16 %v244
    %v3311 = vunpack.c.l.b16 %v245
    %v3312 = vunpack.c.l.b16 %v246
    %v3313 = vunpack.c.h.b16 %v246
    %v3314 = vunpack.c.l.b16 %v247
    %v3315 = vunpack.c.h.b16 %v247
    %v3316 = vunpack.c.l.b16 %v248
    %v3317 = vunpack.c.h.b16 %v248
    %v3318 = vunpack.c.l.b16 %v249
    %v3319 = vunpack.c.l.b16 %v250
    %v3320 = vunpack.c.h.b16 %v250
    %v3321 = vunpack.c.l.b16 %v251
    %v3322 = vunpack.c.h.b16 %v251
    %v3323 = vunpack.c.l.b16 %v252
    %v3324 = vunpack.c.h.b16 %v252
    %v3325 = vunpack.c.l.b16 %v253
    %v3326 = vunpack.c.l.b16 %v254
    %v3327 = vunpack.c.h.b16 %v254
    %v3328 = vunpack.c.l.b16 %v255
    %v3329 = vunpack.c.h.b16 %v255
    %v3330 = vunpack.c.l.b16 %v256
    %v3331 = vunpack.c.h.b16 %v256
    %v3332 = vunpack.c.l.b16 %v257
    %v3333 = vunpack.c.l.b16 %v258
    %v3334 = vunpack.c.h.b16 %v258
    %v3335 = vunpack.c.l.b16 %v259
    %v3336 = vunpack.c.h.b16 %v259
    %v3337 = vunpack.c.l.b16 %v260
    %v3338 = vunpack.c.h.b16 %v260
    %v3339 = vunpack.c.l.b16 %v261
    %v3340 = vunpack.c.l.b16 %v262
    %v3341 = vunpack.c.h.b16 %v262
    %v3342 = vunpack.c.l.b16 %v263
    %v3343 = vunpack.c.h.b16 %v263
    %v3344 = vunpack.c.l.b16 %v264
    %v3345 = vunpack.c.h.b16 %v264
    %v3346 = vunpack.c.l.b16 %v265
    %v3347 = vunpack.c.l.b16 %v266
    %v3348 = vunpack.c.h.b16 %v266
    %v3349 = vunpack.c.l.b16 %v267
    %v3350 = vunpack.c.h.b16 %v267
    %v3351 = vunpack.c.l.b16 %v268
    %v3352 = vunpack.c.h.b16 %v268
    %v3353 = vunpack.c.l.b16 %v269
    %v3354 = vunpack.c.l.b16 %v270
    %v3355 = vunpack.c.h.b16 %v270
    %v3356 = vunpack.c.l.b16 %v271
    %v3357 = vunpack.c.h.b16 %v271
    %v3358 = vunpack.c.l.b16 %v272
    %v3359 = vunpack.c.h.b16 %v272
    %v3360 = vunpack.c.l.b16 %v273
    %v3361 = vunpack.c.l.b16 %v274
    %v3362 = vunpack.c.h.b16 %v274
    %v3363 = vunpack.c.l.b16 %v275
    %v3364 = vunpack.c.h.b16 %v275
    %v3365 = vunpack.c.l.b16 %v276
    %v3366 = vunpack.c.h.b16 %v276
    %v3367 = vunpack.c.l.b16 %v277
    %v3368 = vunpack.c.l.b16 %v278
    %v3369 = vunpack.c.h.b16 %v278
    %v3370 = vunpack.c.l.b16 %v279
    %v3371 = vunpack.c.h.b16 %v279
    %v3372 = vunpack.c.l.b16 %v280
    %v3373 = vunpack.c.h.b16 %v280
    %v3374 = vunpack.c.l.b16 %v281
    %v3375 = vunpack.c.l.b16 %v282
    %v3376 = vunpack.c.h.b16 %v282
    %v3377 = vunpack.c.l.b16 %v283
    %v3378 = vunpack.c.h.b16 %v283
    %v3379 = vunpack.c.l.b16 %v284
    %v3380 = vunpack.c.h.b16 %v284
    %v3381 = vunpack.c.l.b16 %v285
    %v3382 = vunpack.c.l.b16 %v286
    %v3383 = vunpack.c.h.b16 %v286
    %v3384 = vunpack.c.l.b16 %v287
    %v3385 = vunpack.c.h.b16 %v287
    %v3386 = vunpack.c.l.b16 %v288
    %v3387 = vunpack.c.h.b16 %v288
    %v3388 = vunpack.c.l.b16 %v289
    %v3389 = vunpack.c.l.b16 %v290
    %v3390 = vunpack.c.h.b16 %v290
    %v3391 = vunpack.c.l.b16 %v291
    %v3392 = vunpack.c.h.b16 %v291
    %v3393 = vunpack.c.l.b16 %v292
    %v3394 = vunpack.c.h.b16 %v292
    %v3395 = vunpack.c.l.b16 %v293
    %v3396 = vunpack.c.l.b16 %v294
    %v3397 = vunpack.c.h.b16 %v294
    %v3398 = vunpack.c.l.b16 %v295
    %v3399 = vunpack.c.h.b16 %v295
    %v3400 = vunpack.c.l.b16 %v296
    %v3401 = vunpack.c.h.b16 %v296
    %v3402 = vunpack.c.l.b16 %v297
    %v3403 = vunpack.c.l.b16 %v298
    %v3404 = vunpack.c.h.b16 %v298
    %v3405 = vunpack.c.l.b16 %v299
    %v3406 = vunpack.c.h.b16 %v299
    %v3407 = vunpack.c.l.b16 %v300
    %v3408 = vunpack.c.h.b16 %v300
    %v3409 = vunpack.c.l.b16 %v301
    %v3410 = vunpack.c.l.b16 %v302
    %v3411 = vunpack.c.h.b16 %v302
    %v3412 = vunpack.c.l.b16 %v303
    %v3413 = vunpack.c.h.b16 %v303
    %v3414 = vunpack.c.l.b16 %v304
    %v3415 = vunpack.c.h.b16 %v304
    %v3416 = vunpack.c.l.b16 %v305
    %v3417 = vunpack.c.l.b16 %v306
    %v3418 = vunpack.c.h.b16 %v306
    %v3419 = vunpack.c.l.b16 %v307
    %v3420 = vunpack.c.h.b16 %v307
    %v3421 = vunpack.c.l.b16 %v308
    %v3422 = vunpack.c.h.b16 %v308
    %v3423 = vunpack.c.l.b16 %v309
    %v3424 = vunpack.c.l.b16 %v310
    %v3425 = vunpack.c.h.b16 %v310
    %v3426 = vunpack.c.l.b16 %v311
    %v3427 = vunpack.c.h.b16 %v311
    %v3428 = vunpack.c.l.b16 %v312
    %v3429 = vunpack.c.h.b16 %v312
    %v3430 = vunpack.c.l.b16 %v313
    %v3431 = vunpack.c.l.b16 %v314
    %v3432 = vunpack.c.h.b16 %v314
    %v3433 = vunpack.c.l.b16 %v315
    %v3434 = vunpack.c.h.b16 %v315
    %v3435 = vunpack.c.l.b16 %v316
    %v3436 = vunpack.c.h.b16 %v316
    %v3437 = vunpack.c.l.b16 %v317
    %v3438 = vunpack.c.l.b16 %v318
    %v3439 = vunpack.c.h.b16 %v318
    %v3440 = vunpack.c.l.b16 %v319
    %v3441 = vunpack.c.h.b16 %v319
    %v3442 = vunpack.c.l.b16 %v320
    %v3443 = vunpack.c.h.b16 %v320
    %v3444 = vunpack.c.l.b16 %v321
    %v3445 = vunpack.c.l.b16 %v322
    %v3446 = vunpack.c.h.b16 %v322
    %v3447 = vunpack.c.l.b16 %v323
    %v3448 = vunpack.c.h.b16 %v323
    %v3449 = vunpack.c.l.b16 %v324
    %v3450 = vunpack.c.h.b16 %v324
    %v3451 = vunpack.c.l.b16 %v325
    %v3452 = vunpack.c.l.b16 %v326
    %v3453 = vunpack.c.h.b16 %v326
    %v3454 = vunpack.c.l.b16 %v327
    %v3455 = vunpack.c.h.b16 %v327
    %v3456 = vunpack.c.l.b16 %v328
    %v3457 = vunpack.c.h.b16 %v328
    %v3458 = vunpack.c.l.b16 %v329
    %v3459 = vunpack.c.l.b16 %v330
    %v3460 = vunpack.c.h.b16 %v330
    %v3461 = vunpack.c.l.b16 %v331
    %v3462 = vunpack.c.h.b16 %v331
    %v3463 = vunpack.c.l.b16 %v332
    %v3464 = vunpack.c.h.b16 %v332
    %v3465 = vunpack.c.l.b16 %v333
    %v3466 = vunpack.c.l.b16 %v334
    %v3467 = vunpack.c.h.b16 %v334
    %v3468 = vunpack.c.l.b16 %v335
    %v3469 = vunpack.c.h.b16 %v335
    %v3470 = vunpack.c.l.b16 %v336
    %v3471 = vunpack.c.h.b16 %v336
    %v3472 = vunpack.c.l.b16 %v337
    %v3473 = vunpack.c.l.b16 %v338
    %v3474 = vunpack.c.h.b16 %v338
    %v3475 = vunpack.c.l.b16 %v339
    %v3476 = vunpack.c.h.b16 %v339
    %v3477 = vunpack.c.l.b16 %v340
    %v3478 = vunpack.c.h.b16 %v340
    %v3479 = vunpack.c.l.b16 %v341
    %v3480 = vunpack.c.l.b16 %v342
    %v3481 = vunpack.c.h.b16 %v342
    %v3482 = vunpack.c.l.b16 %v343
    %v3483 = vunpack.c.h.b16 %v343
    %v3484 = vunpack.c.l.b16 %v344
    %v3485 = vunpack.c.h.b16 %v344
    %v3486 = vunpack.c.l.b16 %v345
    %v3487 = vunpack.c.l.b16 %v346
    %v3488 = vunpack.c.h.b16 %v346
    %v3489 = vunpack.c.l.b16 %v347
    %v3490 = vunpack.c.h.b16 %v347
    %v3491 = vunpack.c.l.b16 %v348
    %v3492 = vunpack.c.h.b16 %v348
    %v3493 = vunpack.c.l.b16 %v349
    %v3494 = vunpack.c.l.b16 %v350
    %v3495 = vunpack.c.h.b16 %v350
    %v3496 = vunpack.c.l.b16 %v351
    %v3497 = vunpack.c.h.b16 %v351
    %v3498 = vunpack.c.l.b16 %v352
    %v3499 = vunpack.c.h.b16 %v352
    %v3500 = vunpack.c.l.b16 %v353
    %v3501 = vunpack.c.l.b16 %v354
    %v3502 = vunpack.c.h.b16 %v354
    %v3503 = vunpack.c.l.b16 %v355
    %v3504 = vunpack.c.h.b16 %v355
    %v3505 = vunpack.c.l.b16 %v356
    %v3506 = vunpack.c.h.b16 %v356
    %v3507 = vunpack.c.l.b16 %v357
    %v3508 = vunpack.c.l.b16 %v358
    %v3509 = vunpack.c.h.b16 %v358
    %v3510 = vunpack.c.l.b16 %v359
    %v3511 = vunpack.c.h.b16 %v359
    %v3512 = vunpack.c.l.b16 %v360
    %v3513 = vunpack.c.h.b16 %v360
    %v3514 = vunpack.c.l.b16 %v361
    %v3515 = vunpack.c.l.b16 %v362
    %v3516 = vunpack.c.h.b16 %v362
    %v3517 = vunpack.c.l.b16 %v363
    %v3518 = vunpack.c.h.b16 %v363
    %v3519 = vunpack.c.l.b16 %v364
    %v3520 = vunpack.c.h.b16 %v364
    %v3521 = vunpack.c.l.b16 %v365
    %v3522 = vunpack.c.l.b16 %v366
    %v3523 = vunpack.c.h.b16 %v366
    %v3524 = vunpack.c.l.b16 %v367
    %v3525 = vunpack.c.h.b16 %v367
    %v3526 = vunpack.c.l.b16 %v368
    %v3527 = vunpack.c.h.b16 %v368
    %v3528 = vunpack.c.l.b16 %v369
    %v3529 = vunpack.c.l.b16 %v370
    %v3530 = vunpack.c.h.b16 %v370
    %v3531 = vunpack.c.l.b16 %v371
    %v3532 = vunpack.c.h.b16 %v371
    %v3533 = vunpack.c.l.b16 %v372
    %v3534 = vunpack.c.h.b16 %v372
    %v3535 = vunpack.c.l.b16 %v373
    %v3536 = vunpack.c.l.b16 %v374
    %v3537 = vunpack.c.h.b16 %v374
    %v3538 = vunpack.c.l.b16 %v375
    %v3539 = vunpack.c.h.b16 %v375
    %v3540 = vunpack.c.l.b16 %v376
    %v3541 = vunpack.c.h.b16 %v376
    %v3542 = vunpack.c.l.b16 %v377
    %v3543 = vunpack.c.l.b16 %v378
    %v3544 = vunpack.c.h.b16 %v378
    %v3545 = vunpack.c.l.b16 %v379
    %v3546 = vunpack.c.h.b16 %v379
    %v3547 = vunpack.c.l.b16 %v380
    %v3548 = vunpack.c.h.b16 %v380
    %v3549 = vunpack.c.l.b16 %v381
    %v3550 = vunpack.c.l.b16 %v382
    %v3551 = vunpack.c.h.b16 %v382
    %v3552 = vunpack.c.l.b16 %v383
    %v3553 = vunpack.c.h.b16 %v383
    %v3554 = vunpack.c.l.b16 %v384
    %v3555 = vunpack.c.h.b16 %v384
    %v3556 = vunpack.c.l.b16 %v385
    %v3557 = vunpack.c.l.b16 %v386
    %v3558 = vunpack.c.h.b16 %v386
    %v3559 = vunpack.c.l.b16 %v387
    %v3560 = vunpack.c.h.b16 %v387
    %v3561 = vunpack.c.l.b16 %v388
    %v3562 = vunpack.c.h.b16 %v388
    %v3563 = vunpack.c.l.b16 %v389
    %v3564 = vunpack.c.l.b16 %v390
    %v3565 = vunpack.c.h.b16 %v390
    %v3566 = vunpack.c.l.b16 %v391
    %v3567 = vunpack.c.h.b16 %v391
    %v3568 = vunpack.c.l.b16 %v392
    %v3569 = vunpack.c.h.b16 %v392
    %v3570 = vunpack.c.l.b16 %v393
    %v3571 = vunpack.c.l.b16 %v394
    %v3572 = vunpack.c.h.b16 %v394
    %v3573 = vunpack.c.l.b16 %v395
    %v3574 = vunpack.c.h.b16 %v395
    %v3575 = vunpack.c.l.b16 %v396
    %v3576 = vunpack.c.h.b16 %v396
    %v3577 = vunpack.c.l.b16 %v397
    %v3578 = vunpack.c.l.b16 %v398
    %v3579 = vunpack.c.h.b16 %v398
    %v3580 = vunpack.c.l.b16 %v399
    %v3581 = vunpack.c.h.b16 %v399
    %v3582 = vunpack.c.l.b16 %v400
    %v3583 = vunpack.c.h.b16 %v400
    %v3584 = vunpack.c.l.b16 %v401
    %v3585 = vunpack.c.l.b16 %v402
    %v3586 = vunpack.c.h.b16 %v402
    %v3587 = vunpack.c.l.b16 %v403
    %v3588 = vunpack.c.h.b16 %v403
    %v3589 = vunpack.c.l.b16 %v404
    %v3590 = vunpack.c.h.b16 %v404
    %v3591 = vunpack.c.l.b16 %v405
    %v3592 = vunpack.c.l.b16 %v406
    %v3593 = vunpack.c.h.b16 %v406
    %v3594 = vunpack.c.l.b16 %v407
    %v3595 = vunpack.c.h.b16 %v407
    %v3596 = vunpack.c.l.b16 %v408
    %v3597 = vunpack.c.h.b16 %v408
    %v3598 = vunpack.c.l.b16 %v409
    %v3599 = vunpack.c.l.b16 %v410
    %v3600 = vunpack.c.h.b16 %v410
    %v3601 = vunpack.c.l.b16 %v411
    %v3602 = vunpack.c.h.b16 %v411
    %v3603 = vunpack.c.l.b16 %v412
    %v3604 = vunpack.c.h.b16 %v412
    %v3605 = vunpack.c.l.b16 %v413
    %v3606 = vunpack.c.l.b16 %v414
    %v3607 = vunpack.c.h.b16 %v414
    %v3608 = vunpack.c.l.b16 %v415
    %v3609 = vunpack.c.h.b16 %v415
    %v3610 = vunpack.c.l.b16 %v416
    %v3611 = vunpack.c.h.b16 %v416
    %v3612 = vunpack.c.l.b16 %v417
    %v3613 = vunpack.c.l.b16 %v418
    %v3614 = vunpack.c.h.b16 %v418
    %v3615 = vunpack.c.l.b16 %v419
    %v3616 = vunpack.c.h.b16 %v419
    %v3617 = vunpack.c.l.b16 %v420
    %v3618 = vunpack.c.h.b16 %v420
    %v3619 = vunpack.c.l.b16 %v421
    %v3620 = vunpack.c.l.b16 %v422
    %v3621 = vunpack.c.h.b16 %v422
    %v3622 = vunpack.c.l.b16 %v423
    %v3623 = vunpack.c.h.b16 %v423
    %v3624 = vunpack.c.l.b16 %v424
    %v3625 = vunpack.c.h.b16 %v424
    %v3626 = vunpack.c.l.b16 %v425
    %v3627 = vunpack.c.l.b16 %v426
    %v3628 = vunpack.c.h.b16 %v426
    %v3629 = vunpack.c.l.b16 %v427
    %v3630 = vunpack.c.h.b16 %v427
    %v3631 = vunpack.c.l.b16 %v428
    %v3632 = vunpack.c.h.b16 %v428
    %v3633 = vunpack.c.l.b16 %v429
    %v3634 = vunpack.c.l.b16 %v430
    %v3635 = vunpack.c.h.b16 %v430
    %v3636 = vunpack.c.l.b16 %v431
    %v3637 = vunpack.c.h.b16 %v431
    %v3638 = vunpack.c.l.b16 %v432
    %v3639 = vunpack.c.h.b16 %v432
    %v3640 = vunpack.c.l.b16 %v433
    %v3641 = vunpack.c.l.b16 %v434
    %v3642 = vunpack.c.h.b16 %v434
    %v3643 = vunpack.c.l.b16 %v435
    %v3644 = vunpack.c.h.b16 %v435
    %v3645 = vunpack.c.l.b16 %v436
    %v3646 = vunpack.c.h.b16 %v436
    %v3647 = vunpack.c.l.b16 %v437
    %v3648 = vunpack.c.l.b16 %v438
    %v3649 = vunpack.c.h.b16 %v438
    %v3650 = vunpack.c.l.b16 %v439
    %v3651 = vunpack.c.h.b16 %v439
    %v3652 = vunpack.c.l.b16 %v440
    %v3653 = vunpack.c.h.b16 %v440
    %v3654 = vunpack.c.l.b16 %v441
    %v3655 = vunpack.c.l.b16 %v442
    %v3656 = vunpack.c.h.b16 %v442
    %v3657 = vunpack.c.l.b16 %v443
    %v3658 = vunpack.c.h.b16 %v443
    %v3659 = vunpack.c.l.b16 %v444
    %v3660 = vunpack.c.h.b16 %v444
    %v3661 = vunpack.c.l.b16 %v445
    %v3662 = vunpack.c.l.b16 %v446
    %v3663 = vunpack.c.h.b16 %v446
    %v3664 = vunpack.c.l.b16 %v447
    %v3665 = vunpack.c.h.b16 %v447
    %v3666 = vunpack.c.l.b16 %v448
    %v3667 = vunpack.c.h.b16 %v448
    %v3668 = vunpack.c.l.b16 %v449
    %v3669 = vunpack.c.l.b16 %v450
    %v3670 = vunpack.c.h.b16 %v450
    %v3671 = vunpack.c.l.b16 %v451
    %v3672 = vunpack.c.h.b16 %v451
    %v3673 = vunpack.c.l.b16 %v452
    %v3674 = vunpack.c.h.b16 %v452
    %v3675 = vunpack.c.l.b16 %v453
    %v3676 = vunpack.c.l.b16 %v454
    %v3677 = vunpack.c.h.b16 %v454
    %v3678 = vunpack.c.l.b16 %v455
    %v3679 = vunpack.c.h.b16 %v455
    %v3680 = vunpack.c.l.b16 %v456
    %v3681 = vunpack.c.h.b16 %v456
    %v3682 = vunpack.c.l.b16 %v457
    %v3683 = vunpack.c.l.b16 %v458
    %v3684 = vunpack.c.h.b16 %v458
    %v3685 = vunpack.c.l.b16 %v459
    %v3686 = vunpack.c.h.b16 %v459
    %v3687 = vunpack.c.l.b16 %v460
    %v3688 = vunpack.c.h.b16 %v460
    %v3689 = vunpack.c.l.b16 %v461
    %v3690 = vunpack.c.l.b16 %v462
    %v3691 = vunpack.c.h.b16 %v462
    %v3692 = vunpack.c.l.b16 %v463
    %v3693 = vunpack.c.h.b16 %v463
    %v3694 = vunpack.c.l.b16 %v464
    %v3695 = vunpack.c.h.b16 %v464
    %v3696 = vunpack.c.l.b16 %v465
    %v3697 = vunpack.c.l.b16 %v466
    %v3698 = vunpack.c.h.b16 %v466
    %v3699 = vunpack.c.l.b16 %v467
    %v3700 = vunpack.c.h.b16 %v467
    %v3701 = vunpack.c.l.b16 %v468
    %v3702 = vunpack.c.h.b16 %v468
    %v3703 = vunpack.c.l.b16 %v469
    %v3704 = vunpack.c.l.b16 %v470
    %v3705 = vunpack.c.h.b16 %v470
    %v3706 = vunpack.c.l.b16 %v471
    %v3707 = vunpack.c.h.b16 %v471
    %v3708 = vunpack.c.l.b16 %v472
    %v3709 = vunpack.c.h.b16 %v472
    %v3710 = vunpack.c.l.b16 %v473
    %v3711 = vunpack.c.l.b16 %v474
    %v3712 = vunpack.c.h.b16 %v474
    %v3713 = vunpack.c.l.b16 %v475
    %v3714 = vunpack.c.h.b16 %v475
    %v3715 = vunpack.c.l.b16 %v476
    %v3716 = vunpack.c.h.b16 %v476
    %v3717 = vunpack.c.l.b16 %v477
    %v3718 = vunpack.c.l.b16 %v478
    %v3719 = vunpack.c.h.b16 %v478
    %v3720 = vunpack.c.l.b16 %v479
    %v3721 = vunpack.c.h.b16 %v479
    %v3722 = vunpack.c.l.b16 %v480
    %v3723 = vunpack.c.h.b16 %v480
    %v3724 = vunpack.c.l.b16 %v481
    %v3725 = vunpack.c.l.b16 %v482
    %v3726 = vunpack.c.h.b16 %v482
    %v3727 = vunpack.c.l.b16 %v483
    %v3728 = vunpack.c.h.b16 %v483
    %v3729 = vunpack.c.l.b16 %v484
    %v3730 = vunpack.c.h.b16 %v484
    %v3731 = vunpack.c.l.b16 %v485
    %v3732 = vunpack.c.l.b16 %v486
    %v3733 = vunpack.c.h.b16 %v486
    %v3734 = vunpack.c.l.b16 %v487
    %v3735 = vunpack.c.h.b16 %v487
    %v3736 = vunpack.c.l.b16 %v488
    %v3737 = vunpack.c.h.b16 %v488
    %v3738 = vunpack.c.l.b16 %v489
    %v3739 = vunpack.c.l.b16 %v490
    %v3740 = vunpack.c.h.b16 %v490
    %v3741 = vunpack.c.l.b16 %v491
    %v3742 = vunpack.c.h.b16 %v491
    %v3743 = vunpack.c.l.b16 %v492
    %v3744 = vunpack.c.h.b16 %v492
    %v3745 = vunpack.c.l.b16 %v493
    %v3746 = vunpack.c.l.b16 %v494
    %v3747 = vunpack.c.h.b16 %v494
    %v3748 = vunpack.c.l.b16 %v495
    %v3749 = vunpack.c.h.b16 %v495
    %v3750 = vunpack.c.l.b16 %v496
    %v3751 = vunpack.c.h.b16 %v496
    %v3752 = vunpack.c.l.b16 %v497
    %v3753 = vunpack.c.l.b16 %v498
    %v3754 = vunpack.c.h.b16 %v498
    %v3755 = vunpack.c.l.b16 %v499
    %v3756 = vunpack.c.h.b16 %v499
    %v3757 = vunpack.c.l.b16 %v500
    %v3758 = vunpack.c.h.b16 %v500
    %v3759 = vunpack.c.l.b16 %v501
    %v3760 = vunpack.c.l.b16 %v502
    %v3761 = vunpack.c.h.b16 %v502
    %v3762 = vunpack.c.l.b16 %v503
    %v3763 = vunpack.c.h.b16 %v503
    %v3764 = vunpack.c.l.b16 %v504
    %v3765 = vunpack.c.h.b16 %v504
    %v3766 = vunpack.c.l.b16 %v505
    %v3767 = vunpack.c.l.b16 %v506
    %v3768 = vunpack.c.h.b16 %v506
    %v3769 = vunpack.c.l.b16 %v507
    %v3770 = vunpack.c.h.b16 %v507
    %v3771 = vunpack.c.l.b16 %v508
    %v3772 = vunpack.c.h.b16 %v508
    %v3773 = vunpack.c.l.b16 %v509
    %v3774 = vunpack.c.l.b16 %v510
    %v3775 = vunpack.c.h.b16 %v510
    %v3776 = vunpack.c.l.b16 %v511
    %v3777 = vunpack.c.h.b16 %v511
    %v3778 = vunpack.c.l.b16 %v512
    %v3779 = vunpack.c.h.b16 %v512
    %v3780 = vunpack.c.l.b16 %v513
    %v3781 = vunpack.c.l.b16 %v514
    %v3782 = vunpack.c.h.b16 %v514
    %v3783 = vunpack.c.l.b16 %v515
    %v3784 = vunpack.c.h.b16 %v515
    %v3785 = vunpack.c.l.b16 %v516
    %v3786 = vunpack.c.h.b16 %v516
    %v3787 = vunpack.c.l.b16 %v517
    %v3788 = vunpack.c.l.b16 %v518
    %v3789 = vunpack.c.h.b16 %v518
    %v3790 = vunpack.c.l.b16 %v519
    %v3791 = vunpack.c.h.b16 %v519
    %v3792 = vunpack.c.l.b16 %v520
    %v3793 = vunpack.c.h.b16 %v520
    %v3794 = vunpack.c.l.b16 %v521
    %v3795 = vunpack.c.l.b16 %v522
    %v3796 = vunpack.c.h.b16 %v522
    %v3797 = vunpack.c.l.b16 %v523
    %v3798 = vunpack.c.h.b16 %v523
    %v3799 = vunpack.c.l.b16 %v524
    %v3800 = vunpack.c.h.b16 %v524
    %v3801 = vunpack.c.l.b16 %v525
    %v3802 = vunpack.c.l.b16 %v526
    %v3803 = vunpack.c.h.b16 %v526
    %v3804 = vunpack.c.l.b16 %v527
    %v3805 = vunpack.c.h.b16 %v527
    %v3806 = vunpack.c.l.b16 %v528
    %v3807 = vunpack.c.h.b16 %v528
    %v3808 = vunpack.c.l.b16 %v529
    %v3809 = vunpack.c.l.b16 %v530
    %v3810 = vunpack.c.h.b16 %v530
    %v3811 = vunpack.c.l.b16 %v531
    %v3812 = vunpack.c.h.b16 %v531
    %v3813 = vunpack.c.l.b16 %v532
    %v3814 = vunpack.c.h.b16 %v532
    %v3815 = vunpack.c.l.b16 %v533
    %v3816 = vunpack.c.l.b16 %v534
    %v3817 = vunpack.c.h.b16 %v534
    %v3818 = vunpack.c.l.b16 %v535
    %v3819 = vunpack.c.h.b16 %v535
    %v3820 = vunpack.c.l.b16 %v536
    %v3821 = vunpack.c.h.b16 %v536
    %v3822 = vunpack.c.l.b16 %v537
    %v3823 = vunpack.c.l.b16 %v538
    %v3824 = vunpack.c.h.b16 %v538
    %v3825 = vunpack.c.l.b16 %v539
    %v3826 = vunpack.c.h.b16 %v539
    %v3827 = vunpack.c.l.b16 %v540
    %v3828 = vunpack.c.h.b16 %v540
    %v3829 = vunpack.c.l.b16 %v541
    %v3830 = vunpack.c.l.b16 %v542
    %v3831 = vunpack.c.h.b16 %v542
    %v3832 = vunpack.c.l.b16 %v543
    %v3833 = vunpack.c.h.b16 %v543
    %v3834 = vunpack.c.l.b16 %v544
    %v3835 = vunpack.c.h.b16 %v544
    %v3836 = vunpack.c.l.b16 %v545
    %v3837 = vunpack.c.l.b16 %v546
    %v3838 = vunpack.c.h.b16 %v546
    %v3839 = vunpack.c.l.b16 %v547
    %v3840 = vunpack.c.h.b16 %v547
    %v3841 = vunpack.c.l.b16 %v548
    %v3842 = vunpack.c.h.b16 %v548
    %v3843 = vunpack.c.l.b16 %v549
    %v3844 = vunpack.c.l.b16 %v550
    %v3845 = vunpack.c.h.b16 %v550
    %v3846 = vunpack.c.l.b16 %v551
    %v3847 = vunpack.c.h.b16 %v551
    %v3848 = vunpack.c.l.b16 %v552
    %v3849 = vunpack.c.h.b16 %v552
    %v3850 = vunpack.c.l.b16 %v553
    %v3851 = vunpack.c.l.b16 %v554
    %v3852 = vunpack.c.h.b16 %v554
    %v3853 = vunpack.c.l.b16 %v555
    %v3854 = vunpack.c.h.b16 %v555
    %v3855 = vunpack.c.l.b16 %v556
    %v3856 = vunpack.c.h.b16 %v556
    %v3857 = vunpack.c.l.b16 %v557
    %v3858 = vunpack.c.l.b16 %v558
    %v3859 = vunpack.c.h.b16 %v558
    %v3860 = vunpack.c.l.b16 %v559
    %v3861 = vunpack.c.h.b16 %v559
    %v3862 = vunpack.c.l.b16 %v560
    %v3863 = vunpack.c.h.b16 %v560
    %v3864 = vunpack.c.l.b16 %v561
    %v3865 = vunpack.c.l.b16 %v562
    %v3866 = vunpack.c.h.b16 %v562
    %v3867 = vunpack.c.l.b16 %v563
    %v3868 = vunpack.c.h.b16 %v563
    %v3869 = vunpack.c.l.b16 %v564
    %v3870 = vunpack.c.h.b16 %v564
    %v3871 = vunpack.c.l.b16 %v565
    %v3872 = vunpack.c.l.b16 %v566
    %v3873 = vunpack.c.h.b16 %v566
    %v3874 = vunpack.c.l.b16 %v567
    %v3875 = vunpack.c.h.b16 %v567
    %v3876 = vunpack.c.l.b16 %v568
    %v3877 = vunpack.c.h.b16 %v568
    %v3878 = vunpack.c.l.b16 %v569
    %v3879 = vunpack.c.l.b16 %v570
    %v3880 = vunpack.c.h.b16 %v570
    %v3881 = vunpack.c.l.b16 %v571
    %v3882 = vunpack.c.h.b16 %v571
    %v3883 = vunpack.c.l.b16 %v572
    %v3884 = vunpack.c.h.b16 %v572
    %v3885 = vunpack.c.l.b16 %v573
    %v3886 = vunpack.c.l.b16 %v574
    %v3887 = vunpack.c.h.b16 %v574
    %v3888 = vunpack.c.l.b16 %v575
    %v3889 = vunpack.c.h.b16 %v575
    %v3890 = vunpack.c.l.b16 %v576
    %v3891 = vunpack.c.h.b16 %v576
    %v3892 = vunpack.c.l.b16 %v577
    %v3893 = vunpack.c.l.b16 %v578
    %v3894 = vunpack.c.h.b16 %v578
    %v3895 = vunpack.c.l.b16 %v579
    %v3896 = vunpack.c.h.b16 %v579
    %v3897 = vunpack.c.l.b16 %v580
    %v3898 = vunpack.c.h.b16 %v580
    %v3899 = vunpack.c.l.b16 %v581
    %v3900 = vunpack.c.l.b16 %v582
    %v3901 = vunpack.c.h.b16 %v582
    %v3902 = vunpack.c.l.b16 %v583
    %v3903 = vunpack.c.h.b16 %v583
    %v3904 = vunpack.c.l.b16 %v584
    %v3905 = vunpack.c.h.b16 %v584
    %v3906 = vunpack.c.l.b16 %v585
    %v3907 = vunpack.c.l.b16 %v586
    %v3908 = vunpack.c.h.b16 %v586
    %v3909 = vunpack.c.l.b16 %v587
    %v3910 = vunpack.c.h.b16 %v587
    %v3911 = vunpack.c.l.b16 %v588
    %v3912 = vunpack.c.h.b16 %v588
    %v3913 = vunpack.c.l.b16 %v589
    %v3914 = vunpack.c.l.b16 %v590
    %v3915 = vunpack.c.h.b16 %v590
    %v3916 = vunpack.c.l.b16 %v591
    %v3917 = vunpack.c.h.b16 %v591
    %v3918 = vunpack.c.l.b16 %v592
    %v3919 = vunpack.c.h.b16 %v592
    %v3920 = vunpack.c.l.b16 %v593
    %v3921 = vunpack.c.l.b16 %v594
    %v3922 = vunpack.c.h.b16 %v594
    %v3923 = vunpack.c.l.b16 %v595
    %v3924 = vunpack.c.h.b16 %v595
    %v3925 = vunpack.c.l.b16 %v596
    %v3926 = vunpack.c.h.b16 %v596
    %v3927 = vunpack.c.l.b16 %v597
    %v3928 = vunpack.c.l.b16 %v598
    %v3929 = vunpack.c.h.b16 %v598
    %v3930 = vunpack.c.l.b16 %v599
    %v3931 = vunpack.c.h.b16 %v599
    %v3932 = vunpack.c.l.b16 %v600
    %v3933 = vunpack.c.h.b16 %v600
    %v3934 = vunpack.c.l.b16 %v601
    %v3935 = vunpack.c.l.b16 %v602
    %v3936 = vunpack.c.h.b16 %v602
    %v3937 = vunpack.c.l.b16 %v603
    %v3938 = vunpack.c.h.b16 %v603
    %v3939 = vunpack.c.l.b16 %v604
    %v3940 = vunpack.c.h.b16 %v604
    %v3941 = vunpack.c.l.b16 %v605
    %v3942 = vunpack.c.l.b16 %v606
    %v3943 = vunpack.c.h.b16 %v606
    %v3944 = vunpack.c.l.b16 %v607
    %v3945 = vunpack.c.h.b16 %v607
    %v3946 = vunpack.c.l.b16 %v608
    %v3947 = vunpack.c.h.b16 %v608
    %v3948 = vunpack.c.l.b16 %v609
    %v3949 = vunpack.c.l.b16 %v610
    %v3950 = vunpack.c.h.b16 %v610
    %v3951 = vunpack.c.l.b16 %v611
    %v3952 = vunpack.c.h.b16 %v611
    %v3953 = vunpack.c.l.b16 %v612
    %v3954 = vunpack.c.h.b16 %v612
    %v3955 = vunpack.c.l.b16 %v613
    %v3956 = vunpack.c.l.b16 %v614
    %v3957 = vunpack.c.h.b16 %v614
    %v3958 = vunpack.c.l.b16 %v615
    %v3959 = vunpack.c.h.b16 %v615
    %v3960 = vunpack.c.l.b16 %v616
    %v3961 = vunpack.c.h.b16 %v616
    %v3962 = vunpack.c.l.b16 %v617
    %v3963 = vunpack.c.l.b16 %v618
    %v3964 = vunpack.c.h.b16 %v618
    %v3965 = vunpack.c.l.b16 %v619
    %v3966 = vunpack.c.h.b16 %v619
    %v3967 = vunpack.c.l.b16 %v620
    %v3968 = vunpack.c.h.b16 %v620
    %v3969 = vunpack.c.l.b16 %v621
    %v3970 = vunpack.c.l.b16 %v622
    %v3971 = vunpack.c.h.b16 %v622
    %v3972 = vunpack.c.l.b16 %v623
    %v3973 = vunpack.c.h.b16 %v623
    %v3974 = vunpack.c.l.b16 %v624
    %v3975 = vunpack.c.h.b16 %v624
    %v3976 = vunpack.c.l.b16 %v625
    %v3977 = vunpack.c.l.b16 %v626
    %v3978 = vunpack.c.h.b16 %v626
    %v3979 = vunpack.c.l.b16 %v627
    %v3980 = vunpack.c.h.b16 %v627
    %v3981 = vunpack.c.l.b16 %v628
    %v3982 = vunpack.c.h.b16 %v628
    %v3983 = vunpack.c.l.b16 %v629
    %v3984 = vunpack.c.l.b16 %v630
    %v3985 = vunpack.c.h.b16 %v630
    %v3986 = vunpack.c.l.b16 %v631
    %v3987 = vunpack.c.h.b16 %v631
    %v3988 = vunpack.c.l.b16 %v632
    %v3989 = vunpack.c.h.b16 %v632
    %v3990 = vunpack.c.l.b16 %v633
    %v3991 = vunpack.c.l.b16 %v634
    %v3992 = vunpack.c.h.b16 %v634
    %v3993 = vunpack.c.l.b16 %v635
    %v3994 = vunpack.c.h.b16 %v635
    %v3995 = vunpack.c.l.b16 %v636
    %v3996 = vunpack.c.h.b16 %v636
    %v3997 = vunpack.c.l.b16 %v637
    %v3998 = vunpack.c.l.b16 %v638
    %v3999 = vunpack.c.h.b16 %v638
    %v4000 = vunpack.c.l.b16 %v639
    %v4001 = vunpack.c.h.b16 %v639
    %v4002 = vunpack.c.l.b16 %v640
    %v4003 = vunpack.c.h.b16 %v640
    %v4004 = vunpack.c.l.b16 %v641
    %v4005 = vunpack.c.l.b16 %v642
    %v4006 = vunpack.c.h.b16 %v642
    %v4007 = vunpack.c.l.b16 %v643
    %v4008 = vunpack.c.h.b16 %v643
    %v4009 = vunpack.c.l.b16 %v644
    %v4010 = vunpack.c.h.b16 %v644
    %v4011 = vunpack.c.l.b16 %v645
    %v4012 = vunpack.c.l.b16 %v646
    %v4013 = vunpack.c.h.b16 %v646
    %v4014 = vunpack.c.l.b16 %v647
    %v4015 = vunpack.c.h.b16 %v647
    %v4016 = vunpack.c.l.b16 %v648
    %v4017 = vunpack.c.h.b16 %v648
    %v4018 = vunpack.c.l.b16 %v649
    %v4019 = vunpack.c.l.b16 %v650
    %v4020 = vunpack.c.h.b16 %v650
    %v4021 = vunpack.c.l.b16 %v651
    %v4022 = vunpack.c.h.b16 %v651
    %v4023 = vunpack.c.l.b16 %v652
    %v4024 = vunpack.c.h.b16 %v652
    %v4025 = vunpack.c.l.b16 %v653
    %v4026 = vunpack.c.l.b16 %v654
    %v4027 = vunpack.c.h.b16 %v654
    %v4028 = vunpack.c.l.b16 %v655
    %v4029 = vunpack.c.h.b16 %v655
    %v4030 = vunpack.c.l.b16 %v656
    %v4031 = vunpack.c.h.b16 %v656
    %v4032 = vunpack.c.l.b16 %v657
    %v4033 = vunpack.c.l.b16 %v658
    %v4034 = vunpack.c.h.b16 %v658
    %v4035 = vunpack.c.l.b16 %v659
    %v4036 = vunpack.c.h.b16 %v659
    %v4037 = vunpack.c.l.b16 %v660
    %v4038 = vunpack.c.h.b16 %v660
    %v4039 = vunpack.c.l.b16 %v661
    %v4040 = vunpack.c.l.b16 %v662
    %v4041 = vunpack.c.h.b16 %v662
    %v4042 = vunpack.c.l.b16 %v663
    %v4043 = vunpack.c.h.b16 %v663
    %v4044 = vunpack.c.l.b16 %v664
    %v4045 = vunpack.c.h.b16 %v664
    %v4046 = vunpack.c.l.b16 %v665
    %v4047 = vunpack.c.l.b16 %v666
    %v4048 = vunpack.c.h.b16 %v666
    %v4049 = vunpack.c.l.b16 %v667
    %v4050 = vunpack.c.h.b16 %v667
    %v4051 = vunpack.c.l.b16 %v668
    %v4052 = vunpack.c.h.b16 %v668
    %v4053 = vunpack.c.l.b16 %v669
    %v4054 = vunpack.c.l.b16 %v670
    %v4055 = vunpack.c.h.b16 %v670
    %v4056 = vunpack.c.l.b16 %v671
    %v4057 = vunpack.c.h.b16 %v671
    %v4058 = vunpack.c.l.b16 %v672
    %v4059 = vunpack.c.h.b16 %v672
    %v4060 = vunpack.c.l.b16 %v673
    %v4061 = vunpack.c.l.b16 %v674
    %v4062 = vunpack.c.h.b16 %v674
    %v4063 = vunpack.c.l.b16 %v675
    %v4064 = vunpack.c.h.b16 %v675
    %v4065 = vunpack.c.l.b16 %v676
    %v4066 = vunpack.c.h.b16 %v676
    %v4067 = vunpack.c.l.b16 %v677
    %v4068 = vunpack.c.l.b16 %v678
    %v4069 = vunpack.c.h.b16 %v678
    %v4070 = vunpack.c.l.b16 %v679
    %v4071 = vunpack.c.h.b16 %v679
    %v4072 = vunpack.c.l.b16 %v680
    %v4073 = vunpack.c.h.b16 %v680
    %v4074 = vunpack.c.l.b16 %v681
    %v4075 = vunpack.c.l.b16 %v682
    %v4076 = vunpack.c.h.b16 %v682
    %v4077 = vunpack.c.l.b16 %v683
    %v4078 = vunpack.c.h.b16 %v683
    %v4079 = vunpack.c.l.b16 %v684
    %v4080 = vunpack.c.h.b16 %v684
    %v4081 = vunpack.c.l.b16 %v685
    %v4082 = vunpack.c.l.b16 %v686
    %v4083 = vunpack.c.h.b16 %v686
    %v4084 = vunpack.c.l.b16 %v687
    %v4085 = vunpack.c.h.b16 %v687
    %v4086 = vunpack.c.l.b16 %v688
    %v4087 = vunpack.c.h.b16 %v688
    %v4088 = vunpack.c.l.b16 %v689
    %v4089 = vunpack.c.l.b16 %v690
    %v4090 = vunpack.c.h.b16 %v690
    %v4091 = vunpack.c.l.b16 %v691
    %v4092 = vunpack.c.h.b16 %v691
    %v4093 = vunpack.c.l.b16 %v692
    %v4094 = vunpack.c.h.b16 %v692
    %v4095 = vunpack.c.l.b16 %v693
    %v4096 = vunpack.c.l.b16 %v694
    %v4097 = vunpack.c.h.b16 %v694
    %v4098 = vunpack.c.l.b16 %v695
    %v4099 = vunpack.c.h.b16 %v695
    %v4100 = vunpack.c.l.b16 %v696
    %v4101 = vunpack.c.h.b16 %v696
    %v4102 = vunpack.c.l.b16 %v697
    %v4103 = vunpack.c.l.b16 %v698
    %v4104 = vunpack.c.h.b16 %v698
    %v4105 = vunpack.c.l.b16 %v699
    %v4106 = vunpack.c.h.b16 %v699
    %v4107 = vunpack.c.l.b16 %v700
    %v4108 = vunpack.c.h.b16 %v700
    %v4109 = vunpack.c.l.b16 %v701
    %v4110 = vunpack.c.l.b16 %v702
    %v4111 = vunpack.c.h.b16 %v702
    %v4112 = vunpack.c.l.b16 %v703
    %v4113 = vunpack.c.h.b16 %v703
    %v4114 = vunpack.c.l.b16 %v704
    %v4115 = vunpack.c.h.b16 %v704
    %v4116 = vunpack.c.l.b16 %v705
    %v4117 = vunpack.c.l.b16 %v706
    %v4118 = vunpack.c.h.b16 %v706
    %v4119 = vunpack.c.l.b16 %v707
    %v4120 = vunpack.c.h.b16 %v707
    %v4121 = vunpack.c.l.b16 %v708
    %v4122 = vunpack.c.h.b16 %v708
    %v4123 = vunpack.c.l.b16 %v709
    %v4124 = vunpack.c.l.b16 %v710
    %v4125 = vunpack.c.h.b16 %v710
    %v4126 = vunpack.c.l.b16 %v711
    %v4127 = vunpack.c.h.b16 %v711
    %v4128 = vunpack.c.l.b16 %v712
    %v4129 = vunpack.c.h.b16 %v712
    %v4130 = vunpack.c.l.b16 %v713
    %v4131 = vunpack.c.l.b16 %v714
    %v4132 = vunpack.c.h.b16 %v714
    %v4133 = vunpack.c.l.b16 %v715
    %v4134 = vunpack.c.h.b16 %v715
    %v4135 = vunpack.c.l.b16 %v716
    %v4136 = vunpack.c.h.b16 %v716
    %v4137 = vunpack.c.l.b16 %v717
    %v4138 = vunpack.c.l.b16 %v718
    %v4139 = vunpack.c.h.b16 %v718
    %v4140 = vunpack.c.l.b16 %v719
    %v4141 = vunpack.c.h.b16 %v719
    %v4142 = vunpack.c.l.b16 %v720
    %v4143 = vunpack.c.h.b16 %v720
    %v4144 = vunpack.c.l.b16 %v721
    %v4145 = vunpack.c.l.b16 %v722
    %v4146 = vunpack.c.h.b16 %v722
    %v4147 = vunpack.c.l.b16 %v723
    %v4148 = vunpack.c.h.b16 %v723
    %v4149 = vunpack.c.l.b16 %v724
    %v4150 = vunpack.c.h.b16 %v724
    %v4151 = vunpack.c.l.b16 %v725
    %v4152 = vunpack.c.l.b16 %v726
    %v4153 = vunpack.c.h.b16 %v726
    %v4154 = vunpack.c.l.b16 %v727
    %v4155 = vunpack.c.h.b16 %v727
    %v4156 = vunpack.c.l.b16 %v728
    %v4157 = vunpack.c.h.b16 %v728
    %v4158 = vunpack.c.l.b16 %v729
    %v4159 = vunpack.c.l.b16 %v730
    %v4160 = vunpack.c.h.b16 %v730
    %v4161 = vunpack.c.l.b16 %v731
    %v4162 = vunpack.c.h.b16 %v731
    %v4163 = vunpack.c.l.b16 %v732
    %v4164 = vunpack.c.h.b16 %v732
    %v4165 = vunpack.c.l.b16 %v733
    %v4166 = vunpack.c.l.b16 %v734
    %v4167 = vunpack.c.h.b16 %v734
    %v4168 = vunpack.c.l.b16 %v735
    %v4169 = vunpack.c.h.b16 %v735
    %v4170 = vunpack.c.l.b16 %v736
    %v4171 = vunpack.c.h.b16 %v736
    %v4172 = vunpack.c.l.b16 %v737
    %v4173 = vunpack.c.l.b16 %v738
    %v4174 = vunpack.c.h.b16 %v738
    %v4175 = vunpack.c.l.b16 %v739
    %v4176 = vunpack.c.h.b16 %v739
    %v4177 = vunpack.c.l.b16 %v740
    %v4178 = vunpack.c.h.b16 %v740
    %v4179 = vunpack.c.l.b16 %v741
    %v4180 = vunpack.c.l.b16 %v742
    %v4181 = vunpack.c.h.b16 %v742
    %v4182 = vunpack.c.l.b16 %v743
    %v4183 = vunpack.c.h.b16 %v743
    %v4184 = vunpack.c.l.b16 %v744
    %v4185 = vunpack.c.h.b16 %v744
    %v4186 = vunpack.c.l.b16 %v745
    %v4187 = vunpack.c.l.b16 %v746
    %v4188 = vunpack.c.h.b16 %v746
    %v4189 = vunpack.c.l.b16 %v747
    %v4190 = vunpack.c.h.b16 %v747
    %v4191 = vunpack.c.l.b16 %v748
    %v4192 = vunpack.c.h.b16 %v748
    %v4193 = vunpack.c.l.b16 %v749
    %v4194 = vunpack.c.l.b16 %v750
    %v4195 = vunpack.c.h.b16 %v750
    %v4196 = vunpack.c.l.b16 %v751
    %v4197 = vunpack.c.h.b16 %v751
    %v4198 = vunpack.c.l.b16 %v752
    %v4199 = vunpack.c.h.b16 %v752
    %v4200 = vunpack.c.l.b16 %v753
    %v4201 = vunpack.c.l.b16 %v754
    %v4202 = vunpack.c.h.b16 %v754
    %v4203 = vunpack.c.l.b16 %v755
    %v4204 = vunpack.c.h.b16 %v755
    %v4205 = vunpack.c.l.b16 %v756
    %v4206 = vunpack.c.h.b16 %v756
    %v4207 = vunpack.c.l.b16 %v757
    %v4208 = vunpack.c.l.b16 %v758
    %v4209 = vunpack.c.h.b16 %v758
    %v4210 = vunpack.c.l.b16 %v759
    %v4211 = vunpack.c.h.b16 %v759
    %v4212 = vunpack.c.l.b16 %v760
    %v4213 = vunpack.c.h.b16 %v760
    %v4214 = vunpack.c.l.b16 %v761
    %v4215 = vunpack.c.l.b16 %v762
    %v4216 = vunpack.c.h.b16 %v762
    %v4217 = vunpack.c.l.b16 %v763
    %v4218 = vunpack.c.h.b16 %v763
    %v4219 = vunpack.c.l.b16 %v764
    %v4220 = vunpack.c.h.b16 %v764
    %v4221 = vunpack.c.l.b16 %v765
    %v4222 = vunpack.c.l.b16 %v766
    %v4223 = vunpack.c.h.b16 %v766
    %v4224 = vunpack.c.l.b16 %v767
    %v4225 = vunpack.c.h.b16 %v767
    %v4226 = vunpack.c.l.b16 %v768
    %v4227 = vunpack.c.h.b16 %v768
    %v4228 = vunpack.c.l.b16 %v769
    %v4229 = vunpack.c.l.b16 %v770
    %v4230 = vunpack.c.h.b16 %v770
    %v4231 = vunpack.c.l.b16 %v771
    %v4232 = vunpack.c.h.b16 %v771
    %v4233 = vunpack.c.l.b16 %v772
    %v4234 = vunpack.c.h.b16 %v772
    %v4235 = vunpack.c.l.b16 %v773
    %v4236 = vunpack.c.l.b16 %v774
    %v4237 = vunpack.c.h.b16 %v774
    %v4238 = vunpack.c.l.b16 %v775
    %v4239 = vunpack.c.h.b16 %v775
    %v4240 = vunpack.c.l.b16 %v776
    %v4241 = vunpack.c.h.b16 %v776
    %v4242 = vunpack.c.l.b16 %v777
    %v4243 = vunpack.c.l.b16 %v778
    %v4244 = vunpack.c.h.b16 %v778
    %v4245 = vunpack.c.l.b16 %v779
    %v4246 = vunpack.c.h.b16 %v779
    %v4247 = vunpack.c.l.b16 %v780
    %v4248 = vunpack.c.h.b16 %v780
    %v4249 = vunpack.c.l.b16 %v781
    %v4250 = vunpack.c.l.b16 %v782
    %v4251 = vunpack.c.h.b16 %v782
    %v4252 = vunpack.c.l.b16 %v783
    %v4253 = vunpack.c.h.b16 %v783
    %v4254 = vunpack.c.l.b16 %v784
    %v4255 = vunpack.c.h.b16 %v784
    %v4256 = vunpack.c.l.b16 %v785
    %v4257 = vunpack.c.l.b16 %v786
    %v4258 = vunpack.c.h.b16 %v786
    %v4259 = vunpack.c.l.b16 %v787
    %v4260 = vunpack.c.h.b16 %v787
    %v4261 = vunpack.c.l.b16 %v788
    %v4262 = vunpack.c.h.b16 %v788
    %v4263 = vunpack.c.l.b16 %v789
    %v4264 = vunpack.c.l.b16 %v790
    %v4265 = vunpack.c.h.b16 %v790
    %v4266 = vunpack.c.l.b16 %v791
    %v4267 = vunpack.c.h.b16 %v791
    %v4268 = vunpack.c.l.b16 %v792
    %v4269 = vunpack.c.h.b16 %v792
    %v4270 = vunpack.c.l.b16 %v793
    %v4271 = vunpack.c.l.b16 %v794
    %v4272 = vunpack.c.h.b16 %v794
    %v4273 = vunpack.c.l.b16 %v795
    %v4274 = vunpack.c.h.b16 %v795
    %v4275 = vunpack.c.l.b16 %v796
    %v4276 = vunpack.c.h.b16 %v796
    %v4277 = vunpack.c.l.b16 %v797
    %v4278 = vunpack.c.l.b16 %v798
    %v4279 = vunpack.c.h.b16 %v798
    %v4280 = vunpack.c.l.b16 %v799
    %v4281 = vunpack.c.h.b16 %v799
    %v4282 = vunpack.c.l.b16 %v800
    %v4283 = vunpack.c.h.b16 %v800
    %v4284 = vunpack.c.l.b16 %v801
    %v4285 = vunpack.c.l.b16 %v802
    %v4286 = vunpack.c.h.b16 %v802
    %v4287 = vunpack.c.l.b16 %v803
    %v4288 = vunpack.c.h.b16 %v803
    %v4289 = vunpack.c.l.b16 %v804
    %v4290 = vunpack.c.h.b16 %v804
    %v4291 = vunpack.c.l.b16 %v805
    %v4292 = vunpack.c.l.b16 %v806
    %v4293 = vunpack.c.h.b16 %v806
    %v4294 = vunpack.c.l.b16 %v807
    %v4295 = vunpack.c.h.b16 %v807
    %v4296 = vunpack.c.l.b16 %v808
    %v4297 = vunpack.c.h.b16 %v808
    %v4298 = vunpack.c.l.b16 %v809
    %v4299 = vunpack.c.l.b16 %v810
    %v4300 = vunpack.c.h.b16 %v810
    %v4301 = vunpack.c.l.b16 %v811
    %v4302 = vunpack.c.h.b16 %v811
    %v4303 = vunpack.c.l.b16 %v812
    %v4304 = vunpack.c.h.b16 %v812
    %v4305 = vunpack.c.l.b16 %v813
    %v4306 = vunpack.c.l.b16 %v814
    %v4307 = vunpack.c.h.b16 %v814
    %v4308 = vunpack.c.l.b16 %v815
    %v4309 = vunpack.c.h.b16 %v815
    %v4310 = vunpack.c.l.b16 %v816
    %v4311 = vunpack.c.h.b16 %v816
    %v4312 = vunpack.c.l.b16 %v817
    %v4313 = vunpack.c.l.b16 %v818
    %v4314 = vunpack.c.h.b16 %v818
    %v4315 = vunpack.c.l.b16 %v819
    %v4316 = vunpack.c.h.b16 %v819
    %v4317 = vunpack.c.l.b16 %v820
    %v4318 = vunpack.c.h.b16 %v820
    %v4319 = vunpack.c.l.b16 %v821
    %v4320 = vpack.c.b16 %v2927, %v2920
    %v4321 = vpack.c.b16 %v2928, %v2921
    %v4322 = vpack.c.b16 %v2929, %v2922
    %v4323 = vpack.c.b16 %v2930, %v2923
    %v4324 = vpack.c.b16 %v2931, %v2924
    %v4325 = vpack.c.b16 %v2932, %v2925
    %v4326 = vpack.c.b16 %v2933, %v2926
    %v4327 = vpack.c.b16 %v2941, %v2934
    %v4328 = vpack.c.b16 %v2942, %v2935
    %v4329 = vpack.c.b16 %v2943, %v2936
    %v4330 = vpack.c.b16 %v2944, %v2937
    %v4331 = vpack.c.b16 %v2945, %v2938
    %v4332 = vpack.c.b16 %v2946, %v2939
    %v4333 = vpack.c.b16 %v2947, %v2940
    %v4334 = vpack.c.b16 %v2955, %v2948
    %v4335 = vpack.c.b16 %v2956, %v2949
    %v4336 = vpack.c.b16 %v2957, %v2950
    %v4337 = vpack.c.b16 %v2958, %v2951
    %v4338 = vpack.c.b16 %v2959, %v2952
    %v4339 = vpack.c.b16 %v2960, %v2953
    %v4340 = vpack.c.b16 %v2961, %v2954
    %v4341 = vpack.c.b16 %v2969, %v2962
    %v4342 = vpack.c.b16 %v2970, %v2963
    %v4343 = vpack.c.b16 %v2971, %v2964
    %v4344 = vpack.c.b16 %v2972, %v2965
    %v4345 = vpack.c.b16 %v2973, %v2966
    %v4346 = vpack.c.b16 %v2974, %v2967
    %v4347 = vpack.c.b16 %v2975, %v2968
    %v4348 = vpack.c.b16 %v2983, %v2976
    %v4349 = vpack.c.b16 %v2984, %v2977
    %v4350 = vpack.c.b16 %v2985, %v2978
    %v4351 = vpack.c.b16 %v2986, %v2979
    %v4352 = vpack.c.b16 %v2987, %v2980
    %v4353 = vpack.c.b16 %v2988, %v2981
    %v4354 = vpack.c.b16 %v2989, %v2982
    %v4355 = vpack.c.b16 %v2997, %v2990
    %v4356 = vpack.c.b16 %v2998, %v2991
    %v4357 = vpack.c.b16 %v2999, %v2992
    %v4358 = vpack.c.b16 %v3000, %v2993
    %v4359 = vpack.c.b16 %v3001, %v2994
    %v4360 = vpack.c.b16 %v3002, %v2995
    %v4361 = vpack.c.b16 %v3003, %v2996
    %v4362 = vpack.c.b16 %v3011, %v3004
    %v4363 = vpack.c.b16 %v3012, %v3005
    %v4364 = vpack.c.b16 %v3013, %v3006
    %v4365 = vpack.c.b16 %v3014, %v3007
    %v4366 = vpack.c.b16 %v3015, %v3008
    %v4367 = vpack.c.b16 %v3016, %v3009
    %v4368 = vpack.c.b16 %v3017, %v3010
    %v4369 = vpack.c.b16 %v3025, %v3018
    %v4370 = vpack.c.b16 %v3026, %v3019
    %v4371 = vpack.c.b16 %v3027, %v3020
    %v4372 = vpack.c.b16 %v3028, %v3021
    %v4373 = vpack.c.b16 %v3029, %v3022
    %v4374 = vpack.c.b16 %v3030, %v3023
    %v4375 = vpack.c.b16 %v3031, %v3024
    %v4376 = vpack.c.b16 %v3039, %v3032
    %v4377 = vpack.c.b16 %v3040, %v3033
    %v4378 = vpack.c.b16 %v3041, %v3034
    %v4379 = vpack.c.b16 %v3042, %v3035
    %v4380 = vpack.c.b16 %v3043, %v3036
    %v4381 = vpack.c.b16 %v3044, %v3037
    %v4382 = vpack.c.b16 %v3045, %v3038
    %v4383 = vpack.c.b16 %v3053, %v3046
    %v4384 = vpack.c.b16 %v3054, %v3047
    %v4385 = vpack.c.b16 %v3055, %v3048
    %v4386 = vpack.c.b16 %v3056, %v3049
    %v4387 = vpack.c.b16 %v3057, %v3050
    %v4388 = vpack.c.b16 %v3058, %v3051
    %v4389 = vpack.c.b16 %v3059, %v3052
    %v4390 = vpack.c.b16 %v3067, %v3060
    %v4391 = vpack.c.b16 %v3068, %v3061
    %v4392 = vpack.c.b16 %v3069, %v3062
    %v4393 = vpack.c.b16 %v3070, %v3063
    %v4394 = vpack.c.b16 %v3071, %v3064
    %v4395 = vpack.c.b16 %v3072, %v3065
    %v4396 = vpack.c.b16 %v3073, %v3066
    %v4397 = vpack.c.b16 %v3081, %v3074
    %v4398 = vpack.c.b16 %v3082, %v3075
    %v4399 = vpack.c.b16 %v3083, %v3076
    %v4400 = vpack.c.b16 %v3084, %v3077
    %v4401 = vpack.c.b16 %v3085, %v3078
    %v4402 = vpack.c.b16 %v3086, %v3079
    %v4403 = vpack.c.b16 %v3087, %v3080
    %v4404 = vpack.c.b16 %v3095, %v3088
    %v4405 = vpack.c.b16 %v3096, %v3089
    %v4406 = vpack.c.b16 %v3097, %v3090
    %v4407 = vpack.c.b16 %v3098, %v3091
    %v4408 = vpack.c.b16 %v3099, %v3092
    %v4409 = vpack.c.b16 %v3100, %v3093
    %v4410 = vpack.c.b16 %v3101, %v3094
    %v4411 = vpack.c.b16 %v3109, %v3102
    %v4412 = vpack.c.b16 %v3110, %v3103
    %v4413 = vpack.c.b16 %v3111, %v3104
    %v4414 = vpack.c.b16 %v3112, %v3105
    %v4415 = vpack.c.b16 %v3113, %v3106
    %v4416 = vpack.c.b16 %v3114, %v3107
    %v4417 = vpack.c.b16 %v3115, %v3108
    %v4418 = vpack.c.b16 %v3123, %v3116
    %v4419 = vpack.c.b16 %v3124, %v3117
    %v4420 = vpack.c.b16 %v3125, %v3118
    %v4421 = vpack.c.b16 %v3126, %v3119
    %v4422 = vpack.c.b16 %v3127, %v3120
    %v4423 = vpack.c.b16 %v3128, %v3121
    %v4424 = vpack.c.b16 %v3129, %v3122
    %v4425 = vpack.c.b16 %v3137, %v3130
    %v4426 = vpack.c.b16 %v3138, %v3131
    %v4427 = vpack.c.b16 %v3139, %v3132
    %v4428 = vpack.c.b16 %v3140, %v3133
    %v4429 = vpack.c.b16 %v3141, %v3134
    %v4430 = vpack.c.b16 %v3142, %v3135
    %v4431 = vpack.c.b16 %v3143, %v3136
    %v4432 = vpack.c.b16 %v3151, %v3144
    %v4433 = vpack.c.b16 %v3152, %v3145
    %v4434 = vpack.c.b16 %v3153, %v3146
    %v4435 = vpack.c.b16 %v3154, %v3147
    %v4436 = vpack.c.b16 %v3155, %v3148
    %v4437 = vpack.c.b16 %v3156, %v3149
    %v4438 = vpack.c.b16 %v3157, %v3150
    %v4439 = vpack.c.b16 %v3165, %v3158
    %v4440 = vpack.c.b16 %v3166, %v3159
    %v4441 = vpack.c.b16 %v3167, %v3160
    %v4442 = vpack.c.b16 %v3168, %v3161
    %v4443 = vpack.c.b16 %v3169, %v3162
    %v4444 = vpack.c.b16 %v3170, %v3163
    %v4445 = vpack.c.b16 %v3171, %v3164
    %v4446 = vpack.c.b16 %v3179, %v3172
    %v4447 = vpack.c.b16 %v3180, %v3173
    %v4448 = vpack.c.b16 %v3181, %v3174
    %v4449 = vpack.c.b16 %v3182, %v3175
    %v4450 = vpack.c.b16 %v3183, %v3176
    %v4451 = vpack.c.b16 %v3184, %v3177
    %v4452 = vpack.c.b16 %v3185, %v3178
    %v4453 = vpack.c.b16 %v3193, %v3186
    %v4454 = vpack.c.b16 %v3194, %v3187
    %v4455 = vpack.c.b16 %v3195, %v3188
    %v4456 = vpack.c.b16 %v3196, %v3189
    %v4457 = vpack.c.b16 %v3197, %v3190
    %v4458 = vpack.c.b16 %v3198, %v3191
    %v4459 = vpack.c.b16 %v3199, %v3192
    %v4460 = vpack.c.b16 %v3207, %v3200
    %v4461 = vpack.c.b16 %v3208, %v3201
    %v4462 = vpack.c.b16 %v3209, %v3202
    %v4463 = vpack.c.b16 %v3210, %v3203
    %v4464 = vpack.c.b16 %v3211, %v3204
    %v4465 = vpack.c.b16 %v3212, %v3205
    %v4466 = vpack.c.b16 %v3213, %v3206
    %v4467 = vpack.c.b16 %v3221, %v3214
    %v4468 = vpack.c.b16 %v3222, %v3215
    %v4469 = vpack.c.b16 %v3223, %v3216
    %v4470 = vpack.c.b16 %v3224, %v3217
    %v4471 = vpack.c.b16 %v3225, %v3218
    %v4472 = vpack.c.b16 %v3226, %v3219
    %v4473 = vpack.c.b16 %v3227, %v3220
    %v4474 = vpack.c.b16 %v3235, %v3228
    %v4475 = vpack.c.b16 %v3236, %v3229
    %v4476 = vpack.c.b16 %v3237, %v3230
    %v4477 = vpack.c.b16 %v3238, %v3231
    %v4478 = vpack.c.b16 %v3239, %v3232
    %v4479 = vpack.c.b16 %v3240, %v3233
    %v4480 = vpack.c.b16 %v3241, %v3234
    %v4481 = vpack.c.b16 %v3249, %v3242
    %v4482 = vpack.c.b16 %v3250, %v3243
    %v4483 = vpack.c.b16 %v3251, %v3244
    %v4484 = vpack.c.b16 %v3252, %v3245
    %v4485 = vpack.c.b16 %v3253, %v3246
    %v4486 = vpack.c.b16 %v3254, %v3247
    %v4487 = vpack.c.b16 %v3255, %v3248
    %v4488 = vpack.c.b16 %v3263, %v3256
    %v4489 = vpack.c.b16 %v3264, %v3257
    %v4490 = vpack.c.b16 %v3265, %v3258
    %v4491 = vpack.c.b16 %v3266, %v3259
    %v4492 = vpack.c.b16 %v3267, %v3260
    %v4493 = vpack.c.b16 %v3268, %v3261
    %v4494 = vpack.c.b16 %v3269, %v3262
    %v4495 = vpack.c.b16 %v3277, %v3270
    %v4496 = vpack.c.b16 %v3278, %v3271
    %v4497 = vpack.c.b16 %v3279, %v3272
    %v4498 = vpack.c.b16 %v3280, %v3273
    %v4499 = vpack.c.b16 %v3281, %v3274
    %v4500 = vpack.c.b16 %v3282, %v3275
    %v4501 = vpack.c.b16 %v3283, %v3276
    %v4502 = vpack.c.b16 %v3291, %v3284
    %v4503 = vpack.c.b16 %v3292, %v3285
    %v4504 = vpack.c.b16 %v3293, %v3286
    %v4505 = vpack.c.b16 %v3294, %v3287
    %v4506 = vpack.c.b16 %v3295, %v3288
    %v4507 = vpack.c.b16 %v3296, %v3289
    %v4508 = vpack.c.b16 %v3297, %v3290
    %v4509 = vpack.c.b16 %v3305, %v3298
    %v4510 = vpack.c.b16 %v3306, %v3299
    %v4511 = vpack.c.b16 %v3307, %v3300
    %v4512 = vpack.c.b16 %v3308, %v3301
    %v4513 = vpack.c.b16 %v3309, %v3302
    %v4514 = vpack.c.b16 %v3310, %v3303
    %v4515 = vpack.c.b16 %v3311, %v3304
    %v4516 = vpack.c.b16 %v3319, %v3312
    %v4517 = vpack.c.b16 %v3320, %v3313
    %v4518 = vpack.c.b16 %v3321, %v3314
    %v4519 = vpack.c.b16 %v3322, %v3315
    %v4520 = vpack.c.b16 %v3323, %v3316
    %v4521 = vpack.c.b16 %v3324, %v3317
    %v4522 = vpack.c.b16 %v3325, %v3318
    %v4523 = vpack.c.b16 %v3333, %v3326
    %v4524 = vpack.c.b16 %v3334, %v3327
    %v4525 = vpack.c.b16 %v3335, %v3328
    %v4526 = vpack.c.b16 %v3336, %v3329
    %v4527 = vpack.c.b16 %v3337, %v3330
    %v4528 = vpack.c.b16 %v3338, %v3331
    %v4529 = vpack.c.b16 %v3339, %v3332
    %v4530 = vpack.c.b16 %v3347, %v3340
    %v4531 = vpack.c.b16 %v3348, %v3341
    %v4532 = vpack.c.b16 %v3349, %v3342
    %v4533 = vpack.c.b16 %v3350, %v3343
    %v4534 = vpack.c.b16 %v3351, %v3344
    %v4535 = vpack.c.b16 %v3352, %v3345
    %v4536 = vpack.c.b16 %v3353, %v3346
    %v4537 = vpack.c.b16 %v3361, %v3354
    %v4538 = vpack.c.b16 %v3362, %v3355
    %v4539 = vpack.c.b16 %v3363, %v3356
    %v4540 = vpack.c.b16 %v3364, %v3357
    %v4541 = vpack.c.b16 %v3365, %v3358
    %v4542 = vpack.c.b16 %v3366, %v3359
    %v4543 = vpack.c.b16 %v3367, %v3360
    %v4544 = vpack.c.b16 %v3375, %v3368
    %v4545 = vpack.c.b16 %v3376, %v3369
    %v4546 = vpack.c.b16 %v3377, %v3370
    %v4547 = vpack.c.b16 %v3378, %v3371
    %v4548 = vpack.c.b16 %v3379, %v3372
    %v4549 = vpack.c.b16 %v3380, %v3373
    %v4550 = vpack.c.b16 %v3381, %v3374
    %v4551 = vpack.c.b16 %v3389, %v3382
    %v4552 = vpack.c.b16 %v3390, %v3383
    %v4553 = vpack.c.b16 %v3391, %v3384
    %v4554 = vpack.c.b16 %v3392, %v3385
    %v4555 = vpack.c.b16 %v3393, %v3386
    %v4556 = vpack.c.b16 %v3394, %v3387
    %v4557 = vpack.c.b16 %v3395, %v3388
    %v4558 = vpack.c.b16 %v3403, %v3396
    %v4559 = vpack.c.b16 %v3404, %v3397
    %v4560 = vpack.c.b16 %v3405, %v3398
    %v4561 = vpack.c.b16 %v3406, %v3399
    %v4562 = vpack.c.b16 %v3407, %v3400
    %v4563 = vpack.c.b16 %v3408, %v3401
    %v4564 = vpack.c.b16 %v3409, %v3402
    %v4565 = vpack.c.b16 %v3417, %v3410
    %v4566 = vpack.c.b16 %v3418, %v3411
    %v4567 = vpack.c.b16 %v3419, %v3412
    %v4568 = vpack.c.b16 %v3420, %v3413
    %v4569 = vpack.c.b16 %v3421, %v3414
    %v4570 = vpack.c.b16 %v3422, %v3415
    %v4571 = vpack.c.b16 %v3423, %v3416
    %v4572 = vpack.c.b16 %v3431, %v3424
    %v4573 = vpack.c.b16 %v3432, %v3425
    %v4574 = vpack.c.b16 %v3433, %v3426
    %v4575 = vpack.c.b16 %v3434, %v3427
    %v4576 = vpack.c.b16 %v3435, %v3428
    %v4577 = vpack.c.b16 %v3436, %v3429
    %v4578 = vpack.c.b16 %v3437, %v3430
    %v4579 = vpack.c.b16 %v3445, %v3438
    %v4580 = vpack.c.b16 %v3446, %v3439
    %v4581 = vpack.c.b16 %v3447, %v3440
    %v4582 = vpack.c.b16 %v3448, %v3441
    %v4583 = vpack.c.b16 %v3449, %v3442
    %v4584 = vpack.c.b16 %v3450, %v3443
    %v4585 = vpack.c.b16 %v3451, %v3444
    %v4586 = vpack.c.b16 %v3459, %v3452
    %v4587 = vpack.c.b16 %v3460, %v3453
    %v4588 = vpack.c.b16 %v3461, %v3454
    %v4589 = vpack.c.b16 %v3462, %v3455
    %v4590 = vpack.c.b16 %v3463, %v3456
    %v4591 = vpack.c.b16 %v3464, %v3457
    %v4592 = vpack.c.b16 %v3465, %v3458
    %v4593 = vpack.c.b16 %v3473, %v3466
    %v4594 = vpack.c.b16 %v3474, %v3467
    %v4595 = vpack.c.b16 %v3475, %v3468
    %v4596 = vpack.c.b16 %v3476, %v3469
    %v4597 = vpack.c.b16 %v3477, %v3470
    %v4598 = vpack.c.b16 %v3478, %v3471
    %v4599 = vpack.c.b16 %v3479, %v3472
    %v4600 = vpack.c.b16 %v3487, %v3480
    %v4601 = vpack.c.b16 %v3488, %v3481
    %v4602 = vpack.c.b16 %v3489, %v3482
    %v4603 = vpack.c.b16 %v3490, %v3483
    %v4604 = vpack.c.b16 %v3491, %v3484
    %v4605 = vpack.c.b16 %v3492, %v3485
    %v4606 = vpack.c.b16 %v3493, %v3486
    %v4607 = vpack.c.b16 %v3501, %v3494
    %v4608 = vpack.c.b16 %v3502, %v3495
    %v4609 = vpack.c.b16 %v3503, %v3496
    %v4610 = vpack.c.b16 %v3504, %v3497
    %v4611 = vpack.c.b16 %v3505, %v3498
    %v4612 = vpack.c.b16 %v3506, %v3499
    %v4613 = vpack.c.b16 %v3507, %v3500
    %v4614 = vpack.c.b16 %v3515, %v3508
    %v4615 = vpack.c.b16 %v3516, %v3509
    %v4616 = vpack.c.b16 %v3517, %v3510
    %v4617 = vpack.c.b16 %v3518, %v3511
    %v4618 = vpack.c.b16 %v3519, %v3512
    %v4619 = vpack.c.b16 %v3520, %v3513
    %v4620 = vpack.c.b16 %v3521, %v3514
    %v4621 = vpack.c.b16 %v3529, %v3522
    %v4622 = vpack.c.b16 %v3530, %v3523
    %v4623 = vpack.c.b16 %v3531, %v3524
    %v4624 = vpack.c.b16 %v3532, %v3525
    %v4625 = vpack.c.b16 %v3533, %v3526
    %v4626 = vpack.c.b16 %v3534, %v3527
    %v4627 = vpack.c.b16 %v3535, %v3528
    %v4628 = vpack.c.b16 %v3543, %v3536
    %v4629 = vpack.c.b16 %v3544, %v3537
    %v4630 = vpack.c.b16 %v3545, %v3538
    %v4631 = vpack.c.b16 %v3546, %v3539
    %v4632 = vpack.c.b16 %v3547, %v3540
    %v4633 = vpack.c.b16 %v3548, %v3541
    %v4634 = vpack.c.b16 %v3549, %v3542
    %v4635 = vpack.c.b16 %v3557, %v3550
    %v4636 = vpack.c.b16 %v3558, %v3551
    %v4637 = vpack.c.b16 %v3559, %v3552
    %v4638 = vpack.c.b16 %v3560, %v3553
    %v4639 = vpack.c.b16 %v3561, %v3554
    %v4640 = vpack.c.b16 %v3562, %v3555
    %v4641 = vpack.c.b16 %v3563, %v3556
    %v4642 = vpack.c.b16 %v3571, %v3564
    %v4643 = vpack.c.b16 %v3572, %v3565
    %v4644 = vpack.c.b16 %v3573, %v3566
    %v4645 = vpack.c.b16 %v3574, %v3567
    %v4646 = vpack.c.b16 %v3575, %v3568
    %v4647 = vpack.c.b16 %v3576, %v3569
    %v4648 = vpack.c.b16 %v3577, %v3570
    %v4649 = vpack.c.b16 %v3585, %v3578
    %v4650 = vpack.c.b16 %v3586, %v3579
    %v4651 = vpack.c.b16 %v3587, %v3580
    %v4652 = vpack.c.b16 %v3588, %v3581
    %v4653 = vpack.c.b16 %v3589, %v3582
    %v4654 = vpack.c.b16 %v3590, %v3583
    %v4655 = vpack.c.b16 %v3591, %v3584
    %v4656 = vpack.c.b16 %v3599, %v3592
    %v4657 = vpack.c.b16 %v3600, %v3593
    %v4658 = vpack.c.b16 %v3601, %v3594
    %v4659 = vpack.c.b16 %v3602, %v3595
    %v4660 = vpack.c.b16 %v3603, %v3596
    %v4661 = vpack.c.b16 %v3604, %v3597
    %v4662 = vpack.c.b16 %v3605, %v3598
    %v4663 = vpack.c.b16 %v3613, %v3606
    %v4664 = vpack.c.b16 %v3614, %v3607
    %v4665 = vpack.c.b16 %v3615, %v3608
    %v4666 = vpack.c.b16 %v3616, %v3609
    %v4667 = vpack.c.b16 %v3617, %v3610
    %v4668 = vpack.c.b16 %v3618, %v3611
    %v4669 = vpack.c.b16 %v3619, %v3612
    %v4670 = vpack.c.b16 %v3627, %v3620
    %v4671 = vpack.c.b16 %v3628, %v3621
    %v4672 = vpack.c.b16 %v3629, %v3622
    %v4673 = vpack.c.b16 %v3630, %v3623
    %v4674 = vpack.c.b16 %v3631, %v3624
    %v4675 = vpack.c.b16 %v3632, %v3625
    %v4676 = vpack.c.b16 %v3633, %v3626
    %v4677 = vpack.c.b16 %v3641, %v3634
    %v4678 = vpack.c.b16 %v3642, %v3635
    %v4679 = vpack.c.b16 %v3643, %v3636
    %v4680 = vpack.c.b16 %v3644, %v3637
    %v4681 = vpack.c.b16 %v3645, %v3638
    %v4682 = vpack.c.b16 %v3646, %v3639
    %v4683 = vpack.c.b16 %v3647, %v3640
    %v4684 = vpack.c.b16 %v3655, %v3648
    %v4685 = vpack.c.b16 %v3656, %v3649
    %v4686 = vpack.c.b16 %v3657, %v3650
    %v4687 = vpack.c.b16 %v3658, %v3651
    %v4688 = vpack.c.b16 %v3659, %v3652
    %v4689 = vpack.c.b16 %v3660, %v3653
    %v4690 = vpack.c.b16 %v3661, %v3654
    %v4691 = vpack.c.b16 %v3669, %v3662
    %v4692 = vpack.c.b16 %v3670, %v3663
    %v4693 = vpack.c.b16 %v3671, %v3664
    %v4694 = vpack.c.b16 %v3672, %v3665
    %v4695 = vpack.c.b16 %v3673, %v3666
    %v4696 = vpack.c.b16 %v3674, %v3667
    %v4697 = vpack.c.b16 %v3675, %v3668
    %v4698 = vpack.c.b16 %v3683, %v3676
    %v4699 = vpack.c.b16 %v3684, %v3677
    %v4700 = vpack.c.b16 %v3685, %v3678
    %v4701 = vpack.c.b16 %v3686, %v3679
    %v4702 = vpack.c.b16 %v3687, %v3680
    %v4703 = vpack.c.b16 %v3688, %v3681
    %v4704 = vpack.c.b16 %v3689, %v3682
    %v4705 = vpack.c.b16 %v3697, %v3690
    %v4706 = vpack.c.b16 %v3698, %v3691
    %v4707 = vpack.c.b16 %v3699, %v3692
    %v4708 = vpack.c.b16 %v3700, %v3693
    %v4709 = vpack.c.b16 %v3701, %v3694
    %v4710 = vpack.c.b16 %v3702, %v3695
    %v4711 = vpack.c.b16 %v3703, %v3696
    %v4712 = vpack.c.b16 %v3711, %v3704
    %v4713 = vpack.c.b16 %v3712, %v3705
    %v4714 = vpack.c.b16 %v3713, %v3706
    %v4715 = vpack.c.b16 %v3714, %v3707
    %v4716 = vpack.c.b16 %v3715, %v3708
    %v4717 = vpack.c.b16 %v3716, %v3709
    %v4718 = vpack.c.b16 %v3717, %v3710
    %v4719 = vpack.c.b16 %v3725, %v3718
    %v4720 = vpack.c.b16 %v3726, %v3719
    %v4721 = vpack.c.b16 %v3727, %v3720
    %v4722 = vpack.c.b16 %v3728, %v3721
    %v4723 = vpack.c.b16 %v3729, %v3722
    %v4724 = vpack.c.b16 %v3730, %v3723
    %v4725 = vpack.c.b16 %v3731, %v3724
    %v4726 = vpack.c.b16 %v3739, %v3732
    %v4727 = vpack.c.b16 %v3740, %v3733
    %v4728 = vpack.c.b16 %v3741, %v3734
    %v4729 = vpack.c.b16 %v3742, %v3735
    %v4730 = vpack.c.b16 %v3743, %v3736
    %v4731 = vpack.c.b16 %v3744, %v3737
    %v4732 = vpack.c.b16 %v3745, %v3738
    %v4733 = vpack.c.b16 %v3753, %v3746
    %v4734 = vpack.c.b16 %v3754, %v3747
    %v4735 = vpack.c.b16 %v3755, %v3748
    %v4736 = vpack.c.b16 %v3756, %v3749
    %v4737 = vpack.c.b16 %v3757, %v3750
    %v4738 = vpack.c.b16 %v3758, %v3751
    %v4739 = vpack.c.b16 %v3759, %v3752
    %v4740 = vpack.c.b16 %v3767, %v3760
    %v4741 = vpack.c.b16 %v3768, %v3761
    %v4742 = vpack.c.b16 %v3769, %v3762
    %v4743 = vpack.c.b16 %v3770, %v3763
    %v4744 = vpack.c.b16 %v3771, %v3764
    %v4745 = vpack.c.b16 %v3772, %v3765
    %v4746 = vpack.c.b16 %v3773, %v3766
    %v4747 = vpack.c.b16 %v3781, %v3774
    %v4748 = vpack.c.b16 %v3782, %v3775
    %v4749 = vpack.c.b16 %v3783, %v3776
    %v4750 = vpack.c.b16 %v3784, %v3777
    %v4751 = vpack.c.b16 %v3785, %v3778
    %v4752 = vpack.c.b16 %v3786, %v3779
    %v4753 = vpack.c.b16 %v3787, %v3780
    %v4754 = vpack.c.b16 %v3795, %v3788
    %v4755 = vpack.c.b16 %v3796, %v3789
    %v4756 = vpack.c.b16 %v3797, %v3790
    %v4757 = vpack.c.b16 %v3798, %v3791
    %v4758 = vpack.c.b16 %v3799, %v3792
    %v4759 = vpack.c.b16 %v3800, %v3793
    %v4760 = vpack.c.b16 %v3801, %v3794
    %v4761 = vpack.c.b16 %v3809, %v3802
    %v4762 = vpack.c.b16 %v3810, %v3803
    %v4763 = vpack.c.b16 %v3811, %v3804
    %v4764 = vpack.c.b16 %v3812, %v3805
    %v4765 = vpack.c.b16 %v3813, %v3806
    %v4766 = vpack.c.b16 %v3814, %v3807
    %v4767 = vpack.c.b16 %v3815, %v3808
    %v4768 = vpack.c.b16 %v3823, %v3816
    %v4769 = vpack.c.b16 %v3824, %v3817
    %v4770 = vpack.c.b16 %v3825, %v3818
    %v4771 = vpack.c.b16 %v3826, %v3819
    %v4772 = vpack.c.b16 %v3827, %v3820
    %v4773 = vpack.c.b16 %v3828, %v3821
    %v4774 = vpack.c.b16 %v3829, %v3822
    %v4775 = vpack.c.b16 %v3837, %v3830
    %v4776 = vpack.c.b16 %v3838, %v3831
    %v4777 = vpack.c.b16 %v3839, %v3832
    %v4778 = vpack.c.b16 %v3840, %v3833
    %v4779 = vpack.c.b16 %v3841, %v3834
    %v4780 = vpack.c.b16 %v3842, %v3835
    %v4781 = vpack.c.b16 %v3843, %v3836
    %v4782 = vpack.c.b16 %v3851, %v3844
    %v4783 = vpack.c.b16 %v3852, %v3845
    %v4784 = vpack.c.b16 %v3853, %v3846
    %v4785 = vpack.c.b16 %v3854, %v3847
    %v4786 = vpack.c.b16 %v3855, %v3848
    %v4787 = vpack.c.b16 %v3856, %v3849
    %v4788 = vpack.c.b16 %v3857, %v3850
    %v4789 = vpack.c.b16 %v3865, %v3858
    %v4790 = vpack.c.b16 %v3866, %v3859
    %v4791 = vpack.c.b16 %v3867, %v3860
    %v4792 = vpack.c.b16 %v3868, %v3861
    %v4793 = vpack.c.b16 %v3869, %v3862
    %v4794 = vpack.c.b16 %v3870, %v3863
    %v4795 = vpack.c.b16 %v3871, %v3864
    %v4796 = vpack.c.b16 %v3879, %v3872
    %v4797 = vpack.c.b16 %v3880, %v3873
    %v4798 = vpack.c.b16 %v3881, %v3874
    %v4799 = vpack.c.b16 %v3882, %v3875
    %v4800 = vpack.c.b16 %v3883, %v3876
    %v4801 = vpack.c.b16 %v3884, %v3877
    %v4802 = vpack.c.b16 %v3885, %v3878
    %v4803 = vpack.c.b16 %v3893, %v3886
    %v4804 = vpack.c.b16 %v3894, %v3887
    %v4805 = vpack.c.b16 %v3895, %v3888
    %v4806 = vpack.c.b16 %v3896, %v3889
    %v4807 = vpack.c.b16 %v3897, %v3890
    %v4808 = vpack.c.b16 %v3898, %v3891
    %v4809 = vpack.c.b16 %v3899, %v3892
    %v4810 = vpack.c.b16 %v3907, %v3900
    %v4811 = vpack.c.b16 %v3908, %v3901
    %v4812 = vpack.c.b16 %v3909, %v3902
    %v4813 = vpack.c.b16 %v3910, %v3903
    %v4814 = vpack.c.b16 %v3911, %v3904
    %v4815 = vpack.c.b16 %v3912, %v3905
    %v4816 = vpack.c.b16 %v3913, %v3906
    %v4817 = vpack.c.b16 %v3921, %v3914
    %v4818 = vpack.c.b16 %v3922, %v3915
    %v4819 = vpack.c.b16 %v3923, %v3916
    %v4820 = vpack.c.b16 %v3924, %v3917
    %v4821 = vpack.c.b16 %v3925, %v3918
    %v4822 = vpack.c.b16 %v3926, %v3919
    %v4823 = vpack.c.b16 %v3927, %v3920
    %v4824 = vpack.c.b16 %v3935, %v3928
    %v4825 = vpack.c.b16 %v3936, %v3929
    %v4826 = vpack.c.b16 %v3937, %v3930
    %v4827 = vpack.c.b16 %v3938, %v3931
    %v4828 = vpack.c.b16 %v3939, %v3932
    %v4829 = vpack.c.b16 %v3940, %v3933
    %v4830 = vpack.c.b16 %v3941, %v3934
    %v4831 = vpack.c.b16 %v3949, %v3942
    %v4832 = vpack.c.b16 %v3950, %v3943
    %v4833 = vpack.c.b16 %v3951, %v3944
    %v4834 = vpack.c.b16 %v3952, %v3945
    %v4835 = vpack.c.b16 %v3953, %v3946
    %v4836 = vpack.c.b16 %v3954, %v3947
    %v4837 = vpack.c.b16 %v3955, %v3948
    %v4838 = vpack.c.b16 %v3963, %v3956
    %v4839 = vpack.c.b16 %v3964, %v3957
    %v4840 = vpack.c.b16 %v3965, %v3958
    %v4841 = vpack.c.b16 %v3966, %v3959
    %v4842 = vpack.c.b16 %v3967, %v3960
    %v4843 = vpack.c.b16 %v3968, %v3961
    %v4844 = vpack.c.b16 %v3969, %v3962
    %v4845 = vpack.c.b16 %v3977, %v3970
    %v4846 = vpack.c.b16 %v3978, %v3971
    %v4847 = vpack.c.b16 %v3979, %v3972
    %v4848 = vpack.c.b16 %v3980, %v3973
    %v4849 = vpack.c.b16 %v3981, %v3974
    %v4850 = vpack.c.b16 %v3982, %v3975
    %v4851 = vpack.c.b16 %v3983, %v3976
    %v4852 = vpack.c.b16 %v3991, %v3984
    %v4853 = vpack.c.b16 %v3992, %v3985
    %v4854 = vpack.c.b16 %v3993, %v3986
    %v4855 = vpack.c.b16 %v3994, %v3987
    %v4856 = vpack.c.b16 %v3995, %v3988
    %v4857 = vpack.c.b16 %v3996, %v3989
    %v4858 = vpack.c.b16 %v3997, %v3990
    %v4859 = vpack.c.b16 %v4005, %v3998
    %v4860 = vpack.c.b16 %v4006, %v3999
    %v4861 = vpack.c.b16 %v4007, %v4000
    %v4862 = vpack.c.b16 %v4008, %v4001
    %v4863 = vpack.c.b16 %v4009, %v4002
    %v4864 = vpack.c.b16 %v4010, %v4003
    %v4865 = vpack.c.b16 %v4011, %v4004
    %v4866 = vpack.c.b16 %v4019, %v4012
    %v4867 = vpack.c.b16 %v4020, %v4013
    %v4868 = vpack.c.b16 %v4021, %v4014
    %v4869 = vpack.c.b16 %v4022, %v4015
    %v4870 = vpack.c.b16 %v4023, %v4016
    %v4871 = vpack.c.b16 %v4024, %v4017
    %v4872 = vpack.c.b16 %v4025, %v4018
    %v4873 = vpack.c.b16 %v4033, %v4026
    %v4874 = vpack.c.b16 %v4034, %v4027
    %v4875 = vpack.c.b16 %v4035, %v4028
    %v4876 = vpack.c.b16 %v4036, %v4029
    %v4877 = vpack.c.b16 %v4037, %v4030
    %v4878 = vpack.c.b16 %v4038, %v4031
    %v4879 = vpack.c.b16 %v4039, %v4032
    %v4880 = vpack.c.b16 %v4047, %v4040
    %v4881 = vpack.c.b16 %v4048, %v4041
    %v4882 = vpack.c.b16 %v4049, %v4042
    %v4883 = vpack.c.b16 %v4050, %v4043
    %v4884 = vpack.c.b16 %v4051, %v4044
    %v4885 = vpack.c.b16 %v4052, %v4045
    %v4886 = vpack.c.b16 %v4053, %v4046
    %v4887 = vpack.c.b16 %v4061, %v4054
    %v4888 = vpack.c.b16 %v4062, %v4055
    %v4889 = vpack.c.b16 %v4063, %v4056
    %v4890 = vpack.c.b16 %v4064, %v4057
    %v4891 = vpack.c.b16 %v4065, %v4058
    %v4892 = vpack.c.b16 %v4066, %v4059
    %v4893 = vpack.c.b16 %v4067, %v4060
    %v4894 = vpack.c.b16 %v4075, %v4068
    %v4895 = vpack.c.b16 %v4076, %v4069
    %v4896 = vpack.c.b16 %v4077, %v4070
    %v4897 = vpack.c.b16 %v4078, %v4071
    %v4898 = vpack.c.b16 %v4079, %v4072
    %v4899 = vpack.c.b16 %v4080, %v4073
    %v4900 = vpack.c.b16 %v4081, %v4074
    %v4901 = vpack.c.b16 %v4089, %v4082
    %v4902 = vpack.c.b16 %v4090, %v4083
    %v4903 = vpack.c.b16 %v4091, %v4084
    %v4904 = vpack.c.b16 %v4092, %v4085
    %v4905 = vpack.c.b16 %v4093, %v4086
    %v4906 = vpack.c.b16 %v4094, %v4087
    %v4907 = vpack.c.b16 %v4095, %v4088
    %v4908 = vpack.c.b16 %v4103, %v4096
    %v4909 = vpack.c.b16 %v4104, %v4097
    %v4910 = vpack.c.b16 %v4105, %v4098
    %v4911 = vpack.c.b16 %v4106, %v4099
    %v4912 = vpack.c.b16 %v4107, %v4100
    %v4913 = vpack.c.b16 %v4108, %v4101
    %v4914 = vpack.c.b16 %v4109, %v4102
    %v4915 = vpack.c.b16 %v4117, %v4110
    %v4916 = vpack.c.b16 %v4118, %v4111
    %v4917 = vpack.c.b16 %v4119, %v4112
    %v4918 = vpack.c.b16 %v4120, %v4113
    %v4919 = vpack.c.b16 %v4121, %v4114
    %v4920 = vpack.c.b16 %v4122, %v4115
    %v4921 = vpack.c.b16 %v4123, %v4116
    %v4922 = vpack.c.b16 %v4131, %v4124
    %v4923 = vpack.c.b16 %v4132, %v4125
    %v4924 = vpack.c.b16 %v4133, %v4126
    %v4925 = vpack.c.b16 %v4134, %v4127
    %v4926 = vpack.c.b16 %v4135, %v4128
    %v4927 = vpack.c.b16 %v4136, %v4129
    %v4928 = vpack.c.b16 %v4137, %v4130
    %v4929 = vpack.c.b16 %v4145, %v4138
    %v4930 = vpack.c.b16 %v4146, %v4139
    %v4931 = vpack.c.b16 %v4147, %v4140
    %v4932 = vpack.c.b16 %v4148, %v4141
    %v4933 = vpack.c.b16 %v4149, %v4142
    %v4934 = vpack.c.b16 %v4150, %v4143
    %v4935 = vpack.c.b16 %v4151, %v4144
    %v4936 = vpack.c.b16 %v4159, %v4152
    %v4937 = vpack.c.b16 %v4160, %v4153
    %v4938 = vpack.c.b16 %v4161, %v4154
    %v4939 = vpack.c.b16 %v4162, %v4155
    %v4940 = vpack.c.b16 %v4163, %v4156
    %v4941 = vpack.c.b16 %v4164, %v4157
    %v4942 = vpack.c.b16 %v4165, %v4158
    %v4943 = vpack.c.b16 %v4173, %v4166
    %v4944 = vpack.c.b16 %v4174, %v4167
    %v4945 = vpack.c.b16 %v4175, %v4168
    %v4946 = vpack.c.b16 %v4176, %v4169
    %v4947 = vpack.c.b16 %v4177, %v4170
    %v4948 = vpack.c.b16 %v4178, %v4171
    %v4949 = vpack.c.b16 %v4179, %v4172
    %v4950 = vpack.c.b16 %v4187, %v4180
    %v4951 = vpack.c.b16 %v4188, %v4181
    %v4952 = vpack.c.b16 %v4189, %v4182
    %v4953 = vpack.c.b16 %v4190, %v4183
    %v4954 = vpack.c.b16 %v4191, %v4184
    %v4955 = vpack.c.b16 %v4192, %v4185
    %v4956 = vpack.c.b16 %v4193, %v4186
    %v4957 = vpack.c.b16 %v4201, %v4194
    %v4958 = vpack.c.b16 %v4202, %v4195
    %v4959 = vpack.c.b16 %v4203, %v4196
    %v4960 = vpack.c.b16 %v4204, %v4197
    %v4961 = vpack.c.b16 %v4205, %v4198
    %v4962 = vpack.c.b16 %v4206, %v4199
    %v4963 = vpack.c.b16 %v4207, %v4200
    %v4964 = vpack.c.b16 %v4215, %v4208
    %v4965 = vpack.c.b16 %v4216, %v4209
    %v4966 = vpack.c.b16 %v4217, %v4210
    %v4967 = vpack.c.b16 %v4218, %v4211
    %v4968 = vpack.c.b16 %v4219, %v4212
    %v4969 = vpack.c.b16 %v4220, %v4213
    %v4970 = vpack.c.b16 %v4221, %v4214
    %v4971 = vpack.c.b16 %v4229, %v4222
    %v4972 = vpack.c.b16 %v4230, %v4223
    %v4973 = vpack.c.b16 %v4231, %v4224
    %v4974 = vpack.c.b16 %v4232, %v4225
    %v4975 = vpack.c.b16 %v4233, %v4226
    %v4976 = vpack.c.b16 %v4234, %v4227
    %v4977 = vpack.c.b16 %v4235, %v4228
    %v4978 = vpack.c.b16 %v4243, %v4236
    %v4979 = vpack.c.b16 %v4244, %v4237
    %v4980 = vpack.c.b16 %v4245, %v4238
    %v4981 = vpack.c.b16 %v4246, %v4239
    %v4982 = vpack.c.b16 %v4247, %v4240
    %v4983 = vpack.c.b16 %v4248, %v4241
    %v4984 = vpack.c.b16 %v4249, %v4242
    %v4985 = vpack.c.b16 %v4257, %v4250
    %v4986 = vpack.c.b16 %v4258, %v4251
    %v4987 = vpack.c.b16 %v4259, %v4252
    %v4988 = vpack.c.b16 %v4260, %v4253
    %v4989 = vpack.c.b16 %v4261, %v4254
    %v4990 = vpack.c.b16 %v4262, %v4255
    %v4991 = vpack.c.b16 %v4263, %v4256
    %v4992 = vpack.c.b16 %v4271, %v4264
    %v4993 = vpack.c.b16 %v4272, %v4265
    %v4994 = vpack.c.b16 %v4273, %v4266
    %v4995 = vpack.c.b16 %v4274, %v4267
    %v4996 = vpack.c.b16 %v4275, %v4268
    %v4997 = vpack.c.b16 %v4276, %v4269
    %v4998 = vpack.c.b16 %v4277, %v4270
    %v4999 = vpack.c.b16 %v4285, %v4278
    %v5000 = vpack.c.b16 %v4286, %v4279
    %v5001 = vpack.c.b16 %v4287, %v4280
    %v5002 = vpack.c.b16 %v4288, %v4281
    %v5003 = vpack.c.b16 %v4289, %v4282
    %v5004 = vpack.c.b16 %v4290, %v4283
    %v5005 = vpack.c.b16 %v4291, %v4284
    %v5006 = vpack.c.b16 %v4299, %v4292
    %v5007 = vpack.c.b16 %v4300, %v4293
    %v5008 = vpack.c.b16 %v4301, %v4294
    %v5009 = vpack.c.b16 %v4302, %v4295
    %v5010 = vpack.c.b16 %v4303, %v4296
    %v5011 = vpack.c.b16 %v4304, %v4297
    %v5012 = vpack.c.b16 %v4305, %v4298
    %v5013 = vpack.c.b16 %v4313, %v4306
    %v5014 = vpack.c.b16 %v4314, %v4307
    %v5015 = vpack.c.b16 %v4315, %v4308
    %v5016 = vpack.c.b16 %v4316, %v4309
    %v5017 = vpack.c.b16 %v4317, %v4310
    %v5018 = vpack.c.b16 %v4318, %v4311
    %v5019 = vpack.c.b16 %v4319, %v4312
    %v5718 = vunpack.c.l.b16 %v822
    %v5719 = vunpack.c.l.b16 %v823
    %v5720 = vunpack.c.l.b16 %v824
    %v5721 = vunpack.c.l.b16 %v825
    %v5722 = vunpack.c.l.b16 %v826
    %v5723 = vunpack.c.l.b16 %v827
    %v5724 = vunpack.c.l.b16 %v828
    %v5725 = vunpack.c.l.b16 %v829
    %v5726 = vunpack.c.l.b16 %v830
    %v5727 = vunpack.c.l.b16 %v831
    %v5728 = vunpack.c.l.b16 %v832
    %v5729 = vunpack.c.l.b16 %v833
    %v5730 = vunpack.c.l.b16 %v834
    %v5731 = vunpack.c.l.b16 %v835
    %v5732 = vunpack.c.l.b16 %v836
    %v5733 = vunpack.c.l.b16 %v837
    %v5734 = vunpack.c.l.b16 %v838
    %v5735 = vunpack.c.l.b16 %v839
    %v5736 = vunpack.c.l.b16 %v840
    %v5737 = vunpack.c.l.b16 %v841
    %v5738 = vunpack.c.l.b16 %v842
    %v5739 = vunpack.c.l.b16 %v843
    %v5740 = vunpack.c.l.b16 %v844
    %v5741 = vunpack.c.l.b16 %v845
    %v5742 = vunpack.c.l.b16 %v846
    %v5743 = vunpack.c.l.b16 %v847
    %v5744 = vunpack.c.l.b16 %v848
    %v5745 = vunpack.c.l.b16 %v849
    %v5746 = vunpack.c.l.b16 %v850
    %v5747 = vunpack.c.l.b16 %v851
    %v5748 = vunpack.c.l.b16 %v852
    %v5749 = vunpack.c.l.b16 %v853
    %v5750 = vunpack.c.l.b16 %v854
    %v5751 = vunpack.c.l.b16 %v855
    %v5752 = vunpack.c.l.b16 %v856
    %v5753 = vunpack.c.l.b16 %v857
    %v5754 = vunpack.c.l.b16 %v858
    %v5755 = vunpack.c.l.b16 %v859
    %v5756 = vunpack.c.l.b16 %v860
    %v5757 = vunpack.c.l.b16 %v861
    %v5758 = vunpack.c.l.b16 %v862
    %v5759 = vunpack.c.l.b16 %v863
    %v5760 = vunpack.c.l.b16 %v864
    %v5761 = vunpack.c.l.b16 %v865
    %v5762 = vunpack.c.l.b16 %v866
    %v5763 = vunpack.c.l.b16 %v867
    %v5764 = vunpack.c.l.b16 %v868
    %v5765 = vunpack.c.l.b16 %v869
    %v5766 = vunpack.c.l.b16 %v870
    %v5767 = vunpack.c.l.b16 %v871
    %v5768 = vunpack.c.l.b16 %v872
    %v5769 = vunpack.c.l.b16 %v873
    %v5770 = vunpack.c.l.b16 %v874
    %v5771 = vunpack.c.l.b16 %v875
    %v5772 = vunpack.c.l.b16 %v876
    %v5773 = vunpack.c.l.b16 %v877
    %v5774 = vunpack.c.l.b16 %v878
    %v5775 = vunpack.c.l.b16 %v879
    %v5776 = vunpack.c.l.b16 %v880
    %v5777 = vunpack.c.l.b16 %v881
    %v5778 = vunpack.c.l.b16 %v882
    %v5779 = vunpack.c.l.b16 %v883
    %v5780 = vunpack.c.l.b16 %v884
    %v5781 = vunpack.c.l.b16 %v885
    %v5782 = vunpack.c.l.b16 %v886
    %v5783 = vunpack.c.l.b16 %v887
    %v5784 = vunpack.c.l.b16 %v888
    %v5785 = vunpack.c.l.b16 %v889
    %v5786 = vunpack.c.l.b16 %v890
    %v5787 = vunpack.c.l.b16 %v891
    %v5788 = vunpack.c.l.b16 %v892
    %v5789 = vunpack.c.l.b16 %v893
    %v5790 = vunpack.c.l.b16 %v894
    %v5791 = vunpack.c.l.b16 %v895
    %v5792 = vunpack.c.l.b16 %v896
    %v5793 = vunpack.c.l.b16 %v897
    %v5794 = vunpack.c.l.b16 %v898
    %v5795 = vunpack.c.l.b16 %v899
    %v5796 = vunpack.c.l.b16 %v900
    %v5797 = vunpack.c.l.b16 %v901
    %v5798 = vunpack.c.l.b16 %v902
    %v5799 = vunpack.c.l.b16 %v903
    %v5800 = vunpack.c.l.b16 %v904
    %v5801 = vunpack.c.l.b16 %v905
    %v5802 = vunpack.c.l.b16 %v906
    %v5803 = vunpack.c.l.b16 %v907
    %v5804 = vunpack.c.l.b16 %v908
    %v5805 = vunpack.c.l.b16 %v909
    %v5806 = vunpack.c.l.b16 %v910
    %v5807 = vunpack.c.l.b16 %v911
    %v5808 = vunpack.c.l.b16 %v912
    %v5809 = vunpack.c.l.b16 %v913
    %v5810 = vunpack.c.l.b16 %v914
    %v5811 = vunpack.c.l.b16 %v915
    %v5812 = vunpack.c.l.b16 %v916
    %v5813 = vunpack.c.l.b16 %v917
    %v5814 = vunpack.c.l.b16 %v918
    %v5815 = vunpack.c.l.b16 %v919
    %v5816 = vpack.c.b16 %v5719, %v5718
    %v5817 = vpack.c.b16 %v5721, %v5720
    %v5818 = vpack.c.b16 %v5723, %v5722
    %v5819 = vpack.c.b16 %v5725, %v5724
    %v5820 = vpack.c.b16 %v5727, %v5726
    %v5821 = vpack.c.b16 %v5729, %v5728
    %v5822 = vpack.c.b16 %v5731, %v5730
    %v5823 = vpack.c.b16 %v5733, %v5732
    %v5824 = vpack.c.b16 %v5735, %v5734
    %v5825 = vpack.c.b16 %v5737, %v5736
    %v5826 = vpack.c.b16 %v5739, %v5738
    %v5827 = vpack.c.b16 %v5741, %v5740
    %v5828 = vpack.c.b16 %v5743, %v5742
    %v5829 = vpack.c.b16 %v5745, %v5744
    %v5830 = vpack.c.b16 %v5747, %v5746
    %v5831 = vpack.c.b16 %v5749, %v5748
    %v5832 = vpack.c.b16 %v5751, %v5750
    %v5833 = vpack.c.b16 %v5753, %v5752
    %v5834 = vpack.c.b16 %v5755, %v5754
    %v5835 = vpack.c.b16 %v5757, %v5756
    %v5836 = vpack.c.b16 %v5759, %v5758
    %v5837 = vpack.c.b16 %v5761, %v5760
    %v5838 = vpack.c.b16 %v5763, %v5762
    %v5839 = vpack.c.b16 %v5765, %v5764
    %v5840 = vpack.c.b16 %v5767, %v5766
    %v5841 = vpack.c.b16 %v5769, %v5768
    %v5842 = vpack.c.b16 %v5771, %v5770
    %v5843 = vpack.c.b16 %v5773, %v5772
    %v5844 = vpack.c.b16 %v5775, %v5774
    %v5845 = vpack.c.b16 %v5777, %v5776
    %v5846 = vpack.c.b16 %v5779, %v5778
    %v5847 = vpack.c.b16 %v5781, %v5780
    %v5848 = vpack.c.b16 %v5783, %v5782
    %v5849 = vpack.c.b16 %v5785, %v5784
    %v5850 = vpack.c.b16 %v5787, %v5786
    %v5851 = vpack.c.b16 %v5789, %v5788
    %v5852 = vpack.c.b16 %v5791, %v5790
    %v5853 = vpack.c.b16 %v5793, %v5792
    %v5854 = vpack.c.b16 %v5795, %v5794
    %v5855 = vpack.c.b16 %v5797, %v5796
    %v5856 = vpack.c.b16 %v5799, %v5798
    %v5857 = vpack.c.b16 %v5801, %v5800
    %v5858 = vpack.c.b16 %v5803, %v5802
    %v5859 = vpack.c.b16 %v5805, %v5804
    %v5860 = vpack.c.b16 %v5807, %v5806
    %v5861 = vpack.c.b16 %v5809, %v5808
    %v5862 = vpack.c.b16 %v5811, %v5810
    %v5863 = vpack.c.b16 %v5813, %v5812
    %v5864 = vpack.c.b16 %v5815, %v5814
    %vm5914 = vcmask 130048
    %v5916 = vsel %vm5914, %v4326, 0
    %v5919 = vsel %vm5914, %v4333, 0
    %v5922 = vsel %vm5914, %v4340, 0
    %v5925 = vsel %vm5914, %v4347, 0
    %v5928 = vsel %vm5914, %v4354, 0
    %v5931 = vsel %vm5914, %v4361, 0
    %v5934 = vsel %vm5914, %v4368, 0
    %v5937 = vsel %vm5914, %v4375, 0
    %v5940 = vsel %vm5914, %v4382, 0
    %v5943 = vsel %vm5914, %v4389, 0
    %v5946 = vsel %vm5914, %v4396, 0
    %v5949 = vsel %vm5914, %v4403, 0
    %v5952 = vsel %vm5914, %v4410, 0
    %v5955 = vsel %vm5914, %v4417, 0
    %v5958 = vsel %vm5914, %v4424, 0
    %v5961 = vsel %vm5914, %v4431, 0
    %v5964 = vsel %vm5914, %v4438, 0
    %v5967 = vsel %vm5914, %v4445, 0
    %v5970 = vsel %vm5914, %v4452, 0
    %v5973 = vsel %vm5914, %v4459, 0
    %v5976 = vsel %vm5914, %v4466, 0
    %v5979 = vsel %vm5914, %v4473, 0
    %v5982 = vsel %vm5914, %v4480, 0
    %v5985 = vsel %vm5914, %v4487, 0
    %v5988 = vsel %vm5914, %v4494, 0
    %v5991 = vsel %vm5914, %v4501, 0
    %v5994 = vsel %vm5914, %v4508, 0
    %v5997 = vsel %vm5914, %v4515, 0
    %v6000 = vsel %vm5914, %v4522, 0
    %v6003 = vsel %vm5914, %v4529, 0
    %v6006 = vsel %vm5914, %v4536, 0
    %v6009 = vsel %vm5914, %v4543, 0
    %v6012 = vsel %vm5914, %v4550, 0
    %v6015 = vsel %vm5914, %v4557, 0
    %v6018 = vsel %vm5914, %v4564, 0
    %v6021 = vsel %vm5914, %v4571, 0
    %v6024 = vsel %vm5914, %v4578, 0
    %v6027 = vsel %vm5914, %v4585, 0
    %v6030 = vsel %vm5914, %v4592, 0
    %v6033 = vsel %vm5914, %v4599, 0
    %v6036 = vsel %vm5914, %v4606, 0
    %v6039 = vsel %vm5914, %v4613, 0
    %v6042 = vsel %vm5914, %v4620, 0
    %v6045 = vsel %vm5914, %v4627, 0
    %v6048 = vsel %vm5914, %v4634, 0
    %v6051 = vsel %vm5914, %v4641, 0
    %v6054 = vsel %vm5914, %v4648, 0
    %v6057 = vsel %vm5914, %v4655, 0
    %v6060 = vsel %vm5914, %v4662, 0
    %v6063 = vsel %vm5914, %v4669, 0
    %v6066 = vsel %vm5914, %v4676, 0
    %v6069 = vsel %vm5914, %v4683, 0
    %v6072 = vsel %vm5914, %v4690, 0
    %v6075 = vsel %vm5914, %v4697, 0
    %v6078 = vsel %vm5914, %v4704, 0
    %v6081 = vsel %vm5914, %v4711, 0
    %v6084 = vsel %vm5914, %v4718, 0
    %v6087 = vsel %vm5914, %v4725, 0
    %v6090 = vsel %vm5914, %v4732, 0
    %v6093 = vsel %vm5914, %v4739, 0
    %v6096 = vsel %vm5914, %v4746, 0
    %v6099 = vsel %vm5914, %v4753, 0
    %v6102 = vsel %vm5914, %v4760, 0
    %v6105 = vsel %vm5914, %v4767, 0
    %v6108 = vsel %vm5914, %v4774, 0
    %v6111 = vsel %vm5914, %v4781, 0
    %v6114 = vsel %vm5914, %v4788, 0
    %v6117 = vsel %vm5914, %v4795, 0
    %v6120 = vsel %vm5914, %v4802, 0
    %v6123 = vsel %vm5914, %v4809, 0
    %v6126 = vsel %vm5914, %v4816, 0
    %v6129 = vsel %vm5914, %v4823, 0
    %v6132 = vsel %vm5914, %v4830, 0
    %v6135 = vsel %vm5914, %v4837, 0
    %v6138 = vsel %vm5914, %v4844, 0
    %v6141 = vsel %vm5914, %v4851, 0
    %v6144 = vsel %vm5914, %v4858, 0
    %v6147 = vsel %vm5914, %v4865, 0
    %v6150 = vsel %vm5914, %v4872, 0
    %v6153 = vsel %vm5914, %v4879, 0
    %v6156 = vsel %vm5914, %v4886, 0
    %v6159 = vsel %vm5914, %v4893, 0
    %v6162 = vsel %vm5914, %v4900, 0
    %v6165 = vsel %vm5914, %v4907, 0
    %v6168 = vsel %vm5914, %v4914, 0
    %v6171 = vsel %vm5914, %v4921, 0
    %v6174 = vsel %vm5914, %v4928, 0
    %v6177 = vsel %vm5914, %v4935, 0
    %v6180 = vsel %vm5914, %v4942, 0
    %v6183 = vsel %vm5914, %v4949, 0
    %v6186 = vsel %vm5914, %v4956, 0
    %v6189 = vsel %vm5914, %v4963, 0
    %v6192 = vsel %vm5914, %v4970, 0
    %v6195 = vsel %vm5914, %v4977, 0
    %v6198 = vsel %vm5914, %v4984, 0
    %v6201 = vsel %vm5914, %v4991, 0
    %v6204 = vsel %vm5914, %v4998, 0
    %v6207 = vsel %vm5914, %v5005, 0
    %v6210 = vsel %vm5914, %v5012, 0
    %v6213 = vsel %vm5914, %v5019, 0
    %6215 = vmatpush.bf16.msra.mxu0 %v5823
    %6216 = vmatpush.bf16.msra.mxu0 %v5822
    %6217 = vmatpush.bf16.msra.mxu0 %v5821
    %6218 = vmatpush.bf16.msra.mxu0 %v5820
    %6219 = vmatpush.bf16.msra.mxu0 %v5819
    %6220 = vmatpush.bf16.msra.mxu0 %v5818
    %6221 = vmatpush.bf16.msra.mxu0 %v5817
    %6222 = vmatpush.bf16.msra.mxu0 %v5816
    %6223 = vmatmul.bf16.gmra.mxu0 %v4320
    %v6224 = vpop.f32.mrf.mxu0
    %v6225 = vadd.f32 %v1123, %v6224
    %v6226 = vpop.f32.mrf.mxu0
    %v6227 = vadd.f32 %v1128, %v6226
    %6228 = vmatmul.bf16.gmra.mxu0 %v4327
    %v6229 = vpop.f32.mrf.mxu0
    %v6230 = vadd.f32 %v1133, %v6229
    %v6231 = vpop.f32.mrf.mxu0
    %v6232 = vadd.f32 %v1138, %v6231
    %6233 = vmatmul.bf16.gmra.mxu0 %v4334
    %v6234 = vpop.f32.mrf.mxu0
    %v6235 = vadd.f32 %v1143, %v6234
    %v6236 = vpop.f32.mrf.mxu0
    %v6237 = vadd.f32 %v1148, %v6236
    %6238 = vmatmul.bf16.gmra.mxu0 %v4341
    %v6239 = vpop.f32.mrf.mxu0
    %v6240 = vadd.f32 %v1153, %v6239
    %v6241 = vpop.f32.mrf.mxu0
    %v6242 = vadd.f32 %v1158, %v6241
    %6243 = vmatmul.bf16.gmra.mxu0 %v4348
    %v6244 = vpop.f32.mrf.mxu0
    %v6245 = vadd.f32 %v1163, %v6244
    %v6246 = vpop.f32.mrf.mxu0
    %v6247 = vadd.f32 %v1168, %v6246
    %6248 = vmatmul.bf16.gmra.mxu0 %v4355
    %v6249 = vpop.f32.mrf.mxu0
    %v6250 = vadd.f32 %v1173, %v6249
    %v6251 = vpop.f32.mrf.mxu0
    %v6252 = vadd.f32 %v1178, %v6251
    %6253 = vmatmul.bf16.gmra.mxu0 %v4362
    %v6254 = vpop.f32.mrf.mxu0
    %v6255 = vadd.f32 %v1183, %v6254
    %v6256 = vpop.f32.mrf.mxu0
    %v6257 = vadd.f32 %v1188, %v6256
    %6258 = vmatmul.bf16.gmra.mxu0 %v4369
    %v6259 = vpop.f32.mrf.mxu0
    %v6260 = vadd.f32 %v1193, %v6259
    %v6261 = vpop.f32.mrf.mxu0
    %v6262 = vadd.f32 %v1198, %v6261
    %6263 = vmatmul.bf16.gmra.mxu0 %v4376
    %v6264 = vpop.f32.mrf.mxu0
    %v6265 = vadd.f32 %v1203, %v6264
    %v6266 = vpop.f32.mrf.mxu0
    %v6267 = vadd.f32 %v1208, %v6266
    %6268 = vmatmul.bf16.gmra.mxu0 %v4383
    %v6269 = vpop.f32.mrf.mxu0
    %v6270 = vadd.f32 %v1213, %v6269
    %v6271 = vpop.f32.mrf.mxu0
    %v6272 = vadd.f32 %v1218, %v6271
    %6273 = vmatmul.bf16.gmra.mxu0 %v4390
    %v6274 = vpop.f32.mrf.mxu0
    %v6275 = vadd.f32 %v1223, %v6274
    %v6276 = vpop.f32.mrf.mxu0
    %v6277 = vadd.f32 %v1228, %v6276
    %6278 = vmatmul.bf16.gmra.mxu0 %v4397
    %v6279 = vpop.f32.mrf.mxu0
    %v6280 = vadd.f32 %v1233, %v6279
    %v6281 = vpop.f32.mrf.mxu0
    %v6282 = vadd.f32 %v1238, %v6281
    %6283 = vmatmul.bf16.gmra.mxu0 %v4404
    %v6284 = vpop.f32.mrf.mxu0
    %v6285 = vadd.f32 %v1243, %v6284
    %v6286 = vpop.f32.mrf.mxu0
    %v6287 = vadd.f32 %v1248, %v6286
    %6288 = vmatmul.bf16.gmra.mxu0 %v4411
    %v6289 = vpop.f32.mrf.mxu0
    %v6290 = vadd.f32 %v1253, %v6289
    %v6291 = vpop.f32.mrf.mxu0
    %v6292 = vadd.f32 %v1258, %v6291
    %6293 = vmatmul.bf16.gmra.mxu0 %v4418
    %v6294 = vpop.f32.mrf.mxu0
    %v6295 = vadd.f32 %v1263, %v6294
    %v6296 = vpop.f32.mrf.mxu0
    %v6297 = vadd.f32 %v1268, %v6296
    %6298 = vmatmul.bf16.gmra.mxu0 %v4425
    %v6299 = vpop.f32.mrf.mxu0
    %v6300 = vadd.f32 %v1273, %v6299
    %v6301 = vpop.f32.mrf.mxu0
    %v6302 = vadd.f32 %v1278, %v6301
    %6303 = vmatmul.bf16.gmra.mxu0 %v4432
    %v6304 = vpop.f32.mrf.mxu0
    %v6305 = vadd.f32 %v1283, %v6304
    %v6306 = vpop.f32.mrf.mxu0
    %v6307 = vadd.f32 %v1288, %v6306
    %6308 = vmatmul.bf16.gmra.mxu0 %v4439
    %v6309 = vpop.f32.mrf.mxu0
    %v6310 = vadd.f32 %v1293, %v6309
    %v6311 = vpop.f32.mrf.mxu0
    %v6312 = vadd.f32 %v1298, %v6311
    %6313 = vmatmul.bf16.gmra.mxu0 %v4446
    %v6314 = vpop.f32.mrf.mxu0
    %v6315 = vadd.f32 %v1303, %v6314
    %v6316 = vpop.f32.mrf.mxu0
    %v6317 = vadd.f32 %v1308, %v6316
    %6318 = vmatmul.bf16.gmra.mxu0 %v4453
    %v6319 = vpop.f32.mrf.mxu0
    %v6320 = vadd.f32 %v1313, %v6319
    %v6321 = vpop.f32.mrf.mxu0
    %v6322 = vadd.f32 %v1318, %v6321
    %6323 = vmatmul.bf16.gmra.mxu0 %v4460
    %v6324 = vpop.f32.mrf.mxu0
    %v6325 = vadd.f32 %v1323, %v6324
    %v6326 = vpop.f32.mrf.mxu0
    %v6327 = vadd.f32 %v1328, %v6326
    %6328 = vmatmul.bf16.gmra.mxu0 %v4467
    %v6329 = vpop.f32.mrf.mxu0
    %v6330 = vadd.f32 %v1333, %v6329
    %v6331 = vpop.f32.mrf.mxu0
    %v6332 = vadd.f32 %v1338, %v6331
    %6333 = vmatmul.bf16.gmra.mxu0 %v4474
    %v6334 = vpop.f32.mrf.mxu0
    %v6335 = vadd.f32 %v1343, %v6334
    %v6336 = vpop.f32.mrf.mxu0
    %v6337 = vadd.f32 %v1348, %v6336
    %6338 = vmatmul.bf16.gmra.mxu0 %v4481
    %v6339 = vpop.f32.mrf.mxu0
    %v6340 = vadd.f32 %v1353, %v6339
    %v6341 = vpop.f32.mrf.mxu0
    %v6342 = vadd.f32 %v1358, %v6341
    %6343 = vmatmul.bf16.gmra.mxu0 %v4488
    %v6344 = vpop.f32.mrf.mxu0
    %v6345 = vadd.f32 %v1363, %v6344
    %v6346 = vpop.f32.mrf.mxu0
    %v6347 = vadd.f32 %v1368, %v6346
    %6348 = vmatmul.bf16.gmra.mxu0 %v4495
    %v6349 = vpop.f32.mrf.mxu0
    %v6350 = vadd.f32 %v1373, %v6349
    %v6351 = vpop.f32.mrf.mxu0
    %v6352 = vadd.f32 %v1378, %v6351
    %6353 = vmatmul.bf16.gmra.mxu0 %v4502
    %v6354 = vpop.f32.mrf.mxu0
    %v6355 = vadd.f32 %v1383, %v6354
    %v6356 = vpop.f32.mrf.mxu0
    %v6357 = vadd.f32 %v1388, %v6356
    %6358 = vmatmul.bf16.gmra.mxu0 %v4509
    %v6359 = vpop.f32.mrf.mxu0
    %v6360 = vadd.f32 %v1393, %v6359
    %v6361 = vpop.f32.mrf.mxu0
    %v6362 = vadd.f32 %v1398, %v6361
    %6363 = vmatmul.bf16.gmra.mxu0 %v4516
    %v6364 = vpop.f32.mrf.mxu0
    %v6365 = vadd.f32 %v1403, %v6364
    %v6366 = vpop.f32.mrf.mxu0
    %v6367 = vadd.f32 %v1408, %v6366
    %6368 = vmatmul.bf16.gmra.mxu0 %v4523
    %v6369 = vpop.f32.mrf.mxu0
    %v6370 = vadd.f32 %v1413, %v6369
    %v6371 = vpop.f32.mrf.mxu0
    %v6372 = vadd.f32 %v1418, %v6371
    %6373 = vmatmul.bf16.gmra.mxu0 %v4530
    %v6374 = vpop.f32.mrf.mxu0
    %v6375 = vadd.f32 %v1423, %v6374
    %v6376 = vpop.f32.mrf.mxu0
    %v6377 = vadd.f32 %v1428, %v6376
    %6378 = vmatmul.bf16.gmra.mxu0 %v4537
    %v6379 = vpop.f32.mrf.mxu0
    %v6380 = vadd.f32 %v1433, %v6379
    %v6381 = vpop.f32.mrf.mxu0
    %v6382 = vadd.f32 %v1438, %v6381
    %6383 = vmatmul.bf16.gmra.mxu0 %v4544
    %v6384 = vpop.f32.mrf.mxu0
    %v6385 = vadd.f32 %v1443, %v6384
    %v6386 = vpop.f32.mrf.mxu0
    %v6387 = vadd.f32 %v1448, %v6386
    %6388 = vmatmul.bf16.gmra.mxu0 %v4551
    %v6389 = vpop.f32.mrf.mxu0
    %v6390 = vadd.f32 %v1453, %v6389
    %v6391 = vpop.f32.mrf.mxu0
    %v6392 = vadd.f32 %v1458, %v6391
    %6393 = vmatmul.bf16.gmra.mxu0 %v4558
    %v6394 = vpop.f32.mrf.mxu0
    %v6395 = vadd.f32 %v1463, %v6394
    %v6396 = vpop.f32.mrf.mxu0
    %v6397 = vadd.f32 %v1468, %v6396
    %6398 = vmatmul.bf16.gmra.mxu0 %v4565
    %v6399 = vpop.f32.mrf.mxu0
    %v6400 = vadd.f32 %v1473, %v6399
    %v6401 = vpop.f32.mrf.mxu0
    %v6402 = vadd.f32 %v1478, %v6401
    %6403 = vmatmul.bf16.gmra.mxu0 %v4572
    %v6404 = vpop.f32.mrf.mxu0
    %v6405 = vadd.f32 %v1483, %v6404
    %v6406 = vpop.f32.mrf.mxu0
    %v6407 = vadd.f32 %v1488, %v6406
    %6408 = vmatmul.bf16.gmra.mxu0 %v4579
    %v6409 = vpop.f32.mrf.mxu0
    %v6410 = vadd.f32 %v1493, %v6409
    %v6411 = vpop.f32.mrf.mxu0
    %v6412 = vadd.f32 %v1498, %v6411
    %6413 = vmatmul.bf16.gmra.mxu0 %v4586
    %v6414 = vpop.f32.mrf.mxu0
    %v6415 = vadd.f32 %v1503, %v6414
    %v6416 = vpop.f32.mrf.mxu0
    %v6417 = vadd.f32 %v1508, %v6416
    %6418 = vmatmul.bf16.gmra.mxu0 %v4593
    %v6419 = vpop.f32.mrf.mxu0
    %v6420 = vadd.f32 %v1513, %v6419
    %v6421 = vpop.f32.mrf.mxu0
    %v6422 = vadd.f32 %v1518, %v6421
    %6423 = vmatmul.bf16.gmra.mxu0 %v4600
    %v6424 = vpop.f32.mrf.mxu0
    %v6425 = vadd.f32 %v1523, %v6424
    %v6426 = vpop.f32.mrf.mxu0
    %v6427 = vadd.f32 %v1528, %v6426
    %6428 = vmatmul.bf16.gmra.mxu0 %v4607
    %v6429 = vpop.f32.mrf.mxu0
    %v6430 = vadd.f32 %v1533, %v6429
    %v6431 = vpop.f32.mrf.mxu0
    %v6432 = vadd.f32 %v1538, %v6431
    %6433 = vmatmul.bf16.gmra.mxu0 %v4614
    %v6434 = vpop.f32.mrf.mxu0
    %v6435 = vadd.f32 %v1543, %v6434
    %v6436 = vpop.f32.mrf.mxu0
    %v6437 = vadd.f32 %v1548, %v6436
    %6438 = vmatmul.bf16.gmra.mxu0 %v4621
    %v6439 = vpop.f32.mrf.mxu0
    %v6440 = vadd.f32 %v1553, %v6439
    %v6441 = vpop.f32.mrf.mxu0
    %v6442 = vadd.f32 %v1558, %v6441
    %6443 = vmatmul.bf16.gmra.mxu0 %v4628
    %v6444 = vpop.f32.mrf.mxu0
    %v6445 = vadd.f32 %v1563, %v6444
    %v6446 = vpop.f32.mrf.mxu0
    %v6447 = vadd.f32 %v1568, %v6446
    %6448 = vmatmul.bf16.gmra.mxu0 %v4635
    %v6449 = vpop.f32.mrf.mxu0
    %v6450 = vadd.f32 %v1573, %v6449
    %v6451 = vpop.f32.mrf.mxu0
    %v6452 = vadd.f32 %v1578, %v6451
    %6453 = vmatmul.bf16.gmra.mxu0 %v4642
    %v6454 = vpop.f32.mrf.mxu0
    %v6455 = vadd.f32 %v1583, %v6454
    %v6456 = vpop.f32.mrf.mxu0
    %v6457 = vadd.f32 %v1588, %v6456
    %6458 = vmatmul.bf16.gmra.mxu0 %v4649
    %v6459 = vpop.f32.mrf.mxu0
    %v6460 = vadd.f32 %v1593, %v6459
    %v6461 = vpop.f32.mrf.mxu0
    %v6462 = vadd.f32 %v1598, %v6461
    %6463 = vmatmul.bf16.gmra.mxu0 %v4656
    %v6464 = vpop.f32.mrf.mxu0
    %v6465 = vadd.f32 %v1603, %v6464
    %v6466 = vpop.f32.mrf.mxu0
    %v6467 = vadd.f32 %v1608, %v6466
    %6468 = vmatmul.bf16.gmra.mxu0 %v4663
    %v6469 = vpop.f32.mrf.mxu0
    %v6470 = vadd.f32 %v1613, %v6469
    %v6471 = vpop.f32.mrf.mxu0
    %v6472 = vadd.f32 %v1618, %v6471
    %6473 = vmatmul.bf16.gmra.mxu0 %v4670
    %v6474 = vpop.f32.mrf.mxu0
    %v6475 = vadd.f32 %v1623, %v6474
    %v6476 = vpop.f32.mrf.mxu0
    %v6477 = vadd.f32 %v1628, %v6476
    %6478 = vmatmul.bf16.gmra.mxu0 %v4677
    %v6479 = vpop.f32.mrf.mxu0
    %v6480 = vadd.f32 %v1633, %v6479
    %v6481 = vpop.f32.mrf.mxu0
    %v6482 = vadd.f32 %v1638, %v6481
    %6483 = vmatmul.bf16.gmra.mxu0 %v4684
    %v6484 = vpop.f32.mrf.mxu0
    %v6485 = vadd.f32 %v1643, %v6484
    %v6486 = vpop.f32.mrf.mxu0
    %v6487 = vadd.f32 %v1648, %v6486
    %6488 = vmatmul.bf16.gmra.mxu0 %v4691
    %v6489 = vpop.f32.mrf.mxu0
    %v6490 = vadd.f32 %v1653, %v6489
    %v6491 = vpop.f32.mrf.mxu0
    %v6492 = vadd.f32 %v1658, %v6491
    %6493 = vmatmul.bf16.gmra.mxu0 %v4698
    %v6494 = vpop.f32.mrf.mxu0
    %v6495 = vadd.f32 %v1663, %v6494
    %v6496 = vpop.f32.mrf.mxu0
    %v6497 = vadd.f32 %v1668, %v6496
    %6498 = vmatmul.bf16.gmra.mxu0 %v4705
    %v6499 = vpop.f32.mrf.mxu0
    %v6500 = vadd.f32 %v1673, %v6499
    %v6501 = vpop.f32.mrf.mxu0
    %v6502 = vadd.f32 %v1678, %v6501
    %6503 = vmatmul.bf16.gmra.mxu0 %v4712
    %v6504 = vpop.f32.mrf.mxu0
    %v6505 = vadd.f32 %v1683, %v6504
    %v6506 = vpop.f32.mrf.mxu0
    %v6507 = vadd.f32 %v1688, %v6506
    %6508 = vmatmul.bf16.gmra.mxu0 %v4719
    %v6509 = vpop.f32.mrf.mxu0
    %v6510 = vadd.f32 %v1693, %v6509
    %v6511 = vpop.f32.mrf.mxu0
    %v6512 = vadd.f32 %v1698, %v6511
    %6513 = vmatmul.bf16.gmra.mxu0 %v4726
    %v6514 = vpop.f32.mrf.mxu0
    %v6515 = vadd.f32 %v1703, %v6514
    %v6516 = vpop.f32.mrf.mxu0
    %v6517 = vadd.f32 %v1708, %v6516
    %6518 = vmatmul.bf16.gmra.mxu0 %v4733
    %v6519 = vpop.f32.mrf.mxu0
    %v6520 = vadd.f32 %v1713, %v6519
    %v6521 = vpop.f32.mrf.mxu0
    %v6522 = vadd.f32 %v1718, %v6521
    %6523 = vmatmul.bf16.gmra.mxu0 %v4740
    %v6524 = vpop.f32.mrf.mxu0
    %v6525 = vadd.f32 %v1723, %v6524
    %v6526 = vpop.f32.mrf.mxu0
    %v6527 = vadd.f32 %v1728, %v6526
    %6528 = vmatmul.bf16.gmra.mxu0 %v4747
    %v6529 = vpop.f32.mrf.mxu0
    %v6530 = vadd.f32 %v1733, %v6529
    %v6531 = vpop.f32.mrf.mxu0
    %v6532 = vadd.f32 %v1738, %v6531
    %6533 = vmatmul.bf16.gmra.mxu0 %v4754
    %v6534 = vpop.f32.mrf.mxu0
    %v6535 = vadd.f32 %v1743, %v6534
    %v6536 = vpop.f32.mrf.mxu0
    %v6537 = vadd.f32 %v1748, %v6536
    %6538 = vmatmul.bf16.gmra.mxu0 %v4761
    %v6539 = vpop.f32.mrf.mxu0
    %v6540 = vadd.f32 %v1753, %v6539
    %v6541 = vpop.f32.mrf.mxu0
    %v6542 = vadd.f32 %v1758, %v6541
    %6543 = vmatmul.bf16.gmra.mxu0 %v4768
    %v6544 = vpop.f32.mrf.mxu0
    %v6545 = vadd.f32 %v1763, %v6544
    %v6546 = vpop.f32.mrf.mxu0
    %v6547 = vadd.f32 %v1768, %v6546
    %6548 = vmatmul.bf16.gmra.mxu0 %v4775
    %v6549 = vpop.f32.mrf.mxu0
    %v6550 = vadd.f32 %v1773, %v6549
    %v6551 = vpop.f32.mrf.mxu0
    %v6552 = vadd.f32 %v1778, %v6551
    %6553 = vmatmul.bf16.gmra.mxu0 %v4782
    %v6554 = vpop.f32.mrf.mxu0
    %v6555 = vadd.f32 %v1783, %v6554
    %v6556 = vpop.f32.mrf.mxu0
    %v6557 = vadd.f32 %v1788, %v6556
    %6558 = vmatmul.bf16.gmra.mxu0 %v4789
    %v6559 = vpop.f32.mrf.mxu0
    %v6560 = vadd.f32 %v1793, %v6559
    %v6561 = vpop.f32.mrf.mxu0
    %v6562 = vadd.f32 %v1798, %v6561
    %6563 = vmatmul.bf16.gmra.mxu0 %v4796
    %v6564 = vpop.f32.mrf.mxu0
    %v6565 = vadd.f32 %v1803, %v6564
    %v6566 = vpop.f32.mrf.mxu0
    %v6567 = vadd.f32 %v1808, %v6566
    %6568 = vmatmul.bf16.gmra.mxu0 %v4803
    %v6569 = vpop.f32.mrf.mxu0
    %v6570 = vadd.f32 %v1813, %v6569
    %v6571 = vpop.f32.mrf.mxu0
    %v6572 = vadd.f32 %v1818, %v6571
    %6573 = vmatmul.bf16.gmra.mxu0 %v4810
    %v6574 = vpop.f32.mrf.mxu0
    %v6575 = vadd.f32 %v1823, %v6574
    %v6576 = vpop.f32.mrf.mxu0
    %v6577 = vadd.f32 %v1828, %v6576
    %6578 = vmatmul.bf16.gmra.mxu0 %v4817
    %v6579 = vpop.f32.mrf.mxu0
    %v6580 = vadd.f32 %v1833, %v6579
    %v6581 = vpop.f32.mrf.mxu0
    %v6582 = vadd.f32 %v1838, %v6581
    %6583 = vmatmul.bf16.gmra.mxu0 %v4824
    %v6584 = vpop.f32.mrf.mxu0
    %v6585 = vadd.f32 %v1843, %v6584
    %v6586 = vpop.f32.mrf.mxu0
    %v6587 = vadd.f32 %v1848, %v6586
    %6588 = vmatmul.bf16.gmra.mxu0 %v4831
    %v6589 = vpop.f32.mrf.mxu0
    %v6590 = vadd.f32 %v1853, %v6589
    %v6591 = vpop.f32.mrf.mxu0
    %v6592 = vadd.f32 %v1858, %v6591
    %6593 = vmatmul.bf16.gmra.mxu0 %v4838
    %v6594 = vpop.f32.mrf.mxu0
    %v6595 = vadd.f32 %v1863, %v6594
    %v6596 = vpop.f32.mrf.mxu0
    %v6597 = vadd.f32 %v1868, %v6596
    %6598 = vmatmul.bf16.gmra.mxu0 %v4845
    %v6599 = vpop.f32.mrf.mxu0
    %v6600 = vadd.f32 %v1873, %v6599
    %v6601 = vpop.f32.mrf.mxu0
    %v6602 = vadd.f32 %v1878, %v6601
    %6603 = vmatmul.bf16.gmra.mxu0 %v4852
    %v6604 = vpop.f32.mrf.mxu0
    %v6605 = vadd.f32 %v1883, %v6604
    %v6606 = vpop.f32.mrf.mxu0
    %v6607 = vadd.f32 %v1888, %v6606
    %6608 = vmatmul.bf16.gmra.mxu0 %v4859
    %v6609 = vpop.f32.mrf.mxu0
    %v6610 = vadd.f32 %v1893, %v6609
    %v6611 = vpop.f32.mrf.mxu0
    %v6612 = vadd.f32 %v1898, %v6611
    %6613 = vmatmul.bf16.gmra.mxu0 %v4866
    %v6614 = vpop.f32.mrf.mxu0
    %v6615 = vadd.f32 %v1903, %v6614
    %v6616 = vpop.f32.mrf.mxu0
    %v6617 = vadd.f32 %v1908, %v6616
    %6618 = vmatmul.bf16.gmra.mxu0 %v4873
    %v6619 = vpop.f32.mrf.mxu0
    %v6620 = vadd.f32 %v1913, %v6619
    %v6621 = vpop.f32.mrf.mxu0
    %v6622 = vadd.f32 %v1918, %v6621
    %6623 = vmatmul.bf16.gmra.mxu0 %v4880
    %v6624 = vpop.f32.mrf.mxu0
    %v6625 = vadd.f32 %v1923, %v6624
    %v6626 = vpop.f32.mrf.mxu0
    %v6627 = vadd.f32 %v1928, %v6626
    %6628 = vmatmul.bf16.gmra.mxu0 %v4887
    %v6629 = vpop.f32.mrf.mxu0
    %v6630 = vadd.f32 %v1933, %v6629
    %v6631 = vpop.f32.mrf.mxu0
    %v6632 = vadd.f32 %v1938, %v6631
    %6633 = vmatmul.bf16.gmra.mxu0 %v4894
    %v6634 = vpop.f32.mrf.mxu0
    %v6635 = vadd.f32 %v1943, %v6634
    %v6636 = vpop.f32.mrf.mxu0
    %v6637 = vadd.f32 %v1948, %v6636
    %6638 = vmatmul.bf16.gmra.mxu0 %v4901
    %v6639 = vpop.f32.mrf.mxu0
    %v6640 = vadd.f32 %v1953, %v6639
    %v6641 = vpop.f32.mrf.mxu0
    %v6642 = vadd.f32 %v1958, %v6641
    %6643 = vmatmul.bf16.gmra.mxu0 %v4908
    %v6644 = vpop.f32.mrf.mxu0
    %v6645 = vadd.f32 %v1963, %v6644
    %v6646 = vpop.f32.mrf.mxu0
    %v6647 = vadd.f32 %v1968, %v6646
    %6648 = vmatmul.bf16.gmra.mxu0 %v4915
    %v6649 = vpop.f32.mrf.mxu0
    %v6650 = vadd.f32 %v1973, %v6649
    %v6651 = vpop.f32.mrf.mxu0
    %v6652 = vadd.f32 %v1978, %v6651
    %6653 = vmatmul.bf16.gmra.mxu0 %v4922
    %v6654 = vpop.f32.mrf.mxu0
    %v6655 = vadd.f32 %v1983, %v6654
    %v6656 = vpop.f32.mrf.mxu0
    %v6657 = vadd.f32 %v1988, %v6656
    %6658 = vmatmul.bf16.gmra.mxu0 %v4929
    %v6659 = vpop.f32.mrf.mxu0
    %v6660 = vadd.f32 %v1993, %v6659
    %v6661 = vpop.f32.mrf.mxu0
    %v6662 = vadd.f32 %v1998, %v6661
    %6663 = vmatmul.bf16.gmra.mxu0 %v4936
    %v6664 = vpop.f32.mrf.mxu0
    %v6665 = vadd.f32 %v2003, %v6664
    %v6666 = vpop.f32.mrf.mxu0
    %v6667 = vadd.f32 %v2008, %v6666
    %6668 = vmatmul.bf16.gmra.mxu0 %v4943
    %v6669 = vpop.f32.mrf.mxu0
    %v6670 = vadd.f32 %v2013, %v6669
    %v6671 = vpop.f32.mrf.mxu0
    %v6672 = vadd.f32 %v2018, %v6671
    %6673 = vmatmul.bf16.gmra.mxu0 %v4950
    %v6674 = vpop.f32.mrf.mxu0
    %v6675 = vadd.f32 %v2023, %v6674
    %v6676 = vpop.f32.mrf.mxu0
    %v6677 = vadd.f32 %v2028, %v6676
    %6678 = vmatmul.bf16.gmra.mxu0 %v4957
    %v6679 = vpop.f32.mrf.mxu0
    %v6680 = vadd.f32 %v2033, %v6679
    %v6681 = vpop.f32.mrf.mxu0
    %v6682 = vadd.f32 %v2038, %v6681
    %6683 = vmatmul.bf16.gmra.mxu0 %v4964
    %v6684 = vpop.f32.mrf.mxu0
    %v6685 = vadd.f32 %v2043, %v6684
    %v6686 = vpop.f32.mrf.mxu0
    %v6687 = vadd.f32 %v2048, %v6686
    %6688 = vmatmul.bf16.gmra.mxu0 %v4971
    %v6689 = vpop.f32.mrf.mxu0
    %v6690 = vadd.f32 %v2053, %v6689
    %v6691 = vpop.f32.mrf.mxu0
    %v6692 = vadd.f32 %v2058, %v6691
    %6693 = vmatmul.bf16.gmra.mxu0 %v4978
    %v6694 = vpop.f32.mrf.mxu0
    %v6695 = vadd.f32 %v2063, %v6694
    %v6696 = vpop.f32.mrf.mxu0
    %v6697 = vadd.f32 %v2068, %v6696
    %6698 = vmatmul.bf16.gmra.mxu0 %v4985
    %v6699 = vpop.f32.mrf.mxu0
    %v6700 = vadd.f32 %v2073, %v6699
    %v6701 = vpop.f32.mrf.mxu0
    %v6702 = vadd.f32 %v2078, %v6701
    %6703 = vmatmul.bf16.gmra.mxu0 %v4992
    %v6704 = vpop.f32.mrf.mxu0
    %v6705 = vadd.f32 %v2083, %v6704
    %v6706 = vpop.f32.mrf.mxu0
    %v6707 = vadd.f32 %v2088, %v6706
    %6708 = vmatmul.bf16.gmra.mxu0 %v4999
    %v6709 = vpop.f32.mrf.mxu0
    %v6710 = vadd.f32 %v2093, %v6709
    %v6711 = vpop.f32.mrf.mxu0
    %v6712 = vadd.f32 %v2098, %v6711
    %6713 = vmatmul.bf16.gmra.mxu0 %v5006
    %v6714 = vpop.f32.mrf.mxu0
    %v6715 = vadd.f32 %v2103, %v6714
    %v6716 = vpop.f32.mrf.mxu0
    %v6717 = vadd.f32 %v2108, %v6716
    %6718 = vmatmul.bf16.gmra.mxu0 %v5013
    %v6719 = vpop.f32.mrf.mxu0
    %v6720 = vadd.f32 %v2113, %v6719
    %v6721 = vpop.f32.mrf.mxu0
    %v6722 = vadd.f32 %v2118, %v6721
    %6723 = vdwg.mxu0
    %6724 = vmatpush.bf16.msra.mxu0 %v5831
    %6725 = vmatpush.bf16.msra.mxu0 %v5830
    %6726 = vmatpush.bf16.msra.mxu0 %v5829
    %6727 = vmatpush.bf16.msra.mxu0 %v5828
    %6728 = vmatpush.bf16.msra.mxu0 %v5827
    %6729 = vmatpush.bf16.msra.mxu0 %v5826
    %6730 = vmatpush.bf16.msra.mxu0 %v5825
    %6731 = vmatpush.bf16.msra.mxu0 %v5824
    %6732 = vmatmul.bf16.gmra.mxu0 %v4321
    %v6733 = vpop.f32.mrf.mxu0
    %v6734 = vadd.f32 %v6225, %v6733
    %v6735 = vpop.f32.mrf.mxu0
    %v6736 = vadd.f32 %v6227, %v6735
    %6737 = vmatmul.bf16.gmra.mxu0 %v4328
    %v6738 = vpop.f32.mrf.mxu0
    %v6739 = vadd.f32 %v6230, %v6738
    %v6740 = vpop.f32.mrf.mxu0
    %v6741 = vadd.f32 %v6232, %v6740
    %6742 = vmatmul.bf16.gmra.mxu0 %v4335
    %v6743 = vpop.f32.mrf.mxu0
    %v6744 = vadd.f32 %v6235, %v6743
    %v6745 = vpop.f32.mrf.mxu0
    %v6746 = vadd.f32 %v6237, %v6745
    %6747 = vmatmul.bf16.gmra.mxu0 %v4342
    %v6748 = vpop.f32.mrf.mxu0
    %v6749 = vadd.f32 %v6240, %v6748
    %v6750 = vpop.f32.mrf.mxu0
    %v6751 = vadd.f32 %v6242, %v6750
    %6752 = vmatmul.bf16.gmra.mxu0 %v4349
    %v6753 = vpop.f32.mrf.mxu0
    %v6754 = vadd.f32 %v6245, %v6753
    %v6755 = vpop.f32.mrf.mxu0
    %v6756 = vadd.f32 %v6247, %v6755
    %6757 = vmatmul.bf16.gmra.mxu0 %v4356
    %v6758 = vpop.f32.mrf.mxu0
    %v6759 = vadd.f32 %v6250, %v6758
    %v6760 = vpop.f32.mrf.mxu0
    %v6761 = vadd.f32 %v6252, %v6760
    %6762 = vmatmul.bf16.gmra.mxu0 %v4363
    %v6763 = vpop.f32.mrf.mxu0
    %v6764 = vadd.f32 %v6255, %v6763
    %v6765 = vpop.f32.mrf.mxu0
    %v6766 = vadd.f32 %v6257, %v6765
    %6767 = vmatmul.bf16.gmra.mxu0 %v4370
    %v6768 = vpop.f32.mrf.mxu0
    %v6769 = vadd.f32 %v6260, %v6768
    %v6770 = vpop.f32.mrf.mxu0
    %v6771 = vadd.f32 %v6262, %v6770
    %6772 = vmatmul.bf16.gmra.mxu0 %v4377
    %v6773 = vpop.f32.mrf.mxu0
    %v6774 = vadd.f32 %v6265, %v6773
    %v6775 = vpop.f32.mrf.mxu0
    %v6776 = vadd.f32 %v6267, %v6775
    %6777 = vmatmul.bf16.gmra.mxu0 %v4384
    %v6778 = vpop.f32.mrf.mxu0
    %v6779 = vadd.f32 %v6270, %v6778
    %v6780 = vpop.f32.mrf.mxu0
    %v6781 = vadd.f32 %v6272, %v6780
    %6782 = vmatmul.bf16.gmra.mxu0 %v4391
    %v6783 = vpop.f32.mrf.mxu0
    %v6784 = vadd.f32 %v6275, %v6783
    %v6785 = vpop.f32.mrf.mxu0
    %v6786 = vadd.f32 %v6277, %v6785
    %6787 = vmatmul.bf16.gmra.mxu0 %v4398
    %v6788 = vpop.f32.mrf.mxu0
    %v6789 = vadd.f32 %v6280, %v6788
    %v6790 = vpop.f32.mrf.mxu0
    %v6791 = vadd.f32 %v6282, %v6790
    %6792 = vmatmul.bf16.gmra.mxu0 %v4405
    %v6793 = vpop.f32.mrf.mxu0
    %v6794 = vadd.f32 %v6285, %v6793
    %v6795 = vpop.f32.mrf.mxu0
    %v6796 = vadd.f32 %v6287, %v6795
    %6797 = vmatmul.bf16.gmra.mxu0 %v4412
    %v6798 = vpop.f32.mrf.mxu0
    %v6799 = vadd.f32 %v6290, %v6798
    %v6800 = vpop.f32.mrf.mxu0
    %v6801 = vadd.f32 %v6292, %v6800
    %6802 = vmatmul.bf16.gmra.mxu0 %v4419
    %v6803 = vpop.f32.mrf.mxu0
    %v6804 = vadd.f32 %v6295, %v6803
    %v6805 = vpop.f32.mrf.mxu0
    %v6806 = vadd.f32 %v6297, %v6805
    %6807 = vmatmul.bf16.gmra.mxu0 %v4426
    %v6808 = vpop.f32.mrf.mxu0
    %v6809 = vadd.f32 %v6300, %v6808
    %v6810 = vpop.f32.mrf.mxu0
    %v6811 = vadd.f32 %v6302, %v6810
    %6812 = vmatmul.bf16.gmra.mxu0 %v4433
    %v6813 = vpop.f32.mrf.mxu0
    %v6814 = vadd.f32 %v6305, %v6813
    %v6815 = vpop.f32.mrf.mxu0
    %v6816 = vadd.f32 %v6307, %v6815
    %6817 = vmatmul.bf16.gmra.mxu0 %v4440
    %v6818 = vpop.f32.mrf.mxu0
    %v6819 = vadd.f32 %v6310, %v6818
    %v6820 = vpop.f32.mrf.mxu0
    %v6821 = vadd.f32 %v6312, %v6820
    %6822 = vmatmul.bf16.gmra.mxu0 %v4447
    %v6823 = vpop.f32.mrf.mxu0
    %v6824 = vadd.f32 %v6315, %v6823
    %v6825 = vpop.f32.mrf.mxu0
    %v6826 = vadd.f32 %v6317, %v6825
    %6827 = vmatmul.bf16.gmra.mxu0 %v4454
    %v6828 = vpop.f32.mrf.mxu0
    %v6829 = vadd.f32 %v6320, %v6828
    %v6830 = vpop.f32.mrf.mxu0
    %v6831 = vadd.f32 %v6322, %v6830
    %6832 = vmatmul.bf16.gmra.mxu0 %v4461
    %v6833 = vpop.f32.mrf.mxu0
    %v6834 = vadd.f32 %v6325, %v6833
    %v6835 = vpop.f32.mrf.mxu0
    %v6836 = vadd.f32 %v6327, %v6835
    %6837 = vmatmul.bf16.gmra.mxu0 %v4468
    %v6838 = vpop.f32.mrf.mxu0
    %v6839 = vadd.f32 %v6330, %v6838
    %v6840 = vpop.f32.mrf.mxu0
    %v6841 = vadd.f32 %v6332, %v6840
    %6842 = vmatmul.bf16.gmra.mxu0 %v4475
    %v6843 = vpop.f32.mrf.mxu0
    %v6844 = vadd.f32 %v6335, %v6843
    %v6845 = vpop.f32.mrf.mxu0
    %v6846 = vadd.f32 %v6337, %v6845
    %6847 = vmatmul.bf16.gmra.mxu0 %v4482
    %v6848 = vpop.f32.mrf.mxu0
    %v6849 = vadd.f32 %v6340, %v6848
    %v6850 = vpop.f32.mrf.mxu0
    %v6851 = vadd.f32 %v6342, %v6850
    %6852 = vmatmul.bf16.gmra.mxu0 %v4489
    %v6853 = vpop.f32.mrf.mxu0
    %v6854 = vadd.f32 %v6345, %v6853
    %v6855 = vpop.f32.mrf.mxu0
    %v6856 = vadd.f32 %v6347, %v6855
    %6857 = vmatmul.bf16.gmra.mxu0 %v4496
    %v6858 = vpop.f32.mrf.mxu0
    %v6859 = vadd.f32 %v6350, %v6858
    %v6860 = vpop.f32.mrf.mxu0
    %v6861 = vadd.f32 %v6352, %v6860
    %6862 = vmatmul.bf16.gmra.mxu0 %v4503
    %v6863 = vpop.f32.mrf.mxu0
    %v6864 = vadd.f32 %v6355, %v6863
    %v6865 = vpop.f32.mrf.mxu0
    %v6866 = vadd.f32 %v6357, %v6865
    %6867 = vmatmul.bf16.gmra.mxu0 %v4510
    %v6868 = vpop.f32.mrf.mxu0
    %v6869 = vadd.f32 %v6360, %v6868
    %v6870 = vpop.f32.mrf.mxu0
    %v6871 = vadd.f32 %v6362, %v6870
    %6872 = vmatmul.bf16.gmra.mxu0 %v4517
    %v6873 = vpop.f32.mrf.mxu0
    %v6874 = vadd.f32 %v6365, %v6873
    %v6875 = vpop.f32.mrf.mxu0
    %v6876 = vadd.f32 %v6367, %v6875
    %6877 = vmatmul.bf16.gmra.mxu0 %v4524
    %v6878 = vpop.f32.mrf.mxu0
    %v6879 = vadd.f32 %v6370, %v6878
    %v6880 = vpop.f32.mrf.mxu0
    %v6881 = vadd.f32 %v6372, %v6880
    %6882 = vmatmul.bf16.gmra.mxu0 %v4531
    %v6883 = vpop.f32.mrf.mxu0
    %v6884 = vadd.f32 %v6375, %v6883
    %v6885 = vpop.f32.mrf.mxu0
    %v6886 = vadd.f32 %v6377, %v6885
    %6887 = vmatmul.bf16.gmra.mxu0 %v4538
    %v6888 = vpop.f32.mrf.mxu0
    %v6889 = vadd.f32 %v6380, %v6888
    %v6890 = vpop.f32.mrf.mxu0
    %v6891 = vadd.f32 %v6382, %v6890
    %6892 = vmatmul.bf16.gmra.mxu0 %v4545
    %v6893 = vpop.f32.mrf.mxu0
    %v6894 = vadd.f32 %v6385, %v6893
    %v6895 = vpop.f32.mrf.mxu0
    %v6896 = vadd.f32 %v6387, %v6895
    %6897 = vmatmul.bf16.gmra.mxu0 %v4552
    %v6898 = vpop.f32.mrf.mxu0
    %v6899 = vadd.f32 %v6390, %v6898
    %v6900 = vpop.f32.mrf.mxu0
    %v6901 = vadd.f32 %v6392, %v6900
    %6902 = vmatmul.bf16.gmra.mxu0 %v4559
    %v6903 = vpop.f32.mrf.mxu0
    %v6904 = vadd.f32 %v6395, %v6903
    %v6905 = vpop.f32.mrf.mxu0
    %v6906 = vadd.f32 %v6397, %v6905
    %6907 = vmatmul.bf16.gmra.mxu0 %v4566
    %v6908 = vpop.f32.mrf.mxu0
    %v6909 = vadd.f32 %v6400, %v6908
    %v6910 = vpop.f32.mrf.mxu0
    %v6911 = vadd.f32 %v6402, %v6910
    %6912 = vmatmul.bf16.gmra.mxu0 %v4573
    %v6913 = vpop.f32.mrf.mxu0
    %v6914 = vadd.f32 %v6405, %v6913
    %v6915 = vpop.f32.mrf.mxu0
    %v6916 = vadd.f32 %v6407, %v6915
    %6917 = vmatmul.bf16.gmra.mxu0 %v4580
    %v6918 = vpop.f32.mrf.mxu0
    %v6919 = vadd.f32 %v6410, %v6918
    %v6920 = vpop.f32.mrf.mxu0
    %v6921 = vadd.f32 %v6412, %v6920
    %6922 = vmatmul.bf16.gmra.mxu0 %v4587
    %v6923 = vpop.f32.mrf.mxu0
    %v6924 = vadd.f32 %v6415, %v6923
    %v6925 = vpop.f32.mrf.mxu0
    %v6926 = vadd.f32 %v6417, %v6925
    %6927 = vmatmul.bf16.gmra.mxu0 %v4594
    %v6928 = vpop.f32.mrf.mxu0
    %v6929 = vadd.f32 %v6420, %v6928
    %v6930 = vpop.f32.mrf.mxu0
    %v6931 = vadd.f32 %v6422, %v6930
    %6932 = vmatmul.bf16.gmra.mxu0 %v4601
    %v6933 = vpop.f32.mrf.mxu0
    %v6934 = vadd.f32 %v6425, %v6933
    %v6935 = vpop.f32.mrf.mxu0
    %v6936 = vadd.f32 %v6427, %v6935
    %6937 = vmatmul.bf16.gmra.mxu0 %v4608
    %v6938 = vpop.f32.mrf.mxu0
    %v6939 = vadd.f32 %v6430, %v6938
    %v6940 = vpop.f32.mrf.mxu0
    %v6941 = vadd.f32 %v6432, %v6940
    %6942 = vmatmul.bf16.gmra.mxu0 %v4615
    %v6943 = vpop.f32.mrf.mxu0
    %v6944 = vadd.f32 %v6435, %v6943
    %v6945 = vpop.f32.mrf.mxu0
    %v6946 = vadd.f32 %v6437, %v6945
    %6947 = vmatmul.bf16.gmra.mxu0 %v4622
    %v6948 = vpop.f32.mrf.mxu0
    %v6949 = vadd.f32 %v6440, %v6948
    %v6950 = vpop.f32.mrf.mxu0
    %v6951 = vadd.f32 %v6442, %v6950
    %6952 = vmatmul.bf16.gmra.mxu0 %v4629
    %v6953 = vpop.f32.mrf.mxu0
    %v6954 = vadd.f32 %v6445, %v6953
    %v6955 = vpop.f32.mrf.mxu0
    %v6956 = vadd.f32 %v6447, %v6955
    %6957 = vmatmul.bf16.gmra.mxu0 %v4636
    %v6958 = vpop.f32.mrf.mxu0
    %v6959 = vadd.f32 %v6450, %v6958
    %v6960 = vpop.f32.mrf.mxu0
    %v6961 = vadd.f32 %v6452, %v6960
    %6962 = vmatmul.bf16.gmra.mxu0 %v4643
    %v6963 = vpop.f32.mrf.mxu0
    %v6964 = vadd.f32 %v6455, %v6963
    %v6965 = vpop.f32.mrf.mxu0
    %v6966 = vadd.f32 %v6457, %v6965
    %6967 = vmatmul.bf16.gmra.mxu0 %v4650
    %v6968 = vpop.f32.mrf.mxu0
    %v6969 = vadd.f32 %v6460, %v6968
    %v6970 = vpop.f32.mrf.mxu0
    %v6971 = vadd.f32 %v6462, %v6970
    %6972 = vmatmul.bf16.gmra.mxu0 %v4657
    %v6973 = vpop.f32.mrf.mxu0
    %v6974 = vadd.f32 %v6465, %v6973
    %v6975 = vpop.f32.mrf.mxu0
    %v6976 = vadd.f32 %v6467, %v6975
    %6977 = vmatmul.bf16.gmra.mxu0 %v4664
    %v6978 = vpop.f32.mrf.mxu0
    %v6979 = vadd.f32 %v6470, %v6978
    %v6980 = vpop.f32.mrf.mxu0
    %v6981 = vadd.f32 %v6472, %v6980
    %6982 = vmatmul.bf16.gmra.mxu0 %v4671
    %v6983 = vpop.f32.mrf.mxu0
    %v6984 = vadd.f32 %v6475, %v6983
    %v6985 = vpop.f32.mrf.mxu0
    %v6986 = vadd.f32 %v6477, %v6985
    %6987 = vmatmul.bf16.gmra.mxu0 %v4678
    %v6988 = vpop.f32.mrf.mxu0
    %v6989 = vadd.f32 %v6480, %v6988
    %v6990 = vpop.f32.mrf.mxu0
    %v6991 = vadd.f32 %v6482, %v6990
    %6992 = vmatmul.bf16.gmra.mxu0 %v4685
    %v6993 = vpop.f32.mrf.mxu0
    %v6994 = vadd.f32 %v6485, %v6993
    %v6995 = vpop.f32.mrf.mxu0
    %v6996 = vadd.f32 %v6487, %v6995
    %6997 = vmatmul.bf16.gmra.mxu0 %v4692
    %v6998 = vpop.f32.mrf.mxu0
    %v6999 = vadd.f32 %v6490, %v6998
    %v7000 = vpop.f32.mrf.mxu0
    %v7001 = vadd.f32 %v6492, %v7000
    %7002 = vmatmul.bf16.gmra.mxu0 %v4699
    %v7003 = vpop.f32.mrf.mxu0
    %v7004 = vadd.f32 %v6495, %v7003
    %v7005 = vpop.f32.mrf.mxu0
    %v7006 = vadd.f32 %v6497, %v7005
    %7007 = vmatmul.bf16.gmra.mxu0 %v4706
    %v7008 = vpop.f32.mrf.mxu0
    %v7009 = vadd.f32 %v6500, %v7008
    %v7010 = vpop.f32.mrf.mxu0
    %v7011 = vadd.f32 %v6502, %v7010
    %7012 = vmatmul.bf16.gmra.mxu0 %v4713
    %v7013 = vpop.f32.mrf.mxu0
    %v7014 = vadd.f32 %v6505, %v7013
    %v7015 = vpop.f32.mrf.mxu0
    %v7016 = vadd.f32 %v6507, %v7015
    %7017 = vmatmul.bf16.gmra.mxu0 %v4720
    %v7018 = vpop.f32.mrf.mxu0
    %v7019 = vadd.f32 %v6510, %v7018
    %v7020 = vpop.f32.mrf.mxu0
    %v7021 = vadd.f32 %v6512, %v7020
    %7022 = vmatmul.bf16.gmra.mxu0 %v4727
    %v7023 = vpop.f32.mrf.mxu0
    %v7024 = vadd.f32 %v6515, %v7023
    %v7025 = vpop.f32.mrf.mxu0
    %v7026 = vadd.f32 %v6517, %v7025
    %7027 = vmatmul.bf16.gmra.mxu0 %v4734
    %v7028 = vpop.f32.mrf.mxu0
    %v7029 = vadd.f32 %v6520, %v7028
    %v7030 = vpop.f32.mrf.mxu0
    %v7031 = vadd.f32 %v6522, %v7030
    %7032 = vmatmul.bf16.gmra.mxu0 %v4741
    %v7033 = vpop.f32.mrf.mxu0
    %v7034 = vadd.f32 %v6525, %v7033
    %v7035 = vpop.f32.mrf.mxu0
    %v7036 = vadd.f32 %v6527, %v7035
    %7037 = vmatmul.bf16.gmra.mxu0 %v4748
    %v7038 = vpop.f32.mrf.mxu0
    %v7039 = vadd.f32 %v6530, %v7038
    %v7040 = vpop.f32.mrf.mxu0
    %v7041 = vadd.f32 %v6532, %v7040
    %7042 = vmatmul.bf16.gmra.mxu0 %v4755
    %v7043 = vpop.f32.mrf.mxu0
    %v7044 = vadd.f32 %v6535, %v7043
    %v7045 = vpop.f32.mrf.mxu0
    %v7046 = vadd.f32 %v6537, %v7045
    %7047 = vmatmul.bf16.gmra.mxu0 %v4762
    %v7048 = vpop.f32.mrf.mxu0
    %v7049 = vadd.f32 %v6540, %v7048
    %v7050 = vpop.f32.mrf.mxu0
    %v7051 = vadd.f32 %v6542, %v7050
    %7052 = vmatmul.bf16.gmra.mxu0 %v4769
    %v7053 = vpop.f32.mrf.mxu0
    %v7054 = vadd.f32 %v6545, %v7053
    %v7055 = vpop.f32.mrf.mxu0
    %v7056 = vadd.f32 %v6547, %v7055
    %7057 = vmatmul.bf16.gmra.mxu0 %v4776
    %v7058 = vpop.f32.mrf.mxu0
    %v7059 = vadd.f32 %v6550, %v7058
    %v7060 = vpop.f32.mrf.mxu0
    %v7061 = vadd.f32 %v6552, %v7060
    %7062 = vmatmul.bf16.gmra.mxu0 %v4783
    %v7063 = vpop.f32.mrf.mxu0
    %v7064 = vadd.f32 %v6555, %v7063
    %v7065 = vpop.f32.mrf.mxu0
    %v7066 = vadd.f32 %v6557, %v7065
    %7067 = vmatmul.bf16.gmra.mxu0 %v4790
    %v7068 = vpop.f32.mrf.mxu0
    %v7069 = vadd.f32 %v6560, %v7068
    %v7070 = vpop.f32.mrf.mxu0
    %v7071 = vadd.f32 %v6562, %v7070
    %7072 = vmatmul.bf16.gmra.mxu0 %v4797
    %v7073 = vpop.f32.mrf.mxu0
    %v7074 = vadd.f32 %v6565, %v7073
    %v7075 = vpop.f32.mrf.mxu0
    %v7076 = vadd.f32 %v6567, %v7075
    %7077 = vmatmul.bf16.gmra.mxu0 %v4804
    %v7078 = vpop.f32.mrf.mxu0
    %v7079 = vadd.f32 %v6570, %v7078
    %v7080 = vpop.f32.mrf.mxu0
    %v7081 = vadd.f32 %v6572, %v7080
    %7082 = vmatmul.bf16.gmra.mxu0 %v4811
    %v7083 = vpop.f32.mrf.mxu0
    %v7084 = vadd.f32 %v6575, %v7083
    %v7085 = vpop.f32.mrf.mxu0
    %v7086 = vadd.f32 %v6577, %v7085
    %7087 = vmatmul.bf16.gmra.mxu0 %v4818
    %v7088 = vpop.f32.mrf.mxu0
    %v7089 = vadd.f32 %v6580, %v7088
    %v7090 = vpop.f32.mrf.mxu0
    %v7091 = vadd.f32 %v6582, %v7090
    %7092 = vmatmul.bf16.gmra.mxu0 %v4825
    %v7093 = vpop.f32.mrf.mxu0
    %v7094 = vadd.f32 %v6585, %v7093
    %v7095 = vpop.f32.mrf.mxu0
    %v7096 = vadd.f32 %v6587, %v7095
    %7097 = vmatmul.bf16.gmra.mxu0 %v4832
    %v7098 = vpop.f32.mrf.mxu0
    %v7099 = vadd.f32 %v6590, %v7098
    %v7100 = vpop.f32.mrf.mxu0
    %v7101 = vadd.f32 %v6592, %v7100
    %7102 = vmatmul.bf16.gmra.mxu0 %v4839
    %v7103 = vpop.f32.mrf.mxu0
    %v7104 = vadd.f32 %v6595, %v7103
    %v7105 = vpop.f32.mrf.mxu0
    %v7106 = vadd.f32 %v6597, %v7105
    %7107 = vmatmul.bf16.gmra.mxu0 %v4846
    %v7108 = vpop.f32.mrf.mxu0
    %v7109 = vadd.f32 %v6600, %v7108
    %v7110 = vpop.f32.mrf.mxu0
    %v7111 = vadd.f32 %v6602, %v7110
    %7112 = vmatmul.bf16.gmra.mxu0 %v4853
    %v7113 = vpop.f32.mrf.mxu0
    %v7114 = vadd.f32 %v6605, %v7113
    %v7115 = vpop.f32.mrf.mxu0
    %v7116 = vadd.f32 %v6607, %v7115
    %7117 = vmatmul.bf16.gmra.mxu0 %v4860
    %v7118 = vpop.f32.mrf.mxu0
    %v7119 = vadd.f32 %v6610, %v7118
    %v7120 = vpop.f32.mrf.mxu0
    %v7121 = vadd.f32 %v6612, %v7120
    %7122 = vmatmul.bf16.gmra.mxu0 %v4867
    %v7123 = vpop.f32.mrf.mxu0
    %v7124 = vadd.f32 %v6615, %v7123
    %v7125 = vpop.f32.mrf.mxu0
    %v7126 = vadd.f32 %v6617, %v7125
    %7127 = vmatmul.bf16.gmra.mxu0 %v4874
    %v7128 = vpop.f32.mrf.mxu0
    %v7129 = vadd.f32 %v6620, %v7128
    %v7130 = vpop.f32.mrf.mxu0
    %v7131 = vadd.f32 %v6622, %v7130
    %7132 = vmatmul.bf16.gmra.mxu0 %v4881
    %v7133 = vpop.f32.mrf.mxu0
    %v7134 = vadd.f32 %v6625, %v7133
    %v7135 = vpop.f32.mrf.mxu0
    %v7136 = vadd.f32 %v6627, %v7135
    %7137 = vmatmul.bf16.gmra.mxu0 %v4888
    %v7138 = vpop.f32.mrf.mxu0
    %v7139 = vadd.f32 %v6630, %v7138
    %v7140 = vpop.f32.mrf.mxu0
    %v7141 = vadd.f32 %v6632, %v7140
    %7142 = vmatmul.bf16.gmra.mxu0 %v4895
    %v7143 = vpop.f32.mrf.mxu0
    %v7144 = vadd.f32 %v6635, %v7143
    %v7145 = vpop.f32.mrf.mxu0
    %v7146 = vadd.f32 %v6637, %v7145
    %7147 = vmatmul.bf16.gmra.mxu0 %v4902
    %v7148 = vpop.f32.mrf.mxu0
    %v7149 = vadd.f32 %v6640, %v7148
    %v7150 = vpop.f32.mrf.mxu0
    %v7151 = vadd.f32 %v6642, %v7150
    %7152 = vmatmul.bf16.gmra.mxu0 %v4909
    %v7153 = vpop.f32.mrf.mxu0
    %v7154 = vadd.f32 %v6645, %v7153
    %v7155 = vpop.f32.mrf.mxu0
    %v7156 = vadd.f32 %v6647, %v7155
    %7157 = vmatmul.bf16.gmra.mxu0 %v4916
    %v7158 = vpop.f32.mrf.mxu0
    %v7159 = vadd.f32 %v6650, %v7158
    %v7160 = vpop.f32.mrf.mxu0
    %v7161 = vadd.f32 %v6652, %v7160
    %7162 = vmatmul.bf16.gmra.mxu0 %v4923
    %v7163 = vpop.f32.mrf.mxu0
    %v7164 = vadd.f32 %v6655, %v7163
    %v7165 = vpop.f32.mrf.mxu0
    %v7166 = vadd.f32 %v6657, %v7165
    %7167 = vmatmul.bf16.gmra.mxu0 %v4930
    %v7168 = vpop.f32.mrf.mxu0
    %v7169 = vadd.f32 %v6660, %v7168
    %v7170 = vpop.f32.mrf.mxu0
    %v7171 = vadd.f32 %v6662, %v7170
    %7172 = vmatmul.bf16.gmra.mxu0 %v4937
    %v7173 = vpop.f32.mrf.mxu0
    %v7174 = vadd.f32 %v6665, %v7173
    %v7175 = vpop.f32.mrf.mxu0
    %v7176 = vadd.f32 %v6667, %v7175
    %7177 = vmatmul.bf16.gmra.mxu0 %v4944
    %v7178 = vpop.f32.mrf.mxu0
    %v7179 = vadd.f32 %v6670, %v7178
    %v7180 = vpop.f32.mrf.mxu0
    %v7181 = vadd.f32 %v6672, %v7180
    %7182 = vmatmul.bf16.gmra.mxu0 %v4951
    %v7183 = vpop.f32.mrf.mxu0
    %v7184 = vadd.f32 %v6675, %v7183
    %v7185 = vpop.f32.mrf.mxu0
    %v7186 = vadd.f32 %v6677, %v7185
    %7187 = vmatmul.bf16.gmra.mxu0 %v4958
    %v7188 = vpop.f32.mrf.mxu0
    %v7189 = vadd.f32 %v6680, %v7188
    %v7190 = vpop.f32.mrf.mxu0
    %v7191 = vadd.f32 %v6682, %v7190
    %7192 = vmatmul.bf16.gmra.mxu0 %v4965
    %v7193 = vpop.f32.mrf.mxu0
    %v7194 = vadd.f32 %v6685, %v7193
    %v7195 = vpop.f32.mrf.mxu0
    %v7196 = vadd.f32 %v6687, %v7195
    %7197 = vmatmul.bf16.gmra.mxu0 %v4972
    %v7198 = vpop.f32.mrf.mxu0
    %v7199 = vadd.f32 %v6690, %v7198
    %v7200 = vpop.f32.mrf.mxu0
    %v7201 = vadd.f32 %v6692, %v7200
    %7202 = vmatmul.bf16.gmra.mxu0 %v4979
    %v7203 = vpop.f32.mrf.mxu0
    %v7204 = vadd.f32 %v6695, %v7203
    %v7205 = vpop.f32.mrf.mxu0
    %v7206 = vadd.f32 %v6697, %v7205
    %7207 = vmatmul.bf16.gmra.mxu0 %v4986
    %v7208 = vpop.f32.mrf.mxu0
    %v7209 = vadd.f32 %v6700, %v7208
    %v7210 = vpop.f32.mrf.mxu0
    %v7211 = vadd.f32 %v6702, %v7210
    %7212 = vmatmul.bf16.gmra.mxu0 %v4993
    %v7213 = vpop.f32.mrf.mxu0
    %v7214 = vadd.f32 %v6705, %v7213
    %v7215 = vpop.f32.mrf.mxu0
    %v7216 = vadd.f32 %v6707, %v7215
    %7217 = vmatmul.bf16.gmra.mxu0 %v5000
    %v7218 = vpop.f32.mrf.mxu0
    %v7219 = vadd.f32 %v6710, %v7218
    %v7220 = vpop.f32.mrf.mxu0
    %v7221 = vadd.f32 %v6712, %v7220
    %7222 = vmatmul.bf16.gmra.mxu0 %v5007
    %v7223 = vpop.f32.mrf.mxu0
    %v7224 = vadd.f32 %v6715, %v7223
    %v7225 = vpop.f32.mrf.mxu0
    %v7226 = vadd.f32 %v6717, %v7225
    %7227 = vmatmul.bf16.gmra.mxu0 %v5014
    %v7228 = vpop.f32.mrf.mxu0
    %v7229 = vadd.f32 %v6720, %v7228
    %v7230 = vpop.f32.mrf.mxu0
    %v7231 = vadd.f32 %v6722, %v7230
    %7232 = vdwg.mxu0
    %7233 = vmatpush.bf16.msra.mxu0 %v5839
    %7234 = vmatpush.bf16.msra.mxu0 %v5838
    %7235 = vmatpush.bf16.msra.mxu0 %v5837
    %7236 = vmatpush.bf16.msra.mxu0 %v5836
    %7237 = vmatpush.bf16.msra.mxu0 %v5835
    %7238 = vmatpush.bf16.msra.mxu0 %v5834
    %7239 = vmatpush.bf16.msra.mxu0 %v5833
    %7240 = vmatpush.bf16.msra.mxu0 %v5832
    %7241 = vmatmul.bf16.gmra.mxu0 %v4322
    %v7242 = vpop.f32.mrf.mxu0
    %v7243 = vadd.f32 %v6734, %v7242
    %v7244 = vpop.f32.mrf.mxu0
    %v7245 = vadd.f32 %v6736, %v7244
    %7246 = vmatmul.bf16.gmra.mxu0 %v4329
    %v7247 = vpop.f32.mrf.mxu0
    %v7248 = vadd.f32 %v6739, %v7247
    %v7249 = vpop.f32.mrf.mxu0
    %v7250 = vadd.f32 %v6741, %v7249
    %7251 = vmatmul.bf16.gmra.mxu0 %v4336
    %v7252 = vpop.f32.mrf.mxu0
    %v7253 = vadd.f32 %v6744, %v7252
    %v7254 = vpop.f32.mrf.mxu0
    %v7255 = vadd.f32 %v6746, %v7254
    %7256 = vmatmul.bf16.gmra.mxu0 %v4343
    %v7257 = vpop.f32.mrf.mxu0
    %v7258 = vadd.f32 %v6749, %v7257
    %v7259 = vpop.f32.mrf.mxu0
    %v7260 = vadd.f32 %v6751, %v7259
    %7261 = vmatmul.bf16.gmra.mxu0 %v4350
    %v7262 = vpop.f32.mrf.mxu0
    %v7263 = vadd.f32 %v6754, %v7262
    %v7264 = vpop.f32.mrf.mxu0
    %v7265 = vadd.f32 %v6756, %v7264
    %7266 = vmatmul.bf16.gmra.mxu0 %v4357
    %v7267 = vpop.f32.mrf.mxu0
    %v7268 = vadd.f32 %v6759, %v7267
    %v7269 = vpop.f32.mrf.mxu0
    %v7270 = vadd.f32 %v6761, %v7269
    %7271 = vmatmul.bf16.gmra.mxu0 %v4364
    %v7272 = vpop.f32.mrf.mxu0
    %v7273 = vadd.f32 %v6764, %v7272
    %v7274 = vpop.f32.mrf.mxu0
    %v7275 = vadd.f32 %v6766, %v7274
    %7276 = vmatmul.bf16.gmra.mxu0 %v4371
    %v7277 = vpop.f32.mrf.mxu0
    %v7278 = vadd.f32 %v6769, %v7277
    %v7279 = vpop.f32.mrf.mxu0
    %v7280 = vadd.f32 %v6771, %v7279
    %7281 = vmatmul.bf16.gmra.mxu0 %v4378
    %v7282 = vpop.f32.mrf.mxu0
    %v7283 = vadd.f32 %v6774, %v7282
    %v7284 = vpop.f32.mrf.mxu0
    %v7285 = vadd.f32 %v6776, %v7284
    %7286 = vmatmul.bf16.gmra.mxu0 %v4385
    %v7287 = vpop.f32.mrf.mxu0
    %v7288 = vadd.f32 %v6779, %v7287
    %v7289 = vpop.f32.mrf.mxu0
    %v7290 = vadd.f32 %v6781, %v7289
    %7291 = vmatmul.bf16.gmra.mxu0 %v4392
    %v7292 = vpop.f32.mrf.mxu0
    %v7293 = vadd.f32 %v6784, %v7292
    %v7294 = vpop.f32.mrf.mxu0
    %v7295 = vadd.f32 %v6786, %v7294
    %7296 = vmatmul.bf16.gmra.mxu0 %v4399
    %v7297 = vpop.f32.mrf.mxu0
    %v7298 = vadd.f32 %v6789, %v7297
    %v7299 = vpop.f32.mrf.mxu0
    %v7300 = vadd.f32 %v6791, %v7299
    %7301 = vmatmul.bf16.gmra.mxu0 %v4406
    %v7302 = vpop.f32.mrf.mxu0
    %v7303 = vadd.f32 %v6794, %v7302
    %v7304 = vpop.f32.mrf.mxu0
    %v7305 = vadd.f32 %v6796, %v7304
    %7306 = vmatmul.bf16.gmra.mxu0 %v4413
    %v7307 = vpop.f32.mrf.mxu0
    %v7308 = vadd.f32 %v6799, %v7307
    %v7309 = vpop.f32.mrf.mxu0
    %v7310 = vadd.f32 %v6801, %v7309
    %7311 = vmatmul.bf16.gmra.mxu0 %v4420
    %v7312 = vpop.f32.mrf.mxu0
    %v7313 = vadd.f32 %v6804, %v7312
    %v7314 = vpop.f32.mrf.mxu0
    %v7315 = vadd.f32 %v6806, %v7314
    %7316 = vmatmul.bf16.gmra.mxu0 %v4427
    %v7317 = vpop.f32.mrf.mxu0
    %v7318 = vadd.f32 %v6809, %v7317
    %v7319 = vpop.f32.mrf.mxu0
    %v7320 = vadd.f32 %v6811, %v7319
    %7321 = vmatmul.bf16.gmra.mxu0 %v4434
    %v7322 = vpop.f32.mrf.mxu0
    %v7323 = vadd.f32 %v6814, %v7322
    %v7324 = vpop.f32.mrf.mxu0
    %v7325 = vadd.f32 %v6816, %v7324
    %7326 = vmatmul.bf16.gmra.mxu0 %v4441
    %v7327 = vpop.f32.mrf.mxu0
    %v7328 = vadd.f32 %v6819, %v7327
    %v7329 = vpop.f32.mrf.mxu0
    %v7330 = vadd.f32 %v6821, %v7329
    %7331 = vmatmul.bf16.gmra.mxu0 %v4448
    %v7332 = vpop.f32.mrf.mxu0
    %v7333 = vadd.f32 %v6824, %v7332
    %v7334 = vpop.f32.mrf.mxu0
    %v7335 = vadd.f32 %v6826, %v7334
    %7336 = vmatmul.bf16.gmra.mxu0 %v4455
    %v7337 = vpop.f32.mrf.mxu0
    %v7338 = vadd.f32 %v6829, %v7337
    %v7339 = vpop.f32.mrf.mxu0
    %v7340 = vadd.f32 %v6831, %v7339
    %7341 = vmatmul.bf16.gmra.mxu0 %v4462
    %v7342 = vpop.f32.mrf.mxu0
    %v7343 = vadd.f32 %v6834, %v7342
    %v7344 = vpop.f32.mrf.mxu0
    %v7345 = vadd.f32 %v6836, %v7344
    %7346 = vmatmul.bf16.gmra.mxu0 %v4469
    %v7347 = vpop.f32.mrf.mxu0
    %v7348 = vadd.f32 %v6839, %v7347
    %v7349 = vpop.f32.mrf.mxu0
    %v7350 = vadd.f32 %v6841, %v7349
    %7351 = vmatmul.bf16.gmra.mxu0 %v4476
    %v7352 = vpop.f32.mrf.mxu0
    %v7353 = vadd.f32 %v6844, %v7352
    %v7354 = vpop.f32.mrf.mxu0
    %v7355 = vadd.f32 %v6846, %v7354
    %7356 = vmatmul.bf16.gmra.mxu0 %v4483
    %v7357 = vpop.f32.mrf.mxu0
    %v7358 = vadd.f32 %v6849, %v7357
    %v7359 = vpop.f32.mrf.mxu0
    %v7360 = vadd.f32 %v6851, %v7359
    %7361 = vmatmul.bf16.gmra.mxu0 %v4490
    %v7362 = vpop.f32.mrf.mxu0
    %v7363 = vadd.f32 %v6854, %v7362
    %v7364 = vpop.f32.mrf.mxu0
    %v7365 = vadd.f32 %v6856, %v7364
    %7366 = vmatmul.bf16.gmra.mxu0 %v4497
    %v7367 = vpop.f32.mrf.mxu0
    %v7368 = vadd.f32 %v6859, %v7367
    %v7369 = vpop.f32.mrf.mxu0
    %v7370 = vadd.f32 %v6861, %v7369
    %7371 = vmatmul.bf16.gmra.mxu0 %v4504
    %v7372 = vpop.f32.mrf.mxu0
    %v7373 = vadd.f32 %v6864, %v7372
    %v7374 = vpop.f32.mrf.mxu0
    %v7375 = vadd.f32 %v6866, %v7374
    %7376 = vmatmul.bf16.gmra.mxu0 %v4511
    %v7377 = vpop.f32.mrf.mxu0
    %v7378 = vadd.f32 %v6869, %v7377
    %v7379 = vpop.f32.mrf.mxu0
    %v7380 = vadd.f32 %v6871, %v7379
    %7381 = vmatmul.bf16.gmra.mxu0 %v4518
    %v7382 = vpop.f32.mrf.mxu0
    %v7383 = vadd.f32 %v6874, %v7382
    %v7384 = vpop.f32.mrf.mxu0
    %v7385 = vadd.f32 %v6876, %v7384
    %7386 = vmatmul.bf16.gmra.mxu0 %v4525
    %v7387 = vpop.f32.mrf.mxu0
    %v7388 = vadd.f32 %v6879, %v7387
    %v7389 = vpop.f32.mrf.mxu0
    %v7390 = vadd.f32 %v6881, %v7389
    %7391 = vmatmul.bf16.gmra.mxu0 %v4532
    %v7392 = vpop.f32.mrf.mxu0
    %v7393 = vadd.f32 %v6884, %v7392
    %v7394 = vpop.f32.mrf.mxu0
    %v7395 = vadd.f32 %v6886, %v7394
    %7396 = vmatmul.bf16.gmra.mxu0 %v4539
    %v7397 = vpop.f32.mrf.mxu0
    %v7398 = vadd.f32 %v6889, %v7397
    %v7399 = vpop.f32.mrf.mxu0
    %v7400 = vadd.f32 %v6891, %v7399
    %7401 = vmatmul.bf16.gmra.mxu0 %v4546
    %v7402 = vpop.f32.mrf.mxu0
    %v7403 = vadd.f32 %v6894, %v7402
    %v7404 = vpop.f32.mrf.mxu0
    %v7405 = vadd.f32 %v6896, %v7404
    %7406 = vmatmul.bf16.gmra.mxu0 %v4553
    %v7407 = vpop.f32.mrf.mxu0
    %v7408 = vadd.f32 %v6899, %v7407
    %v7409 = vpop.f32.mrf.mxu0
    %v7410 = vadd.f32 %v6901, %v7409
    %7411 = vmatmul.bf16.gmra.mxu0 %v4560
    %v7412 = vpop.f32.mrf.mxu0
    %v7413 = vadd.f32 %v6904, %v7412
    %v7414 = vpop.f32.mrf.mxu0
    %v7415 = vadd.f32 %v6906, %v7414
    %7416 = vmatmul.bf16.gmra.mxu0 %v4567
    %v7417 = vpop.f32.mrf.mxu0
    %v7418 = vadd.f32 %v6909, %v7417
    %v7419 = vpop.f32.mrf.mxu0
    %v7420 = vadd.f32 %v6911, %v7419
    %7421 = vmatmul.bf16.gmra.mxu0 %v4574
    %v7422 = vpop.f32.mrf.mxu0
    %v7423 = vadd.f32 %v6914, %v7422
    %v7424 = vpop.f32.mrf.mxu0
    %v7425 = vadd.f32 %v6916, %v7424
    %7426 = vmatmul.bf16.gmra.mxu0 %v4581
    %v7427 = vpop.f32.mrf.mxu0
    %v7428 = vadd.f32 %v6919, %v7427
    %v7429 = vpop.f32.mrf.mxu0
    %v7430 = vadd.f32 %v6921, %v7429
    %7431 = vmatmul.bf16.gmra.mxu0 %v4588
    %v7432 = vpop.f32.mrf.mxu0
    %v7433 = vadd.f32 %v6924, %v7432
    %v7434 = vpop.f32.mrf.mxu0
    %v7435 = vadd.f32 %v6926, %v7434
    %7436 = vmatmul.bf16.gmra.mxu0 %v4595
    %v7437 = vpop.f32.mrf.mxu0
    %v7438 = vadd.f32 %v6929, %v7437
    %v7439 = vpop.f32.mrf.mxu0
    %v7440 = vadd.f32 %v6931, %v7439
    %7441 = vmatmul.bf16.gmra.mxu0 %v4602
    %v7442 = vpop.f32.mrf.mxu0
    %v7443 = vadd.f32 %v6934, %v7442
    %v7444 = vpop.f32.mrf.mxu0
    %v7445 = vadd.f32 %v6936, %v7444
    %7446 = vmatmul.bf16.gmra.mxu0 %v4609
    %v7447 = vpop.f32.mrf.mxu0
    %v7448 = vadd.f32 %v6939, %v7447
    %v7449 = vpop.f32.mrf.mxu0
    %v7450 = vadd.f32 %v6941, %v7449
    %7451 = vmatmul.bf16.gmra.mxu0 %v4616
    %v7452 = vpop.f32.mrf.mxu0
    %v7453 = vadd.f32 %v6944, %v7452
    %v7454 = vpop.f32.mrf.mxu0
    %v7455 = vadd.f32 %v6946, %v7454
    %7456 = vmatmul.bf16.gmra.mxu0 %v4623
    %v7457 = vpop.f32.mrf.mxu0
    %v7458 = vadd.f32 %v6949, %v7457
    %v7459 = vpop.f32.mrf.mxu0
    %v7460 = vadd.f32 %v6951, %v7459
    %7461 = vmatmul.bf16.gmra.mxu0 %v4630
    %v7462 = vpop.f32.mrf.mxu0
    %v7463 = vadd.f32 %v6954, %v7462
    %v7464 = vpop.f32.mrf.mxu0
    %v7465 = vadd.f32 %v6956, %v7464
    %7466 = vmatmul.bf16.gmra.mxu0 %v4637
    %v7467 = vpop.f32.mrf.mxu0
    %v7468 = vadd.f32 %v6959, %v7467
    %v7469 = vpop.f32.mrf.mxu0
    %v7470 = vadd.f32 %v6961, %v7469
    %7471 = vmatmul.bf16.gmra.mxu0 %v4644
    %v7472 = vpop.f32.mrf.mxu0
    %v7473 = vadd.f32 %v6964, %v7472
    %v7474 = vpop.f32.mrf.mxu0
    %v7475 = vadd.f32 %v6966, %v7474
    %7476 = vmatmul.bf16.gmra.mxu0 %v4651
    %v7477 = vpop.f32.mrf.mxu0
    %v7478 = vadd.f32 %v6969, %v7477
    %v7479 = vpop.f32.mrf.mxu0
    %v7480 = vadd.f32 %v6971, %v7479
    %7481 = vmatmul.bf16.gmra.mxu0 %v4658
    %v7482 = vpop.f32.mrf.mxu0
    %v7483 = vadd.f32 %v6974, %v7482
    %v7484 = vpop.f32.mrf.mxu0
    %v7485 = vadd.f32 %v6976, %v7484
    %7486 = vmatmul.bf16.gmra.mxu0 %v4665
    %v7487 = vpop.f32.mrf.mxu0
    %v7488 = vadd.f32 %v6979, %v7487
    %v7489 = vpop.f32.mrf.mxu0
    %v7490 = vadd.f32 %v6981, %v7489
    %7491 = vmatmul.bf16.gmra.mxu0 %v4672
    %v7492 = vpop.f32.mrf.mxu0
    %v7493 = vadd.f32 %v6984, %v7492
    %v7494 = vpop.f32.mrf.mxu0
    %v7495 = vadd.f32 %v6986, %v7494
    %7496 = vmatmul.bf16.gmra.mxu0 %v4679
    %v7497 = vpop.f32.mrf.mxu0
    %v7498 = vadd.f32 %v6989, %v7497
    %v7499 = vpop.f32.mrf.mxu0
    %v7500 = vadd.f32 %v6991, %v7499
    %7501 = vmatmul.bf16.gmra.mxu0 %v4686
    %v7502 = vpop.f32.mrf.mxu0
    %v7503 = vadd.f32 %v6994, %v7502
    %v7504 = vpop.f32.mrf.mxu0
    %v7505 = vadd.f32 %v6996, %v7504
    %7506 = vmatmul.bf16.gmra.mxu0 %v4693
    %v7507 = vpop.f32.mrf.mxu0
    %v7508 = vadd.f32 %v6999, %v7507
    %v7509 = vpop.f32.mrf.mxu0
    %v7510 = vadd.f32 %v7001, %v7509
    %7511 = vmatmul.bf16.gmra.mxu0 %v4700
    %v7512 = vpop.f32.mrf.mxu0
    %v7513 = vadd.f32 %v7004, %v7512
    %v7514 = vpop.f32.mrf.mxu0
    %v7515 = vadd.f32 %v7006, %v7514
    %7516 = vmatmul.bf16.gmra.mxu0 %v4707
    %v7517 = vpop.f32.mrf.mxu0
    %v7518 = vadd.f32 %v7009, %v7517
    %v7519 = vpop.f32.mrf.mxu0
    %v7520 = vadd.f32 %v7011, %v7519
    %7521 = vmatmul.bf16.gmra.mxu0 %v4714
    %v7522 = vpop.f32.mrf.mxu0
    %v7523 = vadd.f32 %v7014, %v7522
    %v7524 = vpop.f32.mrf.mxu0
    %v7525 = vadd.f32 %v7016, %v7524
    %7526 = vmatmul.bf16.gmra.mxu0 %v4721
    %v7527 = vpop.f32.mrf.mxu0
    %v7528 = vadd.f32 %v7019, %v7527
    %v7529 = vpop.f32.mrf.mxu0
    %v7530 = vadd.f32 %v7021, %v7529
    %7531 = vmatmul.bf16.gmra.mxu0 %v4728
    %v7532 = vpop.f32.mrf.mxu0
    %v7533 = vadd.f32 %v7024, %v7532
    %v7534 = vpop.f32.mrf.mxu0
    %v7535 = vadd.f32 %v7026, %v7534
    %7536 = vmatmul.bf16.gmra.mxu0 %v4735
    %v7537 = vpop.f32.mrf.mxu0
    %v7538 = vadd.f32 %v7029, %v7537
    %v7539 = vpop.f32.mrf.mxu0
    %v7540 = vadd.f32 %v7031, %v7539
    %7541 = vmatmul.bf16.gmra.mxu0 %v4742
    %v7542 = vpop.f32.mrf.mxu0
    %v7543 = vadd.f32 %v7034, %v7542
    %v7544 = vpop.f32.mrf.mxu0
    %v7545 = vadd.f32 %v7036, %v7544
    %7546 = vmatmul.bf16.gmra.mxu0 %v4749
    %v7547 = vpop.f32.mrf.mxu0
    %v7548 = vadd.f32 %v7039, %v7547
    %v7549 = vpop.f32.mrf.mxu0
    %v7550 = vadd.f32 %v7041, %v7549
    %7551 = vmatmul.bf16.gmra.mxu0 %v4756
    %v7552 = vpop.f32.mrf.mxu0
    %v7553 = vadd.f32 %v7044, %v7552
    %v7554 = vpop.f32.mrf.mxu0
    %v7555 = vadd.f32 %v7046, %v7554
    %7556 = vmatmul.bf16.gmra.mxu0 %v4763
    %v7557 = vpop.f32.mrf.mxu0
    %v7558 = vadd.f32 %v7049, %v7557
    %v7559 = vpop.f32.mrf.mxu0
    %v7560 = vadd.f32 %v7051, %v7559
    %7561 = vmatmul.bf16.gmra.mxu0 %v4770
    %v7562 = vpop.f32.mrf.mxu0
    %v7563 = vadd.f32 %v7054, %v7562
    %v7564 = vpop.f32.mrf.mxu0
    %v7565 = vadd.f32 %v7056, %v7564
    %7566 = vmatmul.bf16.gmra.mxu0 %v4777
    %v7567 = vpop.f32.mrf.mxu0
    %v7568 = vadd.f32 %v7059, %v7567
    %v7569 = vpop.f32.mrf.mxu0
    %v7570 = vadd.f32 %v7061, %v7569
    %7571 = vmatmul.bf16.gmra.mxu0 %v4784
    %v7572 = vpop.f32.mrf.mxu0
    %v7573 = vadd.f32 %v7064, %v7572
    %v7574 = vpop.f32.mrf.mxu0
    %v7575 = vadd.f32 %v7066, %v7574
    %7576 = vmatmul.bf16.gmra.mxu0 %v4791
    %v7577 = vpop.f32.mrf.mxu0
    %v7578 = vadd.f32 %v7069, %v7577
    %v7579 = vpop.f32.mrf.mxu0
    %v7580 = vadd.f32 %v7071, %v7579
    %7581 = vmatmul.bf16.gmra.mxu0 %v4798
    %v7582 = vpop.f32.mrf.mxu0
    %v7583 = vadd.f32 %v7074, %v7582
    %v7584 = vpop.f32.mrf.mxu0
    %v7585 = vadd.f32 %v7076, %v7584
    %7586 = vmatmul.bf16.gmra.mxu0 %v4805
    %v7587 = vpop.f32.mrf.mxu0
    %v7588 = vadd.f32 %v7079, %v7587
    %v7589 = vpop.f32.mrf.mxu0
    %v7590 = vadd.f32 %v7081, %v7589
    %7591 = vmatmul.bf16.gmra.mxu0 %v4812
    %v7592 = vpop.f32.mrf.mxu0
    %v7593 = vadd.f32 %v7084, %v7592
    %v7594 = vpop.f32.mrf.mxu0
    %v7595 = vadd.f32 %v7086, %v7594
    %7596 = vmatmul.bf16.gmra.mxu0 %v4819
    %v7597 = vpop.f32.mrf.mxu0
    %v7598 = vadd.f32 %v7089, %v7597
    %v7599 = vpop.f32.mrf.mxu0
    %v7600 = vadd.f32 %v7091, %v7599
    %7601 = vmatmul.bf16.gmra.mxu0 %v4826
    %v7602 = vpop.f32.mrf.mxu0
    %v7603 = vadd.f32 %v7094, %v7602
    %v7604 = vpop.f32.mrf.mxu0
    %v7605 = vadd.f32 %v7096, %v7604
    %7606 = vmatmul.bf16.gmra.mxu0 %v4833
    %v7607 = vpop.f32.mrf.mxu0
    %v7608 = vadd.f32 %v7099, %v7607
    %v7609 = vpop.f32.mrf.mxu0
    %v7610 = vadd.f32 %v7101, %v7609
    %7611 = vmatmul.bf16.gmra.mxu0 %v4840
    %v7612 = vpop.f32.mrf.mxu0
    %v7613 = vadd.f32 %v7104, %v7612
    %v7614 = vpop.f32.mrf.mxu0
    %v7615 = vadd.f32 %v7106, %v7614
    %7616 = vmatmul.bf16.gmra.mxu0 %v4847
    %v7617 = vpop.f32.mrf.mxu0
    %v7618 = vadd.f32 %v7109, %v7617
    %v7619 = vpop.f32.mrf.mxu0
    %v7620 = vadd.f32 %v7111, %v7619
    %7621 = vmatmul.bf16.gmra.mxu0 %v4854
    %v7622 = vpop.f32.mrf.mxu0
    %v7623 = vadd.f32 %v7114, %v7622
    %v7624 = vpop.f32.mrf.mxu0
    %v7625 = vadd.f32 %v7116, %v7624
    %7626 = vmatmul.bf16.gmra.mxu0 %v4861
    %v7627 = vpop.f32.mrf.mxu0
    %v7628 = vadd.f32 %v7119, %v7627
    %v7629 = vpop.f32.mrf.mxu0
    %v7630 = vadd.f32 %v7121, %v7629
    %7631 = vmatmul.bf16.gmra.mxu0 %v4868
    %v7632 = vpop.f32.mrf.mxu0
    %v7633 = vadd.f32 %v7124, %v7632
    %v7634 = vpop.f32.mrf.mxu0
    %v7635 = vadd.f32 %v7126, %v7634
    %7636 = vmatmul.bf16.gmra.mxu0 %v4875
    %v7637 = vpop.f32.mrf.mxu0
    %v7638 = vadd.f32 %v7129, %v7637
    %v7639 = vpop.f32.mrf.mxu0
    %v7640 = vadd.f32 %v7131, %v7639
    %7641 = vmatmul.bf16.gmra.mxu0 %v4882
    %v7642 = vpop.f32.mrf.mxu0
    %v7643 = vadd.f32 %v7134, %v7642
    %v7644 = vpop.f32.mrf.mxu0
    %v7645 = vadd.f32 %v7136, %v7644
    %7646 = vmatmul.bf16.gmra.mxu0 %v4889
    %v7647 = vpop.f32.mrf.mxu0
    %v7648 = vadd.f32 %v7139, %v7647
    %v7649 = vpop.f32.mrf.mxu0
    %v7650 = vadd.f32 %v7141, %v7649
    %7651 = vmatmul.bf16.gmra.mxu0 %v4896
    %v7652 = vpop.f32.mrf.mxu0
    %v7653 = vadd.f32 %v7144, %v7652
    %v7654 = vpop.f32.mrf.mxu0
    %v7655 = vadd.f32 %v7146, %v7654
    %7656 = vmatmul.bf16.gmra.mxu0 %v4903
    %v7657 = vpop.f32.mrf.mxu0
    %v7658 = vadd.f32 %v7149, %v7657
    %v7659 = vpop.f32.mrf.mxu0
    %v7660 = vadd.f32 %v7151, %v7659
    %7661 = vmatmul.bf16.gmra.mxu0 %v4910
    %v7662 = vpop.f32.mrf.mxu0
    %v7663 = vadd.f32 %v7154, %v7662
    %v7664 = vpop.f32.mrf.mxu0
    %v7665 = vadd.f32 %v7156, %v7664
    %7666 = vmatmul.bf16.gmra.mxu0 %v4917
    %v7667 = vpop.f32.mrf.mxu0
    %v7668 = vadd.f32 %v7159, %v7667
    %v7669 = vpop.f32.mrf.mxu0
    %v7670 = vadd.f32 %v7161, %v7669
    %7671 = vmatmul.bf16.gmra.mxu0 %v4924
    %v7672 = vpop.f32.mrf.mxu0
    %v7673 = vadd.f32 %v7164, %v7672
    %v7674 = vpop.f32.mrf.mxu0
    %v7675 = vadd.f32 %v7166, %v7674
    %7676 = vmatmul.bf16.gmra.mxu0 %v4931
    %v7677 = vpop.f32.mrf.mxu0
    %v7678 = vadd.f32 %v7169, %v7677
    %v7679 = vpop.f32.mrf.mxu0
    %v7680 = vadd.f32 %v7171, %v7679
    %7681 = vmatmul.bf16.gmra.mxu0 %v4938
    %v7682 = vpop.f32.mrf.mxu0
    %v7683 = vadd.f32 %v7174, %v7682
    %v7684 = vpop.f32.mrf.mxu0
    %v7685 = vadd.f32 %v7176, %v7684
    %7686 = vmatmul.bf16.gmra.mxu0 %v4945
    %v7687 = vpop.f32.mrf.mxu0
    %v7688 = vadd.f32 %v7179, %v7687
    %v7689 = vpop.f32.mrf.mxu0
    %v7690 = vadd.f32 %v7181, %v7689
    %7691 = vmatmul.bf16.gmra.mxu0 %v4952
    %v7692 = vpop.f32.mrf.mxu0
    %v7693 = vadd.f32 %v7184, %v7692
    %v7694 = vpop.f32.mrf.mxu0
    %v7695 = vadd.f32 %v7186, %v7694
    %7696 = vmatmul.bf16.gmra.mxu0 %v4959
    %v7697 = vpop.f32.mrf.mxu0
    %v7698 = vadd.f32 %v7189, %v7697
    %v7699 = vpop.f32.mrf.mxu0
    %v7700 = vadd.f32 %v7191, %v7699
    %7701 = vmatmul.bf16.gmra.mxu0 %v4966
    %v7702 = vpop.f32.mrf.mxu0
    %v7703 = vadd.f32 %v7194, %v7702
    %v7704 = vpop.f32.mrf.mxu0
    %v7705 = vadd.f32 %v7196, %v7704
    %7706 = vmatmul.bf16.gmra.mxu0 %v4973
    %v7707 = vpop.f32.mrf.mxu0
    %v7708 = vadd.f32 %v7199, %v7707
    %v7709 = vpop.f32.mrf.mxu0
    %v7710 = vadd.f32 %v7201, %v7709
    %7711 = vmatmul.bf16.gmra.mxu0 %v4980
    %v7712 = vpop.f32.mrf.mxu0
    %v7713 = vadd.f32 %v7204, %v7712
    %v7714 = vpop.f32.mrf.mxu0
    %v7715 = vadd.f32 %v7206, %v7714
    %7716 = vmatmul.bf16.gmra.mxu0 %v4987
    %v7717 = vpop.f32.mrf.mxu0
    %v7718 = vadd.f32 %v7209, %v7717
    %v7719 = vpop.f32.mrf.mxu0
    %v7720 = vadd.f32 %v7211, %v7719
    %7721 = vmatmul.bf16.gmra.mxu0 %v4994
    %v7722 = vpop.f32.mrf.mxu0
    %v7723 = vadd.f32 %v7214, %v7722
    %v7724 = vpop.f32.mrf.mxu0
    %v7725 = vadd.f32 %v7216, %v7724
    %7726 = vmatmul.bf16.gmra.mxu0 %v5001
    %v7727 = vpop.f32.mrf.mxu0
    %v7728 = vadd.f32 %v7219, %v7727
    %v7729 = vpop.f32.mrf.mxu0
    %v7730 = vadd.f32 %v7221, %v7729
    %7731 = vmatmul.bf16.gmra.mxu0 %v5008
    %v7732 = vpop.f32.mrf.mxu0
    %v7733 = vadd.f32 %v7224, %v7732
    %v7734 = vpop.f32.mrf.mxu0
    %v7735 = vadd.f32 %v7226, %v7734
    %7736 = vmatmul.bf16.gmra.mxu0 %v5015
    %v7737 = vpop.f32.mrf.mxu0
    %v7738 = vadd.f32 %v7229, %v7737
    %v7739 = vpop.f32.mrf.mxu0
    %v7740 = vadd.f32 %v7231, %v7739
    %7741 = vdwg.mxu0
    %7742 = vmatpush.bf16.msra.mxu0 %v5847
    %7743 = vmatpush.bf16.msra.mxu0 %v5846
    %7744 = vmatpush.bf16.msra.mxu0 %v5845
    %7745 = vmatpush.bf16.msra.mxu0 %v5844
    %7746 = vmatpush.bf16.msra.mxu0 %v5843
    %7747 = vmatpush.bf16.msra.mxu0 %v5842
    %7748 = vmatpush.bf16.msra.mxu0 %v5841
    %7749 = vmatpush.bf16.msra.mxu0 %v5840
    %7750 = vmatmul.bf16.gmra.mxu0 %v4323
    %v7751 = vpop.f32.mrf.mxu0
    %v7752 = vadd.f32 %v7243, %v7751
    %v7753 = vpop.f32.mrf.mxu0
    %v7754 = vadd.f32 %v7245, %v7753
    %7755 = vmatmul.bf16.gmra.mxu0 %v4330
    %v7756 = vpop.f32.mrf.mxu0
    %v7757 = vadd.f32 %v7248, %v7756
    %v7758 = vpop.f32.mrf.mxu0
    %v7759 = vadd.f32 %v7250, %v7758
    %7760 = vmatmul.bf16.gmra.mxu0 %v4337
    %v7761 = vpop.f32.mrf.mxu0
    %v7762 = vadd.f32 %v7253, %v7761
    %v7763 = vpop.f32.mrf.mxu0
    %v7764 = vadd.f32 %v7255, %v7763
    %7765 = vmatmul.bf16.gmra.mxu0 %v4344
    %v7766 = vpop.f32.mrf.mxu0
    %v7767 = vadd.f32 %v7258, %v7766
    %v7768 = vpop.f32.mrf.mxu0
    %v7769 = vadd.f32 %v7260, %v7768
    %7770 = vmatmul.bf16.gmra.mxu0 %v4351
    %v7771 = vpop.f32.mrf.mxu0
    %v7772 = vadd.f32 %v7263, %v7771
    %v7773 = vpop.f32.mrf.mxu0
    %v7774 = vadd.f32 %v7265, %v7773
    %7775 = vmatmul.bf16.gmra.mxu0 %v4358
    %v7776 = vpop.f32.mrf.mxu0
    %v7777 = vadd.f32 %v7268, %v7776
    %v7778 = vpop.f32.mrf.mxu0
    %v7779 = vadd.f32 %v7270, %v7778
    %7780 = vmatmul.bf16.gmra.mxu0 %v4365
    %v7781 = vpop.f32.mrf.mxu0
    %v7782 = vadd.f32 %v7273, %v7781
    %v7783 = vpop.f32.mrf.mxu0
    %v7784 = vadd.f32 %v7275, %v7783
    %7785 = vmatmul.bf16.gmra.mxu0 %v4372
    %v7786 = vpop.f32.mrf.mxu0
    %v7787 = vadd.f32 %v7278, %v7786
    %v7788 = vpop.f32.mrf.mxu0
    %v7789 = vadd.f32 %v7280, %v7788
    %7790 = vmatmul.bf16.gmra.mxu0 %v4379
    %v7791 = vpop.f32.mrf.mxu0
    %v7792 = vadd.f32 %v7283, %v7791
    %v7793 = vpop.f32.mrf.mxu0
    %v7794 = vadd.f32 %v7285, %v7793
    %7795 = vmatmul.bf16.gmra.mxu0 %v4386
    %v7796 = vpop.f32.mrf.mxu0
    %v7797 = vadd.f32 %v7288, %v7796
    %v7798 = vpop.f32.mrf.mxu0
    %v7799 = vadd.f32 %v7290, %v7798
    %7800 = vmatmul.bf16.gmra.mxu0 %v4393
    %v7801 = vpop.f32.mrf.mxu0
    %v7802 = vadd.f32 %v7293, %v7801
    %v7803 = vpop.f32.mrf.mxu0
    %v7804 = vadd.f32 %v7295, %v7803
    %7805 = vmatmul.bf16.gmra.mxu0 %v4400
    %v7806 = vpop.f32.mrf.mxu0
    %v7807 = vadd.f32 %v7298, %v7806
    %v7808 = vpop.f32.mrf.mxu0
    %v7809 = vadd.f32 %v7300, %v7808
    %7810 = vmatmul.bf16.gmra.mxu0 %v4407
    %v7811 = vpop.f32.mrf.mxu0
    %v7812 = vadd.f32 %v7303, %v7811
    %v7813 = vpop.f32.mrf.mxu0
    %v7814 = vadd.f32 %v7305, %v7813
    %7815 = vmatmul.bf16.gmra.mxu0 %v4414
    %v7816 = vpop.f32.mrf.mxu0
    %v7817 = vadd.f32 %v7308, %v7816
    %v7818 = vpop.f32.mrf.mxu0
    %v7819 = vadd.f32 %v7310, %v7818
    %7820 = vmatmul.bf16.gmra.mxu0 %v4421
    %v7821 = vpop.f32.mrf.mxu0
    %v7822 = vadd.f32 %v7313, %v7821
    %v7823 = vpop.f32.mrf.mxu0
    %v7824 = vadd.f32 %v7315, %v7823
    %7825 = vmatmul.bf16.gmra.mxu0 %v4428
    %v7826 = vpop.f32.mrf.mxu0
    %v7827 = vadd.f32 %v7318, %v7826
    %v7828 = vpop.f32.mrf.mxu0
    %v7829 = vadd.f32 %v7320, %v7828
    %7830 = vmatmul.bf16.gmra.mxu0 %v4435
    %v7831 = vpop.f32.mrf.mxu0
    %v7832 = vadd.f32 %v7323, %v7831
    %v7833 = vpop.f32.mrf.mxu0
    %v7834 = vadd.f32 %v7325, %v7833
    %7835 = vmatmul.bf16.gmra.mxu0 %v4442
    %v7836 = vpop.f32.mrf.mxu0
    %v7837 = vadd.f32 %v7328, %v7836
    %v7838 = vpop.f32.mrf.mxu0
    %v7839 = vadd.f32 %v7330, %v7838
    %7840 = vmatmul.bf16.gmra.mxu0 %v4449
    %v7841 = vpop.f32.mrf.mxu0
    %v7842 = vadd.f32 %v7333, %v7841
    %v7843 = vpop.f32.mrf.mxu0
    %v7844 = vadd.f32 %v7335, %v7843
    %7845 = vmatmul.bf16.gmra.mxu0 %v4456
    %v7846 = vpop.f32.mrf.mxu0
    %v7847 = vadd.f32 %v7338, %v7846
    %v7848 = vpop.f32.mrf.mxu0
    %v7849 = vadd.f32 %v7340, %v7848
    %7850 = vmatmul.bf16.gmra.mxu0 %v4463
    %v7851 = vpop.f32.mrf.mxu0
    %v7852 = vadd.f32 %v7343, %v7851
    %v7853 = vpop.f32.mrf.mxu0
    %v7854 = vadd.f32 %v7345, %v7853
    %7855 = vmatmul.bf16.gmra.mxu0 %v4470
    %v7856 = vpop.f32.mrf.mxu0
    %v7857 = vadd.f32 %v7348, %v7856
    %v7858 = vpop.f32.mrf.mxu0
    %v7859 = vadd.f32 %v7350, %v7858
    %7860 = vmatmul.bf16.gmra.mxu0 %v4477
    %v7861 = vpop.f32.mrf.mxu0
    %v7862 = vadd.f32 %v7353, %v7861
    %v7863 = vpop.f32.mrf.mxu0
    %v7864 = vadd.f32 %v7355, %v7863
    %7865 = vmatmul.bf16.gmra.mxu0 %v4484
    %v7866 = vpop.f32.mrf.mxu0
    %v7867 = vadd.f32 %v7358, %v7866
    %v7868 = vpop.f32.mrf.mxu0
    %v7869 = vadd.f32 %v7360, %v7868
    %7870 = vmatmul.bf16.gmra.mxu0 %v4491
    %v7871 = vpop.f32.mrf.mxu0
    %v7872 = vadd.f32 %v7363, %v7871
    %v7873 = vpop.f32.mrf.mxu0
    %v7874 = vadd.f32 %v7365, %v7873
    %7875 = vmatmul.bf16.gmra.mxu0 %v4498
    %v7876 = vpop.f32.mrf.mxu0
    %v7877 = vadd.f32 %v7368, %v7876
    %v7878 = vpop.f32.mrf.mxu0
    %v7879 = vadd.f32 %v7370, %v7878
    %7880 = vmatmul.bf16.gmra.mxu0 %v4505
    %v7881 = vpop.f32.mrf.mxu0
    %v7882 = vadd.f32 %v7373, %v7881
    %v7883 = vpop.f32.mrf.mxu0
    %v7884 = vadd.f32 %v7375, %v7883
    %7885 = vmatmul.bf16.gmra.mxu0 %v4512
    %v7886 = vpop.f32.mrf.mxu0
    %v7887 = vadd.f32 %v7378, %v7886
    %v7888 = vpop.f32.mrf.mxu0
    %v7889 = vadd.f32 %v7380, %v7888
    %7890 = vmatmul.bf16.gmra.mxu0 %v4519
    %v7891 = vpop.f32.mrf.mxu0
    %v7892 = vadd.f32 %v7383, %v7891
    %v7893 = vpop.f32.mrf.mxu0
    %v7894 = vadd.f32 %v7385, %v7893
    %7895 = vmatmul.bf16.gmra.mxu0 %v4526
    %v7896 = vpop.f32.mrf.mxu0
    %v7897 = vadd.f32 %v7388, %v7896
    %v7898 = vpop.f32.mrf.mxu0
    %v7899 = vadd.f32 %v7390, %v7898
    %7900 = vmatmul.bf16.gmra.mxu0 %v4533
    %v7901 = vpop.f32.mrf.mxu0
    %v7902 = vadd.f32 %v7393, %v7901
    %v7903 = vpop.f32.mrf.mxu0
    %v7904 = vadd.f32 %v7395, %v7903
    %7905 = vmatmul.bf16.gmra.mxu0 %v4540
    %v7906 = vpop.f32.mrf.mxu0
    %v7907 = vadd.f32 %v7398, %v7906
    %v7908 = vpop.f32.mrf.mxu0
    %v7909 = vadd.f32 %v7400, %v7908
    %7910 = vmatmul.bf16.gmra.mxu0 %v4547
    %v7911 = vpop.f32.mrf.mxu0
    %v7912 = vadd.f32 %v7403, %v7911
    %v7913 = vpop.f32.mrf.mxu0
    %v7914 = vadd.f32 %v7405, %v7913
    %7915 = vmatmul.bf16.gmra.mxu0 %v4554
    %v7916 = vpop.f32.mrf.mxu0
    %v7917 = vadd.f32 %v7408, %v7916
    %v7918 = vpop.f32.mrf.mxu0
    %v7919 = vadd.f32 %v7410, %v7918
    %7920 = vmatmul.bf16.gmra.mxu0 %v4561
    %v7921 = vpop.f32.mrf.mxu0
    %v7922 = vadd.f32 %v7413, %v7921
    %v7923 = vpop.f32.mrf.mxu0
    %v7924 = vadd.f32 %v7415, %v7923
    %7925 = vmatmul.bf16.gmra.mxu0 %v4568
    %v7926 = vpop.f32.mrf.mxu0
    %v7927 = vadd.f32 %v7418, %v7926
    %v7928 = vpop.f32.mrf.mxu0
    %v7929 = vadd.f32 %v7420, %v7928
    %7930 = vmatmul.bf16.gmra.mxu0 %v4575
    %v7931 = vpop.f32.mrf.mxu0
    %v7932 = vadd.f32 %v7423, %v7931
    %v7933 = vpop.f32.mrf.mxu0
    %v7934 = vadd.f32 %v7425, %v7933
    %7935 = vmatmul.bf16.gmra.mxu0 %v4582
    %v7936 = vpop.f32.mrf.mxu0
    %v7937 = vadd.f32 %v7428, %v7936
    %v7938 = vpop.f32.mrf.mxu0
    %v7939 = vadd.f32 %v7430, %v7938
    %7940 = vmatmul.bf16.gmra.mxu0 %v4589
    %v7941 = vpop.f32.mrf.mxu0
    %v7942 = vadd.f32 %v7433, %v7941
    %v7943 = vpop.f32.mrf.mxu0
    %v7944 = vadd.f32 %v7435, %v7943
    %7945 = vmatmul.bf16.gmra.mxu0 %v4596
    %v7946 = vpop.f32.mrf.mxu0
    %v7947 = vadd.f32 %v7438, %v7946
    %v7948 = vpop.f32.mrf.mxu0
    %v7949 = vadd.f32 %v7440, %v7948
    %7950 = vmatmul.bf16.gmra.mxu0 %v4603
    %v7951 = vpop.f32.mrf.mxu0
    %v7952 = vadd.f32 %v7443, %v7951
    %v7953 = vpop.f32.mrf.mxu0
    %v7954 = vadd.f32 %v7445, %v7953
    %7955 = vmatmul.bf16.gmra.mxu0 %v4610
    %v7956 = vpop.f32.mrf.mxu0
    %v7957 = vadd.f32 %v7448, %v7956
    %v7958 = vpop.f32.mrf.mxu0
    %v7959 = vadd.f32 %v7450, %v7958
    %7960 = vmatmul.bf16.gmra.mxu0 %v4617
    %v7961 = vpop.f32.mrf.mxu0
    %v7962 = vadd.f32 %v7453, %v7961
    %v7963 = vpop.f32.mrf.mxu0
    %v7964 = vadd.f32 %v7455, %v7963
    %7965 = vmatmul.bf16.gmra.mxu0 %v4624
    %v7966 = vpop.f32.mrf.mxu0
    %v7967 = vadd.f32 %v7458, %v7966
    %v7968 = vpop.f32.mrf.mxu0
    %v7969 = vadd.f32 %v7460, %v7968
    %7970 = vmatmul.bf16.gmra.mxu0 %v4631
    %v7971 = vpop.f32.mrf.mxu0
    %v7972 = vadd.f32 %v7463, %v7971
    %v7973 = vpop.f32.mrf.mxu0
    %v7974 = vadd.f32 %v7465, %v7973
    %7975 = vmatmul.bf16.gmra.mxu0 %v4638
    %v7976 = vpop.f32.mrf.mxu0
    %v7977 = vadd.f32 %v7468, %v7976
    %v7978 = vpop.f32.mrf.mxu0
    %v7979 = vadd.f32 %v7470, %v7978
    %7980 = vmatmul.bf16.gmra.mxu0 %v4645
    %v7981 = vpop.f32.mrf.mxu0
    %v7982 = vadd.f32 %v7473, %v7981
    %v7983 = vpop.f32.mrf.mxu0
    %v7984 = vadd.f32 %v7475, %v7983
    %7985 = vmatmul.bf16.gmra.mxu0 %v4652
    %v7986 = vpop.f32.mrf.mxu0
    %v7987 = vadd.f32 %v7478, %v7986
    %v7988 = vpop.f32.mrf.mxu0
    %v7989 = vadd.f32 %v7480, %v7988
    %7990 = vmatmul.bf16.gmra.mxu0 %v4659
    %v7991 = vpop.f32.mrf.mxu0
    %v7992 = vadd.f32 %v7483, %v7991
    %v7993 = vpop.f32.mrf.mxu0
    %v7994 = vadd.f32 %v7485, %v7993
    %7995 = vmatmul.bf16.gmra.mxu0 %v4666
    %v7996 = vpop.f32.mrf.mxu0
    %v7997 = vadd.f32 %v7488, %v7996
    %v7998 = vpop.f32.mrf.mxu0
    %v7999 = vadd.f32 %v7490, %v7998
    %8000 = vmatmul.bf16.gmra.mxu0 %v4673
    %v8001 = vpop.f32.mrf.mxu0
    %v8002 = vadd.f32 %v7493, %v8001
    %v8003 = vpop.f32.mrf.mxu0
    %v8004 = vadd.f32 %v7495, %v8003
    %8005 = vmatmul.bf16.gmra.mxu0 %v4680
    %v8006 = vpop.f32.mrf.mxu0
    %v8007 = vadd.f32 %v7498, %v8006
    %v8008 = vpop.f32.mrf.mxu0
    %v8009 = vadd.f32 %v7500, %v8008
    %8010 = vmatmul.bf16.gmra.mxu0 %v4687
    %v8011 = vpop.f32.mrf.mxu0
    %v8012 = vadd.f32 %v7503, %v8011
    %v8013 = vpop.f32.mrf.mxu0
    %v8014 = vadd.f32 %v7505, %v8013
    %8015 = vmatmul.bf16.gmra.mxu0 %v4694
    %v8016 = vpop.f32.mrf.mxu0
    %v8017 = vadd.f32 %v7508, %v8016
    %v8018 = vpop.f32.mrf.mxu0
    %v8019 = vadd.f32 %v7510, %v8018
    %8020 = vmatmul.bf16.gmra.mxu0 %v4701
    %v8021 = vpop.f32.mrf.mxu0
    %v8022 = vadd.f32 %v7513, %v8021
    %v8023 = vpop.f32.mrf.mxu0
    %v8024 = vadd.f32 %v7515, %v8023
    %8025 = vmatmul.bf16.gmra.mxu0 %v4708
    %v8026 = vpop.f32.mrf.mxu0
    %v8027 = vadd.f32 %v7518, %v8026
    %v8028 = vpop.f32.mrf.mxu0
    %v8029 = vadd.f32 %v7520, %v8028
    %8030 = vmatmul.bf16.gmra.mxu0 %v4715
    %v8031 = vpop.f32.mrf.mxu0
    %v8032 = vadd.f32 %v7523, %v8031
    %v8033 = vpop.f32.mrf.mxu0
    %v8034 = vadd.f32 %v7525, %v8033
    %8035 = vmatmul.bf16.gmra.mxu0 %v4722
    %v8036 = vpop.f32.mrf.mxu0
    %v8037 = vadd.f32 %v7528, %v8036
    %v8038 = vpop.f32.mrf.mxu0
    %v8039 = vadd.f32 %v7530, %v8038
    %8040 = vmatmul.bf16.gmra.mxu0 %v4729
    %v8041 = vpop.f32.mrf.mxu0
    %v8042 = vadd.f32 %v7533, %v8041
    %v8043 = vpop.f32.mrf.mxu0
    %v8044 = vadd.f32 %v7535, %v8043
    %8045 = vmatmul.bf16.gmra.mxu0 %v4736
    %v8046 = vpop.f32.mrf.mxu0
    %v8047 = vadd.f32 %v7538, %v8046
    %v8048 = vpop.f32.mrf.mxu0
    %v8049 = vadd.f32 %v7540, %v8048
    %8050 = vmatmul.bf16.gmra.mxu0 %v4743
    %v8051 = vpop.f32.mrf.mxu0
    %v8052 = vadd.f32 %v7543, %v8051
    %v8053 = vpop.f32.mrf.mxu0
    %v8054 = vadd.f32 %v7545, %v8053
    %8055 = vmatmul.bf16.gmra.mxu0 %v4750
    %v8056 = vpop.f32.mrf.mxu0
    %v8057 = vadd.f32 %v7548, %v8056
    %v8058 = vpop.f32.mrf.mxu0
    %v8059 = vadd.f32 %v7550, %v8058
    %8060 = vmatmul.bf16.gmra.mxu0 %v4757
    %v8061 = vpop.f32.mrf.mxu0
    %v8062 = vadd.f32 %v7553, %v8061
    %v8063 = vpop.f32.mrf.mxu0
    %v8064 = vadd.f32 %v7555, %v8063
    %8065 = vmatmul.bf16.gmra.mxu0 %v4764
    %v8066 = vpop.f32.mrf.mxu0
    %v8067 = vadd.f32 %v7558, %v8066
    %v8068 = vpop.f32.mrf.mxu0
    %v8069 = vadd.f32 %v7560, %v8068
    %8070 = vmatmul.bf16.gmra.mxu0 %v4771
    %v8071 = vpop.f32.mrf.mxu0
    %v8072 = vadd.f32 %v7563, %v8071
    %v8073 = vpop.f32.mrf.mxu0
    %v8074 = vadd.f32 %v7565, %v8073
    %8075 = vmatmul.bf16.gmra.mxu0 %v4778
    %v8076 = vpop.f32.mrf.mxu0
    %v8077 = vadd.f32 %v7568, %v8076
    %v8078 = vpop.f32.mrf.mxu0
    %v8079 = vadd.f32 %v7570, %v8078
    %8080 = vmatmul.bf16.gmra.mxu0 %v4785
    %v8081 = vpop.f32.mrf.mxu0
    %v8082 = vadd.f32 %v7573, %v8081
    %v8083 = vpop.f32.mrf.mxu0
    %v8084 = vadd.f32 %v7575, %v8083
    %8085 = vmatmul.bf16.gmra.mxu0 %v4792
    %v8086 = vpop.f32.mrf.mxu0
    %v8087 = vadd.f32 %v7578, %v8086
    %v8088 = vpop.f32.mrf.mxu0
    %v8089 = vadd.f32 %v7580, %v8088
    %8090 = vmatmul.bf16.gmra.mxu0 %v4799
    %v8091 = vpop.f32.mrf.mxu0
    %v8092 = vadd.f32 %v7583, %v8091
    %v8093 = vpop.f32.mrf.mxu0
    %v8094 = vadd.f32 %v7585, %v8093
    %8095 = vmatmul.bf16.gmra.mxu0 %v4806
    %v8096 = vpop.f32.mrf.mxu0
    %v8097 = vadd.f32 %v7588, %v8096
    %v8098 = vpop.f32.mrf.mxu0
    %v8099 = vadd.f32 %v7590, %v8098
    %8100 = vmatmul.bf16.gmra.mxu0 %v4813
    %v8101 = vpop.f32.mrf.mxu0
    %v8102 = vadd.f32 %v7593, %v8101
    %v8103 = vpop.f32.mrf.mxu0
    %v8104 = vadd.f32 %v7595, %v8103
    %8105 = vmatmul.bf16.gmra.mxu0 %v4820
    %v8106 = vpop.f32.mrf.mxu0
    %v8107 = vadd.f32 %v7598, %v8106
    %v8108 = vpop.f32.mrf.mxu0
    %v8109 = vadd.f32 %v7600, %v8108
    %8110 = vmatmul.bf16.gmra.mxu0 %v4827
    %v8111 = vpop.f32.mrf.mxu0
    %v8112 = vadd.f32 %v7603, %v8111
    %v8113 = vpop.f32.mrf.mxu0
    %v8114 = vadd.f32 %v7605, %v8113
    %8115 = vmatmul.bf16.gmra.mxu0 %v4834
    %v8116 = vpop.f32.mrf.mxu0
    %v8117 = vadd.f32 %v7608, %v8116
    %v8118 = vpop.f32.mrf.mxu0
    %v8119 = vadd.f32 %v7610, %v8118
    %8120 = vmatmul.bf16.gmra.mxu0 %v4841
    %v8121 = vpop.f32.mrf.mxu0
    %v8122 = vadd.f32 %v7613, %v8121
    %v8123 = vpop.f32.mrf.mxu0
    %v8124 = vadd.f32 %v7615, %v8123
    %8125 = vmatmul.bf16.gmra.mxu0 %v4848
    %v8126 = vpop.f32.mrf.mxu0
    %v8127 = vadd.f32 %v7618, %v8126
    %v8128 = vpop.f32.mrf.mxu0
    %v8129 = vadd.f32 %v7620, %v8128
    %8130 = vmatmul.bf16.gmra.mxu0 %v4855
    %v8131 = vpop.f32.mrf.mxu0
    %v8132 = vadd.f32 %v7623, %v8131
    %v8133 = vpop.f32.mrf.mxu0
    %v8134 = vadd.f32 %v7625, %v8133
    %8135 = vmatmul.bf16.gmra.mxu0 %v4862
    %v8136 = vpop.f32.mrf.mxu0
    %v8137 = vadd.f32 %v7628, %v8136
    %v8138 = vpop.f32.mrf.mxu0
    %v8139 = vadd.f32 %v7630, %v8138
    %8140 = vmatmul.bf16.gmra.mxu0 %v4869
    %v8141 = vpop.f32.mrf.mxu0
    %v8142 = vadd.f32 %v7633, %v8141
    %v8143 = vpop.f32.mrf.mxu0
    %v8144 = vadd.f32 %v7635, %v8143
    %8145 = vmatmul.bf16.gmra.mxu0 %v4876
    %v8146 = vpop.f32.mrf.mxu0
    %v8147 = vadd.f32 %v7638, %v8146
    %v8148 = vpop.f32.mrf.mxu0
    %v8149 = vadd.f32 %v7640, %v8148
    %8150 = vmatmul.bf16.gmra.mxu0 %v4883
    %v8151 = vpop.f32.mrf.mxu0
    %v8152 = vadd.f32 %v7643, %v8151
    %v8153 = vpop.f32.mrf.mxu0
    %v8154 = vadd.f32 %v7645, %v8153
    %8155 = vmatmul.bf16.gmra.mxu0 %v4890
    %v8156 = vpop.f32.mrf.mxu0
    %v8157 = vadd.f32 %v7648, %v8156
    %v8158 = vpop.f32.mrf.mxu0
    %v8159 = vadd.f32 %v7650, %v8158
    %8160 = vmatmul.bf16.gmra.mxu0 %v4897
    %v8161 = vpop.f32.mrf.mxu0
    %v8162 = vadd.f32 %v7653, %v8161
    %v8163 = vpop.f32.mrf.mxu0
    %v8164 = vadd.f32 %v7655, %v8163
    %8165 = vmatmul.bf16.gmra.mxu0 %v4904
    %v8166 = vpop.f32.mrf.mxu0
    %v8167 = vadd.f32 %v7658, %v8166
    %v8168 = vpop.f32.mrf.mxu0
    %v8169 = vadd.f32 %v7660, %v8168
    %8170 = vmatmul.bf16.gmra.mxu0 %v4911
    %v8171 = vpop.f32.mrf.mxu0
    %v8172 = vadd.f32 %v7663, %v8171
    %v8173 = vpop.f32.mrf.mxu0
    %v8174 = vadd.f32 %v7665, %v8173
    %8175 = vmatmul.bf16.gmra.mxu0 %v4918
    %v8176 = vpop.f32.mrf.mxu0
    %v8177 = vadd.f32 %v7668, %v8176
    %v8178 = vpop.f32.mrf.mxu0
    %v8179 = vadd.f32 %v7670, %v8178
    %8180 = vmatmul.bf16.gmra.mxu0 %v4925
    %v8181 = vpop.f32.mrf.mxu0
    %v8182 = vadd.f32 %v7673, %v8181
    %v8183 = vpop.f32.mrf.mxu0
    %v8184 = vadd.f32 %v7675, %v8183
    %8185 = vmatmul.bf16.gmra.mxu0 %v4932
    %v8186 = vpop.f32.mrf.mxu0
    %v8187 = vadd.f32 %v7678, %v8186
    %v8188 = vpop.f32.mrf.mxu0
    %v8189 = vadd.f32 %v7680, %v8188
    %8190 = vmatmul.bf16.gmra.mxu0 %v4939
    %v8191 = vpop.f32.mrf.mxu0
    %v8192 = vadd.f32 %v7683, %v8191
    %v8193 = vpop.f32.mrf.mxu0
    %v8194 = vadd.f32 %v7685, %v8193
    %8195 = vmatmul.bf16.gmra.mxu0 %v4946
    %v8196 = vpop.f32.mrf.mxu0
    %v8197 = vadd.f32 %v7688, %v8196
    %v8198 = vpop.f32.mrf.mxu0
    %v8199 = vadd.f32 %v7690, %v8198
    %8200 = vmatmul.bf16.gmra.mxu0 %v4953
    %v8201 = vpop.f32.mrf.mxu0
    %v8202 = vadd.f32 %v7693, %v8201
    %v8203 = vpop.f32.mrf.mxu0
    %v8204 = vadd.f32 %v7695, %v8203
    %8205 = vmatmul.bf16.gmra.mxu0 %v4960
    %v8206 = vpop.f32.mrf.mxu0
    %v8207 = vadd.f32 %v7698, %v8206
    %v8208 = vpop.f32.mrf.mxu0
    %v8209 = vadd.f32 %v7700, %v8208
    %8210 = vmatmul.bf16.gmra.mxu0 %v4967
    %v8211 = vpop.f32.mrf.mxu0
    %v8212 = vadd.f32 %v7703, %v8211
    %v8213 = vpop.f32.mrf.mxu0
    %v8214 = vadd.f32 %v7705, %v8213
    %8215 = vmatmul.bf16.gmra.mxu0 %v4974
    %v8216 = vpop.f32.mrf.mxu0
    %v8217 = vadd.f32 %v7708, %v8216
    %v8218 = vpop.f32.mrf.mxu0
    %v8219 = vadd.f32 %v7710, %v8218
    %8220 = vmatmul.bf16.gmra.mxu0 %v4981
    %v8221 = vpop.f32.mrf.mxu0
    %v8222 = vadd.f32 %v7713, %v8221
    %v8223 = vpop.f32.mrf.mxu0
    %v8224 = vadd.f32 %v7715, %v8223
    %8225 = vmatmul.bf16.gmra.mxu0 %v4988
    %v8226 = vpop.f32.mrf.mxu0
    %v8227 = vadd.f32 %v7718, %v8226
    %v8228 = vpop.f32.mrf.mxu0
    %v8229 = vadd.f32 %v7720, %v8228
    %8230 = vmatmul.bf16.gmra.mxu0 %v4995
    %v8231 = vpop.f32.mrf.mxu0
    %v8232 = vadd.f32 %v7723, %v8231
    %v8233 = vpop.f32.mrf.mxu0
    %v8234 = vadd.f32 %v7725, %v8233
    %8235 = vmatmul.bf16.gmra.mxu0 %v5002
    %v8236 = vpop.f32.mrf.mxu0
    %v8237 = vadd.f32 %v7728, %v8236
    %v8238 = vpop.f32.mrf.mxu0
    %v8239 = vadd.f32 %v7730, %v8238
    %8240 = vmatmul.bf16.gmra.mxu0 %v5009
    %v8241 = vpop.f32.mrf.mxu0
    %v8242 = vadd.f32 %v7733, %v8241
    %v8243 = vpop.f32.mrf.mxu0
    %v8244 = vadd.f32 %v7735, %v8243
    %8245 = vmatmul.bf16.gmra.mxu0 %v5016
    %v8246 = vpop.f32.mrf.mxu0
    %v8247 = vadd.f32 %v7738, %v8246
    %v8248 = vpop.f32.mrf.mxu0
    %v8249 = vadd.f32 %v7740, %v8248
    %8250 = vdwg.mxu0
    %8251 = vmatpush.bf16.msra.mxu0 %v5855
    %8252 = vmatpush.bf16.msra.mxu0 %v5854
    %8253 = vmatpush.bf16.msra.mxu0 %v5853
    %8254 = vmatpush.bf16.msra.mxu0 %v5852
    %8255 = vmatpush.bf16.msra.mxu0 %v5851
    %8256 = vmatpush.bf16.msra.mxu0 %v5850
    %8257 = vmatpush.bf16.msra.mxu0 %v5849
    %8258 = vmatpush.bf16.msra.mxu0 %v5848
    %8259 = vmatmul.bf16.gmra.mxu0 %v4324
    %v8260 = vpop.f32.mrf.mxu0
    %v8261 = vadd.f32 %v7752, %v8260
    %v8262 = vpop.f32.mrf.mxu0
    %v8263 = vadd.f32 %v7754, %v8262
    %8264 = vmatmul.bf16.gmra.mxu0 %v4331
    %v8265 = vpop.f32.mrf.mxu0
    %v8266 = vadd.f32 %v7757, %v8265
    %v8267 = vpop.f32.mrf.mxu0
    %v8268 = vadd.f32 %v7759, %v8267
    %8269 = vmatmul.bf16.gmra.mxu0 %v4338
    %v8270 = vpop.f32.mrf.mxu0
    %v8271 = vadd.f32 %v7762, %v8270
    %v8272 = vpop.f32.mrf.mxu0
    %v8273 = vadd.f32 %v7764, %v8272
    %8274 = vmatmul.bf16.gmra.mxu0 %v4345
    %v8275 = vpop.f32.mrf.mxu0
    %v8276 = vadd.f32 %v7767, %v8275
    %v8277 = vpop.f32.mrf.mxu0
    %v8278 = vadd.f32 %v7769, %v8277
    %8279 = vmatmul.bf16.gmra.mxu0 %v4352
    %v8280 = vpop.f32.mrf.mxu0
    %v8281 = vadd.f32 %v7772, %v8280
    %v8282 = vpop.f32.mrf.mxu0
    %v8283 = vadd.f32 %v7774, %v8282
    %8284 = vmatmul.bf16.gmra.mxu0 %v4359
    %v8285 = vpop.f32.mrf.mxu0
    %v8286 = vadd.f32 %v7777, %v8285
    %v8287 = vpop.f32.mrf.mxu0
    %v8288 = vadd.f32 %v7779, %v8287
    %8289 = vmatmul.bf16.gmra.mxu0 %v4366
    %v8290 = vpop.f32.mrf.mxu0
    %v8291 = vadd.f32 %v7782, %v8290
    %v8292 = vpop.f32.mrf.mxu0
    %v8293 = vadd.f32 %v7784, %v8292
    %8294 = vmatmul.bf16.gmra.mxu0 %v4373
    %v8295 = vpop.f32.mrf.mxu0
    %v8296 = vadd.f32 %v7787, %v8295
    %v8297 = vpop.f32.mrf.mxu0
    %v8298 = vadd.f32 %v7789, %v8297
    %8299 = vmatmul.bf16.gmra.mxu0 %v4380
    %v8300 = vpop.f32.mrf.mxu0
    %v8301 = vadd.f32 %v7792, %v8300
    %v8302 = vpop.f32.mrf.mxu0
    %v8303 = vadd.f32 %v7794, %v8302
    %8304 = vmatmul.bf16.gmra.mxu0 %v4387
    %v8305 = vpop.f32.mrf.mxu0
    %v8306 = vadd.f32 %v7797, %v8305
    %v8307 = vpop.f32.mrf.mxu0
    %v8308 = vadd.f32 %v7799, %v8307
    %8309 = vmatmul.bf16.gmra.mxu0 %v4394
    %v8310 = vpop.f32.mrf.mxu0
    %v8311 = vadd.f32 %v7802, %v8310
    %v8312 = vpop.f32.mrf.mxu0
    %v8313 = vadd.f32 %v7804, %v8312
    %8314 = vmatmul.bf16.gmra.mxu0 %v4401
    %v8315 = vpop.f32.mrf.mxu0
    %v8316 = vadd.f32 %v7807, %v8315
    %v8317 = vpop.f32.mrf.mxu0
    %v8318 = vadd.f32 %v7809, %v8317
    %8319 = vmatmul.bf16.gmra.mxu0 %v4408
    %v8320 = vpop.f32.mrf.mxu0
    %v8321 = vadd.f32 %v7812, %v8320
    %v8322 = vpop.f32.mrf.mxu0
    %v8323 = vadd.f32 %v7814, %v8322
    %8324 = vmatmul.bf16.gmra.mxu0 %v4415
    %v8325 = vpop.f32.mrf.mxu0
    %v8326 = vadd.f32 %v7817, %v8325
    %v8327 = vpop.f32.mrf.mxu0
    %v8328 = vadd.f32 %v7819, %v8327
    %8329 = vmatmul.bf16.gmra.mxu0 %v4422
    %v8330 = vpop.f32.mrf.mxu0
    %v8331 = vadd.f32 %v7822, %v8330
    %v8332 = vpop.f32.mrf.mxu0
    %v8333 = vadd.f32 %v7824, %v8332
    %8334 = vmatmul.bf16.gmra.mxu0 %v4429
    %v8335 = vpop.f32.mrf.mxu0
    %v8336 = vadd.f32 %v7827, %v8335
    %v8337 = vpop.f32.mrf.mxu0
    %v8338 = vadd.f32 %v7829, %v8337
    %8339 = vmatmul.bf16.gmra.mxu0 %v4436
    %v8340 = vpop.f32.mrf.mxu0
    %v8341 = vadd.f32 %v7832, %v8340
    %v8342 = vpop.f32.mrf.mxu0
    %v8343 = vadd.f32 %v7834, %v8342
    %8344 = vmatmul.bf16.gmra.mxu0 %v4443
    %v8345 = vpop.f32.mrf.mxu0
    %v8346 = vadd.f32 %v7837, %v8345
    %v8347 = vpop.f32.mrf.mxu0
    %v8348 = vadd.f32 %v7839, %v8347
    %8349 = vmatmul.bf16.gmra.mxu0 %v4450
    %v8350 = vpop.f32.mrf.mxu0
    %v8351 = vadd.f32 %v7842, %v8350
    %v8352 = vpop.f32.mrf.mxu0
    %v8353 = vadd.f32 %v7844, %v8352
    %8354 = vmatmul.bf16.gmra.mxu0 %v4457
    %v8355 = vpop.f32.mrf.mxu0
    %v8356 = vadd.f32 %v7847, %v8355
    %v8357 = vpop.f32.mrf.mxu0
    %v8358 = vadd.f32 %v7849, %v8357
    %8359 = vmatmul.bf16.gmra.mxu0 %v4464
    %v8360 = vpop.f32.mrf.mxu0
    %v8361 = vadd.f32 %v7852, %v8360
    %v8362 = vpop.f32.mrf.mxu0
    %v8363 = vadd.f32 %v7854, %v8362
    %8364 = vmatmul.bf16.gmra.mxu0 %v4471
    %v8365 = vpop.f32.mrf.mxu0
    %v8366 = vadd.f32 %v7857, %v8365
    %v8367 = vpop.f32.mrf.mxu0
    %v8368 = vadd.f32 %v7859, %v8367
    %8369 = vmatmul.bf16.gmra.mxu0 %v4478
    %v8370 = vpop.f32.mrf.mxu0
    %v8371 = vadd.f32 %v7862, %v8370
    %v8372 = vpop.f32.mrf.mxu0
    %v8373 = vadd.f32 %v7864, %v8372
    %8374 = vmatmul.bf16.gmra.mxu0 %v4485
    %v8375 = vpop.f32.mrf.mxu0
    %v8376 = vadd.f32 %v7867, %v8375
    %v8377 = vpop.f32.mrf.mxu0
    %v8378 = vadd.f32 %v7869, %v8377
    %8379 = vmatmul.bf16.gmra.mxu0 %v4492
    %v8380 = vpop.f32.mrf.mxu0
    %v8381 = vadd.f32 %v7872, %v8380
    %v8382 = vpop.f32.mrf.mxu0
    %v8383 = vadd.f32 %v7874, %v8382
    %8384 = vmatmul.bf16.gmra.mxu0 %v4499
    %v8385 = vpop.f32.mrf.mxu0
    %v8386 = vadd.f32 %v7877, %v8385
    %v8387 = vpop.f32.mrf.mxu0
    %v8388 = vadd.f32 %v7879, %v8387
    %8389 = vmatmul.bf16.gmra.mxu0 %v4506
    %v8390 = vpop.f32.mrf.mxu0
    %v8391 = vadd.f32 %v7882, %v8390
    %v8392 = vpop.f32.mrf.mxu0
    %v8393 = vadd.f32 %v7884, %v8392
    %8394 = vmatmul.bf16.gmra.mxu0 %v4513
    %v8395 = vpop.f32.mrf.mxu0
    %v8396 = vadd.f32 %v7887, %v8395
    %v8397 = vpop.f32.mrf.mxu0
    %v8398 = vadd.f32 %v7889, %v8397
    %8399 = vmatmul.bf16.gmra.mxu0 %v4520
    %v8400 = vpop.f32.mrf.mxu0
    %v8401 = vadd.f32 %v7892, %v8400
    %v8402 = vpop.f32.mrf.mxu0
    %v8403 = vadd.f32 %v7894, %v8402
    %8404 = vmatmul.bf16.gmra.mxu0 %v4527
    %v8405 = vpop.f32.mrf.mxu0
    %v8406 = vadd.f32 %v7897, %v8405
    %v8407 = vpop.f32.mrf.mxu0
    %v8408 = vadd.f32 %v7899, %v8407
    %8409 = vmatmul.bf16.gmra.mxu0 %v4534
    %v8410 = vpop.f32.mrf.mxu0
    %v8411 = vadd.f32 %v7902, %v8410
    %v8412 = vpop.f32.mrf.mxu0
    %v8413 = vadd.f32 %v7904, %v8412
    %8414 = vmatmul.bf16.gmra.mxu0 %v4541
    %v8415 = vpop.f32.mrf.mxu0
    %v8416 = vadd.f32 %v7907, %v8415
    %v8417 = vpop.f32.mrf.mxu0
    %v8418 = vadd.f32 %v7909, %v8417
    %8419 = vmatmul.bf16.gmra.mxu0 %v4548
    %v8420 = vpop.f32.mrf.mxu0
    %v8421 = vadd.f32 %v7912, %v8420
    %v8422 = vpop.f32.mrf.mxu0
    %v8423 = vadd.f32 %v7914, %v8422
    %8424 = vmatmul.bf16.gmra.mxu0 %v4555
    %v8425 = vpop.f32.mrf.mxu0
    %v8426 = vadd.f32 %v7917, %v8425
    %v8427 = vpop.f32.mrf.mxu0
    %v8428 = vadd.f32 %v7919, %v8427
    %8429 = vmatmul.bf16.gmra.mxu0 %v4562
    %v8430 = vpop.f32.mrf.mxu0
    %v8431 = vadd.f32 %v7922, %v8430
    %v8432 = vpop.f32.mrf.mxu0
    %v8433 = vadd.f32 %v7924, %v8432
    %8434 = vmatmul.bf16.gmra.mxu0 %v4569
    %v8435 = vpop.f32.mrf.mxu0
    %v8436 = vadd.f32 %v7927, %v8435
    %v8437 = vpop.f32.mrf.mxu0
    %v8438 = vadd.f32 %v7929, %v8437
    %8439 = vmatmul.bf16.gmra.mxu0 %v4576
    %v8440 = vpop.f32.mrf.mxu0
    %v8441 = vadd.f32 %v7932, %v8440
    %v8442 = vpop.f32.mrf.mxu0
    %v8443 = vadd.f32 %v7934, %v8442
    %8444 = vmatmul.bf16.gmra.mxu0 %v4583
    %v8445 = vpop.f32.mrf.mxu0
    %v8446 = vadd.f32 %v7937, %v8445
    %v8447 = vpop.f32.mrf.mxu0
    %v8448 = vadd.f32 %v7939, %v8447
    %8449 = vmatmul.bf16.gmra.mxu0 %v4590
    %v8450 = vpop.f32.mrf.mxu0
    %v8451 = vadd.f32 %v7942, %v8450
    %v8452 = vpop.f32.mrf.mxu0
    %v8453 = vadd.f32 %v7944, %v8452
    %8454 = vmatmul.bf16.gmra.mxu0 %v4597
    %v8455 = vpop.f32.mrf.mxu0
    %v8456 = vadd.f32 %v7947, %v8455
    %v8457 = vpop.f32.mrf.mxu0
    %v8458 = vadd.f32 %v7949, %v8457
    %8459 = vmatmul.bf16.gmra.mxu0 %v4604
    %v8460 = vpop.f32.mrf.mxu0
    %v8461 = vadd.f32 %v7952, %v8460
    %v8462 = vpop.f32.mrf.mxu0
    %v8463 = vadd.f32 %v7954, %v8462
    %8464 = vmatmul.bf16.gmra.mxu0 %v4611
    %v8465 = vpop.f32.mrf.mxu0
    %v8466 = vadd.f32 %v7957, %v8465
    %v8467 = vpop.f32.mrf.mxu0
    %v8468 = vadd.f32 %v7959, %v8467
    %8469 = vmatmul.bf16.gmra.mxu0 %v4618
    %v8470 = vpop.f32.mrf.mxu0
    %v8471 = vadd.f32 %v7962, %v8470
    %v8472 = vpop.f32.mrf.mxu0
    %v8473 = vadd.f32 %v7964, %v8472
    %8474 = vmatmul.bf16.gmra.mxu0 %v4625
    %v8475 = vpop.f32.mrf.mxu0
    %v8476 = vadd.f32 %v7967, %v8475
    %v8477 = vpop.f32.mrf.mxu0
    %v8478 = vadd.f32 %v7969, %v8477
    %8479 = vmatmul.bf16.gmra.mxu0 %v4632
    %v8480 = vpop.f32.mrf.mxu0
    %v8481 = vadd.f32 %v7972, %v8480
    %v8482 = vpop.f32.mrf.mxu0
    %v8483 = vadd.f32 %v7974, %v8482
    %8484 = vmatmul.bf16.gmra.mxu0 %v4639
    %v8485 = vpop.f32.mrf.mxu0
    %v8486 = vadd.f32 %v7977, %v8485
    %v8487 = vpop.f32.mrf.mxu0
    %v8488 = vadd.f32 %v7979, %v8487
    %8489 = vmatmul.bf16.gmra.mxu0 %v4646
    %v8490 = vpop.f32.mrf.mxu0
    %v8491 = vadd.f32 %v7982, %v8490
    %v8492 = vpop.f32.mrf.mxu0
    %v8493 = vadd.f32 %v7984, %v8492
    %8494 = vmatmul.bf16.gmra.mxu0 %v4653
    %v8495 = vpop.f32.mrf.mxu0
    %v8496 = vadd.f32 %v7987, %v8495
    %v8497 = vpop.f32.mrf.mxu0
    %v8498 = vadd.f32 %v7989, %v8497
    %8499 = vmatmul.bf16.gmra.mxu0 %v4660
    %v8500 = vpop.f32.mrf.mxu0
    %v8501 = vadd.f32 %v7992, %v8500
    %v8502 = vpop.f32.mrf.mxu0
    %v8503 = vadd.f32 %v7994, %v8502
    %8504 = vmatmul.bf16.gmra.mxu0 %v4667
    %v8505 = vpop.f32.mrf.mxu0
    %v8506 = vadd.f32 %v7997, %v8505
    %v8507 = vpop.f32.mrf.mxu0
    %v8508 = vadd.f32 %v7999, %v8507
    %8509 = vmatmul.bf16.gmra.mxu0 %v4674
    %v8510 = vpop.f32.mrf.mxu0
    %v8511 = vadd.f32 %v8002, %v8510
    %v8512 = vpop.f32.mrf.mxu0
    %v8513 = vadd.f32 %v8004, %v8512
    %8514 = vmatmul.bf16.gmra.mxu0 %v4681
    %v8515 = vpop.f32.mrf.mxu0
    %v8516 = vadd.f32 %v8007, %v8515
    %v8517 = vpop.f32.mrf.mxu0
    %v8518 = vadd.f32 %v8009, %v8517
    %8519 = vmatmul.bf16.gmra.mxu0 %v4688
    %v8520 = vpop.f32.mrf.mxu0
    %v8521 = vadd.f32 %v8012, %v8520
    %v8522 = vpop.f32.mrf.mxu0
    %v8523 = vadd.f32 %v8014, %v8522
    %8524 = vmatmul.bf16.gmra.mxu0 %v4695
    %v8525 = vpop.f32.mrf.mxu0
    %v8526 = vadd.f32 %v8017, %v8525
    %v8527 = vpop.f32.mrf.mxu0
    %v8528 = vadd.f32 %v8019, %v8527
    %8529 = vmatmul.bf16.gmra.mxu0 %v4702
    %v8530 = vpop.f32.mrf.mxu0
    %v8531 = vadd.f32 %v8022, %v8530
    %v8532 = vpop.f32.mrf.mxu0
    %v8533 = vadd.f32 %v8024, %v8532
    %8534 = vmatmul.bf16.gmra.mxu0 %v4709
    %v8535 = vpop.f32.mrf.mxu0
    %v8536 = vadd.f32 %v8027, %v8535
    %v8537 = vpop.f32.mrf.mxu0
    %v8538 = vadd.f32 %v8029, %v8537
    %8539 = vmatmul.bf16.gmra.mxu0 %v4716
    %v8540 = vpop.f32.mrf.mxu0
    %v8541 = vadd.f32 %v8032, %v8540
    %v8542 = vpop.f32.mrf.mxu0
    %v8543 = vadd.f32 %v8034, %v8542
    %8544 = vmatmul.bf16.gmra.mxu0 %v4723
    %v8545 = vpop.f32.mrf.mxu0
    %v8546 = vadd.f32 %v8037, %v8545
    %v8547 = vpop.f32.mrf.mxu0
    %v8548 = vadd.f32 %v8039, %v8547
    %8549 = vmatmul.bf16.gmra.mxu0 %v4730
    %v8550 = vpop.f32.mrf.mxu0
    %v8551 = vadd.f32 %v8042, %v8550
    %v8552 = vpop.f32.mrf.mxu0
    %v8553 = vadd.f32 %v8044, %v8552
    %8554 = vmatmul.bf16.gmra.mxu0 %v4737
    %v8555 = vpop.f32.mrf.mxu0
    %v8556 = vadd.f32 %v8047, %v8555
    %v8557 = vpop.f32.mrf.mxu0
    %v8558 = vadd.f32 %v8049, %v8557
    %8559 = vmatmul.bf16.gmra.mxu0 %v4744
    %v8560 = vpop.f32.mrf.mxu0
    %v8561 = vadd.f32 %v8052, %v8560
    %v8562 = vpop.f32.mrf.mxu0
    %v8563 = vadd.f32 %v8054, %v8562
    %8564 = vmatmul.bf16.gmra.mxu0 %v4751
    %v8565 = vpop.f32.mrf.mxu0
    %v8566 = vadd.f32 %v8057, %v8565
    %v8567 = vpop.f32.mrf.mxu0
    %v8568 = vadd.f32 %v8059, %v8567
    %8569 = vmatmul.bf16.gmra.mxu0 %v4758
    %v8570 = vpop.f32.mrf.mxu0
    %v8571 = vadd.f32 %v8062, %v8570
    %v8572 = vpop.f32.mrf.mxu0
    %v8573 = vadd.f32 %v8064, %v8572
    %8574 = vmatmul.bf16.gmra.mxu0 %v4765
    %v8575 = vpop.f32.mrf.mxu0
    %v8576 = vadd.f32 %v8067, %v8575
    %v8577 = vpop.f32.mrf.mxu0
    %v8578 = vadd.f32 %v8069, %v8577
    %8579 = vmatmul.bf16.gmra.mxu0 %v4772
    %v8580 = vpop.f32.mrf.mxu0
    %v8581 = vadd.f32 %v8072, %v8580
    %v8582 = vpop.f32.mrf.mxu0
    %v8583 = vadd.f32 %v8074, %v8582
    %8584 = vmatmul.bf16.gmra.mxu0 %v4779
    %v8585 = vpop.f32.mrf.mxu0
    %v8586 = vadd.f32 %v8077, %v8585
    %v8587 = vpop.f32.mrf.mxu0
    %v8588 = vadd.f32 %v8079, %v8587
    %8589 = vmatmul.bf16.gmra.mxu0 %v4786
    %v8590 = vpop.f32.mrf.mxu0
    %v8591 = vadd.f32 %v8082, %v8590
    %v8592 = vpop.f32.mrf.mxu0
    %v8593 = vadd.f32 %v8084, %v8592
    %8594 = vmatmul.bf16.gmra.mxu0 %v4793
    %v8595 = vpop.f32.mrf.mxu0
    %v8596 = vadd.f32 %v8087, %v8595
    %v8597 = vpop.f32.mrf.mxu0
    %v8598 = vadd.f32 %v8089, %v8597
    %8599 = vmatmul.bf16.gmra.mxu0 %v4800
    %v8600 = vpop.f32.mrf.mxu0
    %v8601 = vadd.f32 %v8092, %v8600
    %v8602 = vpop.f32.mrf.mxu0
    %v8603 = vadd.f32 %v8094, %v8602
    %8604 = vmatmul.bf16.gmra.mxu0 %v4807
    %v8605 = vpop.f32.mrf.mxu0
    %v8606 = vadd.f32 %v8097, %v8605
    %v8607 = vpop.f32.mrf.mxu0
    %v8608 = vadd.f32 %v8099, %v8607
    %8609 = vmatmul.bf16.gmra.mxu0 %v4814
    %v8610 = vpop.f32.mrf.mxu0
    %v8611 = vadd.f32 %v8102, %v8610
    %v8612 = vpop.f32.mrf.mxu0
    %v8613 = vadd.f32 %v8104, %v8612
    %8614 = vmatmul.bf16.gmra.mxu0 %v4821
    %v8615 = vpop.f32.mrf.mxu0
    %v8616 = vadd.f32 %v8107, %v8615
    %v8617 = vpop.f32.mrf.mxu0
    %v8618 = vadd.f32 %v8109, %v8617
    %8619 = vmatmul.bf16.gmra.mxu0 %v4828
    %v8620 = vpop.f32.mrf.mxu0
    %v8621 = vadd.f32 %v8112, %v8620
    %v8622 = vpop.f32.mrf.mxu0
    %v8623 = vadd.f32 %v8114, %v8622
    %8624 = vmatmul.bf16.gmra.mxu0 %v4835
    %v8625 = vpop.f32.mrf.mxu0
    %v8626 = vadd.f32 %v8117, %v8625
    %v8627 = vpop.f32.mrf.mxu0
    %v8628 = vadd.f32 %v8119, %v8627
    %8629 = vmatmul.bf16.gmra.mxu0 %v4842
    %v8630 = vpop.f32.mrf.mxu0
    %v8631 = vadd.f32 %v8122, %v8630
    %v8632 = vpop.f32.mrf.mxu0
    %v8633 = vadd.f32 %v8124, %v8632
    %8634 = vmatmul.bf16.gmra.mxu0 %v4849
    %v8635 = vpop.f32.mrf.mxu0
    %v8636 = vadd.f32 %v8127, %v8635
    %v8637 = vpop.f32.mrf.mxu0
    %v8638 = vadd.f32 %v8129, %v8637
    %8639 = vmatmul.bf16.gmra.mxu0 %v4856
    %v8640 = vpop.f32.mrf.mxu0
    %v8641 = vadd.f32 %v8132, %v8640
    %v8642 = vpop.f32.mrf.mxu0
    %v8643 = vadd.f32 %v8134, %v8642
    %8644 = vmatmul.bf16.gmra.mxu0 %v4863
    %v8645 = vpop.f32.mrf.mxu0
    %v8646 = vadd.f32 %v8137, %v8645
    %v8647 = vpop.f32.mrf.mxu0
    %v8648 = vadd.f32 %v8139, %v8647
    %8649 = vmatmul.bf16.gmra.mxu0 %v4870
    %v8650 = vpop.f32.mrf.mxu0
    %v8651 = vadd.f32 %v8142, %v8650
    %v8652 = vpop.f32.mrf.mxu0
    %v8653 = vadd.f32 %v8144, %v8652
    %8654 = vmatmul.bf16.gmra.mxu0 %v4877
    %v8655 = vpop.f32.mrf.mxu0
    %v8656 = vadd.f32 %v8147, %v8655
    %v8657 = vpop.f32.mrf.mxu0
    %v8658 = vadd.f32 %v8149, %v8657
    %8659 = vmatmul.bf16.gmra.mxu0 %v4884
    %v8660 = vpop.f32.mrf.mxu0
    %v8661 = vadd.f32 %v8152, %v8660
    %v8662 = vpop.f32.mrf.mxu0
    %v8663 = vadd.f32 %v8154, %v8662
    %8664 = vmatmul.bf16.gmra.mxu0 %v4891
    %v8665 = vpop.f32.mrf.mxu0
    %v8666 = vadd.f32 %v8157, %v8665
    %v8667 = vpop.f32.mrf.mxu0
    %v8668 = vadd.f32 %v8159, %v8667
    %8669 = vmatmul.bf16.gmra.mxu0 %v4898
    %v8670 = vpop.f32.mrf.mxu0
    %v8671 = vadd.f32 %v8162, %v8670
    %v8672 = vpop.f32.mrf.mxu0
    %v8673 = vadd.f32 %v8164, %v8672
    %8674 = vmatmul.bf16.gmra.mxu0 %v4905
    %v8675 = vpop.f32.mrf.mxu0
    %v8676 = vadd.f32 %v8167, %v8675
    %v8677 = vpop.f32.mrf.mxu0
    %v8678 = vadd.f32 %v8169, %v8677
    %8679 = vmatmul.bf16.gmra.mxu0 %v4912
    %v8680 = vpop.f32.mrf.mxu0
    %v8681 = vadd.f32 %v8172, %v8680
    %v8682 = vpop.f32.mrf.mxu0
    %v8683 = vadd.f32 %v8174, %v8682
    %8684 = vmatmul.bf16.gmra.mxu0 %v4919
    %v8685 = vpop.f32.mrf.mxu0
    %v8686 = vadd.f32 %v8177, %v8685
    %v8687 = vpop.f32.mrf.mxu0
    %v8688 = vadd.f32 %v8179, %v8687
    %8689 = vmatmul.bf16.gmra.mxu0 %v4926
    %v8690 = vpop.f32.mrf.mxu0
    %v8691 = vadd.f32 %v8182, %v8690
    %v8692 = vpop.f32.mrf.mxu0
    %v8693 = vadd.f32 %v8184, %v8692
    %8694 = vmatmul.bf16.gmra.mxu0 %v4933
    %v8695 = vpop.f32.mrf.mxu0
    %v8696 = vadd.f32 %v8187, %v8695
    %v8697 = vpop.f32.mrf.mxu0
    %v8698 = vadd.f32 %v8189, %v8697
    %8699 = vmatmul.bf16.gmra.mxu0 %v4940
    %v8700 = vpop.f32.mrf.mxu0
    %v8701 = vadd.f32 %v8192, %v8700
    %v8702 = vpop.f32.mrf.mxu0
    %v8703 = vadd.f32 %v8194, %v8702
    %8704 = vmatmul.bf16.gmra.mxu0 %v4947
    %v8705 = vpop.f32.mrf.mxu0
    %v8706 = vadd.f32 %v8197, %v8705
    %v8707 = vpop.f32.mrf.mxu0
    %v8708 = vadd.f32 %v8199, %v8707
    %8709 = vmatmul.bf16.gmra.mxu0 %v4954
    %v8710 = vpop.f32.mrf.mxu0
    %v8711 = vadd.f32 %v8202, %v8710
    %v8712 = vpop.f32.mrf.mxu0
    %v8713 = vadd.f32 %v8204, %v8712
    %8714 = vmatmul.bf16.gmra.mxu0 %v4961
    %v8715 = vpop.f32.mrf.mxu0
    %v8716 = vadd.f32 %v8207, %v8715
    %v8717 = vpop.f32.mrf.mxu0
    %v8718 = vadd.f32 %v8209, %v8717
    %8719 = vmatmul.bf16.gmra.mxu0 %v4968
    %v8720 = vpop.f32.mrf.mxu0
    %v8721 = vadd.f32 %v8212, %v8720
    %v8722 = vpop.f32.mrf.mxu0
    %v8723 = vadd.f32 %v8214, %v8722
    %8724 = vmatmul.bf16.gmra.mxu0 %v4975
    %v8725 = vpop.f32.mrf.mxu0
    %v8726 = vadd.f32 %v8217, %v8725
    %v8727 = vpop.f32.mrf.mxu0
    %v8728 = vadd.f32 %v8219, %v8727
    %8729 = vmatmul.bf16.gmra.mxu0 %v4982
    %v8730 = vpop.f32.mrf.mxu0
    %v8731 = vadd.f32 %v8222, %v8730
    %v8732 = vpop.f32.mrf.mxu0
    %v8733 = vadd.f32 %v8224, %v8732
    %8734 = vmatmul.bf16.gmra.mxu0 %v4989
    %v8735 = vpop.f32.mrf.mxu0
    %v8736 = vadd.f32 %v8227, %v8735
    %v8737 = vpop.f32.mrf.mxu0
    %v8738 = vadd.f32 %v8229, %v8737
    %8739 = vmatmul.bf16.gmra.mxu0 %v4996
    %v8740 = vpop.f32.mrf.mxu0
    %v8741 = vadd.f32 %v8232, %v8740
    %v8742 = vpop.f32.mrf.mxu0
    %v8743 = vadd.f32 %v8234, %v8742
    %8744 = vmatmul.bf16.gmra.mxu0 %v5003
    %v8745 = vpop.f32.mrf.mxu0
    %v8746 = vadd.f32 %v8237, %v8745
    %v8747 = vpop.f32.mrf.mxu0
    %v8748 = vadd.f32 %v8239, %v8747
    %8749 = vmatmul.bf16.gmra.mxu0 %v5010
    %v8750 = vpop.f32.mrf.mxu0
    %v8751 = vadd.f32 %v8242, %v8750
    %v8752 = vpop.f32.mrf.mxu0
    %v8753 = vadd.f32 %v8244, %v8752
    %8754 = vmatmul.bf16.gmra.mxu0 %v5017
    %v8755 = vpop.f32.mrf.mxu0
    %v8756 = vadd.f32 %v8247, %v8755
    %v8757 = vpop.f32.mrf.mxu0
    %v8758 = vadd.f32 %v8249, %v8757
    %8759 = vdwg.mxu0
    %8760 = vmatpush.bf16.msra.mxu0 %v5863
    %8761 = vmatpush.bf16.msra.mxu0 %v5862
    %8762 = vmatpush.bf16.msra.mxu0 %v5861
    %8763 = vmatpush.bf16.msra.mxu0 %v5860
    %8764 = vmatpush.bf16.msra.mxu0 %v5859
    %8765 = vmatpush.bf16.msra.mxu0 %v5858
    %8766 = vmatpush.bf16.msra.mxu0 %v5857
    %8767 = vmatpush.bf16.msra.mxu0 %v5856
    %8768 = vmatmul.bf16.gmra.mxu0 %v4325
    %v8769 = vpop.f32.mrf.mxu0
    %v8770 = vadd.f32 %v8261, %v8769
    %v8771 = vpop.f32.mrf.mxu0
    %v8772 = vadd.f32 %v8263, %v8771
    %8773 = vmatmul.bf16.gmra.mxu0 %v4332
    %v8774 = vpop.f32.mrf.mxu0
    %v8775 = vadd.f32 %v8266, %v8774
    %v8776 = vpop.f32.mrf.mxu0
    %v8777 = vadd.f32 %v8268, %v8776
    %8778 = vmatmul.bf16.gmra.mxu0 %v4339
    %v8779 = vpop.f32.mrf.mxu0
    %v8780 = vadd.f32 %v8271, %v8779
    %v8781 = vpop.f32.mrf.mxu0
    %v8782 = vadd.f32 %v8273, %v8781
    %8783 = vmatmul.bf16.gmra.mxu0 %v4346
    %v8784 = vpop.f32.mrf.mxu0
    %v8785 = vadd.f32 %v8276, %v8784
    %v8786 = vpop.f32.mrf.mxu0
    %v8787 = vadd.f32 %v8278, %v8786
    %8788 = vmatmul.bf16.gmra.mxu0 %v4353
    %v8789 = vpop.f32.mrf.mxu0
    %v8790 = vadd.f32 %v8281, %v8789
    %v8791 = vpop.f32.mrf.mxu0
    %v8792 = vadd.f32 %v8283, %v8791
    %8793 = vmatmul.bf16.gmra.mxu0 %v4360
    %v8794 = vpop.f32.mrf.mxu0
    %v8795 = vadd.f32 %v8286, %v8794
    %v8796 = vpop.f32.mrf.mxu0
    %v8797 = vadd.f32 %v8288, %v8796
    %8798 = vmatmul.bf16.gmra.mxu0 %v4367
    %v8799 = vpop.f32.mrf.mxu0
    %v8800 = vadd.f32 %v8291, %v8799
    %v8801 = vpop.f32.mrf.mxu0
    %v8802 = vadd.f32 %v8293, %v8801
    %8803 = vmatmul.bf16.gmra.mxu0 %v4374
    %v8804 = vpop.f32.mrf.mxu0
    %v8805 = vadd.f32 %v8296, %v8804
    %v8806 = vpop.f32.mrf.mxu0
    %v8807 = vadd.f32 %v8298, %v8806
    %8808 = vmatmul.bf16.gmra.mxu0 %v4381
    %v8809 = vpop.f32.mrf.mxu0
    %v8810 = vadd.f32 %v8301, %v8809
    %v8811 = vpop.f32.mrf.mxu0
    %v8812 = vadd.f32 %v8303, %v8811
    %8813 = vmatmul.bf16.gmra.mxu0 %v4388
    %v8814 = vpop.f32.mrf.mxu0
    %v8815 = vadd.f32 %v8306, %v8814
    %v8816 = vpop.f32.mrf.mxu0
    %v8817 = vadd.f32 %v8308, %v8816
    %8818 = vmatmul.bf16.gmra.mxu0 %v4395
    %v8819 = vpop.f32.mrf.mxu0
    %v8820 = vadd.f32 %v8311, %v8819
    %v8821 = vpop.f32.mrf.mxu0
    %v8822 = vadd.f32 %v8313, %v8821
    %8823 = vmatmul.bf16.gmra.mxu0 %v4402
    %v8824 = vpop.f32.mrf.mxu0
    %v8825 = vadd.f32 %v8316, %v8824
    %v8826 = vpop.f32.mrf.mxu0
    %v8827 = vadd.f32 %v8318, %v8826
    %8828 = vmatmul.bf16.gmra.mxu0 %v4409
    %v8829 = vpop.f32.mrf.mxu0
    %v8830 = vadd.f32 %v8321, %v8829
    %v8831 = vpop.f32.mrf.mxu0
    %v8832 = vadd.f32 %v8323, %v8831
    %8833 = vmatmul.bf16.gmra.mxu0 %v4416
    %v8834 = vpop.f32.mrf.mxu0
    %v8835 = vadd.f32 %v8326, %v8834
    %v8836 = vpop.f32.mrf.mxu0
    %v8837 = vadd.f32 %v8328, %v8836
    %8838 = vmatmul.bf16.gmra.mxu0 %v4423
    %v8839 = vpop.f32.mrf.mxu0
    %v8840 = vadd.f32 %v8331, %v8839
    %v8841 = vpop.f32.mrf.mxu0
    %v8842 = vadd.f32 %v8333, %v8841
    %8843 = vmatmul.bf16.gmra.mxu0 %v4430
    %v8844 = vpop.f32.mrf.mxu0
    %v8845 = vadd.f32 %v8336, %v8844
    %v8846 = vpop.f32.mrf.mxu0
    %v8847 = vadd.f32 %v8338, %v8846
    %8848 = vmatmul.bf16.gmra.mxu0 %v4437
    %v8849 = vpop.f32.mrf.mxu0
    %v8850 = vadd.f32 %v8341, %v8849
    %v8851 = vpop.f32.mrf.mxu0
    %v8852 = vadd.f32 %v8343, %v8851
    %8853 = vmatmul.bf16.gmra.mxu0 %v4444
    %v8854 = vpop.f32.mrf.mxu0
    %v8855 = vadd.f32 %v8346, %v8854
    %v8856 = vpop.f32.mrf.mxu0
    %v8857 = vadd.f32 %v8348, %v8856
    %8858 = vmatmul.bf16.gmra.mxu0 %v4451
    %v8859 = vpop.f32.mrf.mxu0
    %v8860 = vadd.f32 %v8351, %v8859
    %v8861 = vpop.f32.mrf.mxu0
    %v8862 = vadd.f32 %v8353, %v8861
    %8863 = vmatmul.bf16.gmra.mxu0 %v4458
    %v8864 = vpop.f32.mrf.mxu0
    %v8865 = vadd.f32 %v8356, %v8864
    %v8866 = vpop.f32.mrf.mxu0
    %v8867 = vadd.f32 %v8358, %v8866
    %8868 = vmatmul.bf16.gmra.mxu0 %v4465
    %v8869 = vpop.f32.mrf.mxu0
    %v8870 = vadd.f32 %v8361, %v8869
    %v8871 = vpop.f32.mrf.mxu0
    %v8872 = vadd.f32 %v8363, %v8871
    %8873 = vmatmul.bf16.gmra.mxu0 %v4472
    %v8874 = vpop.f32.mrf.mxu0
    %v8875 = vadd.f32 %v8366, %v8874
    %v8876 = vpop.f32.mrf.mxu0
    %v8877 = vadd.f32 %v8368, %v8876
    %8878 = vmatmul.bf16.gmra.mxu0 %v4479
    %v8879 = vpop.f32.mrf.mxu0
    %v8880 = vadd.f32 %v8371, %v8879
    %v8881 = vpop.f32.mrf.mxu0
    %v8882 = vadd.f32 %v8373, %v8881
    %8883 = vmatmul.bf16.gmra.mxu0 %v4486
    %v8884 = vpop.f32.mrf.mxu0
    %v8885 = vadd.f32 %v8376, %v8884
    %v8886 = vpop.f32.mrf.mxu0
    %v8887 = vadd.f32 %v8378, %v8886
    %8888 = vmatmul.bf16.gmra.mxu0 %v4493
    %v8889 = vpop.f32.mrf.mxu0
    %v8890 = vadd.f32 %v8381, %v8889
    %v8891 = vpop.f32.mrf.mxu0
    %v8892 = vadd.f32 %v8383, %v8891
    %8893 = vmatmul.bf16.gmra.mxu0 %v4500
    %v8894 = vpop.f32.mrf.mxu0
    %v8895 = vadd.f32 %v8386, %v8894
    %v8896 = vpop.f32.mrf.mxu0
    %v8897 = vadd.f32 %v8388, %v8896
    %8898 = vmatmul.bf16.gmra.mxu0 %v4507
    %v8899 = vpop.f32.mrf.mxu0
    %v8900 = vadd.f32 %v8391, %v8899
    %v8901 = vpop.f32.mrf.mxu0
    %v8902 = vadd.f32 %v8393, %v8901
    %8903 = vmatmul.bf16.gmra.mxu0 %v4514
    %v8904 = vpop.f32.mrf.mxu0
    %v8905 = vadd.f32 %v8396, %v8904
    %v8906 = vpop.f32.mrf.mxu0
    %v8907 = vadd.f32 %v8398, %v8906
    %8908 = vmatmul.bf16.gmra.mxu0 %v4521
    %v8909 = vpop.f32.mrf.mxu0
    %v8910 = vadd.f32 %v8401, %v8909
    %v8911 = vpop.f32.mrf.mxu0
    %v8912 = vadd.f32 %v8403, %v8911
    %8913 = vmatmul.bf16.gmra.mxu0 %v4528
    %v8914 = vpop.f32.mrf.mxu0
    %v8915 = vadd.f32 %v8406, %v8914
    %v8916 = vpop.f32.mrf.mxu0
    %v8917 = vadd.f32 %v8408, %v8916
    %8918 = vmatmul.bf16.gmra.mxu0 %v4535
    %v8919 = vpop.f32.mrf.mxu0
    %v8920 = vadd.f32 %v8411, %v8919
    %v8921 = vpop.f32.mrf.mxu0
    %v8922 = vadd.f32 %v8413, %v8921
    %8923 = vmatmul.bf16.gmra.mxu0 %v4542
    %v8924 = vpop.f32.mrf.mxu0
    %v8925 = vadd.f32 %v8416, %v8924
    %v8926 = vpop.f32.mrf.mxu0
    %v8927 = vadd.f32 %v8418, %v8926
    %8928 = vmatmul.bf16.gmra.mxu0 %v4549
    %v8929 = vpop.f32.mrf.mxu0
    %v8930 = vadd.f32 %v8421, %v8929
    %v8931 = vpop.f32.mrf.mxu0
    %v8932 = vadd.f32 %v8423, %v8931
    %8933 = vmatmul.bf16.gmra.mxu0 %v4556
    %v8934 = vpop.f32.mrf.mxu0
    %v8935 = vadd.f32 %v8426, %v8934
    %v8936 = vpop.f32.mrf.mxu0
    %v8937 = vadd.f32 %v8428, %v8936
    %8938 = vmatmul.bf16.gmra.mxu0 %v4563
    %v8939 = vpop.f32.mrf.mxu0
    %v8940 = vadd.f32 %v8431, %v8939
    %v8941 = vpop.f32.mrf.mxu0
    %v8942 = vadd.f32 %v8433, %v8941
    %8943 = vmatmul.bf16.gmra.mxu0 %v4570
    %v8944 = vpop.f32.mrf.mxu0
    %v8945 = vadd.f32 %v8436, %v8944
    %v8946 = vpop.f32.mrf.mxu0
    %v8947 = vadd.f32 %v8438, %v8946
    %8948 = vmatmul.bf16.gmra.mxu0 %v4577
    %v8949 = vpop.f32.mrf.mxu0
    %v8950 = vadd.f32 %v8441, %v8949
    %v8951 = vpop.f32.mrf.mxu0
    %v8952 = vadd.f32 %v8443, %v8951
    %8953 = vmatmul.bf16.gmra.mxu0 %v4584
    %v8954 = vpop.f32.mrf.mxu0
    %v8955 = vadd.f32 %v8446, %v8954
    %v8956 = vpop.f32.mrf.mxu0
    %v8957 = vadd.f32 %v8448, %v8956
    %8958 = vmatmul.bf16.gmra.mxu0 %v4591
    %v8959 = vpop.f32.mrf.mxu0
    %v8960 = vadd.f32 %v8451, %v8959
    %v8961 = vpop.f32.mrf.mxu0
    %v8962 = vadd.f32 %v8453, %v8961
    %8963 = vmatmul.bf16.gmra.mxu0 %v4598
    %v8964 = vpop.f32.mrf.mxu0
    %v8965 = vadd.f32 %v8456, %v8964
    %v8966 = vpop.f32.mrf.mxu0
    %v8967 = vadd.f32 %v8458, %v8966
    %8968 = vmatmul.bf16.gmra.mxu0 %v4605
    %v8969 = vpop.f32.mrf.mxu0
    %v8970 = vadd.f32 %v8461, %v8969
    %v8971 = vpop.f32.mrf.mxu0
    %v8972 = vadd.f32 %v8463, %v8971
    %8973 = vmatmul.bf16.gmra.mxu0 %v4612
    %v8974 = vpop.f32.mrf.mxu0
    %v8975 = vadd.f32 %v8466, %v8974
    %v8976 = vpop.f32.mrf.mxu0
    %v8977 = vadd.f32 %v8468, %v8976
    %8978 = vmatmul.bf16.gmra.mxu0 %v4619
    %v8979 = vpop.f32.mrf.mxu0
    %v8980 = vadd.f32 %v8471, %v8979
    %v8981 = vpop.f32.mrf.mxu0
    %v8982 = vadd.f32 %v8473, %v8981
    %8983 = vmatmul.bf16.gmra.mxu0 %v4626
    %v8984 = vpop.f32.mrf.mxu0
    %v8985 = vadd.f32 %v8476, %v8984
    %v8986 = vpop.f32.mrf.mxu0
    %v8987 = vadd.f32 %v8478, %v8986
    %8988 = vmatmul.bf16.gmra.mxu0 %v4633
    %v8989 = vpop.f32.mrf.mxu0
    %v8990 = vadd.f32 %v8481, %v8989
    %v8991 = vpop.f32.mrf.mxu0
    %v8992 = vadd.f32 %v8483, %v8991
    %8993 = vmatmul.bf16.gmra.mxu0 %v4640
    %v8994 = vpop.f32.mrf.mxu0
    %v8995 = vadd.f32 %v8486, %v8994
    %v8996 = vpop.f32.mrf.mxu0
    %v8997 = vadd.f32 %v8488, %v8996
    %8998 = vmatmul.bf16.gmra.mxu0 %v4647
    %v8999 = vpop.f32.mrf.mxu0
    %v9000 = vadd.f32 %v8491, %v8999
    %v9001 = vpop.f32.mrf.mxu0
    %v9002 = vadd.f32 %v8493, %v9001
    %9003 = vmatmul.bf16.gmra.mxu0 %v4654
    %v9004 = vpop.f32.mrf.mxu0
    %v9005 = vadd.f32 %v8496, %v9004
    %v9006 = vpop.f32.mrf.mxu0
    %v9007 = vadd.f32 %v8498, %v9006
    %9008 = vmatmul.bf16.gmra.mxu0 %v4661
    %v9009 = vpop.f32.mrf.mxu0
    %v9010 = vadd.f32 %v8501, %v9009
    %v9011 = vpop.f32.mrf.mxu0
    %v9012 = vadd.f32 %v8503, %v9011
    %9013 = vmatmul.bf16.gmra.mxu0 %v4668
    %v9014 = vpop.f32.mrf.mxu0
    %v9015 = vadd.f32 %v8506, %v9014
    %v9016 = vpop.f32.mrf.mxu0
    %v9017 = vadd.f32 %v8508, %v9016
    %9018 = vmatmul.bf16.gmra.mxu0 %v4675
    %v9019 = vpop.f32.mrf.mxu0
    %v9020 = vadd.f32 %v8511, %v9019
    %v9021 = vpop.f32.mrf.mxu0
    %v9022 = vadd.f32 %v8513, %v9021
    %9023 = vmatmul.bf16.gmra.mxu0 %v4682
    %v9024 = vpop.f32.mrf.mxu0
    %v9025 = vadd.f32 %v8516, %v9024
    %v9026 = vpop.f32.mrf.mxu0
    %v9027 = vadd.f32 %v8518, %v9026
    %9028 = vmatmul.bf16.gmra.mxu0 %v4689
    %v9029 = vpop.f32.mrf.mxu0
    %v9030 = vadd.f32 %v8521, %v9029
    %v9031 = vpop.f32.mrf.mxu0
    %v9032 = vadd.f32 %v8523, %v9031
    %9033 = vmatmul.bf16.gmra.mxu0 %v4696
    %v9034 = vpop.f32.mrf.mxu0
    %v9035 = vadd.f32 %v8526, %v9034
    %v9036 = vpop.f32.mrf.mxu0
    %v9037 = vadd.f32 %v8528, %v9036
    %9038 = vmatmul.bf16.gmra.mxu0 %v4703
    %v9039 = vpop.f32.mrf.mxu0
    %v9040 = vadd.f32 %v8531, %v9039
    %v9041 = vpop.f32.mrf.mxu0
    %v9042 = vadd.f32 %v8533, %v9041
    %9043 = vmatmul.bf16.gmra.mxu0 %v4710
    %v9044 = vpop.f32.mrf.mxu0
    %v9045 = vadd.f32 %v8536, %v9044
    %v9046 = vpop.f32.mrf.mxu0
    %v9047 = vadd.f32 %v8538, %v9046
    %9048 = vmatmul.bf16.gmra.mxu0 %v4717
    %v9049 = vpop.f32.mrf.mxu0
    %v9050 = vadd.f32 %v8541, %v9049
    %v9051 = vpop.f32.mrf.mxu0
    %v9052 = vadd.f32 %v8543, %v9051
    %9053 = vmatmul.bf16.gmra.mxu0 %v4724
    %v9054 = vpop.f32.mrf.mxu0
    %v9055 = vadd.f32 %v8546, %v9054
    %v9056 = vpop.f32.mrf.mxu0
    %v9057 = vadd.f32 %v8548, %v9056
    %9058 = vmatmul.bf16.gmra.mxu0 %v4731
    %v9059 = vpop.f32.mrf.mxu0
    %v9060 = vadd.f32 %v8551, %v9059
    %v9061 = vpop.f32.mrf.mxu0
    %v9062 = vadd.f32 %v8553, %v9061
    %9063 = vmatmul.bf16.gmra.mxu0 %v4738
    %v9064 = vpop.f32.mrf.mxu0
    %v9065 = vadd.f32 %v8556, %v9064
    %v9066 = vpop.f32.mrf.mxu0
    %v9067 = vadd.f32 %v8558, %v9066
    %9068 = vmatmul.bf16.gmra.mxu0 %v4745
    %v9069 = vpop.f32.mrf.mxu0
    %v9070 = vadd.f32 %v8561, %v9069
    %v9071 = vpop.f32.mrf.mxu0
    %v9072 = vadd.f32 %v8563, %v9071
    %9073 = vmatmul.bf16.gmra.mxu0 %v4752
    %v9074 = vpop.f32.mrf.mxu0
    %v9075 = vadd.f32 %v8566, %v9074
    %v9076 = vpop.f32.mrf.mxu0
    %v9077 = vadd.f32 %v8568, %v9076
    %9078 = vmatmul.bf16.gmra.mxu0 %v4759
    %v9079 = vpop.f32.mrf.mxu0
    %v9080 = vadd.f32 %v8571, %v9079
    %v9081 = vpop.f32.mrf.mxu0
    %v9082 = vadd.f32 %v8573, %v9081
    %9083 = vmatmul.bf16.gmra.mxu0 %v4766
    %v9084 = vpop.f32.mrf.mxu0
    %v9085 = vadd.f32 %v8576, %v9084
    %v9086 = vpop.f32.mrf.mxu0
    %v9087 = vadd.f32 %v8578, %v9086
    %9088 = vmatmul.bf16.gmra.mxu0 %v4773
    %v9089 = vpop.f32.mrf.mxu0
    %v9090 = vadd.f32 %v8581, %v9089
    %v9091 = vpop.f32.mrf.mxu0
    %v9092 = vadd.f32 %v8583, %v9091
    %9093 = vmatmul.bf16.gmra.mxu0 %v4780
    %v9094 = vpop.f32.mrf.mxu0
    %v9095 = vadd.f32 %v8586, %v9094
    %v9096 = vpop.f32.mrf.mxu0
    %v9097 = vadd.f32 %v8588, %v9096
    %9098 = vmatmul.bf16.gmra.mxu0 %v4787
    %v9099 = vpop.f32.mrf.mxu0
    %v9100 = vadd.f32 %v8591, %v9099
    %v9101 = vpop.f32.mrf.mxu0
    %v9102 = vadd.f32 %v8593, %v9101
    %9103 = vmatmul.bf16.gmra.mxu0 %v4794
    %v9104 = vpop.f32.mrf.mxu0
    %v9105 = vadd.f32 %v8596, %v9104
    %v9106 = vpop.f32.mrf.mxu0
    %v9107 = vadd.f32 %v8598, %v9106
    %9108 = vmatmul.bf16.gmra.mxu0 %v4801
    %v9109 = vpop.f32.mrf.mxu0
    %v9110 = vadd.f32 %v8601, %v9109
    %v9111 = vpop.f32.mrf.mxu0
    %v9112 = vadd.f32 %v8603, %v9111
    %9113 = vmatmul.bf16.gmra.mxu0 %v4808
    %v9114 = vpop.f32.mrf.mxu0
    %v9115 = vadd.f32 %v8606, %v9114
    %v9116 = vpop.f32.mrf.mxu0
    %v9117 = vadd.f32 %v8608, %v9116
    %9118 = vmatmul.bf16.gmra.mxu0 %v4815
    %v9119 = vpop.f32.mrf.mxu0
    %v9120 = vadd.f32 %v8611, %v9119
    %v9121 = vpop.f32.mrf.mxu0
    %v9122 = vadd.f32 %v8613, %v9121
    %9123 = vmatmul.bf16.gmra.mxu0 %v4822
    %v9124 = vpop.f32.mrf.mxu0
    %v9125 = vadd.f32 %v8616, %v9124
    %v9126 = vpop.f32.mrf.mxu0
    %v9127 = vadd.f32 %v8618, %v9126
    %9128 = vmatmul.bf16.gmra.mxu0 %v4829
    %v9129 = vpop.f32.mrf.mxu0
    %v9130 = vadd.f32 %v8621, %v9129
    %v9131 = vpop.f32.mrf.mxu0
    %v9132 = vadd.f32 %v8623, %v9131
    %9133 = vmatmul.bf16.gmra.mxu0 %v4836
    %v9134 = vpop.f32.mrf.mxu0
    %v9135 = vadd.f32 %v8626, %v9134
    %v9136 = vpop.f32.mrf.mxu0
    %v9137 = vadd.f32 %v8628, %v9136
    %9138 = vmatmul.bf16.gmra.mxu0 %v4843
    %v9139 = vpop.f32.mrf.mxu0
    %v9140 = vadd.f32 %v8631, %v9139
    %v9141 = vpop.f32.mrf.mxu0
    %v9142 = vadd.f32 %v8633, %v9141
    %9143 = vmatmul.bf16.gmra.mxu0 %v4850
    %v9144 = vpop.f32.mrf.mxu0
    %v9145 = vadd.f32 %v8636, %v9144
    %v9146 = vpop.f32.mrf.mxu0
    %v9147 = vadd.f32 %v8638, %v9146
    %9148 = vmatmul.bf16.gmra.mxu0 %v4857
    %v9149 = vpop.f32.mrf.mxu0
    %v9150 = vadd.f32 %v8641, %v9149
    %v9151 = vpop.f32.mrf.mxu0
    %v9152 = vadd.f32 %v8643, %v9151
    %9153 = vmatmul.bf16.gmra.mxu0 %v4864
    %v9154 = vpop.f32.mrf.mxu0
    %v9155 = vadd.f32 %v8646, %v9154
    %v9156 = vpop.f32.mrf.mxu0
    %v9157 = vadd.f32 %v8648, %v9156
    %9158 = vmatmul.bf16.gmra.mxu0 %v4871
    %v9159 = vpop.f32.mrf.mxu0
    %v9160 = vadd.f32 %v8651, %v9159
    %v9161 = vpop.f32.mrf.mxu0
    %v9162 = vadd.f32 %v8653, %v9161
    %9163 = vmatmul.bf16.gmra.mxu0 %v4878
    %v9164 = vpop.f32.mrf.mxu0
    %v9165 = vadd.f32 %v8656, %v9164
    %v9166 = vpop.f32.mrf.mxu0
    %v9167 = vadd.f32 %v8658, %v9166
    %9168 = vmatmul.bf16.gmra.mxu0 %v4885
    %v9169 = vpop.f32.mrf.mxu0
    %v9170 = vadd.f32 %v8661, %v9169
    %v9171 = vpop.f32.mrf.mxu0
    %v9172 = vadd.f32 %v8663, %v9171
    %9173 = vmatmul.bf16.gmra.mxu0 %v4892
    %v9174 = vpop.f32.mrf.mxu0
    %v9175 = vadd.f32 %v8666, %v9174
    %v9176 = vpop.f32.mrf.mxu0
    %v9177 = vadd.f32 %v8668, %v9176
    %9178 = vmatmul.bf16.gmra.mxu0 %v4899
    %v9179 = vpop.f32.mrf.mxu0
    %v9180 = vadd.f32 %v8671, %v9179
    %v9181 = vpop.f32.mrf.mxu0
    %v9182 = vadd.f32 %v8673, %v9181
    %9183 = vmatmul.bf16.gmra.mxu0 %v4906
    %v9184 = vpop.f32.mrf.mxu0
    %v9185 = vadd.f32 %v8676, %v9184
    %v9186 = vpop.f32.mrf.mxu0
    %v9187 = vadd.f32 %v8678, %v9186
    %9188 = vmatmul.bf16.gmra.mxu0 %v4913
    %v9189 = vpop.f32.mrf.mxu0
    %v9190 = vadd.f32 %v8681, %v9189
    %v9191 = vpop.f32.mrf.mxu0
    %v9192 = vadd.f32 %v8683, %v9191
    %9193 = vmatmul.bf16.gmra.mxu0 %v4920
    %v9194 = vpop.f32.mrf.mxu0
    %v9195 = vadd.f32 %v8686, %v9194
    %v9196 = vpop.f32.mrf.mxu0
    %v9197 = vadd.f32 %v8688, %v9196
    %9198 = vmatmul.bf16.gmra.mxu0 %v4927
    %v9199 = vpop.f32.mrf.mxu0
    %v9200 = vadd.f32 %v8691, %v9199
    %v9201 = vpop.f32.mrf.mxu0
    %v9202 = vadd.f32 %v8693, %v9201
    %9203 = vmatmul.bf16.gmra.mxu0 %v4934
    %v9204 = vpop.f32.mrf.mxu0
    %v9205 = vadd.f32 %v8696, %v9204
    %v9206 = vpop.f32.mrf.mxu0
    %v9207 = vadd.f32 %v8698, %v9206
    %9208 = vmatmul.bf16.gmra.mxu0 %v4941
    %v9209 = vpop.f32.mrf.mxu0
    %v9210 = vadd.f32 %v8701, %v9209
    %v9211 = vpop.f32.mrf.mxu0
    %v9212 = vadd.f32 %v8703, %v9211
    %9213 = vmatmul.bf16.gmra.mxu0 %v4948
    %v9214 = vpop.f32.mrf.mxu0
    %v9215 = vadd.f32 %v8706, %v9214
    %v9216 = vpop.f32.mrf.mxu0
    %v9217 = vadd.f32 %v8708, %v9216
    %9218 = vmatmul.bf16.gmra.mxu0 %v4955
    %v9219 = vpop.f32.mrf.mxu0
    %v9220 = vadd.f32 %v8711, %v9219
    %v9221 = vpop.f32.mrf.mxu0
    %v9222 = vadd.f32 %v8713, %v9221
    %9223 = vmatmul.bf16.gmra.mxu0 %v4962
    %v9224 = vpop.f32.mrf.mxu0
    %v9225 = vadd.f32 %v8716, %v9224
    %v9226 = vpop.f32.mrf.mxu0
    %v9227 = vadd.f32 %v8718, %v9226
    %9228 = vmatmul.bf16.gmra.mxu0 %v4969
    %v9229 = vpop.f32.mrf.mxu0
    %v9230 = vadd.f32 %v8721, %v9229
    %v9231 = vpop.f32.mrf.mxu0
    %v9232 = vadd.f32 %v8723, %v9231
    %9233 = vmatmul.bf16.gmra.mxu0 %v4976
    %v9234 = vpop.f32.mrf.mxu0
    %v9235 = vadd.f32 %v8726, %v9234
    %v9236 = vpop.f32.mrf.mxu0
    %v9237 = vadd.f32 %v8728, %v9236
    %9238 = vmatmul.bf16.gmra.mxu0 %v4983
    %v9239 = vpop.f32.mrf.mxu0
    %v9240 = vadd.f32 %v8731, %v9239
    %v9241 = vpop.f32.mrf.mxu0
    %v9242 = vadd.f32 %v8733, %v9241
    %9243 = vmatmul.bf16.gmra.mxu0 %v4990
    %v9244 = vpop.f32.mrf.mxu0
    %v9245 = vadd.f32 %v8736, %v9244
    %v9246 = vpop.f32.mrf.mxu0
    %v9247 = vadd.f32 %v8738, %v9246
    %9248 = vmatmul.bf16.gmra.mxu0 %v4997
    %v9249 = vpop.f32.mrf.mxu0
    %v9250 = vadd.f32 %v8741, %v9249
    %v9251 = vpop.f32.mrf.mxu0
    %v9252 = vadd.f32 %v8743, %v9251
    %9253 = vmatmul.bf16.gmra.mxu0 %v5004
    %v9254 = vpop.f32.mrf.mxu0
    %v9255 = vadd.f32 %v8746, %v9254
    %v9256 = vpop.f32.mrf.mxu0
    %v9257 = vadd.f32 %v8748, %v9256
    %9258 = vmatmul.bf16.gmra.mxu0 %v5011
    %v9259 = vpop.f32.mrf.mxu0
    %v9260 = vadd.f32 %v8751, %v9259
    %v9261 = vpop.f32.mrf.mxu0
    %v9262 = vadd.f32 %v8753, %v9261
    %9263 = vmatmul.bf16.gmra.mxu0 %v5018
    %v9264 = vpop.f32.mrf.mxu0
    %v9265 = vadd.f32 %v8756, %v9264
    %v9266 = vpop.f32.mrf.mxu0
    %v9267 = vadd.f32 %v8758, %v9266
    %9268 = vdwg.mxu0
    %9269 = vmatpush.bf16.msra.mxu0 0
    %9270 = vmatpush.bf16.msra.mxu0 0
    %9271 = vmatpush.bf16.msra.mxu0 0
    %9272 = vmatpush.bf16.msra.mxu0 0
    %9273 = vmatpush.bf16.msra.mxu0 0
    %9274 = vmatpush.bf16.msra.mxu0 0
    %9275 = vmatpush.bf16.msra.mxu0 0
    %9276 = vmatpush.bf16.msra.mxu0 %v5864
    %9277 = vmatmul.bf16.gmra.mxu0 %v5916
    %v9278 = vpop.f32.mrf.mxu0
    %v9279 = vadd.f32 %v8770, %v9278
    %v9280 = vpop.f32.mrf.mxu0
    %v9281 = vadd.f32 %v8772, %v9280
    %9282 = vmatmul.bf16.gmra.mxu0 %v5919
    %v9283 = vpop.f32.mrf.mxu0
    %v9284 = vadd.f32 %v8775, %v9283
    %v9285 = vpop.f32.mrf.mxu0
    %v9286 = vadd.f32 %v8777, %v9285
    %9287 = vmatmul.bf16.gmra.mxu0 %v5922
    %v9288 = vpop.f32.mrf.mxu0
    %v9289 = vadd.f32 %v8780, %v9288
    %v9290 = vpop.f32.mrf.mxu0
    %v9291 = vadd.f32 %v8782, %v9290
    %9292 = vmatmul.bf16.gmra.mxu0 %v5925
    %v9293 = vpop.f32.mrf.mxu0
    %v9294 = vadd.f32 %v8785, %v9293
    %v9295 = vpop.f32.mrf.mxu0
    %v9296 = vadd.f32 %v8787, %v9295
    %9297 = vmatmul.bf16.gmra.mxu0 %v5928
    %v9298 = vpop.f32.mrf.mxu0
    %v9299 = vadd.f32 %v8790, %v9298
    %v9300 = vpop.f32.mrf.mxu0
    %v9301 = vadd.f32 %v8792, %v9300
    %9302 = vmatmul.bf16.gmra.mxu0 %v5931
    %v9303 = vpop.f32.mrf.mxu0
    %v9304 = vadd.f32 %v8795, %v9303
    %v9305 = vpop.f32.mrf.mxu0
    %v9306 = vadd.f32 %v8797, %v9305
    %9307 = vmatmul.bf16.gmra.mxu0 %v5934
    %v9308 = vpop.f32.mrf.mxu0
    %v9309 = vadd.f32 %v8800, %v9308
    %v9310 = vpop.f32.mrf.mxu0
    %v9311 = vadd.f32 %v8802, %v9310
    %9312 = vmatmul.bf16.gmra.mxu0 %v5937
    %v9313 = vpop.f32.mrf.mxu0
    %v9314 = vadd.f32 %v8805, %v9313
    %v9315 = vpop.f32.mrf.mxu0
    %v9316 = vadd.f32 %v8807, %v9315
    %9317 = vmatmul.bf16.gmra.mxu0 %v5940
    %v9318 = vpop.f32.mrf.mxu0
    %v9319 = vadd.f32 %v8810, %v9318
    %v9320 = vpop.f32.mrf.mxu0
    %v9321 = vadd.f32 %v8812, %v9320
    %9322 = vmatmul.bf16.gmra.mxu0 %v5943
    %v9323 = vpop.f32.mrf.mxu0
    %v9324 = vadd.f32 %v8815, %v9323
    %v9325 = vpop.f32.mrf.mxu0
    %v9326 = vadd.f32 %v8817, %v9325
    %9327 = vmatmul.bf16.gmra.mxu0 %v5946
    %v9328 = vpop.f32.mrf.mxu0
    %v9329 = vadd.f32 %v8820, %v9328
    %v9330 = vpop.f32.mrf.mxu0
    %v9331 = vadd.f32 %v8822, %v9330
    %9332 = vmatmul.bf16.gmra.mxu0 %v5949
    %v9333 = vpop.f32.mrf.mxu0
    %v9334 = vadd.f32 %v8825, %v9333
    %v9335 = vpop.f32.mrf.mxu0
    %v9336 = vadd.f32 %v8827, %v9335
    %9337 = vmatmul.bf16.gmra.mxu0 %v5952
    %v9338 = vpop.f32.mrf.mxu0
    %v9339 = vadd.f32 %v8830, %v9338
    %v9340 = vpop.f32.mrf.mxu0
    %v9341 = vadd.f32 %v8832, %v9340
    %9342 = vmatmul.bf16.gmra.mxu0 %v5955
    %v9343 = vpop.f32.mrf.mxu0
    %v9344 = vadd.f32 %v8835, %v9343
    %v9345 = vpop.f32.mrf.mxu0
    %v9346 = vadd.f32 %v8837, %v9345
    %9347 = vmatmul.bf16.gmra.mxu0 %v5958
    %v9348 = vpop.f32.mrf.mxu0
    %v9349 = vadd.f32 %v8840, %v9348
    %v9350 = vpop.f32.mrf.mxu0
    %v9351 = vadd.f32 %v8842, %v9350
    %9352 = vmatmul.bf16.gmra.mxu0 %v5961
    %v9353 = vpop.f32.mrf.mxu0
    %v9354 = vadd.f32 %v8845, %v9353
    %v9355 = vpop.f32.mrf.mxu0
    %v9356 = vadd.f32 %v8847, %v9355
    %9357 = vmatmul.bf16.gmra.mxu0 %v5964
    %v9358 = vpop.f32.mrf.mxu0
    %v9359 = vadd.f32 %v8850, %v9358
    %v9360 = vpop.f32.mrf.mxu0
    %v9361 = vadd.f32 %v8852, %v9360
    %9362 = vmatmul.bf16.gmra.mxu0 %v5967
    %v9363 = vpop.f32.mrf.mxu0
    %v9364 = vadd.f32 %v8855, %v9363
    %v9365 = vpop.f32.mrf.mxu0
    %v9366 = vadd.f32 %v8857, %v9365
    %9367 = vmatmul.bf16.gmra.mxu0 %v5970
    %v9368 = vpop.f32.mrf.mxu0
    %v9369 = vadd.f32 %v8860, %v9368
    %v9370 = vpop.f32.mrf.mxu0
    %v9371 = vadd.f32 %v8862, %v9370
    %9372 = vmatmul.bf16.gmra.mxu0 %v5973
    %v9373 = vpop.f32.mrf.mxu0
    %v9374 = vadd.f32 %v8865, %v9373
    %v9375 = vpop.f32.mrf.mxu0
    %v9376 = vadd.f32 %v8867, %v9375
    %9377 = vmatmul.bf16.gmra.mxu0 %v5976
    %v9378 = vpop.f32.mrf.mxu0
    %v9379 = vadd.f32 %v8870, %v9378
    %v9380 = vpop.f32.mrf.mxu0
    %v9381 = vadd.f32 %v8872, %v9380
    %9382 = vmatmul.bf16.gmra.mxu0 %v5979
    %v9383 = vpop.f32.mrf.mxu0
    %v9384 = vadd.f32 %v8875, %v9383
    %v9385 = vpop.f32.mrf.mxu0
    %v9386 = vadd.f32 %v8877, %v9385
    %9387 = vmatmul.bf16.gmra.mxu0 %v5982
    %v9388 = vpop.f32.mrf.mxu0
    %v9389 = vadd.f32 %v8880, %v9388
    %v9390 = vpop.f32.mrf.mxu0
    %v9391 = vadd.f32 %v8882, %v9390
    %9392 = vmatmul.bf16.gmra.mxu0 %v5985
    %v9393 = vpop.f32.mrf.mxu0
    %v9394 = vadd.f32 %v8885, %v9393
    %v9395 = vpop.f32.mrf.mxu0
    %v9396 = vadd.f32 %v8887, %v9395
    %9397 = vmatmul.bf16.gmra.mxu0 %v5988
    %v9398 = vpop.f32.mrf.mxu0
    %v9399 = vadd.f32 %v8890, %v9398
    %v9400 = vpop.f32.mrf.mxu0
    %v9401 = vadd.f32 %v8892, %v9400
    %9402 = vmatmul.bf16.gmra.mxu0 %v5991
    %v9403 = vpop.f32.mrf.mxu0
    %v9404 = vadd.f32 %v8895, %v9403
    %v9405 = vpop.f32.mrf.mxu0
    %v9406 = vadd.f32 %v8897, %v9405
    %9407 = vmatmul.bf16.gmra.mxu0 %v5994
    %v9408 = vpop.f32.mrf.mxu0
    %v9409 = vadd.f32 %v8900, %v9408
    %v9410 = vpop.f32.mrf.mxu0
    %v9411 = vadd.f32 %v8902, %v9410
    %9412 = vmatmul.bf16.gmra.mxu0 %v5997
    %v9413 = vpop.f32.mrf.mxu0
    %v9414 = vadd.f32 %v8905, %v9413
    %v9415 = vpop.f32.mrf.mxu0
    %v9416 = vadd.f32 %v8907, %v9415
    %9417 = vmatmul.bf16.gmra.mxu0 %v6000
    %v9418 = vpop.f32.mrf.mxu0
    %v9419 = vadd.f32 %v8910, %v9418
    %v9420 = vpop.f32.mrf.mxu0
    %v9421 = vadd.f32 %v8912, %v9420
    %9422 = vmatmul.bf16.gmra.mxu0 %v6003
    %v9423 = vpop.f32.mrf.mxu0
    %v9424 = vadd.f32 %v8915, %v9423
    %v9425 = vpop.f32.mrf.mxu0
    %v9426 = vadd.f32 %v8917, %v9425
    %9427 = vmatmul.bf16.gmra.mxu0 %v6006
    %v9428 = vpop.f32.mrf.mxu0
    %v9429 = vadd.f32 %v8920, %v9428
    %v9430 = vpop.f32.mrf.mxu0
    %v9431 = vadd.f32 %v8922, %v9430
    %9432 = vmatmul.bf16.gmra.mxu0 %v6009
    %v9433 = vpop.f32.mrf.mxu0
    %v9434 = vadd.f32 %v8925, %v9433
    %v9435 = vpop.f32.mrf.mxu0
    %v9436 = vadd.f32 %v8927, %v9435
    %9437 = vmatmul.bf16.gmra.mxu0 %v6012
    %v9438 = vpop.f32.mrf.mxu0
    %v9439 = vadd.f32 %v8930, %v9438
    %v9440 = vpop.f32.mrf.mxu0
    %v9441 = vadd.f32 %v8932, %v9440
    %9442 = vmatmul.bf16.gmra.mxu0 %v6015
    %v9443 = vpop.f32.mrf.mxu0
    %v9444 = vadd.f32 %v8935, %v9443
    %v9445 = vpop.f32.mrf.mxu0
    %v9446 = vadd.f32 %v8937, %v9445
    %9447 = vmatmul.bf16.gmra.mxu0 %v6018
    %v9448 = vpop.f32.mrf.mxu0
    %v9449 = vadd.f32 %v8940, %v9448
    %v9450 = vpop.f32.mrf.mxu0
    %v9451 = vadd.f32 %v8942, %v9450
    %9452 = vmatmul.bf16.gmra.mxu0 %v6021
    %v9453 = vpop.f32.mrf.mxu0
    %v9454 = vadd.f32 %v8945, %v9453
    %v9455 = vpop.f32.mrf.mxu0
    %v9456 = vadd.f32 %v8947, %v9455
    %9457 = vmatmul.bf16.gmra.mxu0 %v6024
    %v9458 = vpop.f32.mrf.mxu0
    %v9459 = vadd.f32 %v8950, %v9458
    %v9460 = vpop.f32.mrf.mxu0
    %v9461 = vadd.f32 %v8952, %v9460
    %9462 = vmatmul.bf16.gmra.mxu0 %v6027
    %v9463 = vpop.f32.mrf.mxu0
    %v9464 = vadd.f32 %v8955, %v9463
    %v9465 = vpop.f32.mrf.mxu0
    %v9466 = vadd.f32 %v8957, %v9465
    %9467 = vmatmul.bf16.gmra.mxu0 %v6030
    %v9468 = vpop.f32.mrf.mxu0
    %v9469 = vadd.f32 %v8960, %v9468
    %v9470 = vpop.f32.mrf.mxu0
    %v9471 = vadd.f32 %v8962, %v9470
    %9472 = vmatmul.bf16.gmra.mxu0 %v6033
    %v9473 = vpop.f32.mrf.mxu0
    %v9474 = vadd.f32 %v8965, %v9473
    %v9475 = vpop.f32.mrf.mxu0
    %v9476 = vadd.f32 %v8967, %v9475
    %9477 = vmatmul.bf16.gmra.mxu0 %v6036
    %v9478 = vpop.f32.mrf.mxu0
    %v9479 = vadd.f32 %v8970, %v9478
    %v9480 = vpop.f32.mrf.mxu0
    %v9481 = vadd.f32 %v8972, %v9480
    %9482 = vmatmul.bf16.gmra.mxu0 %v6039
    %v9483 = vpop.f32.mrf.mxu0
    %v9484 = vadd.f32 %v8975, %v9483
    %v9485 = vpop.f32.mrf.mxu0
    %v9486 = vadd.f32 %v8977, %v9485
    %9487 = vmatmul.bf16.gmra.mxu0 %v6042
    %v9488 = vpop.f32.mrf.mxu0
    %v9489 = vadd.f32 %v8980, %v9488
    %v9490 = vpop.f32.mrf.mxu0
    %v9491 = vadd.f32 %v8982, %v9490
    %9492 = vmatmul.bf16.gmra.mxu0 %v6045
    %v9493 = vpop.f32.mrf.mxu0
    %v9494 = vadd.f32 %v8985, %v9493
    %v9495 = vpop.f32.mrf.mxu0
    %v9496 = vadd.f32 %v8987, %v9495
    %9497 = vmatmul.bf16.gmra.mxu0 %v6048
    %v9498 = vpop.f32.mrf.mxu0
    %v9499 = vadd.f32 %v8990, %v9498
    %v9500 = vpop.f32.mrf.mxu0
    %v9501 = vadd.f32 %v8992, %v9500
    %9502 = vmatmul.bf16.gmra.mxu0 %v6051
    %v9503 = vpop.f32.mrf.mxu0
    %v9504 = vadd.f32 %v8995, %v9503
    %v9505 = vpop.f32.mrf.mxu0
    %v9506 = vadd.f32 %v8997, %v9505
    %9507 = vmatmul.bf16.gmra.mxu0 %v6054
    %v9508 = vpop.f32.mrf.mxu0
    %v9509 = vadd.f32 %v9000, %v9508
    %v9510 = vpop.f32.mrf.mxu0
    %v9511 = vadd.f32 %v9002, %v9510
    %9512 = vmatmul.bf16.gmra.mxu0 %v6057
    %v9513 = vpop.f32.mrf.mxu0
    %v9514 = vadd.f32 %v9005, %v9513
    %v9515 = vpop.f32.mrf.mxu0
    %v9516 = vadd.f32 %v9007, %v9515
    %9517 = vmatmul.bf16.gmra.mxu0 %v6060
    %v9518 = vpop.f32.mrf.mxu0
    %v9519 = vadd.f32 %v9010, %v9518
    %v9520 = vpop.f32.mrf.mxu0
    %v9521 = vadd.f32 %v9012, %v9520
    %9522 = vmatmul.bf16.gmra.mxu0 %v6063
    %v9523 = vpop.f32.mrf.mxu0
    %v9524 = vadd.f32 %v9015, %v9523
    %v9525 = vpop.f32.mrf.mxu0
    %v9526 = vadd.f32 %v9017, %v9525
    %9527 = vmatmul.bf16.gmra.mxu0 %v6066
    %v9528 = vpop.f32.mrf.mxu0
    %v9529 = vadd.f32 %v9020, %v9528
    %v9530 = vpop.f32.mrf.mxu0
    %v9531 = vadd.f32 %v9022, %v9530
    %9532 = vmatmul.bf16.gmra.mxu0 %v6069
    %v9533 = vpop.f32.mrf.mxu0
    %v9534 = vadd.f32 %v9025, %v9533
    %v9535 = vpop.f32.mrf.mxu0
    %v9536 = vadd.f32 %v9027, %v9535
    %9537 = vmatmul.bf16.gmra.mxu0 %v6072
    %v9538 = vpop.f32.mrf.mxu0
    %v9539 = vadd.f32 %v9030, %v9538
    %v9540 = vpop.f32.mrf.mxu0
    %v9541 = vadd.f32 %v9032, %v9540
    %9542 = vmatmul.bf16.gmra.mxu0 %v6075
    %v9543 = vpop.f32.mrf.mxu0
    %v9544 = vadd.f32 %v9035, %v9543
    %v9545 = vpop.f32.mrf.mxu0
    %v9546 = vadd.f32 %v9037, %v9545
    %9547 = vmatmul.bf16.gmra.mxu0 %v6078
    %v9548 = vpop.f32.mrf.mxu0
    %v9549 = vadd.f32 %v9040, %v9548
    %v9550 = vpop.f32.mrf.mxu0
    %v9551 = vadd.f32 %v9042, %v9550
    %9552 = vmatmul.bf16.gmra.mxu0 %v6081
    %v9553 = vpop.f32.mrf.mxu0
    %v9554 = vadd.f32 %v9045, %v9553
    %v9555 = vpop.f32.mrf.mxu0
    %v9556 = vadd.f32 %v9047, %v9555
    %9557 = vmatmul.bf16.gmra.mxu0 %v6084
    %v9558 = vpop.f32.mrf.mxu0
    %v9559 = vadd.f32 %v9050, %v9558
    %v9560 = vpop.f32.mrf.mxu0
    %v9561 = vadd.f32 %v9052, %v9560
    %9562 = vmatmul.bf16.gmra.mxu0 %v6087
    %v9563 = vpop.f32.mrf.mxu0
    %v9564 = vadd.f32 %v9055, %v9563
    %v9565 = vpop.f32.mrf.mxu0
    %v9566 = vadd.f32 %v9057, %v9565
    %9567 = vmatmul.bf16.gmra.mxu0 %v6090
    %v9568 = vpop.f32.mrf.mxu0
    %v9569 = vadd.f32 %v9060, %v9568
    %v9570 = vpop.f32.mrf.mxu0
    %v9571 = vadd.f32 %v9062, %v9570
    %9572 = vmatmul.bf16.gmra.mxu0 %v6093
    %v9573 = vpop.f32.mrf.mxu0
    %v9574 = vadd.f32 %v9065, %v9573
    %v9575 = vpop.f32.mrf.mxu0
    %v9576 = vadd.f32 %v9067, %v9575
    %9577 = vmatmul.bf16.gmra.mxu0 %v6096
    %v9578 = vpop.f32.mrf.mxu0
    %v9579 = vadd.f32 %v9070, %v9578
    %v9580 = vpop.f32.mrf.mxu0
    %v9581 = vadd.f32 %v9072, %v9580
    %9582 = vmatmul.bf16.gmra.mxu0 %v6099
    %v9583 = vpop.f32.mrf.mxu0
    %v9584 = vadd.f32 %v9075, %v9583
    %v9585 = vpop.f32.mrf.mxu0
    %v9586 = vadd.f32 %v9077, %v9585
    %9587 = vmatmul.bf16.gmra.mxu0 %v6102
    %v9588 = vpop.f32.mrf.mxu0
    %v9589 = vadd.f32 %v9080, %v9588
    %v9590 = vpop.f32.mrf.mxu0
    %v9591 = vadd.f32 %v9082, %v9590
    %9592 = vmatmul.bf16.gmra.mxu0 %v6105
    %v9593 = vpop.f32.mrf.mxu0
    %v9594 = vadd.f32 %v9085, %v9593
    %v9595 = vpop.f32.mrf.mxu0
    %v9596 = vadd.f32 %v9087, %v9595
    %9597 = vmatmul.bf16.gmra.mxu0 %v6108
    %v9598 = vpop.f32.mrf.mxu0
    %v9599 = vadd.f32 %v9090, %v9598
    %v9600 = vpop.f32.mrf.mxu0
    %v9601 = vadd.f32 %v9092, %v9600
    %9602 = vmatmul.bf16.gmra.mxu0 %v6111
    %v9603 = vpop.f32.mrf.mxu0
    %v9604 = vadd.f32 %v9095, %v9603
    %v9605 = vpop.f32.mrf.mxu0
    %v9606 = vadd.f32 %v9097, %v9605
    %9607 = vmatmul.bf16.gmra.mxu0 %v6114
    %v9608 = vpop.f32.mrf.mxu0
    %v9609 = vadd.f32 %v9100, %v9608
    %v9610 = vpop.f32.mrf.mxu0
    %v9611 = vadd.f32 %v9102, %v9610
    %9612 = vmatmul.bf16.gmra.mxu0 %v6117
    %v9613 = vpop.f32.mrf.mxu0
    %v9614 = vadd.f32 %v9105, %v9613
    %v9615 = vpop.f32.mrf.mxu0
    %v9616 = vadd.f32 %v9107, %v9615
    %9617 = vmatmul.bf16.gmra.mxu0 %v6120
    %v9618 = vpop.f32.mrf.mxu0
    %v9619 = vadd.f32 %v9110, %v9618
    %v9620 = vpop.f32.mrf.mxu0
    %v9621 = vadd.f32 %v9112, %v9620
    %9622 = vmatmul.bf16.gmra.mxu0 %v6123
    %v9623 = vpop.f32.mrf.mxu0
    %v9624 = vadd.f32 %v9115, %v9623
    %v9625 = vpop.f32.mrf.mxu0
    %v9626 = vadd.f32 %v9117, %v9625
    %9627 = vmatmul.bf16.gmra.mxu0 %v6126
    %v9628 = vpop.f32.mrf.mxu0
    %v9629 = vadd.f32 %v9120, %v9628
    %v9630 = vpop.f32.mrf.mxu0
    %v9631 = vadd.f32 %v9122, %v9630
    %9632 = vmatmul.bf16.gmra.mxu0 %v6129
    %v9633 = vpop.f32.mrf.mxu0
    %v9634 = vadd.f32 %v9125, %v9633
    %v9635 = vpop.f32.mrf.mxu0
    %v9636 = vadd.f32 %v9127, %v9635
    %9637 = vmatmul.bf16.gmra.mxu0 %v6132
    %v9638 = vpop.f32.mrf.mxu0
    %v9639 = vadd.f32 %v9130, %v9638
    %v9640 = vpop.f32.mrf.mxu0
    %v9641 = vadd.f32 %v9132, %v9640
    %9642 = vmatmul.bf16.gmra.mxu0 %v6135
    %v9643 = vpop.f32.mrf.mxu0
    %v9644 = vadd.f32 %v9135, %v9643
    %v9645 = vpop.f32.mrf.mxu0
    %v9646 = vadd.f32 %v9137, %v9645
    %9647 = vmatmul.bf16.gmra.mxu0 %v6138
    %v9648 = vpop.f32.mrf.mxu0
    %v9649 = vadd.f32 %v9140, %v9648
    %v9650 = vpop.f32.mrf.mxu0
    %v9651 = vadd.f32 %v9142, %v9650
    %9652 = vmatmul.bf16.gmra.mxu0 %v6141
    %v9653 = vpop.f32.mrf.mxu0
    %v9654 = vadd.f32 %v9145, %v9653
    %v9655 = vpop.f32.mrf.mxu0
    %v9656 = vadd.f32 %v9147, %v9655
    %9657 = vmatmul.bf16.gmra.mxu0 %v6144
    %v9658 = vpop.f32.mrf.mxu0
    %v9659 = vadd.f32 %v9150, %v9658
    %v9660 = vpop.f32.mrf.mxu0
    %v9661 = vadd.f32 %v9152, %v9660
    %9662 = vmatmul.bf16.gmra.mxu0 %v6147
    %v9663 = vpop.f32.mrf.mxu0
    %v9664 = vadd.f32 %v9155, %v9663
    %v9665 = vpop.f32.mrf.mxu0
    %v9666 = vadd.f32 %v9157, %v9665
    %9667 = vmatmul.bf16.gmra.mxu0 %v6150
    %v9668 = vpop.f32.mrf.mxu0
    %v9669 = vadd.f32 %v9160, %v9668
    %v9670 = vpop.f32.mrf.mxu0
    %v9671 = vadd.f32 %v9162, %v9670
    %9672 = vmatmul.bf16.gmra.mxu0 %v6153
    %v9673 = vpop.f32.mrf.mxu0
    %v9674 = vadd.f32 %v9165, %v9673
    %v9675 = vpop.f32.mrf.mxu0
    %v9676 = vadd.f32 %v9167, %v9675
    %9677 = vmatmul.bf16.gmra.mxu0 %v6156
    %v9678 = vpop.f32.mrf.mxu0
    %v9679 = vadd.f32 %v9170, %v9678
    %v9680 = vpop.f32.mrf.mxu0
    %v9681 = vadd.f32 %v9172, %v9680
    %9682 = vmatmul.bf16.gmra.mxu0 %v6159
    %v9683 = vpop.f32.mrf.mxu0
    %v9684 = vadd.f32 %v9175, %v9683
    %v9685 = vpop.f32.mrf.mxu0
    %v9686 = vadd.f32 %v9177, %v9685
    %9687 = vmatmul.bf16.gmra.mxu0 %v6162
    %v9688 = vpop.f32.mrf.mxu0
    %v9689 = vadd.f32 %v9180, %v9688
    %v9690 = vpop.f32.mrf.mxu0
    %v9691 = vadd.f32 %v9182, %v9690
    %9692 = vmatmul.bf16.gmra.mxu0 %v6165
    %v9693 = vpop.f32.mrf.mxu0
    %v9694 = vadd.f32 %v9185, %v9693
    %v9695 = vpop.f32.mrf.mxu0
    %v9696 = vadd.f32 %v9187, %v9695
    %9697 = vmatmul.bf16.gmra.mxu0 %v6168
    %v9698 = vpop.f32.mrf.mxu0
    %v9699 = vadd.f32 %v9190, %v9698
    %v9700 = vpop.f32.mrf.mxu0
    %v9701 = vadd.f32 %v9192, %v9700
    %9702 = vmatmul.bf16.gmra.mxu0 %v6171
    %v9703 = vpop.f32.mrf.mxu0
    %v9704 = vadd.f32 %v9195, %v9703
    %v9705 = vpop.f32.mrf.mxu0
    %v9706 = vadd.f32 %v9197, %v9705
    %9707 = vmatmul.bf16.gmra.mxu0 %v6174
    %v9708 = vpop.f32.mrf.mxu0
    %v9709 = vadd.f32 %v9200, %v9708
    %v9710 = vpop.f32.mrf.mxu0
    %v9711 = vadd.f32 %v9202, %v9710
    %9712 = vmatmul.bf16.gmra.mxu0 %v6177
    %v9713 = vpop.f32.mrf.mxu0
    %v9714 = vadd.f32 %v9205, %v9713
    %v9715 = vpop.f32.mrf.mxu0
    %v9716 = vadd.f32 %v9207, %v9715
    %9717 = vmatmul.bf16.gmra.mxu0 %v6180
    %v9718 = vpop.f32.mrf.mxu0
    %v9719 = vadd.f32 %v9210, %v9718
    %v9720 = vpop.f32.mrf.mxu0
    %v9721 = vadd.f32 %v9212, %v9720
    %9722 = vmatmul.bf16.gmra.mxu0 %v6183
    %v9723 = vpop.f32.mrf.mxu0
    %v9724 = vadd.f32 %v9215, %v9723
    %v9725 = vpop.f32.mrf.mxu0
    %v9726 = vadd.f32 %v9217, %v9725
    %9727 = vmatmul.bf16.gmra.mxu0 %v6186
    %v9728 = vpop.f32.mrf.mxu0
    %v9729 = vadd.f32 %v9220, %v9728
    %v9730 = vpop.f32.mrf.mxu0
    %v9731 = vadd.f32 %v9222, %v9730
    %9732 = vmatmul.bf16.gmra.mxu0 %v6189
    %v9733 = vpop.f32.mrf.mxu0
    %v9734 = vadd.f32 %v9225, %v9733
    %v9735 = vpop.f32.mrf.mxu0
    %v9736 = vadd.f32 %v9227, %v9735
    %9737 = vmatmul.bf16.gmra.mxu0 %v6192
    %v9738 = vpop.f32.mrf.mxu0
    %v9739 = vadd.f32 %v9230, %v9738
    %v9740 = vpop.f32.mrf.mxu0
    %v9741 = vadd.f32 %v9232, %v9740
    %9742 = vmatmul.bf16.gmra.mxu0 %v6195
    %v9743 = vpop.f32.mrf.mxu0
    %v9744 = vadd.f32 %v9235, %v9743
    %v9745 = vpop.f32.mrf.mxu0
    %v9746 = vadd.f32 %v9237, %v9745
    %9747 = vmatmul.bf16.gmra.mxu0 %v6198
    %v9748 = vpop.f32.mrf.mxu0
    %v9749 = vadd.f32 %v9240, %v9748
    %v9750 = vpop.f32.mrf.mxu0
    %v9751 = vadd.f32 %v9242, %v9750
    %9752 = vmatmul.bf16.gmra.mxu0 %v6201
    %v9753 = vpop.f32.mrf.mxu0
    %v9754 = vadd.f32 %v9245, %v9753
    %v9755 = vpop.f32.mrf.mxu0
    %v9756 = vadd.f32 %v9247, %v9755
    %9757 = vmatmul.bf16.gmra.mxu0 %v6204
    %v9758 = vpop.f32.mrf.mxu0
    %v9759 = vadd.f32 %v9250, %v9758
    %v9760 = vpop.f32.mrf.mxu0
    %v9761 = vadd.f32 %v9252, %v9760
    %9762 = vmatmul.bf16.gmra.mxu0 %v6207
    %v9763 = vpop.f32.mrf.mxu0
    %v9764 = vadd.f32 %v9255, %v9763
    %v9765 = vpop.f32.mrf.mxu0
    %v9766 = vadd.f32 %v9257, %v9765
    %9767 = vmatmul.bf16.gmra.mxu0 %v6210
    %v9768 = vpop.f32.mrf.mxu0
    %v9769 = vadd.f32 %v9260, %v9768
    %v9770 = vpop.f32.mrf.mxu0
    %v9771 = vadd.f32 %v9262, %v9770
    %9772 = vmatmul.bf16.gmra.mxu0 %v6213
    %v9773 = vpop.f32.mrf.mxu0
    %v9774 = vadd.f32 %v9265, %v9773
    %v9775 = vpop.f32.mrf.mxu0
    %v9776 = vadd.f32 %v9267, %v9775
    %9777 = vdwg.mxu0
    %v9778 = vsub.f32 0.0, %v9279
    %v9779 = vsub.f32 0.0, %v9281
    %v9780 = vsub.f32 0.0, %v9284
    %v9781 = vsub.f32 0.0, %v9286
    %v9782 = vsub.f32 0.0, %v9289
    %v9783 = vsub.f32 0.0, %v9291
    %v9784 = vsub.f32 0.0, %v9294
    %v9785 = vsub.f32 0.0, %v9296
    %v9786 = vsub.f32 0.0, %v9299
    %v9787 = vsub.f32 0.0, %v9301
    %v9788 = vsub.f32 0.0, %v9304
    %v9789 = vsub.f32 0.0, %v9306
    %v9790 = vsub.f32 0.0, %v9309
    %v9791 = vsub.f32 0.0, %v9311
    %v9792 = vsub.f32 0.0, %v9314
    %v9793 = vsub.f32 0.0, %v9316
    %v9794 = vsub.f32 0.0, %v9319
    %v9795 = vsub.f32 0.0, %v9321
    %v9796 = vsub.f32 0.0, %v9324
    %v9797 = vsub.f32 0.0, %v9326
    %v9798 = vsub.f32 0.0, %v9329
    %v9799 = vsub.f32 0.0, %v9331
    %v9800 = vsub.f32 0.0, %v9334
    %v9801 = vsub.f32 0.0, %v9336
    %v9802 = vsub.f32 0.0, %v9339
    %v9803 = vsub.f32 0.0, %v9341
    %v9804 = vsub.f32 0.0, %v9344
    %v9805 = vsub.f32 0.0, %v9346
    %v9806 = vsub.f32 0.0, %v9349
    %v9807 = vsub.f32 0.0, %v9351
    %v9808 = vsub.f32 0.0, %v9354
    %v9809 = vsub.f32 0.0, %v9356
    %v9810 = vsub.f32 0.0, %v9359
    %v9811 = vsub.f32 0.0, %v9361
    %v9812 = vsub.f32 0.0, %v9364
    %v9813 = vsub.f32 0.0, %v9366
    %v9814 = vsub.f32 0.0, %v9369
    %v9815 = vsub.f32 0.0, %v9371
    %v9816 = vsub.f32 0.0, %v9374
    %v9817 = vsub.f32 0.0, %v9376
    %v9818 = vsub.f32 0.0, %v9379
    %v9819 = vsub.f32 0.0, %v9381
    %v9820 = vsub.f32 0.0, %v9384
    %v9821 = vsub.f32 0.0, %v9386
    %v9822 = vsub.f32 0.0, %v9389
    %v9823 = vsub.f32 0.0, %v9391
    %v9824 = vsub.f32 0.0, %v9394
    %v9825 = vsub.f32 0.0, %v9396
    %v9826 = vsub.f32 0.0, %v9399
    %v9827 = vsub.f32 0.0, %v9401
    %v9828 = vsub.f32 0.0, %v9404
    %v9829 = vsub.f32 0.0, %v9406
    %v9830 = vsub.f32 0.0, %v9409
    %v9831 = vsub.f32 0.0, %v9411
    %v9832 = vsub.f32 0.0, %v9414
    %v9833 = vsub.f32 0.0, %v9416
    %v9834 = vsub.f32 0.0, %v9419
    %v9835 = vsub.f32 0.0, %v9421
    %v9836 = vsub.f32 0.0, %v9424
    %v9837 = vsub.f32 0.0, %v9426
    %v9838 = vsub.f32 0.0, %v9429
    %v9839 = vsub.f32 0.0, %v9431
    %v9840 = vsub.f32 0.0, %v9434
    %v9841 = vsub.f32 0.0, %v9436
    %v9842 = vsub.f32 0.0, %v9439
    %v9843 = vsub.f32 0.0, %v9441
    %v9844 = vsub.f32 0.0, %v9444
    %v9845 = vsub.f32 0.0, %v9446
    %v9846 = vsub.f32 0.0, %v9449
    %v9847 = vsub.f32 0.0, %v9451
    %v9848 = vsub.f32 0.0, %v9454
    %v9849 = vsub.f32 0.0, %v9456
    %v9850 = vsub.f32 0.0, %v9459
    %v9851 = vsub.f32 0.0, %v9461
    %v9852 = vsub.f32 0.0, %v9464
    %v9853 = vsub.f32 0.0, %v9466
    %v9854 = vsub.f32 0.0, %v9469
    %v9855 = vsub.f32 0.0, %v9471
    %v9856 = vsub.f32 0.0, %v9474
    %v9857 = vsub.f32 0.0, %v9476
    %v9858 = vsub.f32 0.0, %v9479
    %v9859 = vsub.f32 0.0, %v9481
    %v9860 = vsub.f32 0.0, %v9484
    %v9861 = vsub.f32 0.0, %v9486
    %v9862 = vsub.f32 0.0, %v9489
    %v9863 = vsub.f32 0.0, %v9491
    %v9864 = vsub.f32 0.0, %v9494
    %v9865 = vsub.f32 0.0, %v9496
    %v9866 = vsub.f32 0.0, %v9499
    %v9867 = vsub.f32 0.0, %v9501
    %v9868 = vsub.f32 0.0, %v9504
    %v9869 = vsub.f32 0.0, %v9506
    %v9870 = vsub.f32 0.0, %v9509
    %v9871 = vsub.f32 0.0, %v9511
    %v9872 = vsub.f32 0.0, %v9514
    %v9873 = vsub.f32 0.0, %v9516
    %v9874 = vsub.f32 0.0, %v9519
    %v9875 = vsub.f32 0.0, %v9521
    %v9876 = vsub.f32 0.0, %v9524
    %v9877 = vsub.f32 0.0, %v9526
    %v9878 = vsub.f32 0.0, %v9529
    %v9879 = vsub.f32 0.0, %v9531
    %v9880 = vsub.f32 0.0, %v9534
    %v9881 = vsub.f32 0.0, %v9536
    %v9882 = vsub.f32 0.0, %v9539
    %v9883 = vsub.f32 0.0, %v9541
    %v9884 = vsub.f32 0.0, %v9544
    %v9885 = vsub.f32 0.0, %v9546
    %v9886 = vsub.f32 0.0, %v9549
    %v9887 = vsub.f32 0.0, %v9551
    %v9888 = vsub.f32 0.0, %v9554
    %v9889 = vsub.f32 0.0, %v9556
    %v9890 = vsub.f32 0.0, %v9559
    %v9891 = vsub.f32 0.0, %v9561
    %v9892 = vsub.f32 0.0, %v9564
    %v9893 = vsub.f32 0.0, %v9566
    %v9894 = vsub.f32 0.0, %v9569
    %v9895 = vsub.f32 0.0, %v9571
    %v9896 = vsub.f32 0.0, %v9574
    %v9897 = vsub.f32 0.0, %v9576
    %v9898 = vsub.f32 0.0, %v9579
    %v9899 = vsub.f32 0.0, %v9581
    %v9900 = vsub.f32 0.0, %v9584
    %v9901 = vsub.f32 0.0, %v9586
    %v9902 = vsub.f32 0.0, %v9589
    %v9903 = vsub.f32 0.0, %v9591
    %v9904 = vsub.f32 0.0, %v9594
    %v9905 = vsub.f32 0.0, %v9596
    %v9906 = vsub.f32 0.0, %v9599
    %v9907 = vsub.f32 0.0, %v9601
    %v9908 = vsub.f32 0.0, %v9604
    %v9909 = vsub.f32 0.0, %v9606
    %v9910 = vsub.f32 0.0, %v9609
    %v9911 = vsub.f32 0.0, %v9611
    %v9912 = vsub.f32 0.0, %v9614
    %v9913 = vsub.f32 0.0, %v9616
    %v9914 = vsub.f32 0.0, %v9619
    %v9915 = vsub.f32 0.0, %v9621
    %v9916 = vsub.f32 0.0, %v9624
    %v9917 = vsub.f32 0.0, %v9626
    %v9918 = vsub.f32 0.0, %v9629
    %v9919 = vsub.f32 0.0, %v9631
    %v9920 = vsub.f32 0.0, %v9634
    %v9921 = vsub.f32 0.0, %v9636
    %v9922 = vsub.f32 0.0, %v9639
    %v9923 = vsub.f32 0.0, %v9641
    %v9924 = vsub.f32 0.0, %v9644
    %v9925 = vsub.f32 0.0, %v9646
    %v9926 = vsub.f32 0.0, %v9649
    %v9927 = vsub.f32 0.0, %v9651
    %v9928 = vsub.f32 0.0, %v9654
    %v9929 = vsub.f32 0.0, %v9656
    %v9930 = vsub.f32 0.0, %v9659
    %v9931 = vsub.f32 0.0, %v9661
    %v9932 = vsub.f32 0.0, %v9664
    %v9933 = vsub.f32 0.0, %v9666
    %v9934 = vsub.f32 0.0, %v9669
    %v9935 = vsub.f32 0.0, %v9671
    %v9936 = vsub.f32 0.0, %v9674
    %v9937 = vsub.f32 0.0, %v9676
    %v9938 = vsub.f32 0.0, %v9679
    %v9939 = vsub.f32 0.0, %v9681
    %v9940 = vsub.f32 0.0, %v9684
    %v9941 = vsub.f32 0.0, %v9686
    %v9942 = vsub.f32 0.0, %v9689
    %v9943 = vsub.f32 0.0, %v9691
    %v9944 = vsub.f32 0.0, %v9694
    %v9945 = vsub.f32 0.0, %v9696
    %v9946 = vsub.f32 0.0, %v9699
    %v9947 = vsub.f32 0.0, %v9701
    %v9948 = vsub.f32 0.0, %v9704
    %v9949 = vsub.f32 0.0, %v9706
    %v9950 = vsub.f32 0.0, %v9709
    %v9951 = vsub.f32 0.0, %v9711
    %v9952 = vsub.f32 0.0, %v9714
    %v9953 = vsub.f32 0.0, %v9716
    %v9954 = vsub.f32 0.0, %v9719
    %v9955 = vsub.f32 0.0, %v9721
    %v9956 = vsub.f32 0.0, %v9724
    %v9957 = vsub.f32 0.0, %v9726
    %v9958 = vsub.f32 0.0, %v9729
    %v9959 = vsub.f32 0.0, %v9731
    %v9960 = vsub.f32 0.0, %v9734
    %v9961 = vsub.f32 0.0, %v9736
    %v9962 = vsub.f32 0.0, %v9739
    %v9963 = vsub.f32 0.0, %v9741
    %v9964 = vsub.f32 0.0, %v9744
    %v9965 = vsub.f32 0.0, %v9746
    %v9966 = vsub.f32 0.0, %v9749
    %v9967 = vsub.f32 0.0, %v9751
    %v9968 = vsub.f32 0.0, %v9754
    %v9969 = vsub.f32 0.0, %v9756
    %v9970 = vsub.f32 0.0, %v9759
    %v9971 = vsub.f32 0.0, %v9761
    %v9972 = vsub.f32 0.0, %v9764
    %v9973 = vsub.f32 0.0, %v9766
    %v9974 = vsub.f32 0.0, %v9769
    %v9975 = vsub.f32 0.0, %v9771
    %v9976 = vsub.f32 0.0, %v9774
    %v9977 = vsub.f32 0.0, %v9776
    %v9978 = vmul.f32 %v9778, 1.442695
    %v9979 = vpow.pop %v9978
    %v9980 = vmul.f32 %v9779, 1.442695
    %v9981 = vpow.pop %v9980
    %v9982 = vmul.f32 %v9780, 1.442695
    %v9983 = vpow.pop %v9982
    %v9984 = vmul.f32 %v9781, 1.442695
    %v9985 = vpow.pop %v9984
    %v9986 = vmul.f32 %v9782, 1.442695
    %v9987 = vpow.pop %v9986
    %v9988 = vmul.f32 %v9783, 1.442695
    %v9989 = vpow.pop %v9988
    %v9990 = vmul.f32 %v9784, 1.442695
    %v9991 = vpow.pop %v9990
    %v9992 = vmul.f32 %v9785, 1.442695
    %v9993 = vpow.pop %v9992
    %v9994 = vmul.f32 %v9786, 1.442695
    %v9995 = vpow.pop %v9994
    %v9996 = vmul.f32 %v9787, 1.442695
    %v9997 = vpow.pop %v9996
    %v9998 = vmul.f32 %v9788, 1.442695
    %v9999 = vpow.pop %v9998
    %v10000 = vmul.f32 %v9789, 1.442695
    %v10001 = vpow.pop %v10000
    %v10002 = vmul.f32 %v9790, 1.442695
    %v10003 = vpow.pop %v10002
    %v10004 = vmul.f32 %v9791, 1.442695
    %v10005 = vpow.pop %v10004
    %v10006 = vmul.f32 %v9792, 1.442695
    %v10007 = vpow.pop %v10006
    %v10008 = vmul.f32 %v9793, 1.442695
    %v10009 = vpow.pop %v10008
    %v10010 = vmul.f32 %v9794, 1.442695
    %v10011 = vpow.pop %v10010
    %v10012 = vmul.f32 %v9795, 1.442695
    %v10013 = vpow.pop %v10012
    %v10014 = vmul.f32 %v9796, 1.442695
    %v10015 = vpow.pop %v10014
    %v10016 = vmul.f32 %v9797, 1.442695
    %v10017 = vpow.pop %v10016
    %v10018 = vmul.f32 %v9798, 1.442695
    %v10019 = vpow.pop %v10018
    %v10020 = vmul.f32 %v9799, 1.442695
    %v10021 = vpow.pop %v10020
    %v10022 = vmul.f32 %v9800, 1.442695
    %v10023 = vpow.pop %v10022
    %v10024 = vmul.f32 %v9801, 1.442695
    %v10025 = vpow.pop %v10024
    %v10026 = vmul.f32 %v9802, 1.442695
    %v10027 = vpow.pop %v10026
    %v10028 = vmul.f32 %v9803, 1.442695
    %v10029 = vpow.pop %v10028
    %v10030 = vmul.f32 %v9804, 1.442695
    %v10031 = vpow.pop %v10030
    %v10032 = vmul.f32 %v9805, 1.442695
    %v10033 = vpow.pop %v10032
    %v10034 = vmul.f32 %v9806, 1.442695
    %v10035 = vpow.pop %v10034
    %v10036 = vmul.f32 %v9807, 1.442695
    %v10037 = vpow.pop %v10036
    %v10038 = vmul.f32 %v9808, 1.442695
    %v10039 = vpow.pop %v10038
    %v10040 = vmul.f32 %v9809, 1.442695
    %v10041 = vpow.pop %v10040
    %v10042 = vmul.f32 %v9810, 1.442695
    %v10043 = vpow.pop %v10042
    %v10044 = vmul.f32 %v9811, 1.442695
    %v10045 = vpow.pop %v10044
    %v10046 = vmul.f32 %v9812, 1.442695
    %v10047 = vpow.pop %v10046
    %v10048 = vmul.f32 %v9813, 1.442695
    %v10049 = vpow.pop %v10048
    %v10050 = vmul.f32 %v9814, 1.442695
    %v10051 = vpow.pop %v10050
    %v10052 = vmul.f32 %v9815, 1.442695
    %v10053 = vpow.pop %v10052
    %v10054 = vmul.f32 %v9816, 1.442695
    %v10055 = vpow.pop %v10054
    %v10056 = vmul.f32 %v9817, 1.442695
    %v10057 = vpow.pop %v10056
    %v10058 = vmul.f32 %v9818, 1.442695
    %v10059 = vpow.pop %v10058
    %v10060 = vmul.f32 %v9819, 1.442695
    %v10061 = vpow.pop %v10060
    %v10062 = vmul.f32 %v9820, 1.442695
    %v10063 = vpow.pop %v10062
    %v10064 = vmul.f32 %v9821, 1.442695
    %v10065 = vpow.pop %v10064
    %v10066 = vmul.f32 %v9822, 1.442695
    %v10067 = vpow.pop %v10066
    %v10068 = vmul.f32 %v9823, 1.442695
    %v10069 = vpow.pop %v10068
    %v10070 = vmul.f32 %v9824, 1.442695
    %v10071 = vpow.pop %v10070
    %v10072 = vmul.f32 %v9825, 1.442695
    %v10073 = vpow.pop %v10072
    %v10074 = vmul.f32 %v9826, 1.442695
    %v10075 = vpow.pop %v10074
    %v10076 = vmul.f32 %v9827, 1.442695
    %v10077 = vpow.pop %v10076
    %v10078 = vmul.f32 %v9828, 1.442695
    %v10079 = vpow.pop %v10078
    %v10080 = vmul.f32 %v9829, 1.442695
    %v10081 = vpow.pop %v10080
    %v10082 = vmul.f32 %v9830, 1.442695
    %v10083 = vpow.pop %v10082
    %v10084 = vmul.f32 %v9831, 1.442695
    %v10085 = vpow.pop %v10084
    %v10086 = vmul.f32 %v9832, 1.442695
    %v10087 = vpow.pop %v10086
    %v10088 = vmul.f32 %v9833, 1.442695
    %v10089 = vpow.pop %v10088
    %v10090 = vmul.f32 %v9834, 1.442695
    %v10091 = vpow.pop %v10090
    %v10092 = vmul.f32 %v9835, 1.442695
    %v10093 = vpow.pop %v10092
    %v10094 = vmul.f32 %v9836, 1.442695
    %v10095 = vpow.pop %v10094
    %v10096 = vmul.f32 %v9837, 1.442695
    %v10097 = vpow.pop %v10096
    %v10098 = vmul.f32 %v9838, 1.442695
    %v10099 = vpow.pop %v10098
    %v10100 = vmul.f32 %v9839, 1.442695
    %v10101 = vpow.pop %v10100
    %v10102 = vmul.f32 %v9840, 1.442695
    %v10103 = vpow.pop %v10102
    %v10104 = vmul.f32 %v9841, 1.442695
    %v10105 = vpow.pop %v10104
    %v10106 = vmul.f32 %v9842, 1.442695
    %v10107 = vpow.pop %v10106
    %v10108 = vmul.f32 %v9843, 1.442695
    %v10109 = vpow.pop %v10108
    %v10110 = vmul.f32 %v9844, 1.442695
    %v10111 = vpow.pop %v10110
    %v10112 = vmul.f32 %v9845, 1.442695
    %v10113 = vpow.pop %v10112
    %v10114 = vmul.f32 %v9846, 1.442695
    %v10115 = vpow.pop %v10114
    %v10116 = vmul.f32 %v9847, 1.442695
    %v10117 = vpow.pop %v10116
    %v10118 = vmul.f32 %v9848, 1.442695
    %v10119 = vpow.pop %v10118
    %v10120 = vmul.f32 %v9849, 1.442695
    %v10121 = vpow.pop %v10120
    %v10122 = vmul.f32 %v9850, 1.442695
    %v10123 = vpow.pop %v10122
    %v10124 = vmul.f32 %v9851, 1.442695
    %v10125 = vpow.pop %v10124
    %v10126 = vmul.f32 %v9852, 1.442695
    %v10127 = vpow.pop %v10126
    %v10128 = vmul.f32 %v9853, 1.442695
    %v10129 = vpow.pop %v10128
    %v10130 = vmul.f32 %v9854, 1.442695
    %v10131 = vpow.pop %v10130
    %v10132 = vmul.f32 %v9855, 1.442695
    %v10133 = vpow.pop %v10132
    %v10134 = vmul.f32 %v9856, 1.442695
    %v10135 = vpow.pop %v10134
    %v10136 = vmul.f32 %v9857, 1.442695
    %v10137 = vpow.pop %v10136
    %v10138 = vmul.f32 %v9858, 1.442695
    %v10139 = vpow.pop %v10138
    %v10140 = vmul.f32 %v9859, 1.442695
    %v10141 = vpow.pop %v10140
    %v10142 = vmul.f32 %v9860, 1.442695
    %v10143 = vpow.pop %v10142
    %v10144 = vmul.f32 %v9861, 1.442695
    %v10145 = vpow.pop %v10144
    %v10146 = vmul.f32 %v9862, 1.442695
    %v10147 = vpow.pop %v10146
    %v10148 = vmul.f32 %v9863, 1.442695
    %v10149 = vpow.pop %v10148
    %v10150 = vmul.f32 %v9864, 1.442695
    %v10151 = vpow.pop %v10150
    %v10152 = vmul.f32 %v9865, 1.442695
    %v10153 = vpow.pop %v10152
    %v10154 = vmul.f32 %v9866, 1.442695
    %v10155 = vpow.pop %v10154
    %v10156 = vmul.f32 %v9867, 1.442695
    %v10157 = vpow.pop %v10156
    %v10158 = vmul.f32 %v9868, 1.442695
    %v10159 = vpow.pop %v10158
    %v10160 = vmul.f32 %v9869, 1.442695
    %v10161 = vpow.pop %v10160
    %v10162 = vmul.f32 %v9870, 1.442695
    %v10163 = vpow.pop %v10162
    %v10164 = vmul.f32 %v9871, 1.442695
    %v10165 = vpow.pop %v10164
    %v10166 = vmul.f32 %v9872, 1.442695
    %v10167 = vpow.pop %v10166
    %v10168 = vmul.f32 %v9873, 1.442695
    %v10169 = vpow.pop %v10168
    %v10170 = vmul.f32 %v9874, 1.442695
    %v10171 = vpow.pop %v10170
    %v10172 = vmul.f32 %v9875, 1.442695
    %v10173 = vpow.pop %v10172
    %v10174 = vmul.f32 %v9876, 1.442695
    %v10175 = vpow.pop %v10174
    %v10176 = vmul.f32 %v9877, 1.442695
    %v10177 = vpow.pop %v10176
    %v10178 = vmul.f32 %v9878, 1.442695
    %v10179 = vpow.pop %v10178
    %v10180 = vmul.f32 %v9879, 1.442695
    %v10181 = vpow.pop %v10180
    %v10182 = vmul.f32 %v9880, 1.442695
    %v10183 = vpow.pop %v10182
    %v10184 = vmul.f32 %v9881, 1.442695
    %v10185 = vpow.pop %v10184
    %v10186 = vmul.f32 %v9882, 1.442695
    %v10187 = vpow.pop %v10186
    %v10188 = vmul.f32 %v9883, 1.442695
    %v10189 = vpow.pop %v10188
    %v10190 = vmul.f32 %v9884, 1.442695
    %v10191 = vpow.pop %v10190
    %v10192 = vmul.f32 %v9885, 1.442695
    %v10193 = vpow.pop %v10192
    %v10194 = vmul.f32 %v9886, 1.442695
    %v10195 = vpow.pop %v10194
    %v10196 = vmul.f32 %v9887, 1.442695
    %v10197 = vpow.pop %v10196
    %v10198 = vmul.f32 %v9888, 1.442695
    %v10199 = vpow.pop %v10198
    %v10200 = vmul.f32 %v9889, 1.442695
    %v10201 = vpow.pop %v10200
    %v10202 = vmul.f32 %v9890, 1.442695
    %v10203 = vpow.pop %v10202
    %v10204 = vmul.f32 %v9891, 1.442695
    %v10205 = vpow.pop %v10204
    %v10206 = vmul.f32 %v9892, 1.442695
    %v10207 = vpow.pop %v10206
    %v10208 = vmul.f32 %v9893, 1.442695
    %v10209 = vpow.pop %v10208
    %v10210 = vmul.f32 %v9894, 1.442695
    %v10211 = vpow.pop %v10210
    %v10212 = vmul.f32 %v9895, 1.442695
    %v10213 = vpow.pop %v10212
    %v10214 = vmul.f32 %v9896, 1.442695
    %v10215 = vpow.pop %v10214
    %v10216 = vmul.f32 %v9897, 1.442695
    %v10217 = vpow.pop %v10216
    %v10218 = vmul.f32 %v9898, 1.442695
    %v10219 = vpow.pop %v10218
    %v10220 = vmul.f32 %v9899, 1.442695
    %v10221 = vpow.pop %v10220
    %v10222 = vmul.f32 %v9900, 1.442695
    %v10223 = vpow.pop %v10222
    %v10224 = vmul.f32 %v9901, 1.442695
    %v10225 = vpow.pop %v10224
    %v10226 = vmul.f32 %v9902, 1.442695
    %v10227 = vpow.pop %v10226
    %v10228 = vmul.f32 %v9903, 1.442695
    %v10229 = vpow.pop %v10228
    %v10230 = vmul.f32 %v9904, 1.442695
    %v10231 = vpow.pop %v10230
    %v10232 = vmul.f32 %v9905, 1.442695
    %v10233 = vpow.pop %v10232
    %v10234 = vmul.f32 %v9906, 1.442695
    %v10235 = vpow.pop %v10234
    %v10236 = vmul.f32 %v9907, 1.442695
    %v10237 = vpow.pop %v10236
    %v10238 = vmul.f32 %v9908, 1.442695
    %v10239 = vpow.pop %v10238
    %v10240 = vmul.f32 %v9909, 1.442695
    %v10241 = vpow.pop %v10240
    %v10242 = vmul.f32 %v9910, 1.442695
    %v10243 = vpow.pop %v10242
    %v10244 = vmul.f32 %v9911, 1.442695
    %v10245 = vpow.pop %v10244
    %v10246 = vmul.f32 %v9912, 1.442695
    %v10247 = vpow.pop %v10246
    %v10248 = vmul.f32 %v9913, 1.442695
    %v10249 = vpow.pop %v10248
    %v10250 = vmul.f32 %v9914, 1.442695
    %v10251 = vpow.pop %v10250
    %v10252 = vmul.f32 %v9915, 1.442695
    %v10253 = vpow.pop %v10252
    %v10254 = vmul.f32 %v9916, 1.442695
    %v10255 = vpow.pop %v10254
    %v10256 = vmul.f32 %v9917, 1.442695
    %v10257 = vpow.pop %v10256
    %v10258 = vmul.f32 %v9918, 1.442695
    %v10259 = vpow.pop %v10258
    %v10260 = vmul.f32 %v9919, 1.442695
    %v10261 = vpow.pop %v10260
    %v10262 = vmul.f32 %v9920, 1.442695
    %v10263 = vpow.pop %v10262
    %v10264 = vmul.f32 %v9921, 1.442695
    %v10265 = vpow.pop %v10264
    %v10266 = vmul.f32 %v9922, 1.442695
    %v10267 = vpow.pop %v10266
    %v10268 = vmul.f32 %v9923, 1.442695
    %v10269 = vpow.pop %v10268
    %v10270 = vmul.f32 %v9924, 1.442695
    %v10271 = vpow.pop %v10270
    %v10272 = vmul.f32 %v9925, 1.442695
    %v10273 = vpow.pop %v10272
    %v10274 = vmul.f32 %v9926, 1.442695
    %v10275 = vpow.pop %v10274
    %v10276 = vmul.f32 %v9927, 1.442695
    %v10277 = vpow.pop %v10276
    %v10278 = vmul.f32 %v9928, 1.442695
    %v10279 = vpow.pop %v10278
    %v10280 = vmul.f32 %v9929, 1.442695
    %v10281 = vpow.pop %v10280
    %v10282 = vmul.f32 %v9930, 1.442695
    %v10283 = vpow.pop %v10282
    %v10284 = vmul.f32 %v9931, 1.442695
    %v10285 = vpow.pop %v10284
    %v10286 = vmul.f32 %v9932, 1.442695
    %v10287 = vpow.pop %v10286
    %v10288 = vmul.f32 %v9933, 1.442695
    %v10289 = vpow.pop %v10288
    %v10290 = vmul.f32 %v9934, 1.442695
    %v10291 = vpow.pop %v10290
    %v10292 = vmul.f32 %v9935, 1.442695
    %v10293 = vpow.pop %v10292
    %v10294 = vmul.f32 %v9936, 1.442695
    %v10295 = vpow.pop %v10294
    %v10296 = vmul.f32 %v9937, 1.442695
    %v10297 = vpow.pop %v10296
    %v10298 = vmul.f32 %v9938, 1.442695
    %v10299 = vpow.pop %v10298
    %v10300 = vmul.f32 %v9939, 1.442695
    %v10301 = vpow.pop %v10300
    %v10302 = vmul.f32 %v9940, 1.442695
    %v10303 = vpow.pop %v10302
    %v10304 = vmul.f32 %v9941, 1.442695
    %v10305 = vpow.pop %v10304
    %v10306 = vmul.f32 %v9942, 1.442695
    %v10307 = vpow.pop %v10306
    %v10308 = vmul.f32 %v9943, 1.442695
    %v10309 = vpow.pop %v10308
    %v10310 = vmul.f32 %v9944, 1.442695
    %v10311 = vpow.pop %v10310
    %v10312 = vmul.f32 %v9945, 1.442695
    %v10313 = vpow.pop %v10312
    %v10314 = vmul.f32 %v9946, 1.442695
    %v10315 = vpow.pop %v10314
    %v10316 = vmul.f32 %v9947, 1.442695
    %v10317 = vpow.pop %v10316
    %v10318 = vmul.f32 %v9948, 1.442695
    %v10319 = vpow.pop %v10318
    %v10320 = vmul.f32 %v9949, 1.442695
    %v10321 = vpow.pop %v10320
    %v10322 = vmul.f32 %v9950, 1.442695
    %v10323 = vpow.pop %v10322
    %v10324 = vmul.f32 %v9951, 1.442695
    %v10325 = vpow.pop %v10324
    %v10326 = vmul.f32 %v9952, 1.442695
    %v10327 = vpow.pop %v10326
    %v10328 = vmul.f32 %v9953, 1.442695
    %v10329 = vpow.pop %v10328
    %v10330 = vmul.f32 %v9954, 1.442695
    %v10331 = vpow.pop %v10330
    %v10332 = vmul.f32 %v9955, 1.442695
    %v10333 = vpow.pop %v10332
    %v10334 = vmul.f32 %v9956, 1.442695
    %v10335 = vpow.pop %v10334
    %v10336 = vmul.f32 %v9957, 1.442695
    %v10337 = vpow.pop %v10336
    %v10338 = vmul.f32 %v9958, 1.442695
    %v10339 = vpow.pop %v10338
    %v10340 = vmul.f32 %v9959, 1.442695
    %v10341 = vpow.pop %v10340
    %v10342 = vmul.f32 %v9960, 1.442695
    %v10343 = vpow.pop %v10342
    %v10344 = vmul.f32 %v9961, 1.442695
    %v10345 = vpow.pop %v10344
    %v10346 = vmul.f32 %v9962, 1.442695
    %v10347 = vpow.pop %v10346
    %v10348 = vmul.f32 %v9963, 1.442695
    %v10349 = vpow.pop %v10348
    %v10350 = vmul.f32 %v9964, 1.442695
    %v10351 = vpow.pop %v10350
    %v10352 = vmul.f32 %v9965, 1.442695
    %v10353 = vpow.pop %v10352
    %v10354 = vmul.f32 %v9966, 1.442695
    %v10355 = vpow.pop %v10354
    %v10356 = vmul.f32 %v9967, 1.442695
    %v10357 = vpow.pop %v10356
    %v10358 = vmul.f32 %v9968, 1.442695
    %v10359 = vpow.pop %v10358
    %v10360 = vmul.f32 %v9969, 1.442695
    %v10361 = vpow.pop %v10360
    %v10362 = vmul.f32 %v9970, 1.442695
    %v10363 = vpow.pop %v10362
    %v10364 = vmul.f32 %v9971, 1.442695
    %v10365 = vpow.pop %v10364
    %v10366 = vmul.f32 %v9972, 1.442695
    %v10367 = vpow.pop %v10366
    %v10368 = vmul.f32 %v9973, 1.442695
    %v10369 = vpow.pop %v10368
    %v10370 = vmul.f32 %v9974, 1.442695
    %v10371 = vpow.pop %v10370
    %v10372 = vmul.f32 %v9975, 1.442695
    %v10373 = vpow.pop %v10372
    %v10374 = vmul.f32 %v9976, 1.442695
    %v10375 = vpow.pop %v10374
    %v10376 = vmul.f32 %v9977, 1.442695
    %v10377 = vpow.pop %v10376
    %v10378 = vadd.f32 %v9979, 1.0
    %v10379 = vadd.f32 %v9981, 1.0
    %v10380 = vadd.f32 %v9983, 1.0
    %v10381 = vadd.f32 %v9985, 1.0
    %v10382 = vadd.f32 %v9987, 1.0
    %v10383 = vadd.f32 %v9989, 1.0
    %v10384 = vadd.f32 %v9991, 1.0
    %v10385 = vadd.f32 %v9993, 1.0
    %v10386 = vadd.f32 %v9995, 1.0
    %v10387 = vadd.f32 %v9997, 1.0
    %v10388 = vadd.f32 %v9999, 1.0
    %v10389 = vadd.f32 %v10001, 1.0
    %v10390 = vadd.f32 %v10003, 1.0
    %v10391 = vadd.f32 %v10005, 1.0
    %v10392 = vadd.f32 %v10007, 1.0
    %v10393 = vadd.f32 %v10009, 1.0
    %v10394 = vadd.f32 %v10011, 1.0
    %v10395 = vadd.f32 %v10013, 1.0
    %v10396 = vadd.f32 %v10015, 1.0
    %v10397 = vadd.f32 %v10017, 1.0
    %v10398 = vadd.f32 %v10019, 1.0
    %v10399 = vadd.f32 %v10021, 1.0
    %v10400 = vadd.f32 %v10023, 1.0
    %v10401 = vadd.f32 %v10025, 1.0
    %v10402 = vadd.f32 %v10027, 1.0
    %v10403 = vadd.f32 %v10029, 1.0
    %v10404 = vadd.f32 %v10031, 1.0
    %v10405 = vadd.f32 %v10033, 1.0
    %v10406 = vadd.f32 %v10035, 1.0
    %v10407 = vadd.f32 %v10037, 1.0
    %v10408 = vadd.f32 %v10039, 1.0
    %v10409 = vadd.f32 %v10041, 1.0
    %v10410 = vadd.f32 %v10043, 1.0
    %v10411 = vadd.f32 %v10045, 1.0
    %v10412 = vadd.f32 %v10047, 1.0
    %v10413 = vadd.f32 %v10049, 1.0
    %v10414 = vadd.f32 %v10051, 1.0
    %v10415 = vadd.f32 %v10053, 1.0
    %v10416 = vadd.f32 %v10055, 1.0
    %v10417 = vadd.f32 %v10057, 1.0
    %v10418 = vadd.f32 %v10059, 1.0
    %v10419 = vadd.f32 %v10061, 1.0
    %v10420 = vadd.f32 %v10063, 1.0
    %v10421 = vadd.f32 %v10065, 1.0
    %v10422 = vadd.f32 %v10067, 1.0
    %v10423 = vadd.f32 %v10069, 1.0
    %v10424 = vadd.f32 %v10071, 1.0
    %v10425 = vadd.f32 %v10073, 1.0
    %v10426 = vadd.f32 %v10075, 1.0
    %v10427 = vadd.f32 %v10077, 1.0
    %v10428 = vadd.f32 %v10079, 1.0
    %v10429 = vadd.f32 %v10081, 1.0
    %v10430 = vadd.f32 %v10083, 1.0
    %v10431 = vadd.f32 %v10085, 1.0
    %v10432 = vadd.f32 %v10087, 1.0
    %v10433 = vadd.f32 %v10089, 1.0
    %v10434 = vadd.f32 %v10091, 1.0
    %v10435 = vadd.f32 %v10093, 1.0
    %v10436 = vadd.f32 %v10095, 1.0
    %v10437 = vadd.f32 %v10097, 1.0
    %v10438 = vadd.f32 %v10099, 1.0
    %v10439 = vadd.f32 %v10101, 1.0
    %v10440 = vadd.f32 %v10103, 1.0
    %v10441 = vadd.f32 %v10105, 1.0
    %v10442 = vadd.f32 %v10107, 1.0
    %v10443 = vadd.f32 %v10109, 1.0
    %v10444 = vadd.f32 %v10111, 1.0
    %v10445 = vadd.f32 %v10113, 1.0
    %v10446 = vadd.f32 %v10115, 1.0
    %v10447 = vadd.f32 %v10117, 1.0
    %v10448 = vadd.f32 %v10119, 1.0
    %v10449 = vadd.f32 %v10121, 1.0
    %v10450 = vadd.f32 %v10123, 1.0
    %v10451 = vadd.f32 %v10125, 1.0
    %v10452 = vadd.f32 %v10127, 1.0
    %v10453 = vadd.f32 %v10129, 1.0
    %v10454 = vadd.f32 %v10131, 1.0
    %v10455 = vadd.f32 %v10133, 1.0
    %v10456 = vadd.f32 %v10135, 1.0
    %v10457 = vadd.f32 %v10137, 1.0
    %v10458 = vadd.f32 %v10139, 1.0
    %v10459 = vadd.f32 %v10141, 1.0
    %v10460 = vadd.f32 %v10143, 1.0
    %v10461 = vadd.f32 %v10145, 1.0
    %v10462 = vadd.f32 %v10147, 1.0
    %v10463 = vadd.f32 %v10149, 1.0
    %v10464 = vadd.f32 %v10151, 1.0
    %v10465 = vadd.f32 %v10153, 1.0
    %v10466 = vadd.f32 %v10155, 1.0
    %v10467 = vadd.f32 %v10157, 1.0
    %v10468 = vadd.f32 %v10159, 1.0
    %v10469 = vadd.f32 %v10161, 1.0
    %v10470 = vadd.f32 %v10163, 1.0
    %v10471 = vadd.f32 %v10165, 1.0
    %v10472 = vadd.f32 %v10167, 1.0
    %v10473 = vadd.f32 %v10169, 1.0
    %v10474 = vadd.f32 %v10171, 1.0
    %v10475 = vadd.f32 %v10173, 1.0
    %v10476 = vadd.f32 %v10175, 1.0
    %v10477 = vadd.f32 %v10177, 1.0
    %v10478 = vadd.f32 %v10179, 1.0
    %v10479 = vadd.f32 %v10181, 1.0
    %v10480 = vadd.f32 %v10183, 1.0
    %v10481 = vadd.f32 %v10185, 1.0
    %v10482 = vadd.f32 %v10187, 1.0
    %v10483 = vadd.f32 %v10189, 1.0
    %v10484 = vadd.f32 %v10191, 1.0
    %v10485 = vadd.f32 %v10193, 1.0
    %v10486 = vadd.f32 %v10195, 1.0
    %v10487 = vadd.f32 %v10197, 1.0
    %v10488 = vadd.f32 %v10199, 1.0
    %v10489 = vadd.f32 %v10201, 1.0
    %v10490 = vadd.f32 %v10203, 1.0
    %v10491 = vadd.f32 %v10205, 1.0
    %v10492 = vadd.f32 %v10207, 1.0
    %v10493 = vadd.f32 %v10209, 1.0
    %v10494 = vadd.f32 %v10211, 1.0
    %v10495 = vadd.f32 %v10213, 1.0
    %v10496 = vadd.f32 %v10215, 1.0
    %v10497 = vadd.f32 %v10217, 1.0
    %v10498 = vadd.f32 %v10219, 1.0
    %v10499 = vadd.f32 %v10221, 1.0
    %v10500 = vadd.f32 %v10223, 1.0
    %v10501 = vadd.f32 %v10225, 1.0
    %v10502 = vadd.f32 %v10227, 1.0
    %v10503 = vadd.f32 %v10229, 1.0
    %v10504 = vadd.f32 %v10231, 1.0
    %v10505 = vadd.f32 %v10233, 1.0
    %v10506 = vadd.f32 %v10235, 1.0
    %v10507 = vadd.f32 %v10237, 1.0
    %v10508 = vadd.f32 %v10239, 1.0
    %v10509 = vadd.f32 %v10241, 1.0
    %v10510 = vadd.f32 %v10243, 1.0
    %v10511 = vadd.f32 %v10245, 1.0
    %v10512 = vadd.f32 %v10247, 1.0
    %v10513 = vadd.f32 %v10249, 1.0
    %v10514 = vadd.f32 %v10251, 1.0
    %v10515 = vadd.f32 %v10253, 1.0
    %v10516 = vadd.f32 %v10255, 1.0
    %v10517 = vadd.f32 %v10257, 1.0
    %v10518 = vadd.f32 %v10259, 1.0
    %v10519 = vadd.f32 %v10261, 1.0
    %v10520 = vadd.f32 %v10263, 1.0
    %v10521 = vadd.f32 %v10265, 1.0
    %v10522 = vadd.f32 %v10267, 1.0
    %v10523 = vadd.f32 %v10269, 1.0
    %v10524 = vadd.f32 %v10271, 1.0
    %v10525 = vadd.f32 %v10273, 1.0
    %v10526 = vadd.f32 %v10275, 1.0
    %v10527 = vadd.f32 %v10277, 1.0
    %v10528 = vadd.f32 %v10279, 1.0
    %v10529 = vadd.f32 %v10281, 1.0
    %v10530 = vadd.f32 %v10283, 1.0
    %v10531 = vadd.f32 %v10285, 1.0
    %v10532 = vadd.f32 %v10287, 1.0
    %v10533 = vadd.f32 %v10289, 1.0
    %v10534 = vadd.f32 %v10291, 1.0
    %v10535 = vadd.f32 %v10293, 1.0
    %v10536 = vadd.f32 %v10295, 1.0
    %v10537 = vadd.f32 %v10297, 1.0
    %v10538 = vadd.f32 %v10299, 1.0
    %v10539 = vadd.f32 %v10301, 1.0
    %v10540 = vadd.f32 %v10303, 1.0
    %v10541 = vadd.f32 %v10305, 1.0
    %v10542 = vadd.f32 %v10307, 1.0
    %v10543 = vadd.f32 %v10309, 1.0
    %v10544 = vadd.f32 %v10311, 1.0
    %v10545 = vadd.f32 %v10313, 1.0
    %v10546 = vadd.f32 %v10315, 1.0
    %v10547 = vadd.f32 %v10317, 1.0
    %v10548 = vadd.f32 %v10319, 1.0
    %v10549 = vadd.f32 %v10321, 1.0
    %v10550 = vadd.f32 %v10323, 1.0
    %v10551 = vadd.f32 %v10325, 1.0
    %v10552 = vadd.f32 %v10327, 1.0
    %v10553 = vadd.f32 %v10329, 1.0
    %v10554 = vadd.f32 %v10331, 1.0
    %v10555 = vadd.f32 %v10333, 1.0
    %v10556 = vadd.f32 %v10335, 1.0
    %v10557 = vadd.f32 %v10337, 1.0
    %v10558 = vadd.f32 %v10339, 1.0
    %v10559 = vadd.f32 %v10341, 1.0
    %v10560 = vadd.f32 %v10343, 1.0
    %v10561 = vadd.f32 %v10345, 1.0
    %v10562 = vadd.f32 %v10347, 1.0
    %v10563 = vadd.f32 %v10349, 1.0
    %v10564 = vadd.f32 %v10351, 1.0
    %v10565 = vadd.f32 %v10353, 1.0
    %v10566 = vadd.f32 %v10355, 1.0
    %v10567 = vadd.f32 %v10357, 1.0
    %v10568 = vadd.f32 %v10359, 1.0
    %v10569 = vadd.f32 %v10361, 1.0
    %v10570 = vadd.f32 %v10363, 1.0
    %v10571 = vadd.f32 %v10365, 1.0
    %v10572 = vadd.f32 %v10367, 1.0
    %v10573 = vadd.f32 %v10369, 1.0
    %v10574 = vadd.f32 %v10371, 1.0
    %v10575 = vadd.f32 %v10373, 1.0
    %v10576 = vadd.f32 %v10375, 1.0
    %v10577 = vadd.f32 %v10377, 1.0
    %v10578 = vrcp.pop %v10378
    %v10579 = vrcp.pop %v10379
    %v10580 = vrcp.pop %v10380
    %v10581 = vrcp.pop %v10381
    %v10582 = vrcp.pop %v10382
    %v10583 = vrcp.pop %v10383
    %v10584 = vrcp.pop %v10384
    %v10585 = vrcp.pop %v10385
    %v10586 = vrcp.pop %v10386
    %v10587 = vrcp.pop %v10387
    %v10588 = vrcp.pop %v10388
    %v10589 = vrcp.pop %v10389
    %v10590 = vrcp.pop %v10390
    %v10591 = vrcp.pop %v10391
    %v10592 = vrcp.pop %v10392
    %v10593 = vrcp.pop %v10393
    %v10594 = vrcp.pop %v10394
    %v10595 = vrcp.pop %v10395
    %v10596 = vrcp.pop %v10396
    %v10597 = vrcp.pop %v10397
    %v10598 = vrcp.pop %v10398
    %v10599 = vrcp.pop %v10399
    %v10600 = vrcp.pop %v10400
    %v10601 = vrcp.pop %v10401
    %v10602 = vrcp.pop %v10402
    %v10603 = vrcp.pop %v10403
    %v10604 = vrcp.pop %v10404
    %v10605 = vrcp.pop %v10405
    %v10606 = vrcp.pop %v10406
    %v10607 = vrcp.pop %v10407
    %v10608 = vrcp.pop %v10408
    %v10609 = vrcp.pop %v10409
    %v10610 = vrcp.pop %v10410
    %v10611 = vrcp.pop %v10411
    %v10612 = vrcp.pop %v10412
    %v10613 = vrcp.pop %v10413
    %v10614 = vrcp.pop %v10414
    %v10615 = vrcp.pop %v10415
    %v10616 = vrcp.pop %v10416
    %v10617 = vrcp.pop %v10417
    %v10618 = vrcp.pop %v10418
    %v10619 = vrcp.pop %v10419
    %v10620 = vrcp.pop %v10420
    %v10621 = vrcp.pop %v10421
    %v10622 = vrcp.pop %v10422
    %v10623 = vrcp.pop %v10423
    %v10624 = vrcp.pop %v10424
    %v10625 = vrcp.pop %v10425
    %v10626 = vrcp.pop %v10426
    %v10627 = vrcp.pop %v10427
    %v10628 = vrcp.pop %v10428
    %v10629 = vrcp.pop %v10429
    %v10630 = vrcp.pop %v10430
    %v10631 = vrcp.pop %v10431
    %v10632 = vrcp.pop %v10432
    %v10633 = vrcp.pop %v10433
    %v10634 = vrcp.pop %v10434
    %v10635 = vrcp.pop %v10435
    %v10636 = vrcp.pop %v10436
    %v10637 = vrcp.pop %v10437
    %v10638 = vrcp.pop %v10438
    %v10639 = vrcp.pop %v10439
    %v10640 = vrcp.pop %v10440
    %v10641 = vrcp.pop %v10441
    %v10642 = vrcp.pop %v10442
    %v10643 = vrcp.pop %v10443
    %v10644 = vrcp.pop %v10444
    %v10645 = vrcp.pop %v10445
    %v10646 = vrcp.pop %v10446
    %v10647 = vrcp.pop %v10447
    %v10648 = vrcp.pop %v10448
    %v10649 = vrcp.pop %v10449
    %v10650 = vrcp.pop %v10450
    %v10651 = vrcp.pop %v10451
    %v10652 = vrcp.pop %v10452
    %v10653 = vrcp.pop %v10453
    %v10654 = vrcp.pop %v10454
    %v10655 = vrcp.pop %v10455
    %v10656 = vrcp.pop %v10456
    %v10657 = vrcp.pop %v10457
    %v10658 = vrcp.pop %v10458
    %v10659 = vrcp.pop %v10459
    %v10660 = vrcp.pop %v10460
    %v10661 = vrcp.pop %v10461
    %v10662 = vrcp.pop %v10462
    %v10663 = vrcp.pop %v10463
    %v10664 = vrcp.pop %v10464
    %v10665 = vrcp.pop %v10465
    %v10666 = vrcp.pop %v10466
    %v10667 = vrcp.pop %v10467
    %v10668 = vrcp.pop %v10468
    %v10669 = vrcp.pop %v10469
    %v10670 = vrcp.pop %v10470
    %v10671 = vrcp.pop %v10471
    %v10672 = vrcp.pop %v10472
    %v10673 = vrcp.pop %v10473
    %v10674 = vrcp.pop %v10474
    %v10675 = vrcp.pop %v10475
    %v10676 = vrcp.pop %v10476
    %v10677 = vrcp.pop %v10477
    %v10678 = vrcp.pop %v10478
    %v10679 = vrcp.pop %v10479
    %v10680 = vrcp.pop %v10480
    %v10681 = vrcp.pop %v10481
    %v10682 = vrcp.pop %v10482
    %v10683 = vrcp.pop %v10483
    %v10684 = vrcp.pop %v10484
    %v10685 = vrcp.pop %v10485
    %v10686 = vrcp.pop %v10486
    %v10687 = vrcp.pop %v10487
    %v10688 = vrcp.pop %v10488
    %v10689 = vrcp.pop %v10489
    %v10690 = vrcp.pop %v10490
    %v10691 = vrcp.pop %v10491
    %v10692 = vrcp.pop %v10492
    %v10693 = vrcp.pop %v10493
    %v10694 = vrcp.pop %v10494
    %v10695 = vrcp.pop %v10495
    %v10696 = vrcp.pop %v10496
    %v10697 = vrcp.pop %v10497
    %v10698 = vrcp.pop %v10498
    %v10699 = vrcp.pop %v10499
    %v10700 = vrcp.pop %v10500
    %v10701 = vrcp.pop %v10501
    %v10702 = vrcp.pop %v10502
    %v10703 = vrcp.pop %v10503
    %v10704 = vrcp.pop %v10504
    %v10705 = vrcp.pop %v10505
    %v10706 = vrcp.pop %v10506
    %v10707 = vrcp.pop %v10507
    %v10708 = vrcp.pop %v10508
    %v10709 = vrcp.pop %v10509
    %v10710 = vrcp.pop %v10510
    %v10711 = vrcp.pop %v10511
    %v10712 = vrcp.pop %v10512
    %v10713 = vrcp.pop %v10513
    %v10714 = vrcp.pop %v10514
    %v10715 = vrcp.pop %v10515
    %v10716 = vrcp.pop %v10516
    %v10717 = vrcp.pop %v10517
    %v10718 = vrcp.pop %v10518
    %v10719 = vrcp.pop %v10519
    %v10720 = vrcp.pop %v10520
    %v10721 = vrcp.pop %v10521
    %v10722 = vrcp.pop %v10522
    %v10723 = vrcp.pop %v10523
    %v10724 = vrcp.pop %v10524
    %v10725 = vrcp.pop %v10525
    %v10726 = vrcp.pop %v10526
    %v10727 = vrcp.pop %v10527
    %v10728 = vrcp.pop %v10528
    %v10729 = vrcp.pop %v10529
    %v10730 = vrcp.pop %v10530
    %v10731 = vrcp.pop %v10531
    %v10732 = vrcp.pop %v10532
    %v10733 = vrcp.pop %v10533
    %v10734 = vrcp.pop %v10534
    %v10735 = vrcp.pop %v10535
    %v10736 = vrcp.pop %v10536
    %v10737 = vrcp.pop %v10537
    %v10738 = vrcp.pop %v10538
    %v10739 = vrcp.pop %v10539
    %v10740 = vrcp.pop %v10540
    %v10741 = vrcp.pop %v10541
    %v10742 = vrcp.pop %v10542
    %v10743 = vrcp.pop %v10543
    %v10744 = vrcp.pop %v10544
    %v10745 = vrcp.pop %v10545
    %v10746 = vrcp.pop %v10546
    %v10747 = vrcp.pop %v10547
    %v10748 = vrcp.pop %v10548
    %v10749 = vrcp.pop %v10549
    %v10750 = vrcp.pop %v10550
    %v10751 = vrcp.pop %v10551
    %v10752 = vrcp.pop %v10552
    %v10753 = vrcp.pop %v10553
    %v10754 = vrcp.pop %v10554
    %v10755 = vrcp.pop %v10555
    %v10756 = vrcp.pop %v10556
    %v10757 = vrcp.pop %v10557
    %v10758 = vrcp.pop %v10558
    %v10759 = vrcp.pop %v10559
    %v10760 = vrcp.pop %v10560
    %v10761 = vrcp.pop %v10561
    %v10762 = vrcp.pop %v10562
    %v10763 = vrcp.pop %v10563
    %v10764 = vrcp.pop %v10564
    %v10765 = vrcp.pop %v10565
    %v10766 = vrcp.pop %v10566
    %v10767 = vrcp.pop %v10567
    %v10768 = vrcp.pop %v10568
    %v10769 = vrcp.pop %v10569
    %v10770 = vrcp.pop %v10570
    %v10771 = vrcp.pop %v10571
    %v10772 = vrcp.pop %v10572
    %v10773 = vrcp.pop %v10573
    %v10774 = vrcp.pop %v10574
    %v10775 = vrcp.pop %v10575
    %v10776 = vrcp.pop %v10576
    %v10777 = vrcp.pop %v10577
    %v10778 = vld [vmem:[%s3] sm:$0xff]
    %v10779 = vld [vmem:[%s3 + $0x8] sm:$0xff]
    %v10780 = vld [vmem:[%s3 + $0x10] sm:$0xff]
    %v10781 = vld [vmem:[%s3 + $0x18] sm:$0xff]
    %v10782 = vld [vmem:[%s3 + $0x20] sm:$0xff]
    %v10783 = vld [vmem:[%s3 + $0x28] sm:$0xff]
    %v10784 = vld [vmem:[%s3 + $0x30] sm:$0xf]
    %v10785 = vld [vmem:[%s3 + $0x34] sm:$0x11]
    %v10786 = vld [vmem:[%s3 + $0x3c] sm:$0x11]
    %v10787 = vld [vmem:[%s3 + $0x44] sm:$0x11]
    %v10788 = vld [vmem:[%s3 + $0x4c] sm:$0x11]
    %v10789 = vld [vmem:[%s3 + $0x54] sm:$0x11]
    %v10790 = vld [vmem:[%s3 + $0x5c] sm:$0x11]
    %v10791 = vld [vmem:[%s3 + $0x64] sm:$0x1]
    %v10792 = vpack.c.bf16 %v10579, %v10578
    %v10793 = vpack.c.bf16 %v10581, %v10580
    %v10794 = vpack.c.bf16 %v10583, %v10582
    %v10795 = vpack.c.bf16 %v10585, %v10584
    %v10796 = vpack.c.bf16 %v10587, %v10586
    %v10797 = vpack.c.bf16 %v10589, %v10588
    %v10798 = vpack.c.bf16 %v10591, %v10590
    %v10799 = vpack.c.bf16 %v10593, %v10592
    %v10800 = vpack.c.bf16 %v10595, %v10594
    %v10801 = vpack.c.bf16 %v10597, %v10596
    %v10802 = vpack.c.bf16 %v10599, %v10598
    %v10803 = vpack.c.bf16 %v10601, %v10600
    %v10804 = vpack.c.bf16 %v10603, %v10602
    %v10805 = vpack.c.bf16 %v10605, %v10604
    %v10806 = vpack.c.bf16 %v10607, %v10606
    %v10807 = vpack.c.bf16 %v10609, %v10608
    %v10808 = vpack.c.bf16 %v10611, %v10610
    %v10809 = vpack.c.bf16 %v10613, %v10612
    %v10810 = vpack.c.bf16 %v10615, %v10614
    %v10811 = vpack.c.bf16 %v10617, %v10616
    %v10812 = vpack.c.bf16 %v10619, %v10618
    %v10813 = vpack.c.bf16 %v10621, %v10620
    %v10814 = vpack.c.bf16 %v10623, %v10622
    %v10815 = vpack.c.bf16 %v10625, %v10624
    %v10816 = vpack.c.bf16 %v10627, %v10626
    %v10817 = vpack.c.bf16 %v10629, %v10628
    %v10818 = vpack.c.bf16 %v10631, %v10630
    %v10819 = vpack.c.bf16 %v10633, %v10632
    %v10820 = vpack.c.bf16 %v10635, %v10634
    %v10821 = vpack.c.bf16 %v10637, %v10636
    %v10822 = vpack.c.bf16 %v10639, %v10638
    %v10823 = vpack.c.bf16 %v10641, %v10640
    %v10824 = vpack.c.bf16 %v10643, %v10642
    %v10825 = vpack.c.bf16 %v10645, %v10644
    %v10826 = vpack.c.bf16 %v10647, %v10646
    %v10827 = vpack.c.bf16 %v10649, %v10648
    %v10828 = vpack.c.bf16 %v10651, %v10650
    %v10829 = vpack.c.bf16 %v10653, %v10652
    %v10830 = vpack.c.bf16 %v10655, %v10654
    %v10831 = vpack.c.bf16 %v10657, %v10656
    %v10832 = vpack.c.bf16 %v10659, %v10658
    %v10833 = vpack.c.bf16 %v10661, %v10660
    %v10834 = vpack.c.bf16 %v10663, %v10662
    %v10835 = vpack.c.bf16 %v10665, %v10664
    %v10836 = vpack.c.bf16 %v10667, %v10666
    %v10837 = vpack.c.bf16 %v10669, %v10668
    %v10838 = vpack.c.bf16 %v10671, %v10670
    %v10839 = vpack.c.bf16 %v10673, %v10672
    %v10840 = vpack.c.bf16 %v10675, %v10674
    %v10841 = vpack.c.bf16 %v10677, %v10676
    %v10842 = vpack.c.bf16 %v10679, %v10678
    %v10843 = vpack.c.bf16 %v10681, %v10680
    %v10844 = vpack.c.bf16 %v10683, %v10682
    %v10845 = vpack.c.bf16 %v10685, %v10684
    %v10846 = vpack.c.bf16 %v10687, %v10686
    %v10847 = vpack.c.bf16 %v10689, %v10688
    %v10848 = vpack.c.bf16 %v10691, %v10690
    %v10849 = vpack.c.bf16 %v10693, %v10692
    %v10850 = vpack.c.bf16 %v10695, %v10694
    %v10851 = vpack.c.bf16 %v10697, %v10696
    %v10852 = vpack.c.bf16 %v10699, %v10698
    %v10853 = vpack.c.bf16 %v10701, %v10700
    %v10854 = vpack.c.bf16 %v10703, %v10702
    %v10855 = vpack.c.bf16 %v10705, %v10704
    %v10856 = vpack.c.bf16 %v10707, %v10706
    %v10857 = vpack.c.bf16 %v10709, %v10708
    %v10858 = vpack.c.bf16 %v10711, %v10710
    %v10859 = vpack.c.bf16 %v10713, %v10712
    %v10860 = vpack.c.bf16 %v10715, %v10714
    %v10861 = vpack.c.bf16 %v10717, %v10716
    %v10862 = vpack.c.bf16 %v10719, %v10718
    %v10863 = vpack.c.bf16 %v10721, %v10720
    %v10864 = vpack.c.bf16 %v10723, %v10722
    %v10865 = vpack.c.bf16 %v10725, %v10724
    %v10866 = vpack.c.bf16 %v10727, %v10726
    %v10867 = vpack.c.bf16 %v10729, %v10728
    %v10868 = vpack.c.bf16 %v10731, %v10730
    %v10869 = vpack.c.bf16 %v10733, %v10732
    %v10870 = vpack.c.bf16 %v10735, %v10734
    %v10871 = vpack.c.bf16 %v10737, %v10736
    %v10872 = vpack.c.bf16 %v10739, %v10738
    %v10873 = vpack.c.bf16 %v10741, %v10740
    %v10874 = vpack.c.bf16 %v10743, %v10742
    %v10875 = vpack.c.bf16 %v10745, %v10744
    %v10876 = vpack.c.bf16 %v10747, %v10746
    %v10877 = vpack.c.bf16 %v10749, %v10748
    %v10878 = vpack.c.bf16 %v10751, %v10750
    %v10879 = vpack.c.bf16 %v10753, %v10752
    %v10880 = vpack.c.bf16 %v10755, %v10754
    %v10881 = vpack.c.bf16 %v10757, %v10756
    %v10882 = vpack.c.bf16 %v10759, %v10758
    %v10883 = vpack.c.bf16 %v10761, %v10760
    %v10884 = vpack.c.bf16 %v10763, %v10762
    %v10885 = vpack.c.bf16 %v10765, %v10764
    %v10886 = vpack.c.bf16 %v10767, %v10766
    %v10887 = vpack.c.bf16 %v10769, %v10768
    %v10888 = vpack.c.bf16 %v10771, %v10770
    %v10889 = vpack.c.bf16 %v10773, %v10772
    %v10890 = vpack.c.bf16 %v10775, %v10774
    %v10891 = vpack.c.bf16 %v10777, %v10776
    %v10892 = vld [vmem:[%s4] sm:$0xff]
    %v10893 = vld [vmem:[%s4 + $0x8] sm:$0x3]
    %10895 = vset.pattern.permute.xlu0 0
    %10896 = vperm.xlu0 %10895, %v10892
    %v10897 = vpop.permute.xlu0 %10896
    %10900 = vset.pattern.permute.xlu0 0
    %10901 = vperm.xlu0 %10900, %v10893
    %v10902 = vpop.permute.xlu0 %10901
    %v10918 = vunpack.c.l.b16 %v10778
    %v10919 = vunpack.c.h.b16 %v10778
    %v10920 = vunpack.c.l.b16 %v10779
    %v10921 = vunpack.c.h.b16 %v10779
    %v10922 = vunpack.c.l.b16 %v10780
    %v10923 = vunpack.c.h.b16 %v10780
    %v10924 = vunpack.c.l.b16 %v10781
    %v10925 = vunpack.c.h.b16 %v10781
    %v10926 = vunpack.c.l.b16 %v10782
    %v10927 = vunpack.c.h.b16 %v10782
    %v10928 = vunpack.c.l.b16 %v10783
    %v10929 = vunpack.c.h.b16 %v10783
    %v10930 = vunpack.c.l.b16 %v10784
    %v10931 = vunpack.c.l.b16 %v10785
    %v10932 = vunpack.c.h.b16 %v10785
    %v10933 = vunpack.c.l.b16 %v10786
    %v10934 = vunpack.c.h.b16 %v10786
    %v10935 = vunpack.c.l.b16 %v10787
    %v10936 = vunpack.c.h.b16 %v10787
    %v10937 = vunpack.c.l.b16 %v10788
    %v10938 = vunpack.c.h.b16 %v10788
    %v10939 = vunpack.c.l.b16 %v10789
    %v10940 = vunpack.c.h.b16 %v10789
    %v10941 = vunpack.c.l.b16 %v10790
    %v10942 = vunpack.c.h.b16 %v10790
    %v10943 = vunpack.c.l.b16 %v10791
    %v10944 = vpack.c.b16 %v10931, %v10918
    %v10945 = vpack.c.b16 %v10932, %v10919
    %v10946 = vpack.c.b16 %v10933, %v10920
    %v10947 = vpack.c.b16 %v10934, %v10921
    %v10948 = vpack.c.b16 %v10935, %v10922
    %v10949 = vpack.c.b16 %v10936, %v10923
    %v10950 = vpack.c.b16 %v10937, %v10924
    %v10951 = vpack.c.b16 %v10938, %v10925
    %v10952 = vpack.c.b16 %v10939, %v10926
    %v10953 = vpack.c.b16 %v10940, %v10927
    %v10954 = vpack.c.b16 %v10941, %v10928
    %v10955 = vpack.c.b16 %v10942, %v10929
    %v10956 = vpack.c.b16 %v10943, %v10930
    %vm10969 = vcmask 523264
    %v10971 = vsel %vm10969, %v10956, 0
    %10973 = vmatpush.bf16.msra.mxu0 %v10799
    %10974 = vmatpush.bf16.msra.mxu0 %v10798
    %10975 = vmatpush.bf16.msra.mxu0 %v10797
    %10976 = vmatpush.bf16.msra.mxu0 %v10796
    %10977 = vmatpush.bf16.msra.mxu0 %v10795
    %10978 = vmatpush.bf16.msra.mxu0 %v10794
    %10979 = vmatpush.bf16.msra.mxu0 %v10793
    %10980 = vmatpush.bf16.msra.mxu0 %v10792
    %10981 = vmatmul.bf16.gmra.mxu0 %v10944
    %v10982 = vpop.f32.mrf.mxu0
    %v10983 = vadd.f32 %v10897, %v10982
    %v10984 = vpop.f32.mrf.mxu0
    %v10985 = vadd.f32 %v10902, %v10984
    %10986 = vdwg.mxu0
    %10987 = vmatpush.bf16.msra.mxu0 %v10807
    %10988 = vmatpush.bf16.msra.mxu0 %v10806
    %10989 = vmatpush.bf16.msra.mxu0 %v10805
    %10990 = vmatpush.bf16.msra.mxu0 %v10804
    %10991 = vmatpush.bf16.msra.mxu0 %v10803
    %10992 = vmatpush.bf16.msra.mxu0 %v10802
    %10993 = vmatpush.bf16.msra.mxu0 %v10801
    %10994 = vmatpush.bf16.msra.mxu0 %v10800
    %10995 = vmatmul.bf16.gmra.mxu0 %v10945
    %v10996 = vpop.f32.mrf.mxu0
    %v10997 = vadd.f32 %v10983, %v10996
    %v10998 = vpop.f32.mrf.mxu0
    %v10999 = vadd.f32 %v10985, %v10998
    %11000 = vdwg.mxu0
    %11001 = vmatpush.bf16.msra.mxu0 %v10815
    %11002 = vmatpush.bf16.msra.mxu0 %v10814
    %11003 = vmatpush.bf16.msra.mxu0 %v10813
    %11004 = vmatpush.bf16.msra.mxu0 %v10812
    %11005 = vmatpush.bf16.msra.mxu0 %v10811
    %11006 = vmatpush.bf16.msra.mxu0 %v10810
    %11007 = vmatpush.bf16.msra.mxu0 %v10809
    %11008 = vmatpush.bf16.msra.mxu0 %v10808
    %11009 = vmatmul.bf16.gmra.mxu0 %v10946
    %v11010 = vpop.f32.mrf.mxu0
    %v11011 = vadd.f32 %v10997, %v11010
    %v11012 = vpop.f32.mrf.mxu0
    %v11013 = vadd.f32 %v10999, %v11012
    %11014 = vdwg.mxu0
    %11015 = vmatpush.bf16.msra.mxu0 %v10823
    %11016 = vmatpush.bf16.msra.mxu0 %v10822
    %11017 = vmatpush.bf16.msra.mxu0 %v10821
    %11018 = vmatpush.bf16.msra.mxu0 %v10820
    %11019 = vmatpush.bf16.msra.mxu0 %v10819
    %11020 = vmatpush.bf16.msra.mxu0 %v10818
    %11021 = vmatpush.bf16.msra.mxu0 %v10817
    %11022 = vmatpush.bf16.msra.mxu0 %v10816
    %11023 = vmatmul.bf16.gmra.mxu0 %v10947
    %v11024 = vpop.f32.mrf.mxu0
    %v11025 = vadd.f32 %v11011, %v11024
    %v11026 = vpop.f32.mrf.mxu0
    %v11027 = vadd.f32 %v11013, %v11026
    %11028 = vdwg.mxu0
    %11029 = vmatpush.bf16.msra.mxu0 %v10831
    %11030 = vmatpush.bf16.msra.mxu0 %v10830
    %11031 = vmatpush.bf16.msra.mxu0 %v10829
    %11032 = vmatpush.bf16.msra.mxu0 %v10828
    %11033 = vmatpush.bf16.msra.mxu0 %v10827
    %11034 = vmatpush.bf16.msra.mxu0 %v10826
    %11035 = vmatpush.bf16.msra.mxu0 %v10825
    %11036 = vmatpush.bf16.msra.mxu0 %v10824
    %11037 = vmatmul.bf16.gmra.mxu0 %v10948
    %v11038 = vpop.f32.mrf.mxu0
    %v11039 = vadd.f32 %v11025, %v11038
    %v11040 = vpop.f32.mrf.mxu0
    %v11041 = vadd.f32 %v11027, %v11040
    %11042 = vdwg.mxu0
    %11043 = vmatpush.bf16.msra.mxu0 %v10839
    %11044 = vmatpush.bf16.msra.mxu0 %v10838
    %11045 = vmatpush.bf16.msra.mxu0 %v10837
    %11046 = vmatpush.bf16.msra.mxu0 %v10836
    %11047 = vmatpush.bf16.msra.mxu0 %v10835
    %11048 = vmatpush.bf16.msra.mxu0 %v10834
    %11049 = vmatpush.bf16.msra.mxu0 %v10833
    %11050 = vmatpush.bf16.msra.mxu0 %v10832
    %11051 = vmatmul.bf16.gmra.mxu0 %v10949
    %v11052 = vpop.f32.mrf.mxu0
    %v11053 = vadd.f32 %v11039, %v11052
    %v11054 = vpop.f32.mrf.mxu0
    %v11055 = vadd.f32 %v11041, %v11054
    %11056 = vdwg.mxu0
    %11057 = vmatpush.bf16.msra.mxu0 %v10847
    %11058 = vmatpush.bf16.msra.mxu0 %v10846
    %11059 = vmatpush.bf16.msra.mxu0 %v10845
    %11060 = vmatpush.bf16.msra.mxu0 %v10844
    %11061 = vmatpush.bf16.msra.mxu0 %v10843
    %11062 = vmatpush.bf16.msra.mxu0 %v10842
    %11063 = vmatpush.bf16.msra.mxu0 %v10841
    %11064 = vmatpush.bf16.msra.mxu0 %v10840
    %11065 = vmatmul.bf16.gmra.mxu0 %v10950
    %v11066 = vpop.f32.mrf.mxu0
    %v11067 = vadd.f32 %v11053, %v11066
    %v11068 = vpop.f32.mrf.mxu0
    %v11069 = vadd.f32 %v11055, %v11068
    %11070 = vdwg.mxu0
    %11071 = vmatpush.bf16.msra.mxu0 %v10855
    %11072 = vmatpush.bf16.msra.mxu0 %v10854
    %11073 = vmatpush.bf16.msra.mxu0 %v10853
    %11074 = vmatpush.bf16.msra.mxu0 %v10852
    %11075 = vmatpush.bf16.msra.mxu0 %v10851
    %11076 = vmatpush.bf16.msra.mxu0 %v10850
    %11077 = vmatpush.bf16.msra.mxu0 %v10849
    %11078 = vmatpush.bf16.msra.mxu0 %v10848
    %11079 = vmatmul.bf16.gmra.mxu0 %v10951
    %v11080 = vpop.f32.mrf.mxu0
    %v11081 = vadd.f32 %v11067, %v11080
    %v11082 = vpop.f32.mrf.mxu0
    %v11083 = vadd.f32 %v11069, %v11082
    %11084 = vdwg.mxu0
    %11085 = vmatpush.bf16.msra.mxu0 %v10863
    %11086 = vmatpush.bf16.msra.mxu0 %v10862
    %11087 = vmatpush.bf16.msra.mxu0 %v10861
    %11088 = vmatpush.bf16.msra.mxu0 %v10860
    %11089 = vmatpush.bf16.msra.mxu0 %v10859
    %11090 = vmatpush.bf16.msra.mxu0 %v10858
    %11091 = vmatpush.bf16.msra.mxu0 %v10857
    %11092 = vmatpush.bf16.msra.mxu0 %v10856
    %11093 = vmatmul.bf16.gmra.mxu0 %v10952
    %v11094 = vpop.f32.mrf.mxu0
    %v11095 = vadd.f32 %v11081, %v11094
    %v11096 = vpop.f32.mrf.mxu0
    %v11097 = vadd.f32 %v11083, %v11096
    %11098 = vdwg.mxu0
    %11099 = vmatpush.bf16.msra.mxu0 %v10871
    %11100 = vmatpush.bf16.msra.mxu0 %v10870
    %11101 = vmatpush.bf16.msra.mxu0 %v10869
    %11102 = vmatpush.bf16.msra.mxu0 %v10868
    %11103 = vmatpush.bf16.msra.mxu0 %v10867
    %11104 = vmatpush.bf16.msra.mxu0 %v10866
    %11105 = vmatpush.bf16.msra.mxu0 %v10865
    %11106 = vmatpush.bf16.msra.mxu0 %v10864
    %11107 = vmatmul.bf16.gmra.mxu0 %v10953
    %v11108 = vpop.f32.mrf.mxu0
    %v11109 = vadd.f32 %v11095, %v11108
    %v11110 = vpop.f32.mrf.mxu0
    %v11111 = vadd.f32 %v11097, %v11110
    %11112 = vdwg.mxu0
    %11113 = vmatpush.bf16.msra.mxu0 %v10879
    %11114 = vmatpush.bf16.msra.mxu0 %v10878
    %11115 = vmatpush.bf16.msra.mxu0 %v10877
    %11116 = vmatpush.bf16.msra.mxu0 %v10876
    %11117 = vmatpush.bf16.msra.mxu0 %v10875
    %11118 = vmatpush.bf16.msra.mxu0 %v10874
    %11119 = vmatpush.bf16.msra.mxu0 %v10873
    %11120 = vmatpush.bf16.msra.mxu0 %v10872
    %11121 = vmatmul.bf16.gmra.mxu0 %v10954
    %v11122 = vpop.f32.mrf.mxu0
    %v11123 = vadd.f32 %v11109, %v11122
    %v11124 = vpop.f32.mrf.mxu0
    %v11125 = vadd.f32 %v11111, %v11124
    %11126 = vdwg.mxu0
    %11127 = vmatpush.bf16.msra.mxu0 %v10887
    %11128 = vmatpush.bf16.msra.mxu0 %v10886
    %11129 = vmatpush.bf16.msra.mxu0 %v10885
    %11130 = vmatpush.bf16.msra.mxu0 %v10884
    %11131 = vmatpush.bf16.msra.mxu0 %v10883
    %11132 = vmatpush.bf16.msra.mxu0 %v10882
    %11133 = vmatpush.bf16.msra.mxu0 %v10881
    %11134 = vmatpush.bf16.msra.mxu0 %v10880
    %11135 = vmatmul.bf16.gmra.mxu0 %v10955
    %v11136 = vpop.f32.mrf.mxu0
    %v11137 = vadd.f32 %v11123, %v11136
    %v11138 = vpop.f32.mrf.mxu0
    %v11139 = vadd.f32 %v11125, %v11138
    %11140 = vdwg.mxu0
    %11141 = vmatpush.bf16.msra.mxu0 0
    %11142 = vmatpush.bf16.msra.mxu0 0
    %11143 = vmatpush.bf16.msra.mxu0 0
    %11144 = vmatpush.bf16.msra.mxu0 0
    %11145 = vmatpush.bf16.msra.mxu0 %v10891
    %11146 = vmatpush.bf16.msra.mxu0 %v10890
    %11147 = vmatpush.bf16.msra.mxu0 %v10889
    %11148 = vmatpush.bf16.msra.mxu0 %v10888
    %11149 = vmatmul.bf16.gmra.mxu0 %v10971
    %v11150 = vpop.f32.mrf.mxu0
    %v11151 = vadd.f32 %v11137, %v11150
    %v11152 = vpop.f32.mrf.mxu0
    %v11153 = vadd.f32 %v11139, %v11152
    %11154 = vdwg.mxu0
    %vm11155 = vcmask 1041408
    %v11156 = vsel %vm11155, %v11153, -inf
    %v11157 = vmax.f32 %v11151, %v11156
    %v11158 = vrot.slane %v11157, 4
    %v11159 = vmax.f32 %v11157, %v11158
    %v11160 = vrot.slane %v11159, 2
    %v11161 = vmax.f32 %v11159, %v11160
    %v11162 = vrot.slane %v11161, 1
    %v11163 = vmax.f32 %v11161, %v11162
    %v11164 = vsub.f32 %v11151, %v11163
    %v11165 = vsub.f32 %v11153, %v11163
    %v11166 = vmul.f32 %v11164, 1.442695
    %v11167 = vpow.pop %v11166
    %v11168 = vmul.f32 %v11165, 1.442695
    %v11169 = vpow.pop %v11168
    %v11170 = vsel %vm11155, %v11169, 0.0
    %v11171 = vadd.f32 %v11167, %v11170
    %v11172 = vrot.slane %v11171, 4
    %v11173 = vadd.f32 %v11171, %v11172
    %v11174 = vrot.slane %v11173, 2
    %v11175 = vadd.f32 %v11173, %v11174
    %v11176 = vrot.slane %v11175, 1
    %v11177 = vadd.f32 %v11175, %v11176
    %v11178 = vrcp.pop %v11177
    %v11179 = vmul.f32 %v11177, %v11178
    %v11180 = vsub.f32 1.0, %v11179
    %v11181 = vmul.f32 %v11178, %v11180
    %v11182 = vadd.f32 %v11178, %v11181
    %vm11183 = vweird.f32 %v11177
    %vm11184 = vweird.f32 %v11178
    %vm11185 = vmor %vm11183, %vm11184
    %v11186 = vsel %vm11185, %v11178, %v11182
    %v11187 = vand.u32 2147483647, %v11177
    %vm11188 = vcmp.eq.f32.partialorder %v11187, 8.507059e+37
    %v11189 = vand.u32 %v11177, 2147483648
    %v11190 = vor.u32 1.1754944e-38, %v11189
    %v11191 = vsel %vm11188, %v11190, %v11186
    %v11192 = vmul.f32 %v11167, %v11191
    %v11193 = vmul.f32 %v11169, %v11191
    %11194 = vst [vmem:[#allocation2] sm:$0xff] %v11192
    %11195 = vst [vmem:[#allocation2 + $0x8] sm:$0x3] %v11193
    // Predicated region
    $region22: #{tpu_custom_call.1} parent=1 // pred_check
      _
    $region23: #{tpu_custom_call.1} parent=1 // pred_check_branch
      %11197 = sbr.rel (0) target = $region25
    $region24: #{tpu_custom_call.1} parent=1 // pred_region
      %11199 = vsyncadd [#allocation3], 0
      %s11200 = sshll.u32 [#allocation2], 4
      %s11201 = int_to_ptr.vmem [resolvable:$true] %s11200
      %s11202 = sshll.u32 %s5, 4
      %s11203 = int_to_ptr.hbm [resolvable:$true] %s11202
      %11208 = dma.vmem_to_hbm [thread:$0]  %s11201, 256, %s11203, [#allocation3], 128, 128, 8
    $region25: #{tpu_custom_call.1} parent=1 // pred_fallthru
      _
    // Predicated region
    $region26: #{tpu_custom_call.1} parent=1 // pred_check
      _
    $region27: #{tpu_custom_call.1} parent=1 // pred_check_branch
      %11210 = sbr.rel (0) target = $region29
    $region28: #{tpu_custom_call.1} parent=1 // pred_region
      %11212 = dma.done [#allocation3], 256
    $region29: #{tpu_custom_call.1} parent=1 // pred_fallthru
      _
    %11213 = vsyncpa [#allocation3], 1

</llo_original>
